<compile_context>
chip_gen: v6e
topology: v6e:2x2x1
jax: 0.10.0
libtpu: 0.0.40
codegen_flags: <defaults>
</compile_context>

<pallas_src>
import functools

import jax
import jax.numpy as jnp
from jax.experimental import pallas as pl
from jax.experimental.pallas import tpu as pltpu


_VMEM = pl.BlockSpec(memory_space=pltpu.MemorySpace.VMEM)


# ----------------------------- fused kernel ---------------------------------

def _cnn_shared_kernel(obs_ref, x_ref, w1_ref, b1_ref, w2_ref, b2_ref,
                       w3_ref, b3_ref, fc1w_ref, fc1b_ref, fc2w_ref, fc2b_ref,
                       out_ref, lhs2_scr, pool_scr, lhs3_scr):
    f32 = jnp.float32
    bf16 = jnp.bfloat16

    N, H, W, Cin = x_ref.shape
    C1 = b1_ref.shape[1]          # 64
    C2 = b2_ref.shape[1]          # 128
    C3 = b3_ref.shape[1]          # 256
    obs_dim = obs_ref.shape[1]

    Ho1, Wo1 = H - 2, W - 2       # conv1 output (valid, 3x3)
    Ho2, Wo2 = Ho1 - 2, Wo1 - 2   # conv2 output
    Hp, Wp = Ho2 // 2, Wo2 // 2   # maxpool(2), floor mode (PyTorch default)
    Ho2p, Wo2p = 2 * Hp, 2 * Wp   # only the conv2 rows/cols the pool consumes
    Ho3, Wo3 = Hp - 2, Wp - 2     # conv3 output
    P = Ho3 * Wo3                 # conv3 pixels per sample
    R2 = N * Ho2p * Wo2p          # conv2 im2col rows

    assert w1_ref.shape[0] == 9 * Cin
    assert w2_ref.shape == (9 * C1, C2)
    assert w3_ref.shape == (9 * C2, C3)
    assert fc1w_ref.shape[0] == obs_dim + P * C3

    # ---- conv1 (3x3, valid) + ReLU: shifted VPU FMAs; bias broadcast hoisted ----
    x = x_ref[...]
    acc1 = None
    for i in range(3):
        for j in range(3):
            for c in range(Cin):
                t = (i * 3 + j) * Cin + c
                term = x[:, i:i + Ho1, j:j + Wo1, c:c + 1] * w1_ref[t:t + 1, :]
                acc1 = term if acc1 is None else acc1 + term
    a1 = jnp.maximum(acc1 + b1_ref[...], 0.0)             # (N, Ho1, Wo1, C1) f32

    # ---- conv2: batched im2col -> ONE (R2, 9*C1) x (9*C1, C2) MXU dot ----
    # LHS rows are ordered (n, h, w); assembled once into a VMEM scratch with static
    # slice stores (no per-tap M<=6 dots).
    for n in range(N):
        for h in range(Ho2p):
            r0 = (n * Ho2p + h) * Wo2p
            for i in range(3):
                for j in range(3):
                    c0 = (i * 3 + j) * C1
                    lhs2_scr[r0:r0 + Wo2p, c0:c0 + C1] = a1[n, h + i, j:j + Wo2p, :]
    a2 = jnp.dot(lhs2_scr[...].astype(bf16), w2_ref[...],
                 preferred_element_type=f32)
    a2 = jnp.maximum(a2 + b2_ref[...], 0.0)                # (R2, C2), rows (n, h, w)

    # ---- maxpool(2): whole-row maxes over h, row-pair maxes over w (done once) ----
    # pooled rows are stored in (hp, wp, n) order so conv3's im2col reads contiguous
    # N-row blocks per tap.
    for n in range(N):
        for hp in range(Hp):
            s0 = (n * Ho2p + 2 * hp) * Wo2p
            s1 = (n * Ho2p + 2 * hp + 1) * Wo2p
            m = jnp.maximum(a2[s0:s0 + Wo2p, :], a2[s1:s1 + Wo2p, :])   # (Wo2p, C2)
            for wp in range(Wp):
                row = jnp.maximum(m[2 * wp:2 * wp + 1, :],
                                  m[2 * wp + 1:2 * wp + 2, :])
                d = (hp * Wp + wp) * N + n
                pool_scr[d:d + 1, :] = row

    # ---- conv3: batched im2col -> ONE (P*N, 9*C2) x (9*C2, C3) MXU dot ----
    for i in range(3):
        for j in range(3):
            c0 = (i * 3 + j) * C2
            for oh in range(Ho3):
                for ow in range(Wo3):
                    src = ((oh + i) * Wp + (ow + j)) * N
                    dst = (oh * Wo3 + ow) * N
                    lhs3_scr[dst:dst + N, c0:c0 + C2] = pool_scr[src:src + N, :]
    a3 = jnp.dot(lhs3_scr[...].astype(bf16), w3_ref[...],
                 preferred_element_type=f32)
    a3 = jnp.maximum(a3 + b3_ref[...], 0.0)                # (P*N, C3), rows (p, n)

    # ---- fc1: torch.cat folded into row blocks of fc1_w, issued once at M=N ----
    h = fc1b_ref[...] + jnp.dot(obs_ref[...].astype(bf16), fc1w_ref[0:obs_dim, :],
                                preferred_element_type=f32)
    for p in range(P):
        r = obs_dim + p * C3
        h = h + jnp.dot(a3[p * N:(p + 1) * N, :].astype(bf16), fc1w_ref[r:r + C3, :],
                        preferred_element_type=f32)
    h = jnp.maximum(h, 0.0)                                # (N, 1024) f32

    # ---- fc2: one (N,1024)x(1024,128) dot; single lane-dense store ----
    out = jnp.dot(h.astype(bf16), fc2w_ref[...],
                  preferred_element_type=f32) + fc2b_ref[...]
    out_ref[...] = out.astype(out_ref.dtype)


# ----------------------------- wrapper ---------------------------------------

def cnn_shared_forward(params, obs_encoding, patch_nchw, *, n_outputs):
    n = patch_nchw.shape[0]
    obs = obs_encoding.reshape(n, -1).astype(jnp.float32)
    # NCHW (PyTorch) -> NHWC: tiny one-time layout change in glue (a reshape when Cin==1).
    x = jnp.transpose(patch_nchw, (0, 2, 3, 1)).astype(jnp.float32)

    _, hh, ww = patch_nchw.shape[1], patch_nchw.shape[2], patch_nchw.shape[3]
    ho2, wo2 = hh - 4, ww - 4
    hp, wp = ho2 // 2, wo2 // 2
    ho3, wo3 = hp - 2, wp - 2
    c1 = params["conv1_b"].shape[1]
    c2 = params["conv2_b"].shape[1]
    r2 = n * (2 * hp) * (2 * wp)
    n_pad = params["fc2_w"].shape[1]

    out_padded = pl.pallas_call(
        _cnn_shared_kernel,
        out_shape=jax.ShapeDtypeStruct((n, n_pad), jnp.float32),
        in_specs=[_VMEM] * 12,
        out_specs=_VMEM,
        scratch_shapes=[
            pltpu.VMEM((r2, 9 * c1), jnp.float32),            # conv2 im2col LHS
            pltpu.VMEM((hp * wp * n, c2), jnp.float32),       # pooled activations
            pltpu.VMEM((ho3 * wo3 * n, 9 * c2), jnp.float32), # conv3 im2col LHS
        ],
    )(obs, x,
      params["conv1_w"], params["conv1_b"],
      params["conv2_w"], params["conv2_b"],
      params["conv3_w"], params["conv3_b"],
      params["fc1_w"], params["fc1_b"],
      params["fc2_w"], params["fc2_b"])
    return out_padded[:, :n_outputs]


# ----------------------------- params ----------------------------------------

def conv_out_hw(h):
    # conv3x3 -> conv3x3 -> pool2 -> conv3x3 (all 'valid')
    return (h - 4) // 2 - 2


def init_params(key, image_shape, n_outputs):
    # Weight layouts (to import PyTorch weights):
    #   conv1_w: Conv2d weight (64,Cin,3,3) -> transpose to (3,3,Cin,64) -> reshape (9*Cin,64), f32
    #   conv2_w / conv3_w: (Cout,Cin,3,3) -> transpose(2,3,1,0) -> reshape (9*Cin,Cout), bf16
    #   fc1_w: fc1.weight.T with the patch-feature rows permuted from PyTorch's (C,H,W)
    #          flatten order to (H,W,C) order (identity here since Ho3=Wo3=1), bf16
    #   fc2_w/fc2_b: fc2.weight.T / bias zero-padded to 128 output columns (lane-dense)
    C, H, W = image_shape
    ho, wo = conv_out_hw(H), conv_out_hw(W)
    patch_feats = 256 * ho * wo
    conv_out_size = 2 * patch_feats                  # obs features + patch features
    n_pad = ((max(n_outputs, 1) + 127) // 128) * 128
    bf16 = jnp.bfloat16

    def xavier_conv(k, kh, kw, cin, cout):
        fan_in, fan_out = cin * kh * kw, cout * kh * kw
        std = (2.0 / (fan_in + fan_out)) ** 0.5
        return std * jax.random.normal(k, (kh, kw, cin, cout), jnp.float32)

    def uniform(k, shape, bound):
        return jax.random.uniform(k, shape, jnp.float32, -bound, bound)

    ks = jax.random.split(key, 10)
    fc2_w = jnp.zeros((1024, n_pad), jnp.float32).at[:, :n_outputs].set(
        uniform(ks[8], (1024, n_outputs), 1.0 / 1024 ** 0.5))
    fc2_b = jnp.zeros((1, n_pad), jnp.float32).at[:, :n_outputs].set(
        uniform(ks[9], (1, n_outputs), 1.0 / 1024 ** 0.5))
    params = {
        "conv1_w": xavier_conv(ks[0], 3, 3, C, 64).reshape(9 * C, 64),       # f32 (VPU)
        "conv1_b": uniform(ks[1], (1, 64), 1.0 / (C * 9) ** 0.5),
        "conv2_w": xavier_conv(ks[2], 3, 3, 64, 128).reshape(9 * 64, 128).astype(bf16),
        "conv2_b": uniform(ks[3], (1, 128), 1.0 / (64 * 9) ** 0.5),
        "conv3_w": xavier_conv(ks[4], 3, 3, 128, 256).reshape(9 * 128, 256).astype(bf16),
        "conv3_b": uniform(ks[5], (1, 256), 1.0 / (128 * 9) ** 0.5),
        "fc1_w": uniform(ks[6], (conv_out_size, 1024),
                         1.0 / conv_out_size ** 0.5).astype(bf16),
        "fc1_b": uniform(ks[7], (1, 1024), 1.0 / conv_out_size ** 0.5),
        "fc2_w": fc2_w.astype(bf16),
        "fc2_b": fc2_b,
    }
    return params, conv_out_size


# ----------------------------- main -------------------------------------------

if __name__ == "__main__":
    key = jax.random.PRNGKey(0)
    k_params, k_obs, k_patch = jax.random.split(key, 3)

    image_shape = (1, 10, 10)   # (C, H, W): 10 -> 8 -> 6 -> pool 3 -> 1
    n_outputs = 8
    batch = 2

    params, conv_out_size = init_params(k_params, image_shape, n_outputs)
    # obs_encoding flattens to conv_out_size // 2 features (= 256 here)
    obs_encoding = jax.random.normal(k_obs, (batch, conv_out_size // 2), jnp.float32)
    patch = jax.random.normal(k_patch, (batch,) + image_shape, jnp.float32)

    fwd = jax.jit(functools.partial(cnn_shared_forward, n_outputs=n_outputs))
    out = fwd(params, obs_encoding, patch)
    jax.block_until_ready(out)

    assert out.shape == (batch, n_outputs), out.shape
    print("KERNEL_OK")
</pallas_src>

<mosaic_0001>
module attributes {stable_mosaic.version = 11 : i64} {
  func.func @_cnn_shared_kernel(%arg0: memref<2x256xf32, #tpu.memory_space<vmem>>, %arg1: memref<2x10x10x1xf32, #tpu.memory_space<vmem>>, %arg2: memref<9x64xf32, #tpu.memory_space<vmem>>, %arg3: memref<1x64xf32, #tpu.memory_space<vmem>>, %arg4: memref<576x128xbf16, #tpu.memory_space<vmem>>, %arg5: memref<1x128xf32, #tpu.memory_space<vmem>>, %arg6: memref<1152x256xbf16, #tpu.memory_space<vmem>>, %arg7: memref<1x256xf32, #tpu.memory_space<vmem>>, %arg8: memref<512x1024xbf16, #tpu.memory_space<vmem>>, %arg9: memref<1x1024xf32, #tpu.memory_space<vmem>>, %arg10: memref<1024x128xbf16, #tpu.memory_space<vmem>>, %arg11: memref<1x128xf32, #tpu.memory_space<vmem>>, %arg12: memref<2x128xf32, #tpu.memory_space<vmem>>, %arg13: memref<72x576xf32, #tpu.memory_space<vmem>>, %arg14: memref<18x128xf32, #tpu.memory_space<vmem>>, %arg15: memref<2x1152xf32, #tpu.memory_space<vmem>>) attributes {dimension_semantics = [], scalar_prefetch = 0 : i64, scratch_operands = 3 : i64, tpu.core_type = #tpu.core_type<tc>} {
    %c0 = arith.constant 0 : index
    %c0_0 = arith.constant 0 : index
    %c0_1 = arith.constant 0 : index
    %c0_2 = arith.constant 0 : index
    %0 = vector.load %arg1[%c0, %c0_0, %c0_1, %c0_2] : memref<2x10x10x1xf32, #tpu.memory_space<vmem>>, vector<2x10x10x1xf32>
    %1 = vector.extract_strided_slice %0 {offsets = [0, 0, 0, 0], sizes = [2, 8, 8, 1], strides = [1, 1, 1, 1]} : vector<2x10x10x1xf32> to vector<2x8x8x1xf32>
    %c0_3 = arith.constant 0 : index
    %c0_4 = arith.constant 0 : index
    %2 = vector.load %arg2[%c0_3, %c0_4] : memref<9x64xf32, #tpu.memory_space<vmem>>, vector<1x64xf32>
    %3 = vector.shape_cast %2 : vector<1x64xf32> to vector<1x1x1x64xf32>
    %4 = vector.broadcast %1 : vector<2x8x8x1xf32> to vector<2x8x8x64xf32>
    %5 = vector.broadcast %3 : vector<1x1x1x64xf32> to vector<2x8x8x64xf32>
    %6 = arith.mulf %4, %5 : vector<2x8x8x64xf32>
    %7 = vector.extract_strided_slice %0 {offsets = [0, 0, 1, 0], sizes = [2, 8, 8, 1], strides = [1, 1, 1, 1]} : vector<2x10x10x1xf32> to vector<2x8x8x1xf32>
    %c1 = arith.constant 1 : index
    %c0_5 = arith.constant 0 : index
    %8 = vector.load %arg2[%c1, %c0_5] : memref<9x64xf32, #tpu.memory_space<vmem>>, vector<1x64xf32>
    %9 = vector.shape_cast %8 : vector<1x64xf32> to vector<1x1x1x64xf32>
    %10 = vector.broadcast %7 : vector<2x8x8x1xf32> to vector<2x8x8x64xf32>
    %11 = vector.broadcast %9 : vector<1x1x1x64xf32> to vector<2x8x8x64xf32>
    %12 = arith.mulf %10, %11 : vector<2x8x8x64xf32>
    %13 = arith.addf %6, %12 : vector<2x8x8x64xf32>
    %14 = vector.extract_strided_slice %0 {offsets = [0, 0, 2, 0], sizes = [2, 8, 8, 1], strides = [1, 1, 1, 1]} : vector<2x10x10x1xf32> to vector<2x8x8x1xf32>
    %c2 = arith.constant 2 : index
    %c0_6 = arith.constant 0 : index
    %15 = vector.load %arg2[%c2, %c0_6] : memref<9x64xf32, #tpu.memory_space<vmem>>, vector<1x64xf32>
    %16 = vector.shape_cast %15 : vector<1x64xf32> to vector<1x1x1x64xf32>
    %17 = vector.broadcast %14 : vector<2x8x8x1xf32> to vector<2x8x8x64xf32>
    %18 = vector.broadcast %16 : vector<1x1x1x64xf32> to vector<2x8x8x64xf32>
    %19 = arith.mulf %17, %18 : vector<2x8x8x64xf32>
    %20 = arith.addf %13, %19 : vector<2x8x8x64xf32>
    %21 = vector.extract_strided_slice %0 {offsets = [0, 1, 0, 0], sizes = [2, 8, 8, 1], strides = [1, 1, 1, 1]} : vector<2x10x10x1xf32> to vector<2x8x8x1xf32>
    %c3 = arith.constant 3 : index
    %c0_7 = arith.constant 0 : index
    %22 = vector.load %arg2[%c3, %c0_7] : memref<9x64xf32, #tpu.memory_space<vmem>>, vector<1x64xf32>
    %23 = vector.shape_cast %22 : vector<1x64xf32> to vector<1x1x1x64xf32>
    %24 = vector.broadcast %21 : vector<2x8x8x1xf32> to vector<2x8x8x64xf32>
    %25 = vector.broadcast %23 : vector<1x1x1x64xf32> to vector<2x8x8x64xf32>
    %26 = arith.mulf %24, %25 : vector<2x8x8x64xf32>
    %27 = arith.addf %20, %26 : vector<2x8x8x64xf32>
    %28 = vector.extract_strided_slice %0 {offsets = [0, 1, 1, 0], sizes = [2, 8, 8, 1], strides = [1, 1, 1, 1]} : vector<2x10x10x1xf32> to vector<2x8x8x1xf32>
    %c4 = arith.constant 4 : index
    %c0_8 = arith.constant 0 : index
    %29 = vector.load %arg2[%c4, %c0_8] : memref<9x64xf32, #tpu.memory_space<vmem>>, vector<1x64xf32>
    %30 = vector.shape_cast %29 : vector<1x64xf32> to vector<1x1x1x64xf32>
    %31 = vector.broadcast %28 : vector<2x8x8x1xf32> to vector<2x8x8x64xf32>
    %32 = vector.broadcast %30 : vector<1x1x1x64xf32> to vector<2x8x8x64xf32>
    %33 = arith.mulf %31, %32 : vector<2x8x8x64xf32>
    %34 = arith.addf %27, %33 : vector<2x8x8x64xf32>
    %35 = vector.extract_strided_slice %0 {offsets = [0, 1, 2, 0], sizes = [2, 8, 8, 1], strides = [1, 1, 1, 1]} : vector<2x10x10x1xf32> to vector<2x8x8x1xf32>
    %c5 = arith.constant 5 : index
    %c0_9 = arith.constant 0 : index
    %36 = vector.load %arg2[%c5, %c0_9] : memref<9x64xf32, #tpu.memory_space<vmem>>, vector<1x64xf32>
    %37 = vector.shape_cast %36 : vector<1x64xf32> to vector<1x1x1x64xf32>
    %38 = vector.broadcast %35 : vector<2x8x8x1xf32> to vector<2x8x8x64xf32>
    %39 = vector.broadcast %37 : vector<1x1x1x64xf32> to vector<2x8x8x64xf32>
    %40 = arith.mulf %38, %39 : vector<2x8x8x64xf32>
    %41 = arith.addf %34, %40 : vector<2x8x8x64xf32>
    %42 = vector.extract_strided_slice %0 {offsets = [0, 2, 0, 0], sizes = [2, 8, 8, 1], strides = [1, 1, 1, 1]} : vector<2x10x10x1xf32> to vector<2x8x8x1xf32>
    %c6 = arith.constant 6 : index
    %c0_10 = arith.constant 0 : index
    %43 = vector.load %arg2[%c6, %c0_10] : memref<9x64xf32, #tpu.memory_space<vmem>>, vector<1x64xf32>
    %44 = vector.shape_cast %43 : vector<1x64xf32> to vector<1x1x1x64xf32>
    %45 = vector.broadcast %42 : vector<2x8x8x1xf32> to vector<2x8x8x64xf32>
    %46 = vector.broadcast %44 : vector<1x1x1x64xf32> to vector<2x8x8x64xf32>
    %47 = arith.mulf %45, %46 : vector<2x8x8x64xf32>
    %48 = arith.addf %41, %47 : vector<2x8x8x64xf32>
    %49 = vector.extract_strided_slice %0 {offsets = [0, 2, 1, 0], sizes = [2, 8, 8, 1], strides = [1, 1, 1, 1]} : vector<2x10x10x1xf32> to vector<2x8x8x1xf32>
    %c7 = arith.constant 7 : index
    %c0_11 = arith.constant 0 : index
    %50 = vector.load %arg2[%c7, %c0_11] : memref<9x64xf32, #tpu.memory_space<vmem>>, vector<1x64xf32>
    %51 = vector.shape_cast %50 : vector<1x64xf32> to vector<1x1x1x64xf32>
    %52 = vector.broadcast %49 : vector<2x8x8x1xf32> to vector<2x8x8x64xf32>
    %53 = vector.broadcast %51 : vector<1x1x1x64xf32> to vector<2x8x8x64xf32>
    %54 = arith.mulf %52, %53 : vector<2x8x8x64xf32>
    %55 = arith.addf %48, %54 : vector<2x8x8x64xf32>
    %56 = vector.extract_strided_slice %0 {offsets = [0, 2, 2, 0], sizes = [2, 8, 8, 1], strides = [1, 1, 1, 1]} : vector<2x10x10x1xf32> to vector<2x8x8x1xf32>
    %c8 = arith.constant 8 : index
    %c0_12 = arith.constant 0 : index
    %57 = vector.load %arg2[%c8, %c0_12] : memref<9x64xf32, #tpu.memory_space<vmem>>, vector<1x64xf32>
    %58 = vector.shape_cast %57 : vector<1x64xf32> to vector<1x1x1x64xf32>
    %59 = vector.broadcast %56 : vector<2x8x8x1xf32> to vector<2x8x8x64xf32>
    %60 = vector.broadcast %58 : vector<1x1x1x64xf32> to vector<2x8x8x64xf32>
    %61 = arith.mulf %59, %60 : vector<2x8x8x64xf32>
    %62 = arith.addf %55, %61 : vector<2x8x8x64xf32>
    %c0_13 = arith.constant 0 : index
    %c0_14 = arith.constant 0 : index
    %63 = vector.load %arg3[%c0_13, %c0_14] : memref<1x64xf32, #tpu.memory_space<vmem>>, vector<1x64xf32>
    %64 = vector.shape_cast %63 : vector<1x64xf32> to vector<1x1x1x64xf32>
    %65 = vector.broadcast %64 : vector<1x1x1x64xf32> to vector<2x8x8x64xf32>
    %66 = arith.addf %62, %65 : vector<2x8x8x64xf32>
    %cst = arith.constant 0.000000e+00 : f32
    %67 = vector.broadcast %cst : f32 to vector<2x8x8x64xf32>
    %68 = arith.maximumf %66, %67 : vector<2x8x8x64xf32>
    %69 = vector.extract_strided_slice %68 {offsets = [0, 0, 0, 0], sizes = [1, 1, 6, 64], strides = [1, 1, 1, 1]} : vector<2x8x8x64xf32> to vector<1x1x6x64xf32>
    %70 = vector.shape_cast %69 : vector<1x1x6x64xf32> to vector<6x64xf32>
    %c0_15 = arith.constant 0 : index
    %c0_16 = arith.constant 0 : index
    %71 = vector.load %arg13[%c0_15, %c0_16] : memref<72x576xf32, #tpu.memory_space<vmem>>, vector<6x64xf32>
    tpu.vector_store %arg13[%c0_15, %c0_16], %70 {strides = array<i32>} : memref<72x576xf32, #tpu.memory_space<vmem>>, vector<6x64xf32>,
    %72 = vector.extract_strided_slice %68 {offsets = [0, 0, 1, 0], sizes = [1, 1, 6, 64], strides = [1, 1, 1, 1]} : vector<2x8x8x64xf32> to vector<1x1x6x64xf32>
    %73 = vector.shape_cast %72 : vector<1x1x6x64xf32> to vector<6x64xf32>
    %c0_17 = arith.constant 0 : index
    %c64 = arith.constant 64 : index
    %74 = vector.load %arg13[%c0_17, %c64] : memref<72x576xf32, #tpu.memory_space<vmem>>, vector<6x64xf32>
    tpu.vector_store %arg13[%c0_17, %c64], %73 {strides = array<i32>} : memref<72x576xf32, #tpu.memory_space<vmem>>, vector<6x64xf32>,
    %75 = vector.extract_strided_slice %68 {offsets = [0, 0, 2, 0], sizes = [1, 1, 6, 64], strides = [1, 1, 1, 1]} : vector<2x8x8x64xf32> to vector<1x1x6x64xf32>
    %76 = vector.shape_cast %75 : vector<1x1x6x64xf32> to vector<6x64xf32>
    %c0_18 = arith.constant 0 : index
    %c128 = arith.constant 128 : index
    %77 = vector.load %arg13[%c0_18, %c128] : memref<72x576xf32, #tpu.memory_space<vmem>>, vector<6x64xf32>
    tpu.vector_store %arg13[%c0_18, %c128], %76 {strides = array<i32>} : memref<72x576xf32, #tpu.memory_space<vmem>>, vector<6x64xf32>,
    %78 = vector.extract_strided_slice %68 {offsets = [0, 1, 0, 0], sizes = [1, 1, 6, 64], strides = [1, 1, 1, 1]} : vector<2x8x8x64xf32> to vector<1x1x6x64xf32>
    %79 = vector.shape_cast %78 : vector<1x1x6x64xf32> to vector<6x64xf32>
    %c0_19 = arith.constant 0 : index
    %c192 = arith.constant 192 : index
    %80 = vector.load %arg13[%c0_19, %c192] : memref<72x576xf32, #tpu.memory_space<vmem>>, vector<6x64xf32>
    tpu.vector_store %arg13[%c0_19, %c192], %79 {strides = array<i32>} : memref<72x576xf32, #tpu.memory_space<vmem>>, vector<6x64xf32>,
    %81 = vector.extract_strided_slice %68 {offsets = [0, 1, 1, 0], sizes = [1, 1, 6, 64], strides = [1, 1, 1, 1]} : vector<2x8x8x64xf32> to vector<1x1x6x64xf32>
    %82 = vector.shape_cast %81 : vector<1x1x6x64xf32> to vector<6x64xf32>
    %c0_20 = arith.constant 0 : index
    %c256 = arith.constant 256 : index
    %83 = vector.load %arg13[%c0_20, %c256] : memref<72x576xf32, #tpu.memory_space<vmem>>, vector<6x64xf32>
    tpu.vector_store %arg13[%c0_20, %c256], %82 {strides = array<i32>} : memref<72x576xf32, #tpu.memory_space<vmem>>, vector<6x64xf32>,
    %84 = vector.extract_strided_slice %68 {offsets = [0, 1, 2, 0], sizes = [1, 1, 6, 64], strides = [1, 1, 1, 1]} : vector<2x8x8x64xf32> to vector<1x1x6x64xf32>
    %85 = vector.shape_cast %84 : vector<1x1x6x64xf32> to vector<6x64xf32>
    %c0_21 = arith.constant 0 : index
    %c320 = arith.constant 320 : index
    %86 = vector.load %arg13[%c0_21, %c320] : memref<72x576xf32, #tpu.memory_space<vmem>>, vector<6x64xf32>
    tpu.vector_store %arg13[%c0_21, %c320], %85 {strides = array<i32>} : memref<72x576xf32, #tpu.memory_space<vmem>>, vector<6x64xf32>,
    %87 = vector.extract_strided_slice %68 {offsets = [0, 2, 0, 0], sizes = [1, 1, 6, 64], strides = [1, 1, 1, 1]} : vector<2x8x8x64xf32> to vector<1x1x6x64xf32>
    %88 = vector.shape_cast %87 : vector<1x1x6x64xf32> to vector<6x64xf32>
    %c0_22 = arith.constant 0 : index
    %c384 = arith.constant 384 : index
    %89 = vector.load %arg13[%c0_22, %c384] : memref<72x576xf32, #tpu.memory_space<vmem>>, vector<6x64xf32>
    tpu.vector_store %arg13[%c0_22, %c384], %88 {strides = array<i32>} : memref<72x576xf32, #tpu.memory_space<vmem>>, vector<6x64xf32>,
    %90 = vector.extract_strided_slice %68 {offsets = [0, 2, 1, 0], sizes = [1, 1, 6, 64], strides = [1, 1, 1, 1]} : vector<2x8x8x64xf32> to vector<1x1x6x64xf32>
    %91 = vector.shape_cast %90 : vector<1x1x6x64xf32> to vector<6x64xf32>
    %c0_23 = arith.constant 0 : index
    %c448 = arith.constant 448 : index
    %92 = vector.load %arg13[%c0_23, %c448] : memref<72x576xf32, #tpu.memory_space<vmem>>, vector<6x64xf32>
    tpu.vector_store %arg13[%c0_23, %c448], %91 {strides = array<i32>} : memref<72x576xf32, #tpu.memory_space<vmem>>, vector<6x64xf32>,
    %93 = vector.extract_strided_slice %68 {offsets = [0, 2, 2, 0], sizes = [1, 1, 6, 64], strides = [1, 1, 1, 1]} : vector<2x8x8x64xf32> to vector<1x1x6x64xf32>
    %94 = vector.shape_cast %93 : vector<1x1x6x64xf32> to vector<6x64xf32>
    %c0_24 = arith.constant 0 : index
    %c512 = arith.constant 512 : index
    %95 = vector.load %arg13[%c0_24, %c512] : memref<72x576xf32, #tpu.memory_space<vmem>>, vector<6x64xf32>
    tpu.vector_store %arg13[%c0_24, %c512], %94 {strides = array<i32>} : memref<72x576xf32, #tpu.memory_space<vmem>>, vector<6x64xf32>,
    %96 = vector.extract_strided_slice %68 {offsets = [0, 1, 0, 0], sizes = [1, 1, 6, 64], strides = [1, 1, 1, 1]} : vector<2x8x8x64xf32> to vector<1x1x6x64xf32>
    %97 = vector.shape_cast %96 : vector<1x1x6x64xf32> to vector<6x64xf32>
    %c6_25 = arith.constant 6 : index
    %c0_26 = arith.constant 0 : index
    %98 = vector.load %arg13[%c6_25, %c0_26] : memref<72x576xf32, #tpu.memory_space<vmem>>, vector<6x64xf32>
    tpu.vector_store %arg13[%c6_25, %c0_26], %97 {strides = array<i32>} : memref<72x576xf32, #tpu.memory_space<vmem>>, vector<6x64xf32>,
    %99 = vector.extract_strided_slice %68 {offsets = [0, 1, 1, 0], sizes = [1, 1, 6, 64], strides = [1, 1, 1, 1]} : vector<2x8x8x64xf32> to vector<1x1x6x64xf32>
    %100 = vector.shape_cast %99 : vector<1x1x6x64xf32> to vector<6x64xf32>
    %c6_27 = arith.constant 6 : index
    %c64_28 = arith.constant 64 : index
    %101 = vector.load %arg13[%c6_27, %c64_28] : memref<72x576xf32, #tpu.memory_space<vmem>>, vector<6x64xf32>
    tpu.vector_store %arg13[%c6_27, %c64_28], %100 {strides = array<i32>} : memref<72x576xf32, #tpu.memory_space<vmem>>, vector<6x64xf32>,
    %102 = vector.extract_strided_slice %68 {offsets = [0, 1, 2, 0], sizes = [1, 1, 6, 64], strides = [1, 1, 1, 1]} : vector<2x8x8x64xf32> to vector<1x1x6x64xf32>
    %103 = vector.shape_cast %102 : vector<1x1x6x64xf32> to vector<6x64xf32>
    %c6_29 = arith.constant 6 : index
    %c128_30 = arith.constant 128 : index
    %104 = vector.load %arg13[%c6_29, %c128_30] : memref<72x576xf32, #tpu.memory_space<vmem>>, vector<6x64xf32>
    tpu.vector_store %arg13[%c6_29, %c128_30], %103 {strides = array<i32>} : memref<72x576xf32, #tpu.memory_space<vmem>>, vector<6x64xf32>,
    %105 = vector.extract_strided_slice %68 {offsets = [0, 2, 0, 0], sizes = [1, 1, 6, 64], strides = [1, 1, 1, 1]} : vector<2x8x8x64xf32> to vector<1x1x6x64xf32>
    %106 = vector.shape_cast %105 : vector<1x1x6x64xf32> to vector<6x64xf32>
    %c6_31 = arith.constant 6 : index
    %c192_32 = arith.constant 192 : index
    %107 = vector.load %arg13[%c6_31, %c192_32] : memref<72x576xf32, #tpu.memory_space<vmem>>, vector<6x64xf32>
    tpu.vector_store %arg13[%c6_31, %c192_32], %106 {strides = array<i32>} : memref<72x576xf32, #tpu.memory_space<vmem>>, vector<6x64xf32>,
    %108 = vector.extract_strided_slice %68 {offsets = [0, 2, 1, 0], sizes = [1, 1, 6, 64], strides = [1, 1, 1, 1]} : vector<2x8x8x64xf32> to vector<1x1x6x64xf32>
    %109 = vector.shape_cast %108 : vector<1x1x6x64xf32> to vector<6x64xf32>
    %c6_33 = arith.constant 6 : index
    %c256_34 = arith.constant 256 : index
    %110 = vector.load %arg13[%c6_33, %c256_34] : memref<72x576xf32, #tpu.memory_space<vmem>>, vector<6x64xf32>
    tpu.vector_store %arg13[%c6_33, %c256_34], %109 {strides = array<i32>} : memref<72x576xf32, #tpu.memory_space<vmem>>, vector<6x64xf32>,
    %111 = vector.extract_strided_slice %68 {offsets = [0, 2, 2, 0], sizes = [1, 1, 6, 64], strides = [1, 1, 1, 1]} : vector<2x8x8x64xf32> to vector<1x1x6x64xf32>
    %112 = vector.shape_cast %111 : vector<1x1x6x64xf32> to vector<6x64xf32>
    %c6_35 = arith.constant 6 : index
    %c320_36 = arith.constant 320 : index
    %113 = vector.load %arg13[%c6_35, %c320_36] : memref<72x576xf32, #tpu.memory_space<vmem>>, vector<6x64xf32>
    tpu.vector_store %arg13[%c6_35, %c320_36], %112 {strides = array<i32>} : memref<72x576xf32, #tpu.memory_space<vmem>>, vector<6x64xf32>,
    %114 = vector.extract_strided_slice %68 {offsets = [0, 3, 0, 0], sizes = [1, 1, 6, 64], strides = [1, 1, 1, 1]} : vector<2x8x8x64xf32> to vector<1x1x6x64xf32>
    %115 = vector.shape_cast %114 : vector<1x1x6x64xf32> to vector<6x64xf32>
    %c6_37 = arith.constant 6 : index
    %c384_38 = arith.constant 384 : index
    %116 = vector.load %arg13[%c6_37, %c384_38] : memref<72x576xf32, #tpu.memory_space<vmem>>, vector<6x64xf32>
    tpu.vector_store %arg13[%c6_37, %c384_38], %115 {strides = array<i32>} : memref<72x576xf32, #tpu.memory_space<vmem>>, vector<6x64xf32>,
    %117 = vector.extract_strided_slice %68 {offsets = [0, 3, 1, 0], sizes = [1, 1, 6, 64], strides = [1, 1, 1, 1]} : vector<2x8x8x64xf32> to vector<1x1x6x64xf32>
    %118 = vector.shape_cast %117 : vector<1x1x6x64xf32> to vector<6x64xf32>
    %c6_39 = arith.constant 6 : index
    %c448_40 = arith.constant 448 : index
    %119 = vector.load %arg13[%c6_39, %c448_40] : memref<72x576xf32, #tpu.memory_space<vmem>>, vector<6x64xf32>
    tpu.vector_store %arg13[%c6_39, %c448_40], %118 {strides = array<i32>} : memref<72x576xf32, #tpu.memory_space<vmem>>, vector<6x64xf32>,
    %120 = vector.extract_strided_slice %68 {offsets = [0, 3, 2, 0], sizes = [1, 1, 6, 64], strides = [1, 1, 1, 1]} : vector<2x8x8x64xf32> to vector<1x1x6x64xf32>
    %121 = vector.shape_cast %120 : vector<1x1x6x64xf32> to vector<6x64xf32>
    %c6_41 = arith.constant 6 : index
    %c512_42 = arith.constant 512 : index
    %122 = vector.load %arg13[%c6_41, %c512_42] : memref<72x576xf32, #tpu.memory_space<vmem>>, vector<6x64xf32>
    tpu.vector_store %arg13[%c6_41, %c512_42], %121 {strides = array<i32>} : memref<72x576xf32, #tpu.memory_space<vmem>>, vector<6x64xf32>,
    %123 = vector.extract_strided_slice %68 {offsets = [0, 2, 0, 0], sizes = [1, 1, 6, 64], strides = [1, 1, 1, 1]} : vector<2x8x8x64xf32> to vector<1x1x6x64xf32>
    %124 = vector.shape_cast %123 : vector<1x1x6x64xf32> to vector<6x64xf32>
    %c12 = arith.constant 12 : index
    %c0_43 = arith.constant 0 : index
    %125 = vector.load %arg13[%c12, %c0_43] : memref<72x576xf32, #tpu.memory_space<vmem>>, vector<6x64xf32>
    tpu.vector_store %arg13[%c12, %c0_43], %124 {strides = array<i32>} : memref<72x576xf32, #tpu.memory_space<vmem>>, vector<6x64xf32>,
    %126 = vector.extract_strided_slice %68 {offsets = [0, 2, 1, 0], sizes = [1, 1, 6, 64], strides = [1, 1, 1, 1]} : vector<2x8x8x64xf32> to vector<1x1x6x64xf32>
    %127 = vector.shape_cast %126 : vector<1x1x6x64xf32> to vector<6x64xf32>
    %c12_44 = arith.constant 12 : index
    %c64_45 = arith.constant 64 : index
    %128 = vector.load %arg13[%c12_44, %c64_45] : memref<72x576xf32, #tpu.memory_space<vmem>>, vector<6x64xf32>
    tpu.vector_store %arg13[%c12_44, %c64_45], %127 {strides = array<i32>} : memref<72x576xf32, #tpu.memory_space<vmem>>, vector<6x64xf32>,
    %129 = vector.extract_strided_slice %68 {offsets = [0, 2, 2, 0], sizes = [1, 1, 6, 64], strides = [1, 1, 1, 1]} : vector<2x8x8x64xf32> to vector<1x1x6x64xf32>
    %130 = vector.shape_cast %129 : vector<1x1x6x64xf32> to vector<6x64xf32>
    %c12_46 = arith.constant 12 : index
    %c128_47 = arith.constant 128 : index
    %131 = vector.load %arg13[%c12_46, %c128_47] : memref<72x576xf32, #tpu.memory_space<vmem>>, vector<6x64xf32>
    tpu.vector_store %arg13[%c12_46, %c128_47], %130 {strides = array<i32>} : memref<72x576xf32, #tpu.memory_space<vmem>>, vector<6x64xf32>,
    %132 = vector.extract_strided_slice %68 {offsets = [0, 3, 0, 0], sizes = [1, 1, 6, 64], strides = [1, 1, 1, 1]} : vector<2x8x8x64xf32> to vector<1x1x6x64xf32>
    %133 = vector.shape_cast %132 : vector<1x1x6x64xf32> to vector<6x64xf32>
    %c12_48 = arith.constant 12 : index
    %c192_49 = arith.constant 192 : index
    %134 = vector.load %arg13[%c12_48, %c192_49] : memref<72x576xf32, #tpu.memory_space<vmem>>, vector<6x64xf32>
    tpu.vector_store %arg13[%c12_48, %c192_49], %133 {strides = array<i32>} : memref<72x576xf32, #tpu.memory_space<vmem>>, vector<6x64xf32>,
    %135 = vector.extract_strided_slice %68 {offsets = [0, 3, 1, 0], sizes = [1, 1, 6, 64], strides = [1, 1, 1, 1]} : vector<2x8x8x64xf32> to vector<1x1x6x64xf32>
    %136 = vector.shape_cast %135 : vector<1x1x6x64xf32> to vector<6x64xf32>
    %c12_50 = arith.constant 12 : index
    %c256_51 = arith.constant 256 : index
    %137 = vector.load %arg13[%c12_50, %c256_51] : memref<72x576xf32, #tpu.memory_space<vmem>>, vector<6x64xf32>
    tpu.vector_store %arg13[%c12_50, %c256_51], %136 {strides = array<i32>} : memref<72x576xf32, #tpu.memory_space<vmem>>, vector<6x64xf32>,
    %138 = vector.extract_strided_slice %68 {offsets = [0, 3, 2, 0], sizes = [1, 1, 6, 64], strides = [1, 1, 1, 1]} : vector<2x8x8x64xf32> to vector<1x1x6x64xf32>
    %139 = vector.shape_cast %138 : vector<1x1x6x64xf32> to vector<6x64xf32>
    %c12_52 = arith.constant 12 : index
    %c320_53 = arith.constant 320 : index
    %140 = vector.load %arg13[%c12_52, %c320_53] : memref<72x576xf32, #tpu.memory_space<vmem>>, vector<6x64xf32>
    tpu.vector_store %arg13[%c12_52, %c320_53], %139 {strides = array<i32>} : memref<72x576xf32, #tpu.memory_space<vmem>>, vector<6x64xf32>,
    %141 = vector.extract_strided_slice %68 {offsets = [0, 4, 0, 0], sizes = [1, 1, 6, 64], strides = [1, 1, 1, 1]} : vector<2x8x8x64xf32> to vector<1x1x6x64xf32>
    %142 = vector.shape_cast %141 : vector<1x1x6x64xf32> to vector<6x64xf32>
    %c12_54 = arith.constant 12 : index
    %c384_55 = arith.constant 384 : index
    %143 = vector.load %arg13[%c12_54, %c384_55] : memref<72x576xf32, #tpu.memory_space<vmem>>, vector<6x64xf32>
    tpu.vector_store %arg13[%c12_54, %c384_55], %142 {strides = array<i32>} : memref<72x576xf32, #tpu.memory_space<vmem>>, vector<6x64xf32>,
    %144 = vector.extract_strided_slice %68 {offsets = [0, 4, 1, 0], sizes = [1, 1, 6, 64], strides = [1, 1, 1, 1]} : vector<2x8x8x64xf32> to vector<1x1x6x64xf32>
    %145 = vector.shape_cast %144 : vector<1x1x6x64xf32> to vector<6x64xf32>
    %c12_56 = arith.constant 12 : index
    %c448_57 = arith.constant 448 : index
    %146 = vector.load %arg13[%c12_56, %c448_57] : memref<72x576xf32, #tpu.memory_space<vmem>>, vector<6x64xf32>
    tpu.vector_store %arg13[%c12_56, %c448_57], %145 {strides = array<i32>} : memref<72x576xf32, #tpu.memory_space<vmem>>, vector<6x64xf32>,
    %147 = vector.extract_strided_slice %68 {offsets = [0, 4, 2, 0], sizes = [1, 1, 6, 64], strides = [1, 1, 1, 1]} : vector<2x8x8x64xf32> to vector<1x1x6x64xf32>
    %148 = vector.shape_cast %147 : vector<1x1x6x64xf32> to vector<6x64xf32>
    %c12_58 = arith.constant 12 : index
    %c512_59 = arith.constant 512 : index
    %149 = vector.load %arg13[%c12_58, %c512_59] : memref<72x576xf32, #tpu.memory_space<vmem>>, vector<6x64xf32>
    tpu.vector_store %arg13[%c12_58, %c512_59], %148 {strides = array<i32>} : memref<72x576xf32, #tpu.memory_space<vmem>>, vector<6x64xf32>,
    %150 = vector.extract_strided_slice %68 {offsets = [0, 3, 0, 0], sizes = [1, 1, 6, 64], strides = [1, 1, 1, 1]} : vector<2x8x8x64xf32> to vector<1x1x6x64xf32>
    %151 = vector.shape_cast %150 : vector<1x1x6x64xf32> to vector<6x64xf32>
    %c18 = arith.constant 18 : index
    %c0_60 = arith.constant 0 : index
    %152 = vector.load %arg13[%c18, %c0_60] : memref<72x576xf32, #tpu.memory_space<vmem>>, vector<6x64xf32>
    tpu.vector_store %arg13[%c18, %c0_60], %151 {strides = array<i32>} : memref<72x576xf32, #tpu.memory_space<vmem>>, vector<6x64xf32>,
    %153 = vector.extract_strided_slice %68 {offsets = [0, 3, 1, 0], sizes = [1, 1, 6, 64], strides = [1, 1, 1, 1]} : vector<2x8x8x64xf32> to vector<1x1x6x64xf32>
    %154 = vector.shape_cast %153 : vector<1x1x6x64xf32> to vector<6x64xf32>
    %c18_61 = arith.constant 18 : index
    %c64_62 = arith.constant 64 : index
    %155 = vector.load %arg13[%c18_61, %c64_62] : memref<72x576xf32, #tpu.memory_space<vmem>>, vector<6x64xf32>
    tpu.vector_store %arg13[%c18_61, %c64_62], %154 {strides = array<i32>} : memref<72x576xf32, #tpu.memory_space<vmem>>, vector<6x64xf32>,
    %156 = vector.extract_strided_slice %68 {offsets = [0, 3, 2, 0], sizes = [1, 1, 6, 64], strides = [1, 1, 1, 1]} : vector<2x8x8x64xf32> to vector<1x1x6x64xf32>
    %157 = vector.shape_cast %156 : vector<1x1x6x64xf32> to vector<6x64xf32>
    %c18_63 = arith.constant 18 : index
    %c128_64 = arith.constant 128 : index
    %158 = vector.load %arg13[%c18_63, %c128_64] : memref<72x576xf32, #tpu.memory_space<vmem>>, vector<6x64xf32>
    tpu.vector_store %arg13[%c18_63, %c128_64], %157 {strides = array<i32>} : memref<72x576xf32, #tpu.memory_space<vmem>>, vector<6x64xf32>,
    %159 = vector.extract_strided_slice %68 {offsets = [0, 4, 0, 0], sizes = [1, 1, 6, 64], strides = [1, 1, 1, 1]} : vector<2x8x8x64xf32> to vector<1x1x6x64xf32>
    %160 = vector.shape_cast %159 : vector<1x1x6x64xf32> to vector<6x64xf32>
    %c18_65 = arith.constant 18 : index
    %c192_66 = arith.constant 192 : index
    %161 = vector.load %arg13[%c18_65, %c192_66] : memref<72x576xf32, #tpu.memory_space<vmem>>, vector<6x64xf32>
    tpu.vector_store %arg13[%c18_65, %c192_66], %160 {strides = array<i32>} : memref<72x576xf32, #tpu.memory_space<vmem>>, vector<6x64xf32>,
    %162 = vector.extract_strided_slice %68 {offsets = [0, 4, 1, 0], sizes = [1, 1, 6, 64], strides = [1, 1, 1, 1]} : vector<2x8x8x64xf32> to vector<1x1x6x64xf32>
    %163 = vector.shape_cast %162 : vector<1x1x6x64xf32> to vector<6x64xf32>
    %c18_67 = arith.constant 18 : index
    %c256_68 = arith.constant 256 : index
    %164 = vector.load %arg13[%c18_67, %c256_68] : memref<72x576xf32, #tpu.memory_space<vmem>>, vector<6x64xf32>
    tpu.vector_store %arg13[%c18_67, %c256_68], %163 {strides = array<i32>} : memref<72x576xf32, #tpu.memory_space<vmem>>, vector<6x64xf32>,
    %165 = vector.extract_strided_slice %68 {offsets = [0, 4, 2, 0], sizes = [1, 1, 6, 64], strides = [1, 1, 1, 1]} : vector<2x8x8x64xf32> to vector<1x1x6x64xf32>
    %166 = vector.shape_cast %165 : vector<1x1x6x64xf32> to vector<6x64xf32>
    %c18_69 = arith.constant 18 : index
    %c320_70 = arith.constant 320 : index
    %167 = vector.load %arg13[%c18_69, %c320_70] : memref<72x576xf32, #tpu.memory_space<vmem>>, vector<6x64xf32>
    tpu.vector_store %arg13[%c18_69, %c320_70], %166 {strides = array<i32>} : memref<72x576xf32, #tpu.memory_space<vmem>>, vector<6x64xf32>,
    %168 = vector.extract_strided_slice %68 {offsets = [0, 5, 0, 0], sizes = [1, 1, 6, 64], strides = [1, 1, 1, 1]} : vector<2x8x8x64xf32> to vector<1x1x6x64xf32>
    %169 = vector.shape_cast %168 : vector<1x1x6x64xf32> to vector<6x64xf32>
    %c18_71 = arith.constant 18 : index
    %c384_72 = arith.constant 384 : index
    %170 = vector.load %arg13[%c18_71, %c384_72] : memref<72x576xf32, #tpu.memory_space<vmem>>, vector<6x64xf32>
    tpu.vector_store %arg13[%c18_71, %c384_72], %169 {strides = array<i32>} : memref<72x576xf32, #tpu.memory_space<vmem>>, vector<6x64xf32>,
    %171 = vector.extract_strided_slice %68 {offsets = [0, 5, 1, 0], sizes = [1, 1, 6, 64], strides = [1, 1, 1, 1]} : vector<2x8x8x64xf32> to vector<1x1x6x64xf32>
    %172 = vector.shape_cast %171 : vector<1x1x6x64xf32> to vector<6x64xf32>
    %c18_73 = arith.constant 18 : index
    %c448_74 = arith.constant 448 : index
    %173 = vector.load %arg13[%c18_73, %c448_74] : memref<72x576xf32, #tpu.memory_space<vmem>>, vector<6x64xf32>
    tpu.vector_store %arg13[%c18_73, %c448_74], %172 {strides = array<i32>} : memref<72x576xf32, #tpu.memory_space<vmem>>, vector<6x64xf32>,
    %174 = vector.extract_strided_slice %68 {offsets = [0, 5, 2, 0], sizes = [1, 1, 6, 64], strides = [1, 1, 1, 1]} : vector<2x8x8x64xf32> to vector<1x1x6x64xf32>
    %175 = vector.shape_cast %174 : vector<1x1x6x64xf32> to vector<6x64xf32>
    %c18_75 = arith.constant 18 : index
    %c512_76 = arith.constant 512 : index
    %176 = vector.load %arg13[%c18_75, %c512_76] : memref<72x576xf32, #tpu.memory_space<vmem>>, vector<6x64xf32>
    tpu.vector_store %arg13[%c18_75, %c512_76], %175 {strides = array<i32>} : memref<72x576xf32, #tpu.memory_space<vmem>>, vector<6x64xf32>,
    %177 = vector.extract_strided_slice %68 {offsets = [0, 4, 0, 0], sizes = [1, 1, 6, 64], strides = [1, 1, 1, 1]} : vector<2x8x8x64xf32> to vector<1x1x6x64xf32>
    %178 = vector.shape_cast %177 : vector<1x1x6x64xf32> to vector<6x64xf32>
    %c24 = arith.constant 24 : index
    %c0_77 = arith.constant 0 : index
    %179 = vector.load %arg13[%c24, %c0_77] : memref<72x576xf32, #tpu.memory_space<vmem>>, vector<6x64xf32>
    tpu.vector_store %arg13[%c24, %c0_77], %178 {strides = array<i32>} : memref<72x576xf32, #tpu.memory_space<vmem>>, vector<6x64xf32>,
    %180 = vector.extract_strided_slice %68 {offsets = [0, 4, 1, 0], sizes = [1, 1, 6, 64], strides = [1, 1, 1, 1]} : vector<2x8x8x64xf32> to vector<1x1x6x64xf32>
    %181 = vector.shape_cast %180 : vector<1x1x6x64xf32> to vector<6x64xf32>
    %c24_78 = arith.constant 24 : index
    %c64_79 = arith.constant 64 : index
    %182 = vector.load %arg13[%c24_78, %c64_79] : memref<72x576xf32, #tpu.memory_space<vmem>>, vector<6x64xf32>
    tpu.vector_store %arg13[%c24_78, %c64_79], %181 {strides = array<i32>} : memref<72x576xf32, #tpu.memory_space<vmem>>, vector<6x64xf32>,
    %183 = vector.extract_strided_slice %68 {offsets = [0, 4, 2, 0], sizes = [1, 1, 6, 64], strides = [1, 1, 1, 1]} : vector<2x8x8x64xf32> to vector<1x1x6x64xf32>
    %184 = vector.shape_cast %183 : vector<1x1x6x64xf32> to vector<6x64xf32>
    %c24_80 = arith.constant 24 : index
    %c128_81 = arith.constant 128 : index
    %185 = vector.load %arg13[%c24_80, %c128_81] : memref<72x576xf32, #tpu.memory_space<vmem>>, vector<6x64xf32>
    tpu.vector_store %arg13[%c24_80, %c128_81], %184 {strides = array<i32>} : memref<72x576xf32, #tpu.memory_space<vmem>>, vector<6x64xf32>,
    %186 = vector.extract_strided_slice %68 {offsets = [0, 5, 0, 0], sizes = [1, 1, 6, 64], strides = [1, 1, 1, 1]} : vector<2x8x8x64xf32> to vector<1x1x6x64xf32>
    %187 = vector.shape_cast %186 : vector<1x1x6x64xf32> to vector<6x64xf32>
    %c24_82 = arith.constant 24 : index
    %c192_83 = arith.constant 192 : index
    %188 = vector.load %arg13[%c24_82, %c192_83] : memref<72x576xf32, #tpu.memory_space<vmem>>, vector<6x64xf32>
    tpu.vector_store %arg13[%c24_82, %c192_83], %187 {strides = array<i32>} : memref<72x576xf32, #tpu.memory_space<vmem>>, vector<6x64xf32>,
    %189 = vector.extract_strided_slice %68 {offsets = [0, 5, 1, 0], sizes = [1, 1, 6, 64], strides = [1, 1, 1, 1]} : vector<2x8x8x64xf32> to vector<1x1x6x64xf32>
    %190 = vector.shape_cast %189 : vector<1x1x6x64xf32> to vector<6x64xf32>
    %c24_84 = arith.constant 24 : index
    %c256_85 = arith.constant 256 : index
    %191 = vector.load %arg13[%c24_84, %c256_85] : memref<72x576xf32, #tpu.memory_space<vmem>>, vector<6x64xf32>
    tpu.vector_store %arg13[%c24_84, %c256_85], %190 {strides = array<i32>} : memref<72x576xf32, #tpu.memory_space<vmem>>, vector<6x64xf32>,
    %192 = vector.extract_strided_slice %68 {offsets = [0, 5, 2, 0], sizes = [1, 1, 6, 64], strides = [1, 1, 1, 1]} : vector<2x8x8x64xf32> to vector<1x1x6x64xf32>
    %193 = vector.shape_cast %192 : vector<1x1x6x64xf32> to vector<6x64xf32>
    %c24_86 = arith.constant 24 : index
    %c320_87 = arith.constant 320 : index
    %194 = vector.load %arg13[%c24_86, %c320_87] : memref<72x576xf32, #tpu.memory_space<vmem>>, vector<6x64xf32>
    tpu.vector_store %arg13[%c24_86, %c320_87], %193 {strides = array<i32>} : memref<72x576xf32, #tpu.memory_space<vmem>>, vector<6x64xf32>,
    %195 = vector.extract_strided_slice %68 {offsets = [0, 6, 0, 0], sizes = [1, 1, 6, 64], strides = [1, 1, 1, 1]} : vector<2x8x8x64xf32> to vector<1x1x6x64xf32>
    %196 = vector.shape_cast %195 : vector<1x1x6x64xf32> to vector<6x64xf32>
    %c24_88 = arith.constant 24 : index
    %c384_89 = arith.constant 384 : index
    %197 = vector.load %arg13[%c24_88, %c384_89] : memref<72x576xf32, #tpu.memory_space<vmem>>, vector<6x64xf32>
    tpu.vector_store %arg13[%c24_88, %c384_89], %196 {strides = array<i32>} : memref<72x576xf32, #tpu.memory_space<vmem>>, vector<6x64xf32>,
    %198 = vector.extract_strided_slice %68 {offsets = [0, 6, 1, 0], sizes = [1, 1, 6, 64], strides = [1, 1, 1, 1]} : vector<2x8x8x64xf32> to vector<1x1x6x64xf32>
    %199 = vector.shape_cast %198 : vector<1x1x6x64xf32> to vector<6x64xf32>
    %c24_90 = arith.constant 24 : index
    %c448_91 = arith.constant 448 : index
    %200 = vector.load %arg13[%c24_90, %c448_91] : memref<72x576xf32, #tpu.memory_space<vmem>>, vector<6x64xf32>
    tpu.vector_store %arg13[%c24_90, %c448_91], %199 {strides = array<i32>} : memref<72x576xf32, #tpu.memory_space<vmem>>, vector<6x64xf32>,
    %201 = vector.extract_strided_slice %68 {offsets = [0, 6, 2, 0], sizes = [1, 1, 6, 64], strides = [1, 1, 1, 1]} : vector<2x8x8x64xf32> to vector<1x1x6x64xf32>
    %202 = vector.shape_cast %201 : vector<1x1x6x64xf32> to vector<6x64xf32>
    %c24_92 = arith.constant 24 : index
    %c512_93 = arith.constant 512 : index
    %203 = vector.load %arg13[%c24_92, %c512_93] : memref<72x576xf32, #tpu.memory_space<vmem>>, vector<6x64xf32>
    tpu.vector_store %arg13[%c24_92, %c512_93], %202 {strides = array<i32>} : memref<72x576xf32, #tpu.memory_space<vmem>>, vector<6x64xf32>,
    %204 = vector.extract_strided_slice %68 {offsets = [0, 5, 0, 0], sizes = [1, 1, 6, 64], strides = [1, 1, 1, 1]} : vector<2x8x8x64xf32> to vector<1x1x6x64xf32>
    %205 = vector.shape_cast %204 : vector<1x1x6x64xf32> to vector<6x64xf32>
    %c30 = arith.constant 30 : index
    %c0_94 = arith.constant 0 : index
    %206 = vector.load %arg13[%c30, %c0_94] : memref<72x576xf32, #tpu.memory_space<vmem>>, vector<6x64xf32>
    tpu.vector_store %arg13[%c30, %c0_94], %205 {strides = array<i32>} : memref<72x576xf32, #tpu.memory_space<vmem>>, vector<6x64xf32>,
    %207 = vector.extract_strided_slice %68 {offsets = [0, 5, 1, 0], sizes = [1, 1, 6, 64], strides = [1, 1, 1, 1]} : vector<2x8x8x64xf32> to vector<1x1x6x64xf32>
    %208 = vector.shape_cast %207 : vector<1x1x6x64xf32> to vector<6x64xf32>
    %c30_95 = arith.constant 30 : index
    %c64_96 = arith.constant 64 : index
    %209 = vector.load %arg13[%c30_95, %c64_96] : memref<72x576xf32, #tpu.memory_space<vmem>>, vector<6x64xf32>
    tpu.vector_store %arg13[%c30_95, %c64_96], %208 {strides = array<i32>} : memref<72x576xf32, #tpu.memory_space<vmem>>, vector<6x64xf32>,
    %210 = vector.extract_strided_slice %68 {offsets = [0, 5, 2, 0], sizes = [1, 1, 6, 64], strides = [1, 1, 1, 1]} : vector<2x8x8x64xf32> to vector<1x1x6x64xf32>
    %211 = vector.shape_cast %210 : vector<1x1x6x64xf32> to vector<6x64xf32>
    %c30_97 = arith.constant 30 : index
    %c128_98 = arith.constant 128 : index
    %212 = vector.load %arg13[%c30_97, %c128_98] : memref<72x576xf32, #tpu.memory_space<vmem>>, vector<6x64xf32>
    tpu.vector_store %arg13[%c30_97, %c128_98], %211 {strides = array<i32>} : memref<72x576xf32, #tpu.memory_space<vmem>>, vector<6x64xf32>,
    %213 = vector.extract_strided_slice %68 {offsets = [0, 6, 0, 0], sizes = [1, 1, 6, 64], strides = [1, 1, 1, 1]} : vector<2x8x8x64xf32> to vector<1x1x6x64xf32>
    %214 = vector.shape_cast %213 : vector<1x1x6x64xf32> to vector<6x64xf32>
    %c30_99 = arith.constant 30 : index
    %c192_100 = arith.constant 192 : index
    %215 = vector.load %arg13[%c30_99, %c192_100] : memref<72x576xf32, #tpu.memory_space<vmem>>, vector<6x64xf32>
    tpu.vector_store %arg13[%c30_99, %c192_100], %214 {strides = array<i32>} : memref<72x576xf32, #tpu.memory_space<vmem>>, vector<6x64xf32>,
    %216 = vector.extract_strided_slice %68 {offsets = [0, 6, 1, 0], sizes = [1, 1, 6, 64], strides = [1, 1, 1, 1]} : vector<2x8x8x64xf32> to vector<1x1x6x64xf32>
    %217 = vector.shape_cast %216 : vector<1x1x6x64xf32> to vector<6x64xf32>
    %c30_101 = arith.constant 30 : index
    %c256_102 = arith.constant 256 : index
    %218 = vector.load %arg13[%c30_101, %c256_102] : memref<72x576xf32, #tpu.memory_space<vmem>>, vector<6x64xf32>
    tpu.vector_store %arg13[%c30_101, %c256_102], %217 {strides = array<i32>} : memref<72x576xf32, #tpu.memory_space<vmem>>, vector<6x64xf32>,
    %219 = vector.extract_strided_slice %68 {offsets = [0, 6, 2, 0], sizes = [1, 1, 6, 64], strides = [1, 1, 1, 1]} : vector<2x8x8x64xf32> to vector<1x1x6x64xf32>
    %220 = vector.shape_cast %219 : vector<1x1x6x64xf32> to vector<6x64xf32>
    %c30_103 = arith.constant 30 : index
    %c320_104 = arith.constant 320 : index
    %221 = vector.load %arg13[%c30_103, %c320_104] : memref<72x576xf32, #tpu.memory_space<vmem>>, vector<6x64xf32>
    tpu.vector_store %arg13[%c30_103, %c320_104], %220 {strides = array<i32>} : memref<72x576xf32, #tpu.memory_space<vmem>>, vector<6x64xf32>,
    %222 = vector.extract_strided_slice %68 {offsets = [0, 7, 0, 0], sizes = [1, 1, 6, 64], strides = [1, 1, 1, 1]} : vector<2x8x8x64xf32> to vector<1x1x6x64xf32>
    %223 = vector.shape_cast %222 : vector<1x1x6x64xf32> to vector<6x64xf32>
    %c30_105 = arith.constant 30 : index
    %c384_106 = arith.constant 384 : index
    %224 = vector.load %arg13[%c30_105, %c384_106] : memref<72x576xf32, #tpu.memory_space<vmem>>, vector<6x64xf32>
    tpu.vector_store %arg13[%c30_105, %c384_106], %223 {strides = array<i32>} : memref<72x576xf32, #tpu.memory_space<vmem>>, vector<6x64xf32>,
    %225 = vector.extract_strided_slice %68 {offsets = [0, 7, 1, 0], sizes = [1, 1, 6, 64], strides = [1, 1, 1, 1]} : vector<2x8x8x64xf32> to vector<1x1x6x64xf32>
    %226 = vector.shape_cast %225 : vector<1x1x6x64xf32> to vector<6x64xf32>
    %c30_107 = arith.constant 30 : index
    %c448_108 = arith.constant 448 : index
    %227 = vector.load %arg13[%c30_107, %c448_108] : memref<72x576xf32, #tpu.memory_space<vmem>>, vector<6x64xf32>
    tpu.vector_store %arg13[%c30_107, %c448_108], %226 {strides = array<i32>} : memref<72x576xf32, #tpu.memory_space<vmem>>, vector<6x64xf32>,
    %228 = vector.extract_strided_slice %68 {offsets = [0, 7, 2, 0], sizes = [1, 1, 6, 64], strides = [1, 1, 1, 1]} : vector<2x8x8x64xf32> to vector<1x1x6x64xf32>
    %229 = vector.shape_cast %228 : vector<1x1x6x64xf32> to vector<6x64xf32>
    %c30_109 = arith.constant 30 : index
    %c512_110 = arith.constant 512 : index
    %230 = vector.load %arg13[%c30_109, %c512_110] : memref<72x576xf32, #tpu.memory_space<vmem>>, vector<6x64xf32>
    tpu.vector_store %arg13[%c30_109, %c512_110], %229 {strides = array<i32>} : memref<72x576xf32, #tpu.memory_space<vmem>>, vector<6x64xf32>,
    %231 = vector.extract_strided_slice %68 {offsets = [1, 0, 0, 0], sizes = [1, 1, 6, 64], strides = [1, 1, 1, 1]} : vector<2x8x8x64xf32> to vector<1x1x6x64xf32>
    %232 = vector.shape_cast %231 : vector<1x1x6x64xf32> to vector<6x64xf32>
    %c36 = arith.constant 36 : index
    %c0_111 = arith.constant 0 : index
    %233 = vector.load %arg13[%c36, %c0_111] : memref<72x576xf32, #tpu.memory_space<vmem>>, vector<6x64xf32>
    tpu.vector_store %arg13[%c36, %c0_111], %232 {strides = array<i32>} : memref<72x576xf32, #tpu.memory_space<vmem>>, vector<6x64xf32>,
    %234 = vector.extract_strided_slice %68 {offsets = [1, 0, 1, 0], sizes = [1, 1, 6, 64], strides = [1, 1, 1, 1]} : vector<2x8x8x64xf32> to vector<1x1x6x64xf32>
    %235 = vector.shape_cast %234 : vector<1x1x6x64xf32> to vector<6x64xf32>
    %c36_112 = arith.constant 36 : index
    %c64_113 = arith.constant 64 : index
    %236 = vector.load %arg13[%c36_112, %c64_113] : memref<72x576xf32, #tpu.memory_space<vmem>>, vector<6x64xf32>
    tpu.vector_store %arg13[%c36_112, %c64_113], %235 {strides = array<i32>} : memref<72x576xf32, #tpu.memory_space<vmem>>, vector<6x64xf32>,
    %237 = vector.extract_strided_slice %68 {offsets = [1, 0, 2, 0], sizes = [1, 1, 6, 64], strides = [1, 1, 1, 1]} : vector<2x8x8x64xf32> to vector<1x1x6x64xf32>
    %238 = vector.shape_cast %237 : vector<1x1x6x64xf32> to vector<6x64xf32>
    %c36_114 = arith.constant 36 : index
    %c128_115 = arith.constant 128 : index
    %239 = vector.load %arg13[%c36_114, %c128_115] : memref<72x576xf32, #tpu.memory_space<vmem>>, vector<6x64xf32>
    tpu.vector_store %arg13[%c36_114, %c128_115], %238 {strides = array<i32>} : memref<72x576xf32, #tpu.memory_space<vmem>>, vector<6x64xf32>,
    %240 = vector.extract_strided_slice %68 {offsets = [1, 1, 0, 0], sizes = [1, 1, 6, 64], strides = [1, 1, 1, 1]} : vector<2x8x8x64xf32> to vector<1x1x6x64xf32>
    %241 = vector.shape_cast %240 : vector<1x1x6x64xf32> to vector<6x64xf32>
    %c36_116 = arith.constant 36 : index
    %c192_117 = arith.constant 192 : index
    %242 = vector.load %arg13[%c36_116, %c192_117] : memref<72x576xf32, #tpu.memory_space<vmem>>, vector<6x64xf32>
    tpu.vector_store %arg13[%c36_116, %c192_117], %241 {strides = array<i32>} : memref<72x576xf32, #tpu.memory_space<vmem>>, vector<6x64xf32>,
    %243 = vector.extract_strided_slice %68 {offsets = [1, 1, 1, 0], sizes = [1, 1, 6, 64], strides = [1, 1, 1, 1]} : vector<2x8x8x64xf32> to vector<1x1x6x64xf32>
    %244 = vector.shape_cast %243 : vector<1x1x6x64xf32> to vector<6x64xf32>
    %c36_118 = arith.constant 36 : index
    %c256_119 = arith.constant 256 : index
    %245 = vector.load %arg13[%c36_118, %c256_119] : memref<72x576xf32, #tpu.memory_space<vmem>>, vector<6x64xf32>
    tpu.vector_store %arg13[%c36_118, %c256_119], %244 {strides = array<i32>} : memref<72x576xf32, #tpu.memory_space<vmem>>, vector<6x64xf32>,
    %246 = vector.extract_strided_slice %68 {offsets = [1, 1, 2, 0], sizes = [1, 1, 6, 64], strides = [1, 1, 1, 1]} : vector<2x8x8x64xf32> to vector<1x1x6x64xf32>
    %247 = vector.shape_cast %246 : vector<1x1x6x64xf32> to vector<6x64xf32>
    %c36_120 = arith.constant 36 : index
    %c320_121 = arith.constant 320 : index
    %248 = vector.load %arg13[%c36_120, %c320_121] : memref<72x576xf32, #tpu.memory_space<vmem>>, vector<6x64xf32>
    tpu.vector_store %arg13[%c36_120, %c320_121], %247 {strides = array<i32>} : memref<72x576xf32, #tpu.memory_space<vmem>>, vector<6x64xf32>,
    %249 = vector.extract_strided_slice %68 {offsets = [1, 2, 0, 0], sizes = [1, 1, 6, 64], strides = [1, 1, 1, 1]} : vector<2x8x8x64xf32> to vector<1x1x6x64xf32>
    %250 = vector.shape_cast %249 : vector<1x1x6x64xf32> to vector<6x64xf32>
    %c36_122 = arith.constant 36 : index
    %c384_123 = arith.constant 384 : index
    %251 = vector.load %arg13[%c36_122, %c384_123] : memref<72x576xf32, #tpu.memory_space<vmem>>, vector<6x64xf32>
    tpu.vector_store %arg13[%c36_122, %c384_123], %250 {strides = array<i32>} : memref<72x576xf32, #tpu.memory_space<vmem>>, vector<6x64xf32>,
    %252 = vector.extract_strided_slice %68 {offsets = [1, 2, 1, 0], sizes = [1, 1, 6, 64], strides = [1, 1, 1, 1]} : vector<2x8x8x64xf32> to vector<1x1x6x64xf32>
    %253 = vector.shape_cast %252 : vector<1x1x6x64xf32> to vector<6x64xf32>
    %c36_124 = arith.constant 36 : index
    %c448_125 = arith.constant 448 : index
    %254 = vector.load %arg13[%c36_124, %c448_125] : memref<72x576xf32, #tpu.memory_space<vmem>>, vector<6x64xf32>
    tpu.vector_store %arg13[%c36_124, %c448_125], %253 {strides = array<i32>} : memref<72x576xf32, #tpu.memory_space<vmem>>, vector<6x64xf32>,
    %255 = vector.extract_strided_slice %68 {offsets = [1, 2, 2, 0], sizes = [1, 1, 6, 64], strides = [1, 1, 1, 1]} : vector<2x8x8x64xf32> to vector<1x1x6x64xf32>
    %256 = vector.shape_cast %255 : vector<1x1x6x64xf32> to vector<6x64xf32>
    %c36_126 = arith.constant 36 : index
    %c512_127 = arith.constant 512 : index
    %257 = vector.load %arg13[%c36_126, %c512_127] : memref<72x576xf32, #tpu.memory_space<vmem>>, vector<6x64xf32>
    tpu.vector_store %arg13[%c36_126, %c512_127], %256 {strides = array<i32>} : memref<72x576xf32, #tpu.memory_space<vmem>>, vector<6x64xf32>,
    %258 = vector.extract_strided_slice %68 {offsets = [1, 1, 0, 0], sizes = [1, 1, 6, 64], strides = [1, 1, 1, 1]} : vector<2x8x8x64xf32> to vector<1x1x6x64xf32>
    %259 = vector.shape_cast %258 : vector<1x1x6x64xf32> to vector<6x64xf32>
    %c42 = arith.constant 42 : index
    %c0_128 = arith.constant 0 : index
    %260 = vector.load %arg13[%c42, %c0_128] : memref<72x576xf32, #tpu.memory_space<vmem>>, vector<6x64xf32>
    tpu.vector_store %arg13[%c42, %c0_128], %259 {strides = array<i32>} : memref<72x576xf32, #tpu.memory_space<vmem>>, vector<6x64xf32>,
    %261 = vector.extract_strided_slice %68 {offsets = [1, 1, 1, 0], sizes = [1, 1, 6, 64], strides = [1, 1, 1, 1]} : vector<2x8x8x64xf32> to vector<1x1x6x64xf32>
    %262 = vector.shape_cast %261 : vector<1x1x6x64xf32> to vector<6x64xf32>
    %c42_129 = arith.constant 42 : index
    %c64_130 = arith.constant 64 : index
    %263 = vector.load %arg13[%c42_129, %c64_130] : memref<72x576xf32, #tpu.memory_space<vmem>>, vector<6x64xf32>
    tpu.vector_store %arg13[%c42_129, %c64_130], %262 {strides = array<i32>} : memref<72x576xf32, #tpu.memory_space<vmem>>, vector<6x64xf32>,
    %264 = vector.extract_strided_slice %68 {offsets = [1, 1, 2, 0], sizes = [1, 1, 6, 64], strides = [1, 1, 1, 1]} : vector<2x8x8x64xf32> to vector<1x1x6x64xf32>
    %265 = vector.shape_cast %264 : vector<1x1x6x64xf32> to vector<6x64xf32>
    %c42_131 = arith.constant 42 : index
    %c128_132 = arith.constant 128 : index
    %266 = vector.load %arg13[%c42_131, %c128_132] : memref<72x576xf32, #tpu.memory_space<vmem>>, vector<6x64xf32>
    tpu.vector_store %arg13[%c42_131, %c128_132], %265 {strides = array<i32>} : memref<72x576xf32, #tpu.memory_space<vmem>>, vector<6x64xf32>,
    %267 = vector.extract_strided_slice %68 {offsets = [1, 2, 0, 0], sizes = [1, 1, 6, 64], strides = [1, 1, 1, 1]} : vector<2x8x8x64xf32> to vector<1x1x6x64xf32>
    %268 = vector.shape_cast %267 : vector<1x1x6x64xf32> to vector<6x64xf32>
    %c42_133 = arith.constant 42 : index
    %c192_134 = arith.constant 192 : index
    %269 = vector.load %arg13[%c42_133, %c192_134] : memref<72x576xf32, #tpu.memory_space<vmem>>, vector<6x64xf32>
    tpu.vector_store %arg13[%c42_133, %c192_134], %268 {strides = array<i32>} : memref<72x576xf32, #tpu.memory_space<vmem>>, vector<6x64xf32>,
    %270 = vector.extract_strided_slice %68 {offsets = [1, 2, 1, 0], sizes = [1, 1, 6, 64], strides = [1, 1, 1, 1]} : vector<2x8x8x64xf32> to vector<1x1x6x64xf32>
    %271 = vector.shape_cast %270 : vector<1x1x6x64xf32> to vector<6x64xf32>
    %c42_135 = arith.constant 42 : index
    %c256_136 = arith.constant 256 : index
    %272 = vector.load %arg13[%c42_135, %c256_136] : memref<72x576xf32, #tpu.memory_space<vmem>>, vector<6x64xf32>
    tpu.vector_store %arg13[%c42_135, %c256_136], %271 {strides = array<i32>} : memref<72x576xf32, #tpu.memory_space<vmem>>, vector<6x64xf32>,
    %273 = vector.extract_strided_slice %68 {offsets = [1, 2, 2, 0], sizes = [1, 1, 6, 64], strides = [1, 1, 1, 1]} : vector<2x8x8x64xf32> to vector<1x1x6x64xf32>
    %274 = vector.shape_cast %273 : vector<1x1x6x64xf32> to vector<6x64xf32>
    %c42_137 = arith.constant 42 : index
    %c320_138 = arith.constant 320 : index
    %275 = vector.load %arg13[%c42_137, %c320_138] : memref<72x576xf32, #tpu.memory_space<vmem>>, vector<6x64xf32>
    tpu.vector_store %arg13[%c42_137, %c320_138], %274 {strides = array<i32>} : memref<72x576xf32, #tpu.memory_space<vmem>>, vector<6x64xf32>,
    %276 = vector.extract_strided_slice %68 {offsets = [1, 3, 0, 0], sizes = [1, 1, 6, 64], strides = [1, 1, 1, 1]} : vector<2x8x8x64xf32> to vector<1x1x6x64xf32>
    %277 = vector.shape_cast %276 : vector<1x1x6x64xf32> to vector<6x64xf32>
    %c42_139 = arith.constant 42 : index
    %c384_140 = arith.constant 384 : index
    %278 = vector.load %arg13[%c42_139, %c384_140] : memref<72x576xf32, #tpu.memory_space<vmem>>, vector<6x64xf32>
    tpu.vector_store %arg13[%c42_139, %c384_140], %277 {strides = array<i32>} : memref<72x576xf32, #tpu.memory_space<vmem>>, vector<6x64xf32>,
    %279 = vector.extract_strided_slice %68 {offsets = [1, 3, 1, 0], sizes = [1, 1, 6, 64], strides = [1, 1, 1, 1]} : vector<2x8x8x64xf32> to vector<1x1x6x64xf32>
    %280 = vector.shape_cast %279 : vector<1x1x6x64xf32> to vector<6x64xf32>
    %c42_141 = arith.constant 42 : index
    %c448_142 = arith.constant 448 : index
    %281 = vector.load %arg13[%c42_141, %c448_142] : memref<72x576xf32, #tpu.memory_space<vmem>>, vector<6x64xf32>
    tpu.vector_store %arg13[%c42_141, %c448_142], %280 {strides = array<i32>} : memref<72x576xf32, #tpu.memory_space<vmem>>, vector<6x64xf32>,
    %282 = vector.extract_strided_slice %68 {offsets = [1, 3, 2, 0], sizes = [1, 1, 6, 64], strides = [1, 1, 1, 1]} : vector<2x8x8x64xf32> to vector<1x1x6x64xf32>
    %283 = vector.shape_cast %282 : vector<1x1x6x64xf32> to vector<6x64xf32>
    %c42_143 = arith.constant 42 : index
    %c512_144 = arith.constant 512 : index
    %284 = vector.load %arg13[%c42_143, %c512_144] : memref<72x576xf32, #tpu.memory_space<vmem>>, vector<6x64xf32>
    tpu.vector_store %arg13[%c42_143, %c512_144], %283 {strides = array<i32>} : memref<72x576xf32, #tpu.memory_space<vmem>>, vector<6x64xf32>,
    %285 = vector.extract_strided_slice %68 {offsets = [1, 2, 0, 0], sizes = [1, 1, 6, 64], strides = [1, 1, 1, 1]} : vector<2x8x8x64xf32> to vector<1x1x6x64xf32>
    %286 = vector.shape_cast %285 : vector<1x1x6x64xf32> to vector<6x64xf32>
    %c48 = arith.constant 48 : index
    %c0_145 = arith.constant 0 : index
    %287 = vector.load %arg13[%c48, %c0_145] : memref<72x576xf32, #tpu.memory_space<vmem>>, vector<6x64xf32>
    tpu.vector_store %arg13[%c48, %c0_145], %286 {strides = array<i32>} : memref<72x576xf32, #tpu.memory_space<vmem>>, vector<6x64xf32>,
    %288 = vector.extract_strided_slice %68 {offsets = [1, 2, 1, 0], sizes = [1, 1, 6, 64], strides = [1, 1, 1, 1]} : vector<2x8x8x64xf32> to vector<1x1x6x64xf32>
    %289 = vector.shape_cast %288 : vector<1x1x6x64xf32> to vector<6x64xf32>
    %c48_146 = arith.constant 48 : index
    %c64_147 = arith.constant 64 : index
    %290 = vector.load %arg13[%c48_146, %c64_147] : memref<72x576xf32, #tpu.memory_space<vmem>>, vector<6x64xf32>
    tpu.vector_store %arg13[%c48_146, %c64_147], %289 {strides = array<i32>} : memref<72x576xf32, #tpu.memory_space<vmem>>, vector<6x64xf32>,
    %291 = vector.extract_strided_slice %68 {offsets = [1, 2, 2, 0], sizes = [1, 1, 6, 64], strides = [1, 1, 1, 1]} : vector<2x8x8x64xf32> to vector<1x1x6x64xf32>
    %292 = vector.shape_cast %291 : vector<1x1x6x64xf32> to vector<6x64xf32>
    %c48_148 = arith.constant 48 : index
    %c128_149 = arith.constant 128 : index
    %293 = vector.load %arg13[%c48_148, %c128_149] : memref<72x576xf32, #tpu.memory_space<vmem>>, vector<6x64xf32>
    tpu.vector_store %arg13[%c48_148, %c128_149], %292 {strides = array<i32>} : memref<72x576xf32, #tpu.memory_space<vmem>>, vector<6x64xf32>,
    %294 = vector.extract_strided_slice %68 {offsets = [1, 3, 0, 0], sizes = [1, 1, 6, 64], strides = [1, 1, 1, 1]} : vector<2x8x8x64xf32> to vector<1x1x6x64xf32>
    %295 = vector.shape_cast %294 : vector<1x1x6x64xf32> to vector<6x64xf32>
    %c48_150 = arith.constant 48 : index
    %c192_151 = arith.constant 192 : index
    %296 = vector.load %arg13[%c48_150, %c192_151] : memref<72x576xf32, #tpu.memory_space<vmem>>, vector<6x64xf32>
    tpu.vector_store %arg13[%c48_150, %c192_151], %295 {strides = array<i32>} : memref<72x576xf32, #tpu.memory_space<vmem>>, vector<6x64xf32>,
    %297 = vector.extract_strided_slice %68 {offsets = [1, 3, 1, 0], sizes = [1, 1, 6, 64], strides = [1, 1, 1, 1]} : vector<2x8x8x64xf32> to vector<1x1x6x64xf32>
    %298 = vector.shape_cast %297 : vector<1x1x6x64xf32> to vector<6x64xf32>
    %c48_152 = arith.constant 48 : index
    %c256_153 = arith.constant 256 : index
    %299 = vector.load %arg13[%c48_152, %c256_153] : memref<72x576xf32, #tpu.memory_space<vmem>>, vector<6x64xf32>
    tpu.vector_store %arg13[%c48_152, %c256_153], %298 {strides = array<i32>} : memref<72x576xf32, #tpu.memory_space<vmem>>, vector<6x64xf32>,
    %300 = vector.extract_strided_slice %68 {offsets = [1, 3, 2, 0], sizes = [1, 1, 6, 64], strides = [1, 1, 1, 1]} : vector<2x8x8x64xf32> to vector<1x1x6x64xf32>
    %301 = vector.shape_cast %300 : vector<1x1x6x64xf32> to vector<6x64xf32>
    %c48_154 = arith.constant 48 : index
    %c320_155 = arith.constant 320 : index
    %302 = vector.load %arg13[%c48_154, %c320_155] : memref<72x576xf32, #tpu.memory_space<vmem>>, vector<6x64xf32>
    tpu.vector_store %arg13[%c48_154, %c320_155], %301 {strides = array<i32>} : memref<72x576xf32, #tpu.memory_space<vmem>>, vector<6x64xf32>,
    %303 = vector.extract_strided_slice %68 {offsets = [1, 4, 0, 0], sizes = [1, 1, 6, 64], strides = [1, 1, 1, 1]} : vector<2x8x8x64xf32> to vector<1x1x6x64xf32>
    %304 = vector.shape_cast %303 : vector<1x1x6x64xf32> to vector<6x64xf32>
    %c48_156 = arith.constant 48 : index
    %c384_157 = arith.constant 384 : index
    %305 = vector.load %arg13[%c48_156, %c384_157] : memref<72x576xf32, #tpu.memory_space<vmem>>, vector<6x64xf32>
    tpu.vector_store %arg13[%c48_156, %c384_157], %304 {strides = array<i32>} : memref<72x576xf32, #tpu.memory_space<vmem>>, vector<6x64xf32>,
    %306 = vector.extract_strided_slice %68 {offsets = [1, 4, 1, 0], sizes = [1, 1, 6, 64], strides = [1, 1, 1, 1]} : vector<2x8x8x64xf32> to vector<1x1x6x64xf32>
    %307 = vector.shape_cast %306 : vector<1x1x6x64xf32> to vector<6x64xf32>
    %c48_158 = arith.constant 48 : index
    %c448_159 = arith.constant 448 : index
    %308 = vector.load %arg13[%c48_158, %c448_159] : memref<72x576xf32, #tpu.memory_space<vmem>>, vector<6x64xf32>
    tpu.vector_store %arg13[%c48_158, %c448_159], %307 {strides = array<i32>} : memref<72x576xf32, #tpu.memory_space<vmem>>, vector<6x64xf32>,
    %309 = vector.extract_strided_slice %68 {offsets = [1, 4, 2, 0], sizes = [1, 1, 6, 64], strides = [1, 1, 1, 1]} : vector<2x8x8x64xf32> to vector<1x1x6x64xf32>
    %310 = vector.shape_cast %309 : vector<1x1x6x64xf32> to vector<6x64xf32>
    %c48_160 = arith.constant 48 : index
    %c512_161 = arith.constant 512 : index
    %311 = vector.load %arg13[%c48_160, %c512_161] : memref<72x576xf32, #tpu.memory_space<vmem>>, vector<6x64xf32>
    tpu.vector_store %arg13[%c48_160, %c512_161], %310 {strides = array<i32>} : memref<72x576xf32, #tpu.memory_space<vmem>>, vector<6x64xf32>,
    %312 = vector.extract_strided_slice %68 {offsets = [1, 3, 0, 0], sizes = [1, 1, 6, 64], strides = [1, 1, 1, 1]} : vector<2x8x8x64xf32> to vector<1x1x6x64xf32>
    %313 = vector.shape_cast %312 : vector<1x1x6x64xf32> to vector<6x64xf32>
    %c54 = arith.constant 54 : index
    %c0_162 = arith.constant 0 : index
    %314 = vector.load %arg13[%c54, %c0_162] : memref<72x576xf32, #tpu.memory_space<vmem>>, vector<6x64xf32>
    tpu.vector_store %arg13[%c54, %c0_162], %313 {strides = array<i32>} : memref<72x576xf32, #tpu.memory_space<vmem>>, vector<6x64xf32>,
    %315 = vector.extract_strided_slice %68 {offsets = [1, 3, 1, 0], sizes = [1, 1, 6, 64], strides = [1, 1, 1, 1]} : vector<2x8x8x64xf32> to vector<1x1x6x64xf32>
    %316 = vector.shape_cast %315 : vector<1x1x6x64xf32> to vector<6x64xf32>
    %c54_163 = arith.constant 54 : index
    %c64_164 = arith.constant 64 : index
    %317 = vector.load %arg13[%c54_163, %c64_164] : memref<72x576xf32, #tpu.memory_space<vmem>>, vector<6x64xf32>
    tpu.vector_store %arg13[%c54_163, %c64_164], %316 {strides = array<i32>} : memref<72x576xf32, #tpu.memory_space<vmem>>, vector<6x64xf32>,
    %318 = vector.extract_strided_slice %68 {offsets = [1, 3, 2, 0], sizes = [1, 1, 6, 64], strides = [1, 1, 1, 1]} : vector<2x8x8x64xf32> to vector<1x1x6x64xf32>
    %319 = vector.shape_cast %318 : vector<1x1x6x64xf32> to vector<6x64xf32>
    %c54_165 = arith.constant 54 : index
    %c128_166 = arith.constant 128 : index
    %320 = vector.load %arg13[%c54_165, %c128_166] : memref<72x576xf32, #tpu.memory_space<vmem>>, vector<6x64xf32>
    tpu.vector_store %arg13[%c54_165, %c128_166], %319 {strides = array<i32>} : memref<72x576xf32, #tpu.memory_space<vmem>>, vector<6x64xf32>,
    %321 = vector.extract_strided_slice %68 {offsets = [1, 4, 0, 0], sizes = [1, 1, 6, 64], strides = [1, 1, 1, 1]} : vector<2x8x8x64xf32> to vector<1x1x6x64xf32>
    %322 = vector.shape_cast %321 : vector<1x1x6x64xf32> to vector<6x64xf32>
    %c54_167 = arith.constant 54 : index
    %c192_168 = arith.constant 192 : index
    %323 = vector.load %arg13[%c54_167, %c192_168] : memref<72x576xf32, #tpu.memory_space<vmem>>, vector<6x64xf32>
    tpu.vector_store %arg13[%c54_167, %c192_168], %322 {strides = array<i32>} : memref<72x576xf32, #tpu.memory_space<vmem>>, vector<6x64xf32>,
    %324 = vector.extract_strided_slice %68 {offsets = [1, 4, 1, 0], sizes = [1, 1, 6, 64], strides = [1, 1, 1, 1]} : vector<2x8x8x64xf32> to vector<1x1x6x64xf32>
    %325 = vector.shape_cast %324 : vector<1x1x6x64xf32> to vector<6x64xf32>
    %c54_169 = arith.constant 54 : index
    %c256_170 = arith.constant 256 : index
    %326 = vector.load %arg13[%c54_169, %c256_170] : memref<72x576xf32, #tpu.memory_space<vmem>>, vector<6x64xf32>
    tpu.vector_store %arg13[%c54_169, %c256_170], %325 {strides = array<i32>} : memref<72x576xf32, #tpu.memory_space<vmem>>, vector<6x64xf32>,
    %327 = vector.extract_strided_slice %68 {offsets = [1, 4, 2, 0], sizes = [1, 1, 6, 64], strides = [1, 1, 1, 1]} : vector<2x8x8x64xf32> to vector<1x1x6x64xf32>
    %328 = vector.shape_cast %327 : vector<1x1x6x64xf32> to vector<6x64xf32>
    %c54_171 = arith.constant 54 : index
    %c320_172 = arith.constant 320 : index
    %329 = vector.load %arg13[%c54_171, %c320_172] : memref<72x576xf32, #tpu.memory_space<vmem>>, vector<6x64xf32>
    tpu.vector_store %arg13[%c54_171, %c320_172], %328 {strides = array<i32>} : memref<72x576xf32, #tpu.memory_space<vmem>>, vector<6x64xf32>,
    %330 = vector.extract_strided_slice %68 {offsets = [1, 5, 0, 0], sizes = [1, 1, 6, 64], strides = [1, 1, 1, 1]} : vector<2x8x8x64xf32> to vector<1x1x6x64xf32>
    %331 = vector.shape_cast %330 : vector<1x1x6x64xf32> to vector<6x64xf32>
    %c54_173 = arith.constant 54 : index
    %c384_174 = arith.constant 384 : index
    %332 = vector.load %arg13[%c54_173, %c384_174] : memref<72x576xf32, #tpu.memory_space<vmem>>, vector<6x64xf32>
    tpu.vector_store %arg13[%c54_173, %c384_174], %331 {strides = array<i32>} : memref<72x576xf32, #tpu.memory_space<vmem>>, vector<6x64xf32>,
    %333 = vector.extract_strided_slice %68 {offsets = [1, 5, 1, 0], sizes = [1, 1, 6, 64], strides = [1, 1, 1, 1]} : vector<2x8x8x64xf32> to vector<1x1x6x64xf32>
    %334 = vector.shape_cast %333 : vector<1x1x6x64xf32> to vector<6x64xf32>
    %c54_175 = arith.constant 54 : index
    %c448_176 = arith.constant 448 : index
    %335 = vector.load %arg13[%c54_175, %c448_176] : memref<72x576xf32, #tpu.memory_space<vmem>>, vector<6x64xf32>
    tpu.vector_store %arg13[%c54_175, %c448_176], %334 {strides = array<i32>} : memref<72x576xf32, #tpu.memory_space<vmem>>, vector<6x64xf32>,
    %336 = vector.extract_strided_slice %68 {offsets = [1, 5, 2, 0], sizes = [1, 1, 6, 64], strides = [1, 1, 1, 1]} : vector<2x8x8x64xf32> to vector<1x1x6x64xf32>
    %337 = vector.shape_cast %336 : vector<1x1x6x64xf32> to vector<6x64xf32>
    %c54_177 = arith.constant 54 : index
    %c512_178 = arith.constant 512 : index
    %338 = vector.load %arg13[%c54_177, %c512_178] : memref<72x576xf32, #tpu.memory_space<vmem>>, vector<6x64xf32>
    tpu.vector_store %arg13[%c54_177, %c512_178], %337 {strides = array<i32>} : memref<72x576xf32, #tpu.memory_space<vmem>>, vector<6x64xf32>,
    %339 = vector.extract_strided_slice %68 {offsets = [1, 4, 0, 0], sizes = [1, 1, 6, 64], strides = [1, 1, 1, 1]} : vector<2x8x8x64xf32> to vector<1x1x6x64xf32>
    %340 = vector.shape_cast %339 : vector<1x1x6x64xf32> to vector<6x64xf32>
    %c60 = arith.constant 60 : index
    %c0_179 = arith.constant 0 : index
    %341 = vector.load %arg13[%c60, %c0_179] : memref<72x576xf32, #tpu.memory_space<vmem>>, vector<6x64xf32>
    tpu.vector_store %arg13[%c60, %c0_179], %340 {strides = array<i32>} : memref<72x576xf32, #tpu.memory_space<vmem>>, vector<6x64xf32>,
    %342 = vector.extract_strided_slice %68 {offsets = [1, 4, 1, 0], sizes = [1, 1, 6, 64], strides = [1, 1, 1, 1]} : vector<2x8x8x64xf32> to vector<1x1x6x64xf32>
    %343 = vector.shape_cast %342 : vector<1x1x6x64xf32> to vector<6x64xf32>
    %c60_180 = arith.constant 60 : index
    %c64_181 = arith.constant 64 : index
    %344 = vector.load %arg13[%c60_180, %c64_181] : memref<72x576xf32, #tpu.memory_space<vmem>>, vector<6x64xf32>
    tpu.vector_store %arg13[%c60_180, %c64_181], %343 {strides = array<i32>} : memref<72x576xf32, #tpu.memory_space<vmem>>, vector<6x64xf32>,
    %345 = vector.extract_strided_slice %68 {offsets = [1, 4, 2, 0], sizes = [1, 1, 6, 64], strides = [1, 1, 1, 1]} : vector<2x8x8x64xf32> to vector<1x1x6x64xf32>
    %346 = vector.shape_cast %345 : vector<1x1x6x64xf32> to vector<6x64xf32>
    %c60_182 = arith.constant 60 : index
    %c128_183 = arith.constant 128 : index
    %347 = vector.load %arg13[%c60_182, %c128_183] : memref<72x576xf32, #tpu.memory_space<vmem>>, vector<6x64xf32>
    tpu.vector_store %arg13[%c60_182, %c128_183], %346 {strides = array<i32>} : memref<72x576xf32, #tpu.memory_space<vmem>>, vector<6x64xf32>,
    %348 = vector.extract_strided_slice %68 {offsets = [1, 5, 0, 0], sizes = [1, 1, 6, 64], strides = [1, 1, 1, 1]} : vector<2x8x8x64xf32> to vector<1x1x6x64xf32>
    %349 = vector.shape_cast %348 : vector<1x1x6x64xf32> to vector<6x64xf32>
    %c60_184 = arith.constant 60 : index
    %c192_185 = arith.constant 192 : index
    %350 = vector.load %arg13[%c60_184, %c192_185] : memref<72x576xf32, #tpu.memory_space<vmem>>, vector<6x64xf32>
    tpu.vector_store %arg13[%c60_184, %c192_185], %349 {strides = array<i32>} : memref<72x576xf32, #tpu.memory_space<vmem>>, vector<6x64xf32>,
    %351 = vector.extract_strided_slice %68 {offsets = [1, 5, 1, 0], sizes = [1, 1, 6, 64], strides = [1, 1, 1, 1]} : vector<2x8x8x64xf32> to vector<1x1x6x64xf32>
    %352 = vector.shape_cast %351 : vector<1x1x6x64xf32> to vector<6x64xf32>
    %c60_186 = arith.constant 60 : index
    %c256_187 = arith.constant 256 : index
    %353 = vector.load %arg13[%c60_186, %c256_187] : memref<72x576xf32, #tpu.memory_space<vmem>>, vector<6x64xf32>
    tpu.vector_store %arg13[%c60_186, %c256_187], %352 {strides = array<i32>} : memref<72x576xf32, #tpu.memory_space<vmem>>, vector<6x64xf32>,
    %354 = vector.extract_strided_slice %68 {offsets = [1, 5, 2, 0], sizes = [1, 1, 6, 64], strides = [1, 1, 1, 1]} : vector<2x8x8x64xf32> to vector<1x1x6x64xf32>
    %355 = vector.shape_cast %354 : vector<1x1x6x64xf32> to vector<6x64xf32>
    %c60_188 = arith.constant 60 : index
    %c320_189 = arith.constant 320 : index
    %356 = vector.load %arg13[%c60_188, %c320_189] : memref<72x576xf32, #tpu.memory_space<vmem>>, vector<6x64xf32>
    tpu.vector_store %arg13[%c60_188, %c320_189], %355 {strides = array<i32>} : memref<72x576xf32, #tpu.memory_space<vmem>>, vector<6x64xf32>,
    %357 = vector.extract_strided_slice %68 {offsets = [1, 6, 0, 0], sizes = [1, 1, 6, 64], strides = [1, 1, 1, 1]} : vector<2x8x8x64xf32> to vector<1x1x6x64xf32>
    %358 = vector.shape_cast %357 : vector<1x1x6x64xf32> to vector<6x64xf32>
    %c60_190 = arith.constant 60 : index
    %c384_191 = arith.constant 384 : index
    %359 = vector.load %arg13[%c60_190, %c384_191] : memref<72x576xf32, #tpu.memory_space<vmem>>, vector<6x64xf32>
    tpu.vector_store %arg13[%c60_190, %c384_191], %358 {strides = array<i32>} : memref<72x576xf32, #tpu.memory_space<vmem>>, vector<6x64xf32>,
    %360 = vector.extract_strided_slice %68 {offsets = [1, 6, 1, 0], sizes = [1, 1, 6, 64], strides = [1, 1, 1, 1]} : vector<2x8x8x64xf32> to vector<1x1x6x64xf32>
    %361 = vector.shape_cast %360 : vector<1x1x6x64xf32> to vector<6x64xf32>
    %c60_192 = arith.constant 60 : index
    %c448_193 = arith.constant 448 : index
    %362 = vector.load %arg13[%c60_192, %c448_193] : memref<72x576xf32, #tpu.memory_space<vmem>>, vector<6x64xf32>
    tpu.vector_store %arg13[%c60_192, %c448_193], %361 {strides = array<i32>} : memref<72x576xf32, #tpu.memory_space<vmem>>, vector<6x64xf32>,
    %363 = vector.extract_strided_slice %68 {offsets = [1, 6, 2, 0], sizes = [1, 1, 6, 64], strides = [1, 1, 1, 1]} : vector<2x8x8x64xf32> to vector<1x1x6x64xf32>
    %364 = vector.shape_cast %363 : vector<1x1x6x64xf32> to vector<6x64xf32>
    %c60_194 = arith.constant 60 : index
    %c512_195 = arith.constant 512 : index
    %365 = vector.load %arg13[%c60_194, %c512_195] : memref<72x576xf32, #tpu.memory_space<vmem>>, vector<6x64xf32>
    tpu.vector_store %arg13[%c60_194, %c512_195], %364 {strides = array<i32>} : memref<72x576xf32, #tpu.memory_space<vmem>>, vector<6x64xf32>,
    %366 = vector.extract_strided_slice %68 {offsets = [1, 5, 0, 0], sizes = [1, 1, 6, 64], strides = [1, 1, 1, 1]} : vector<2x8x8x64xf32> to vector<1x1x6x64xf32>
    %367 = vector.shape_cast %366 : vector<1x1x6x64xf32> to vector<6x64xf32>
    %c66 = arith.constant 66 : index
    %c0_196 = arith.constant 0 : index
    %368 = vector.load %arg13[%c66, %c0_196] : memref<72x576xf32, #tpu.memory_space<vmem>>, vector<6x64xf32>
    tpu.vector_store %arg13[%c66, %c0_196], %367 {strides = array<i32>} : memref<72x576xf32, #tpu.memory_space<vmem>>, vector<6x64xf32>,
    %369 = vector.extract_strided_slice %68 {offsets = [1, 5, 1, 0], sizes = [1, 1, 6, 64], strides = [1, 1, 1, 1]} : vector<2x8x8x64xf32> to vector<1x1x6x64xf32>
    %370 = vector.shape_cast %369 : vector<1x1x6x64xf32> to vector<6x64xf32>
    %c66_197 = arith.constant 66 : index
    %c64_198 = arith.constant 64 : index
    %371 = vector.load %arg13[%c66_197, %c64_198] : memref<72x576xf32, #tpu.memory_space<vmem>>, vector<6x64xf32>
    tpu.vector_store %arg13[%c66_197, %c64_198], %370 {strides = array<i32>} : memref<72x576xf32, #tpu.memory_space<vmem>>, vector<6x64xf32>,
    %372 = vector.extract_strided_slice %68 {offsets = [1, 5, 2, 0], sizes = [1, 1, 6, 64], strides = [1, 1, 1, 1]} : vector<2x8x8x64xf32> to vector<1x1x6x64xf32>
    %373 = vector.shape_cast %372 : vector<1x1x6x64xf32> to vector<6x64xf32>
    %c66_199 = arith.constant 66 : index
    %c128_200 = arith.constant 128 : index
    %374 = vector.load %arg13[%c66_199, %c128_200] : memref<72x576xf32, #tpu.memory_space<vmem>>, vector<6x64xf32>
    tpu.vector_store %arg13[%c66_199, %c128_200], %373 {strides = array<i32>} : memref<72x576xf32, #tpu.memory_space<vmem>>, vector<6x64xf32>,
    %375 = vector.extract_strided_slice %68 {offsets = [1, 6, 0, 0], sizes = [1, 1, 6, 64], strides = [1, 1, 1, 1]} : vector<2x8x8x64xf32> to vector<1x1x6x64xf32>
    %376 = vector.shape_cast %375 : vector<1x1x6x64xf32> to vector<6x64xf32>
    %c66_201 = arith.constant 66 : index
    %c192_202 = arith.constant 192 : index
    %377 = vector.load %arg13[%c66_201, %c192_202] : memref<72x576xf32, #tpu.memory_space<vmem>>, vector<6x64xf32>
    tpu.vector_store %arg13[%c66_201, %c192_202], %376 {strides = array<i32>} : memref<72x576xf32, #tpu.memory_space<vmem>>, vector<6x64xf32>,
    %378 = vector.extract_strided_slice %68 {offsets = [1, 6, 1, 0], sizes = [1, 1, 6, 64], strides = [1, 1, 1, 1]} : vector<2x8x8x64xf32> to vector<1x1x6x64xf32>
    %379 = vector.shape_cast %378 : vector<1x1x6x64xf32> to vector<6x64xf32>
    %c66_203 = arith.constant 66 : index
    %c256_204 = arith.constant 256 : index
    %380 = vector.load %arg13[%c66_203, %c256_204] : memref<72x576xf32, #tpu.memory_space<vmem>>, vector<6x64xf32>
    tpu.vector_store %arg13[%c66_203, %c256_204], %379 {strides = array<i32>} : memref<72x576xf32, #tpu.memory_space<vmem>>, vector<6x64xf32>,
    %381 = vector.extract_strided_slice %68 {offsets = [1, 6, 2, 0], sizes = [1, 1, 6, 64], strides = [1, 1, 1, 1]} : vector<2x8x8x64xf32> to vector<1x1x6x64xf32>
    %382 = vector.shape_cast %381 : vector<1x1x6x64xf32> to vector<6x64xf32>
    %c66_205 = arith.constant 66 : index
    %c320_206 = arith.constant 320 : index
    %383 = vector.load %arg13[%c66_205, %c320_206] : memref<72x576xf32, #tpu.memory_space<vmem>>, vector<6x64xf32>
    tpu.vector_store %arg13[%c66_205, %c320_206], %382 {strides = array<i32>} : memref<72x576xf32, #tpu.memory_space<vmem>>, vector<6x64xf32>,
    %384 = vector.extract_strided_slice %68 {offsets = [1, 7, 0, 0], sizes = [1, 1, 6, 64], strides = [1, 1, 1, 1]} : vector<2x8x8x64xf32> to vector<1x1x6x64xf32>
    %385 = vector.shape_cast %384 : vector<1x1x6x64xf32> to vector<6x64xf32>
    %c66_207 = arith.constant 66 : index
    %c384_208 = arith.constant 384 : index
    %386 = vector.load %arg13[%c66_207, %c384_208] : memref<72x576xf32, #tpu.memory_space<vmem>>, vector<6x64xf32>
    tpu.vector_store %arg13[%c66_207, %c384_208], %385 {strides = array<i32>} : memref<72x576xf32, #tpu.memory_space<vmem>>, vector<6x64xf32>,
    %387 = vector.extract_strided_slice %68 {offsets = [1, 7, 1, 0], sizes = [1, 1, 6, 64], strides = [1, 1, 1, 1]} : vector<2x8x8x64xf32> to vector<1x1x6x64xf32>
    %388 = vector.shape_cast %387 : vector<1x1x6x64xf32> to vector<6x64xf32>
    %c66_209 = arith.constant 66 : index
    %c448_210 = arith.constant 448 : index
    %389 = vector.load %arg13[%c66_209, %c448_210] : memref<72x576xf32, #tpu.memory_space<vmem>>, vector<6x64xf32>
    tpu.vector_store %arg13[%c66_209, %c448_210], %388 {strides = array<i32>} : memref<72x576xf32, #tpu.memory_space<vmem>>, vector<6x64xf32>,
    %390 = vector.extract_strided_slice %68 {offsets = [1, 7, 2, 0], sizes = [1, 1, 6, 64], strides = [1, 1, 1, 1]} : vector<2x8x8x64xf32> to vector<1x1x6x64xf32>
    %391 = vector.shape_cast %390 : vector<1x1x6x64xf32> to vector<6x64xf32>
    %c66_211 = arith.constant 66 : index
    %c512_212 = arith.constant 512 : index
    %392 = vector.load %arg13[%c66_211, %c512_212] : memref<72x576xf32, #tpu.memory_space<vmem>>, vector<6x64xf32>
    tpu.vector_store %arg13[%c66_211, %c512_212], %391 {strides = array<i32>} : memref<72x576xf32, #tpu.memory_space<vmem>>, vector<6x64xf32>,
    %c0_213 = arith.constant 0 : index
    %c0_214 = arith.constant 0 : index
    %393 = vector.load %arg13[%c0_213, %c0_214] : memref<72x576xf32, #tpu.memory_space<vmem>>, vector<72x576xf32>
    %394 = arith.truncf %393 : vector<72x576xf32> to vector<72x576xbf16>
    %c0_215 = arith.constant 0 : index
    %c0_216 = arith.constant 0 : index
    %395 = vector.load %arg4[%c0_215, %c0_216] : memref<576x128xbf16, #tpu.memory_space<vmem>>, vector<576x128xbf16>
    %cst_217 = arith.constant dense<0.000000e+00> : vector<72x128xf32>
    %396 = tpu.matmul %394, %395, %cst_217 {dimension_numbers = #tpu.dot_dimension_numbers<[1], [0], [0], [1], [0, 0, 1, 1], [], []>} : vector<72x576xbf16>, vector<576x128xbf16>, vector<72x128xf32> -> vector<72x128xf32>
    %c0_218 = arith.constant 0 : index
    %c0_219 = arith.constant 0 : index
    %397 = vector.load %arg5[%c0_218, %c0_219] : memref<1x128xf32, #tpu.memory_space<vmem>>, vector<1x128xf32>
    %398 = vector.broadcast %397 : vector<1x128xf32> to vector<72x128xf32>
    %399 = arith.addf %396, %398 : vector<72x128xf32>
    %cst_220 = arith.constant 0.000000e+00 : f32
    %400 = vector.broadcast %cst_220 : f32 to vector<72x128xf32>
    %401 = arith.maximumf %399, %400 : vector<72x128xf32>
    %402 = vector.extract_strided_slice %401 {offsets = [0, 0], sizes = [6, 128], strides = [1, 1]} : vector<72x128xf32> to vector<6x128xf32>
    %403 = vector.extract_strided_slice %401 {offsets = [6, 0], sizes = [6, 128], strides = [1, 1]} : vector<72x128xf32> to vector<6x128xf32>
    %404 = arith.maximumf %402, %403 : vector<6x128xf32>
    %405 = vector.extract_strided_slice %404 {offsets = [0, 0], sizes = [1, 128], strides = [1, 1]} : vector<6x128xf32> to vector<1x128xf32>
    %406 = vector.extract_strided_slice %404 {offsets = [1, 0], sizes = [1, 128], strides = [1, 1]} : vector<6x128xf32> to vector<1x128xf32>
    %407 = arith.maximumf %405, %406 : vector<1x128xf32>
    %c0_221 = arith.constant 0 : index
    %c0_222 = arith.constant 0 : index
    %408 = vector.load %arg14[%c0_221, %c0_222] : memref<18x128xf32, #tpu.memory_space<vmem>>, vector<1x128xf32>
    tpu.vector_store %arg14[%c0_221, %c0_222], %407 {strides = array<i32>} : memref<18x128xf32, #tpu.memory_space<vmem>>, vector<1x128xf32>,
    %409 = vector.extract_strided_slice %404 {offsets = [2, 0], sizes = [1, 128], strides = [1, 1]} : vector<6x128xf32> to vector<1x128xf32>
    %410 = vector.extract_strided_slice %404 {offsets = [3, 0], sizes = [1, 128], strides = [1, 1]} : vector<6x128xf32> to vector<1x128xf32>
    %411 = arith.maximumf %409, %410 : vector<1x128xf32>
    %c2_223 = arith.constant 2 : index
    %c0_224 = arith.constant 0 : index
    %412 = vector.load %arg14[%c2_223, %c0_224] : memref<18x128xf32, #tpu.memory_space<vmem>>, vector<1x128xf32>
    tpu.vector_store %arg14[%c2_223, %c0_224], %411 {strides = array<i32>} : memref<18x128xf32, #tpu.memory_space<vmem>>, vector<1x128xf32>,
    %413 = vector.extract_strided_slice %404 {offsets = [4, 0], sizes = [1, 128], strides = [1, 1]} : vector<6x128xf32> to vector<1x128xf32>
    %414 = vector.extract_strided_slice %404 {offsets = [5, 0], sizes = [1, 128], strides = [1, 1]} : vector<6x128xf32> to vector<1x128xf32>
    %415 = arith.maximumf %413, %414 : vector<1x128xf32>
    %c4_225 = arith.constant 4 : index
    %c0_226 = arith.constant 0 : index
    %416 = vector.load %arg14[%c4_225, %c0_226] : memref<18x128xf32, #tpu.memory_space<vmem>>, vector<1x128xf32>
    tpu.vector_store %arg14[%c4_225, %c0_226], %415 {strides = array<i32>} : memref<18x128xf32, #tpu.memory_space<vmem>>, vector<1x128xf32>,
    %417 = vector.extract_strided_slice %401 {offsets = [12, 0], sizes = [6, 128], strides = [1, 1]} : vector<72x128xf32> to vector<6x128xf32>
    %418 = vector.extract_strided_slice %401 {offsets = [18, 0], sizes = [6, 128], strides = [1, 1]} : vector<72x128xf32> to vector<6x128xf32>
    %419 = arith.maximumf %417, %418 : vector<6x128xf32>
    %420 = vector.extract_strided_slice %419 {offsets = [0, 0], sizes = [1, 128], strides = [1, 1]} : vector<6x128xf32> to vector<1x128xf32>
    %421 = vector.extract_strided_slice %419 {offsets = [1, 0], sizes = [1, 128], strides = [1, 1]} : vector<6x128xf32> to vector<1x128xf32>
    %422 = arith.maximumf %420, %421 : vector<1x128xf32>
    %c6_227 = arith.constant 6 : index
    %c0_228 = arith.constant 0 : index
    %423 = vector.load %arg14[%c6_227, %c0_228] : memref<18x128xf32, #tpu.memory_space<vmem>>, vector<1x128xf32>
    tpu.vector_store %arg14[%c6_227, %c0_228], %422 {strides = array<i32>} : memref<18x128xf32, #tpu.memory_space<vmem>>, vector<1x128xf32>,
    %424 = vector.extract_strided_slice %419 {offsets = [2, 0], sizes = [1, 128], strides = [1, 1]} : vector<6x128xf32> to vector<1x128xf32>
    %425 = vector.extract_strided_slice %419 {offsets = [3, 0], sizes = [1, 128], strides = [1, 1]} : vector<6x128xf32> to vector<1x128xf32>
    %426 = arith.maximumf %424, %425 : vector<1x128xf32>
    %c8_229 = arith.constant 8 : index
    %c0_230 = arith.constant 0 : index
    %427 = vector.load %arg14[%c8_229, %c0_230] : memref<18x128xf32, #tpu.memory_space<vmem>>, vector<1x128xf32>
    tpu.vector_store %arg14[%c8_229, %c0_230], %426 {strides = array<i32>} : memref<18x128xf32, #tpu.memory_space<vmem>>, vector<1x128xf32>,
    %428 = vector.extract_strided_slice %419 {offsets = [4, 0], sizes = [1, 128], strides = [1, 1]} : vector<6x128xf32> to vector<1x128xf32>
    %429 = vector.extract_strided_slice %419 {offsets = [5, 0], sizes = [1, 128], strides = [1, 1]} : vector<6x128xf32> to vector<1x128xf32>
    %430 = arith.maximumf %428, %429 : vector<1x128xf32>
    %c10 = arith.constant 10 : index
    %c0_231 = arith.constant 0 : index
    %431 = vector.load %arg14[%c10, %c0_231] : memref<18x128xf32, #tpu.memory_space<vmem>>, vector<1x128xf32>
    tpu.vector_store %arg14[%c10, %c0_231], %430 {strides = array<i32>} : memref<18x128xf32, #tpu.memory_space<vmem>>, vector<1x128xf32>,
    %432 = vector.extract_strided_slice %401 {offsets = [24, 0], sizes = [6, 128], strides = [1, 1]} : vector<72x128xf32> to vector<6x128xf32>
    %433 = vector.extract_strided_slice %401 {offsets = [30, 0], sizes = [6, 128], strides = [1, 1]} : vector<72x128xf32> to vector<6x128xf32>
    %434 = arith.maximumf %432, %433 : vector<6x128xf32>
    %435 = vector.extract_strided_slice %434 {offsets = [0, 0], sizes = [1, 128], strides = [1, 1]} : vector<6x128xf32> to vector<1x128xf32>
    %436 = vector.extract_strided_slice %434 {offsets = [1, 0], sizes = [1, 128], strides = [1, 1]} : vector<6x128xf32> to vector<1x128xf32>
    %437 = arith.maximumf %435, %436 : vector<1x128xf32>
    %c12_232 = arith.constant 12 : index
    %c0_233 = arith.constant 0 : index
    %438 = vector.load %arg14[%c12_232, %c0_233] : memref<18x128xf32, #tpu.memory_space<vmem>>, vector<1x128xf32>
    tpu.vector_store %arg14[%c12_232, %c0_233], %437 {strides = array<i32>} : memref<18x128xf32, #tpu.memory_space<vmem>>, vector<1x128xf32>,
    %439 = vector.extract_strided_slice %434 {offsets = [2, 0], sizes = [1, 128], strides = [1, 1]} : vector<6x128xf32> to vector<1x128xf32>
    %440 = vector.extract_strided_slice %434 {offsets = [3, 0], sizes = [1, 128], strides = [1, 1]} : vector<6x128xf32> to vector<1x128xf32>
    %441 = arith.maximumf %439, %440 : vector<1x128xf32>
    %c14 = arith.constant 14 : index
    %c0_234 = arith.constant 0 : index
    %442 = vector.load %arg14[%c14, %c0_234] : memref<18x128xf32, #tpu.memory_space<vmem>>, vector<1x128xf32>
    tpu.vector_store %arg14[%c14, %c0_234], %441 {strides = array<i32>} : memref<18x128xf32, #tpu.memory_space<vmem>>, vector<1x128xf32>,
    %443 = vector.extract_strided_slice %434 {offsets = [4, 0], sizes = [1, 128], strides = [1, 1]} : vector<6x128xf32> to vector<1x128xf32>
    %444 = vector.extract_strided_slice %434 {offsets = [5, 0], sizes = [1, 128], strides = [1, 1]} : vector<6x128xf32> to vector<1x128xf32>
    %445 = arith.maximumf %443, %444 : vector<1x128xf32>
    %c16 = arith.constant 16 : index
    %c0_235 = arith.constant 0 : index
    %446 = vector.load %arg14[%c16, %c0_235] : memref<18x128xf32, #tpu.memory_space<vmem>>, vector<1x128xf32>
    tpu.vector_store %arg14[%c16, %c0_235], %445 {strides = array<i32>} : memref<18x128xf32, #tpu.memory_space<vmem>>, vector<1x128xf32>,
    %447 = vector.extract_strided_slice %401 {offsets = [36, 0], sizes = [6, 128], strides = [1, 1]} : vector<72x128xf32> to vector<6x128xf32>
    %448 = vector.extract_strided_slice %401 {offsets = [42, 0], sizes = [6, 128], strides = [1, 1]} : vector<72x128xf32> to vector<6x128xf32>
    %449 = arith.maximumf %447, %448 : vector<6x128xf32>
    %450 = vector.extract_strided_slice %449 {offsets = [0, 0], sizes = [1, 128], strides = [1, 1]} : vector<6x128xf32> to vector<1x128xf32>
    %451 = vector.extract_strided_slice %449 {offsets = [1, 0], sizes = [1, 128], strides = [1, 1]} : vector<6x128xf32> to vector<1x128xf32>
    %452 = arith.maximumf %450, %451 : vector<1x128xf32>
    %c1_236 = arith.constant 1 : index
    %c0_237 = arith.constant 0 : index
    %453 = vector.load %arg14[%c1_236, %c0_237] : memref<18x128xf32, #tpu.memory_space<vmem>>, vector<1x128xf32>
    tpu.vector_store %arg14[%c1_236, %c0_237], %452 {strides = array<i32>} : memref<18x128xf32, #tpu.memory_space<vmem>>, vector<1x128xf32>,
    %454 = vector.extract_strided_slice %449 {offsets = [2, 0], sizes = [1, 128], strides = [1, 1]} : vector<6x128xf32> to vector<1x128xf32>
    %455 = vector.extract_strided_slice %449 {offsets = [3, 0], sizes = [1, 128], strides = [1, 1]} : vector<6x128xf32> to vector<1x128xf32>
    %456 = arith.maximumf %454, %455 : vector<1x128xf32>
    %c3_238 = arith.constant 3 : index
    %c0_239 = arith.constant 0 : index
    %457 = vector.load %arg14[%c3_238, %c0_239] : memref<18x128xf32, #tpu.memory_space<vmem>>, vector<1x128xf32>
    tpu.vector_store %arg14[%c3_238, %c0_239], %456 {strides = array<i32>} : memref<18x128xf32, #tpu.memory_space<vmem>>, vector<1x128xf32>,
    %458 = vector.extract_strided_slice %449 {offsets = [4, 0], sizes = [1, 128], strides = [1, 1]} : vector<6x128xf32> to vector<1x128xf32>
    %459 = vector.extract_strided_slice %449 {offsets = [5, 0], sizes = [1, 128], strides = [1, 1]} : vector<6x128xf32> to vector<1x128xf32>
    %460 = arith.maximumf %458, %459 : vector<1x128xf32>
    %c5_240 = arith.constant 5 : index
    %c0_241 = arith.constant 0 : index
    %461 = vector.load %arg14[%c5_240, %c0_241] : memref<18x128xf32, #tpu.memory_space<vmem>>, vector<1x128xf32>
    tpu.vector_store %arg14[%c5_240, %c0_241], %460 {strides = array<i32>} : memref<18x128xf32, #tpu.memory_space<vmem>>, vector<1x128xf32>,
    %462 = vector.extract_strided_slice %401 {offsets = [48, 0], sizes = [6, 128], strides = [1, 1]} : vector<72x128xf32> to vector<6x128xf32>
    %463 = vector.extract_strided_slice %401 {offsets = [54, 0], sizes = [6, 128], strides = [1, 1]} : vector<72x128xf32> to vector<6x128xf32>
    %464 = arith.maximumf %462, %463 : vector<6x128xf32>
    %465 = vector.extract_strided_slice %464 {offsets = [0, 0], sizes = [1, 128], strides = [1, 1]} : vector<6x128xf32> to vector<1x128xf32>
    %466 = vector.extract_strided_slice %464 {offsets = [1, 0], sizes = [1, 128], strides = [1, 1]} : vector<6x128xf32> to vector<1x128xf32>
    %467 = arith.maximumf %465, %466 : vector<1x128xf32>
    %c7_242 = arith.constant 7 : index
    %c0_243 = arith.constant 0 : index
    %468 = vector.load %arg14[%c7_242, %c0_243] : memref<18x128xf32, #tpu.memory_space<vmem>>, vector<1x128xf32>
    tpu.vector_store %arg14[%c7_242, %c0_243], %467 {strides = array<i32>} : memref<18x128xf32, #tpu.memory_space<vmem>>, vector<1x128xf32>,
    %469 = vector.extract_strided_slice %464 {offsets = [2, 0], sizes = [1, 128], strides = [1, 1]} : vector<6x128xf32> to vector<1x128xf32>
    %470 = vector.extract_strided_slice %464 {offsets = [3, 0], sizes = [1, 128], strides = [1, 1]} : vector<6x128xf32> to vector<1x128xf32>
    %471 = arith.maximumf %469, %470 : vector<1x128xf32>
    %c9 = arith.constant 9 : index
    %c0_244 = arith.constant 0 : index
    %472 = vector.load %arg14[%c9, %c0_244] : memref<18x128xf32, #tpu.memory_space<vmem>>, vector<1x128xf32>
    tpu.vector_store %arg14[%c9, %c0_244], %471 {strides = array<i32>} : memref<18x128xf32, #tpu.memory_space<vmem>>, vector<1x128xf32>,
    %473 = vector.extract_strided_slice %464 {offsets = [4, 0], sizes = [1, 128], strides = [1, 1]} : vector<6x128xf32> to vector<1x128xf32>
    %474 = vector.extract_strided_slice %464 {offsets = [5, 0], sizes = [1, 128], strides = [1, 1]} : vector<6x128xf32> to vector<1x128xf32>
    %475 = arith.maximumf %473, %474 : vector<1x128xf32>
    %c11 = arith.constant 11 : index
    %c0_245 = arith.constant 0 : index
    %476 = vector.load %arg14[%c11, %c0_245] : memref<18x128xf32, #tpu.memory_space<vmem>>, vector<1x128xf32>
    tpu.vector_store %arg14[%c11, %c0_245], %475 {strides = array<i32>} : memref<18x128xf32, #tpu.memory_space<vmem>>, vector<1x128xf32>,
    %477 = vector.extract_strided_slice %401 {offsets = [60, 0], sizes = [6, 128], strides = [1, 1]} : vector<72x128xf32> to vector<6x128xf32>
    %478 = vector.extract_strided_slice %401 {offsets = [66, 0], sizes = [6, 128], strides = [1, 1]} : vector<72x128xf32> to vector<6x128xf32>
    %479 = arith.maximumf %477, %478 : vector<6x128xf32>
    %480 = vector.extract_strided_slice %479 {offsets = [0, 0], sizes = [1, 128], strides = [1, 1]} : vector<6x128xf32> to vector<1x128xf32>
    %481 = vector.extract_strided_slice %479 {offsets = [1, 0], sizes = [1, 128], strides = [1, 1]} : vector<6x128xf32> to vector<1x128xf32>
    %482 = arith.maximumf %480, %481 : vector<1x128xf32>
    %c13 = arith.constant 13 : index
    %c0_246 = arith.constant 0 : index
    %483 = vector.load %arg14[%c13, %c0_246] : memref<18x128xf32, #tpu.memory_space<vmem>>, vector<1x128xf32>
    tpu.vector_store %arg14[%c13, %c0_246], %482 {strides = array<i32>} : memref<18x128xf32, #tpu.memory_space<vmem>>, vector<1x128xf32>,
    %484 = vector.extract_strided_slice %479 {offsets = [2, 0], sizes = [1, 128], strides = [1, 1]} : vector<6x128xf32> to vector<1x128xf32>
    %485 = vector.extract_strided_slice %479 {offsets = [3, 0], sizes = [1, 128], strides = [1, 1]} : vector<6x128xf32> to vector<1x128xf32>
    %486 = arith.maximumf %484, %485 : vector<1x128xf32>
    %c15 = arith.constant 15 : index
    %c0_247 = arith.constant 0 : index
    %487 = vector.load %arg14[%c15, %c0_247] : memref<18x128xf32, #tpu.memory_space<vmem>>, vector<1x128xf32>
    tpu.vector_store %arg14[%c15, %c0_247], %486 {strides = array<i32>} : memref<18x128xf32, #tpu.memory_space<vmem>>, vector<1x128xf32>,
    %488 = vector.extract_strided_slice %479 {offsets = [4, 0], sizes = [1, 128], strides = [1, 1]} : vector<6x128xf32> to vector<1x128xf32>
    %489 = vector.extract_strided_slice %479 {offsets = [5, 0], sizes = [1, 128], strides = [1, 1]} : vector<6x128xf32> to vector<1x128xf32>
    %490 = arith.maximumf %488, %489 : vector<1x128xf32>
    %c17 = arith.constant 17 : index
    %c0_248 = arith.constant 0 : index
    %491 = vector.load %arg14[%c17, %c0_248] : memref<18x128xf32, #tpu.memory_space<vmem>>, vector<1x128xf32>
    tpu.vector_store %arg14[%c17, %c0_248], %490 {strides = array<i32>} : memref<18x128xf32, #tpu.memory_space<vmem>>, vector<1x128xf32>,
    %c0_249 = arith.constant 0 : index
    %c0_250 = arith.constant 0 : index
    %492 = vector.load %arg14[%c0_249, %c0_250] : memref<18x128xf32, #tpu.memory_space<vmem>>, vector<2x128xf32>
    %c0_251 = arith.constant 0 : index
    %c0_252 = arith.constant 0 : index
    %493 = vector.load %arg15[%c0_251, %c0_252] : memref<2x1152xf32, #tpu.memory_space<vmem>>, vector<2x128xf32>
    tpu.vector_store %arg15[%c0_251, %c0_252], %492 {strides = array<i32>} : memref<2x1152xf32, #tpu.memory_space<vmem>>, vector<2x128xf32>,
    %c2_253 = arith.constant 2 : index
    %c0_254 = arith.constant 0 : index
    %494 = vector.load %arg14[%c2_253, %c0_254] : memref<18x128xf32, #tpu.memory_space<vmem>>, vector<2x128xf32>
    %c0_255 = arith.constant 0 : index
    %c128_256 = arith.constant 128 : index
    %495 = vector.load %arg15[%c0_255, %c128_256] : memref<2x1152xf32, #tpu.memory_space<vmem>>, vector<2x128xf32>
    tpu.vector_store %arg15[%c0_255, %c128_256], %494 {strides = array<i32>} : memref<2x1152xf32, #tpu.memory_space<vmem>>, vector<2x128xf32>,
    %c4_257 = arith.constant 4 : index
    %c0_258 = arith.constant 0 : index
    %496 = vector.load %arg14[%c4_257, %c0_258] : memref<18x128xf32, #tpu.memory_space<vmem>>, vector<2x128xf32>
    %c0_259 = arith.constant 0 : index
    %c256_260 = arith.constant 256 : index
    %497 = vector.load %arg15[%c0_259, %c256_260] : memref<2x1152xf32, #tpu.memory_space<vmem>>, vector<2x128xf32>
    tpu.vector_store %arg15[%c0_259, %c256_260], %496 {strides = array<i32>} : memref<2x1152xf32, #tpu.memory_space<vmem>>, vector<2x128xf32>,
    %c6_261 = arith.constant 6 : index
    %c0_262 = arith.constant 0 : index
    %498 = vector.load %arg14[%c6_261, %c0_262] : memref<18x128xf32, #tpu.memory_space<vmem>>, vector<2x128xf32>
    %c0_263 = arith.constant 0 : index
    %c384_264 = arith.constant 384 : index
    %499 = vector.load %arg15[%c0_263, %c384_264] : memref<2x1152xf32, #tpu.memory_space<vmem>>, vector<2x128xf32>
    tpu.vector_store %arg15[%c0_263, %c384_264], %498 {strides = array<i32>} : memref<2x1152xf32, #tpu.memory_space<vmem>>, vector<2x128xf32>,
    %c8_265 = arith.constant 8 : index
    %c0_266 = arith.constant 0 : index
    %500 = vector.load %arg14[%c8_265, %c0_266] : memref<18x128xf32, #tpu.memory_space<vmem>>, vector<2x128xf32>
    %c0_267 = arith.constant 0 : index
    %c512_268 = arith.constant 512 : index
    %501 = vector.load %arg15[%c0_267, %c512_268] : memref<2x1152xf32, #tpu.memory_space<vmem>>, vector<2x128xf32>
    tpu.vector_store %arg15[%c0_267, %c512_268], %500 {strides = array<i32>} : memref<2x1152xf32, #tpu.memory_space<vmem>>, vector<2x128xf32>,
    %c10_269 = arith.constant 10 : index
    %c0_270 = arith.constant 0 : index
    %502 = vector.load %arg14[%c10_269, %c0_270] : memref<18x128xf32, #tpu.memory_space<vmem>>, vector<2x128xf32>
    %c0_271 = arith.constant 0 : index
    %c640 = arith.constant 640 : index
    %503 = vector.load %arg15[%c0_271, %c640] : memref<2x1152xf32, #tpu.memory_space<vmem>>, vector<2x128xf32>
    tpu.vector_store %arg15[%c0_271, %c640], %502 {strides = array<i32>} : memref<2x1152xf32, #tpu.memory_space<vmem>>, vector<2x128xf32>,
    %c12_272 = arith.constant 12 : index
    %c0_273 = arith.constant 0 : index
    %504 = vector.load %arg14[%c12_272, %c0_273] : memref<18x128xf32, #tpu.memory_space<vmem>>, vector<2x128xf32>
    %c0_274 = arith.constant 0 : index
    %c768 = arith.constant 768 : index
    %505 = vector.load %arg15[%c0_274, %c768] : memref<2x1152xf32, #tpu.memory_space<vmem>>, vector<2x128xf32>
    tpu.vector_store %arg15[%c0_274, %c768], %504 {strides = array<i32>} : memref<2x1152xf32, #tpu.memory_space<vmem>>, vector<2x128xf32>,
    %c14_275 = arith.constant 14 : index
    %c0_276 = arith.constant 0 : index
    %506 = vector.load %arg14[%c14_275, %c0_276] : memref<18x128xf32, #tpu.memory_space<vmem>>, vector<2x128xf32>
    %c0_277 = arith.constant 0 : index
    %c896 = arith.constant 896 : index
    %507 = vector.load %arg15[%c0_277, %c896] : memref<2x1152xf32, #tpu.memory_space<vmem>>, vector<2x128xf32>
    tpu.vector_store %arg15[%c0_277, %c896], %506 {strides = array<i32>} : memref<2x1152xf32, #tpu.memory_space<vmem>>, vector<2x128xf32>,
    %c16_278 = arith.constant 16 : index
    %c0_279 = arith.constant 0 : index
    %508 = vector.load %arg14[%c16_278, %c0_279] : memref<18x128xf32, #tpu.memory_space<vmem>>, vector<2x128xf32>
    %c0_280 = arith.constant 0 : index
    %c1024 = arith.constant 1024 : index
    %509 = vector.load %arg15[%c0_280, %c1024] : memref<2x1152xf32, #tpu.memory_space<vmem>>, vector<2x128xf32>
    tpu.vector_store %arg15[%c0_280, %c1024], %508 {strides = array<i32>} : memref<2x1152xf32, #tpu.memory_space<vmem>>, vector<2x128xf32>,
    %c0_281 = arith.constant 0 : index
    %c0_282 = arith.constant 0 : index
    %510 = vector.load %arg15[%c0_281, %c0_282] : memref<2x1152xf32, #tpu.memory_space<vmem>>, vector<2x1152xf32>
    %511 = arith.truncf %510 : vector<2x1152xf32> to vector<2x1152xbf16>
    %c0_283 = arith.constant 0 : index
    %c0_284 = arith.constant 0 : index
    %512 = vector.load %arg6[%c0_283, %c0_284] : memref<1152x256xbf16, #tpu.memory_space<vmem>>, vector<1152x256xbf16>
    %cst_285 = arith.constant dense<0.000000e+00> : vector<2x256xf32>
    %513 = tpu.matmul %511, %512, %cst_285 {dimension_numbers = #tpu.dot_dimension_numbers<[1], [0], [0], [1], [0, 0, 1, 1], [], []>} : vector<2x1152xbf16>, vector<1152x256xbf16>, vector<2x256xf32> -> vector<2x256xf32>
    %c0_286 = arith.constant 0 : index
    %c0_287 = arith.constant 0 : index
    %514 = vector.load %arg7[%c0_286, %c0_287] : memref<1x256xf32, #tpu.memory_space<vmem>>, vector<1x256xf32>
    %515 = vector.broadcast %514 : vector<1x256xf32> to vector<2x256xf32>
    %516 = arith.addf %513, %515 : vector<2x256xf32>
    %cst_288 = arith.constant 0.000000e+00 : f32
    %517 = vector.broadcast %cst_288 : f32 to vector<2x256xf32>
    %518 = arith.maximumf %516, %517 : vector<2x256xf32>
    %c0_289 = arith.constant 0 : index
    %c0_290 = arith.constant 0 : index
    %519 = vector.load %arg9[%c0_289, %c0_290] : memref<1x1024xf32, #tpu.memory_space<vmem>>, vector<1x1024xf32>
    %c0_291 = arith.constant 0 : index
    %c0_292 = arith.constant 0 : index
    %520 = vector.load %arg0[%c0_291, %c0_292] : memref<2x256xf32, #tpu.memory_space<vmem>>, vector<2x256xf32>
    %521 = arith.truncf %520 : vector<2x256xf32> to vector<2x256xbf16>
    %c0_293 = arith.constant 0 : index
    %c0_294 = arith.constant 0 : index
    %522 = vector.load %arg8[%c0_293, %c0_294] : memref<512x1024xbf16, #tpu.memory_space<vmem>>, vector<256x1024xbf16>
    %cst_295 = arith.constant dense<0.000000e+00> : vector<2x1024xf32>
    %523 = tpu.matmul %521, %522, %cst_295 {dimension_numbers = #tpu.dot_dimension_numbers<[1], [0], [0], [1], [0, 0, 1, 1], [], []>} : vector<2x256xbf16>, vector<256x1024xbf16>, vector<2x1024xf32> -> vector<2x1024xf32>
    %524 = vector.broadcast %519 : vector<1x1024xf32> to vector<2x1024xf32>
    %525 = arith.addf %524, %523 : vector<2x1024xf32>
    %526 = arith.truncf %518 : vector<2x256xf32> to vector<2x256xbf16>
    %c256_296 = arith.constant 256 : index
    %c0_297 = arith.constant 0 : index
    %527 = vector.load %arg8[%c256_296, %c0_297] : memref<512x1024xbf16, #tpu.memory_space<vmem>>, vector<256x1024xbf16>
    %cst_298 = arith.constant dense<0.000000e+00> : vector<2x1024xf32>
    %528 = tpu.matmul %526, %527, %cst_298 {dimension_numbers = #tpu.dot_dimension_numbers<[1], [0], [0], [1], [0, 0, 1, 1], [], []>} : vector<2x256xbf16>, vector<256x1024xbf16>, vector<2x1024xf32> -> vector<2x1024xf32>
    %529 = arith.addf %525, %528 : vector<2x1024xf32>
    %cst_299 = arith.constant 0.000000e+00 : f32
    %530 = vector.broadcast %cst_299 : f32 to vector<2x1024xf32>
    %531 = arith.maximumf %529, %530 : vector<2x1024xf32>
    %532 = arith.truncf %531 : vector<2x1024xf32> to vector<2x1024xbf16>
    %c0_300 = arith.constant 0 : index
    %c0_301 = arith.constant 0 : index
    %533 = vector.load %arg10[%c0_300, %c0_301] : memref<1024x128xbf16, #tpu.memory_space<vmem>>, vector<1024x128xbf16>
    %cst_302 = arith.constant dense<0.000000e+00> : vector<2x128xf32>
    %534 = tpu.matmul %532, %533, %cst_302 {dimension_numbers = #tpu.dot_dimension_numbers<[1], [0], [0], [1], [0, 0, 1, 1], [], []>} : vector<2x1024xbf16>, vector<1024x128xbf16>, vector<2x128xf32> -> vector<2x128xf32>
    %c0_303 = arith.constant 0 : index
    %c0_304 = arith.constant 0 : index
    %535 = vector.load %arg11[%c0_303, %c0_304] : memref<1x128xf32, #tpu.memory_space<vmem>>, vector<1x128xf32>
    %536 = vector.broadcast %535 : vector<1x128xf32> to vector<2x128xf32>
    %537 = arith.addf %534, %536 : vector<2x128xf32>
    %c0_305 = arith.constant 0 : index
    %c0_306 = arith.constant 0 : index
    %538 = vector.load %arg12[%c0_305, %c0_306] : memref<2x128xf32, #tpu.memory_space<vmem>>, vector<2x128xf32>
    tpu.vector_store %arg12[%c0_305, %c0_306], %537 {strides = array<i32>} : memref<2x128xf32, #tpu.memory_space<vmem>>, vector<2x128xf32>,
    return
  }
}

</mosaic_0001>

<llo_original>
// kernel: cnn_shared_forward.1
$region0: #{cnn_shared_forward.1}
  #allocation0 [shape = 'u32[]', space=smem, size = 0x4, offset = 0x4, fixed_abs, tag = 'smem constant byte address 0x4 - core index']
  #allocation1 [shape = 'u32[144,128]{1,0:T(1,128)}', space=vmem, size = 0x12000, scoped, tag = 'internal scratch']
  #allocation2 [shape = 'f32[72,576]{1,0:T(8,128)}', space=vmem, size = 0x2d000, scoped, tag = 'scratch operand']
  #allocation3 [shape = 'f32[18,128]{1,0:T(8,128)}', space=vmem, size = 0x3000, scoped, tag = 'scratch operand']
  #allocation4 [shape = 'f32[2,1152]{1,0:T(2,128)}', space=vmem, size = 0x2400, scoped, tag = 'scratch operand']
  %s0 = inlined_call_operand.vmem [shape: f32[2,256], index: 0, kind: input, shape index: {}]
  %s1 = inlined_call_operand.vmem [shape: f32[2,10,10,1], index: 1, kind: input, shape index: {}]
  %s2 = inlined_call_operand.vmem [shape: f32[9,64], index: 2, kind: input, shape index: {}]
  %s3 = inlined_call_operand.vmem [shape: f32[1,64], index: 3, kind: input, shape index: {}]
  %s4 = inlined_call_operand.vmem [shape: bf16[576,128], index: 4, kind: input, shape index: {}]
  %s5 = inlined_call_operand.vmem [shape: f32[1,128], index: 5, kind: input, shape index: {}]
  %s6 = inlined_call_operand.hbm [shape: bf16[1152,256], index: 6, kind: input, shape index: {}]
  %s7 = inlined_call_operand.vmem [shape: f32[1,256], index: 7, kind: input, shape index: {}]
  %s8 = inlined_call_operand.hbm [shape: bf16[512,1024], index: 8, kind: input, shape index: {}]
  %s9 = inlined_call_operand.vmem [shape: f32[1,1024], index: 9, kind: input, shape index: {}]
  %s10 = inlined_call_operand.hbm [shape: bf16[1024,128], index: 10, kind: input, shape index: {}]
  %s11 = inlined_call_operand.vmem [shape: f32[1,128], index: 11, kind: input, shape index: {}]
  %s12 = inlined_call_operand.hbm [shape: f32[2,128], index: 12, kind: output, shape index: {}]
  %s13 = sld [smem:[#allocation0]]
  $region70: #{cnn_shared_forward.1} parent=0
    _
  %s15 = ssub.s32 1, %s13
  %s16 = scalar_select 0, %s15, %s13
  $region1: #{cnn_shared_forward.1} parent=0
    #allocation5 [shape = 'u8[589824]{0}', space=vmem, size = 0x90000, scoped, tag = 'input window, operand 6, single buffered']
    #allocation6 [shape = 's32[1]{0}', space=sflag, size = 0x4, scoped, tag = 'scoped memory for cnn_shared_forward.1']
    #allocation7 [shape = 's32[1]{0}', space=sflag, size = 0x4, scoped, tag = 'scoped memory for cnn_shared_forward.1']
    #allocation8 [shape = 'u8[1048576]{0}', space=vmem, size = 0x100000, scoped, tag = 'input window, operand 8, single buffered']
    #allocation9 [shape = 's32[1]{0}', space=sflag, size = 0x4, scoped, tag = 'scoped memory for cnn_shared_forward.1']
    #allocation10 [shape = 'u8[262144]{0}', space=vmem, size = 0x40000, scoped, tag = 'input window, operand 10, single buffered']
    #allocation11 [shape = 'u8[1024]{0}', space=vmem, size = 0x400, scoped, tag = 'output window, operand 0, single buffered']
    %17 = vsyncpa [#allocation6], 0
    %18 = vsyncpa [#allocation9], 0
    %19 = vsyncpa [#allocation7], 0
    // Predicated region
    $region2: #{cnn_shared_forward.1} parent=1 // pred_check
      _
    $region3: #{cnn_shared_forward.1} parent=1 // pred_check_branch
      %21 = sbr.rel (0) target = $region5
    $region4: #{cnn_shared_forward.1} parent=1 // pred_region
      _
    $region5: #{cnn_shared_forward.1} parent=1 // pred_fallthru
      _
    // Predicated region
    $region6: #{cnn_shared_forward.1} parent=1 // pred_check
      _
    $region7: #{cnn_shared_forward.1} parent=1 // pred_check_branch
      %23 = sbr.rel (0) target = $region9
    $region8: #{cnn_shared_forward.1} parent=1 // pred_region
      _
    $region9: #{cnn_shared_forward.1} parent=1 // pred_fallthru
      _
    // Predicated region
    $region10: #{cnn_shared_forward.1} parent=1 // pred_check
      _
    $region11: #{cnn_shared_forward.1} parent=1 // pred_check_branch
      %25 = sbr.rel (0) target = $region13
    $region12: #{cnn_shared_forward.1} parent=1 // pred_region
      _
    $region13: #{cnn_shared_forward.1} parent=1 // pred_fallthru
      _
    // Predicated region
    $region14: #{cnn_shared_forward.1} parent=1 // pred_check
      _
    $region15: #{cnn_shared_forward.1} parent=1 // pred_check_branch
      %27 = sbr.rel (0) target = $region17
    $region16: #{cnn_shared_forward.1} parent=1 // pred_region
      _
    $region17: #{cnn_shared_forward.1} parent=1 // pred_fallthru
      _
    // Predicated region
    $region18: #{cnn_shared_forward.1} parent=1 // pred_check
      _
    $region19: #{cnn_shared_forward.1} parent=1 // pred_check_branch
      %29 = sbr.rel (0) target = $region21
    $region20: #{cnn_shared_forward.1} parent=1 // pred_region
      _
    $region21: #{cnn_shared_forward.1} parent=1 // pred_fallthru
      _
    // Predicated region
    $region22: #{cnn_shared_forward.1} parent=1 // pred_check
      _
    $region23: #{cnn_shared_forward.1} parent=1 // pred_check_branch
      %31 = sbr.rel (0) target = $region25
    $region24: #{cnn_shared_forward.1} parent=1 // pred_region
      _
    $region25: #{cnn_shared_forward.1} parent=1 // pred_fallthru
      _
    // Predicated region
    $region26: #{cnn_shared_forward.1} parent=1 // pred_check
      _
    $region27: #{cnn_shared_forward.1} parent=1 // pred_check_branch
      %33 = sbr.rel (0) target = $region29
    $region28: #{cnn_shared_forward.1} parent=1 // pred_region
      %s35 = ssub.s32 18432, 18432
      %36 = vsyncadd [#allocation6], %s35
      %s37 = sshll.u32 [#allocation5], 4
      %s38 = int_to_ptr.vmem [resolvable:$true] %s37
      %43 = dma.hbm_to_vmem [thread:$0]  %s6, 18432, %s38, [#allocation6], 128, 128, 8
    $region29: #{cnn_shared_forward.1} parent=1 // pred_fallthru
      _
    // Predicated region
    $region30: #{cnn_shared_forward.1} parent=1 // pred_check
      _
    $region31: #{cnn_shared_forward.1} parent=1 // pred_check_branch
      %45 = sbr.rel (0) target = $region33
    $region32: #{cnn_shared_forward.1} parent=1 // pred_region
      _
    $region33: #{cnn_shared_forward.1} parent=1 // pred_fallthru
      _
    // Predicated region
    $region34: #{cnn_shared_forward.1} parent=1 // pred_check
      _
    $region35: #{cnn_shared_forward.1} parent=1 // pred_check_branch
      %47 = sbr.rel (0) target = $region37
    $region36: #{cnn_shared_forward.1} parent=1 // pred_region
      %s49 = ssub.s32 32768, 32768
      %50 = vsyncadd [#allocation9], %s49
      %s51 = sshll.u32 [#allocation8], 4
      %s52 = int_to_ptr.vmem [resolvable:$true] %s51
      %57 = dma.hbm_to_vmem [thread:$0]  %s8, 32768, %s52, [#allocation9], 512, 512, 32
    $region37: #{cnn_shared_forward.1} parent=1 // pred_fallthru
      _
    // Predicated region
    $region38: #{cnn_shared_forward.1} parent=1 // pred_check
      _
    $region39: #{cnn_shared_forward.1} parent=1 // pred_check_branch
      %59 = sbr.rel (0) target = $region41
    $region40: #{cnn_shared_forward.1} parent=1 // pred_region
      _
    $region41: #{cnn_shared_forward.1} parent=1 // pred_fallthru
      _
    // Predicated region
    $region42: #{cnn_shared_forward.1} parent=1 // pred_check
      _
    $region43: #{cnn_shared_forward.1} parent=1 // pred_check_branch
      %61 = sbr.rel (0) target = $region45
    $region44: #{cnn_shared_forward.1} parent=1 // pred_region
      %s63 = ssub.s32 8192, 8192
      %64 = vsyncadd [#allocation9], %s63
      %s65 = sshll.u32 [#allocation10], 4
      %s66 = int_to_ptr.vmem [resolvable:$true] %s65
      %71 = dma.hbm_to_vmem [thread:$0]  %s10, 8192, %s66, [#allocation9], 64, 64, 4
    $region45: #{cnn_shared_forward.1} parent=1 // pred_fallthru
      _
    // Predicated region
    $region46: #{cnn_shared_forward.1} parent=1 // pred_check
      _
    $region47: #{cnn_shared_forward.1} parent=1 // pred_check_branch
      %73 = sbr.rel (0) target = $region49
    $region48: #{cnn_shared_forward.1} parent=1 // pred_region
      _
    $region49: #{cnn_shared_forward.1} parent=1 // pred_fallthru
      _
    // Predicated region
    $region50: #{cnn_shared_forward.1} parent=1 // pred_check
      _
    $region51: #{cnn_shared_forward.1} parent=1 // pred_check_branch
      %75 = sbr.rel (0) target = $region53
    $region52: #{cnn_shared_forward.1} parent=1 // pred_region
      %76 = dma.done [#allocation6], 18432
    $region53: #{cnn_shared_forward.1} parent=1 // pred_fallthru
      _
    // Predicated region
    $region54: #{cnn_shared_forward.1} parent=1 // pred_check
      _
    $region55: #{cnn_shared_forward.1} parent=1 // pred_check_branch
      %78 = sbr.rel (0) target = $region57
    $region56: #{cnn_shared_forward.1} parent=1 // pred_region
      %79 = dma.done [#allocation9], 32768
    $region57: #{cnn_shared_forward.1} parent=1 // pred_fallthru
      _
    // Predicated region
    $region58: #{cnn_shared_forward.1} parent=1 // pred_check
      _
    $region59: #{cnn_shared_forward.1} parent=1 // pred_check_branch
      %81 = sbr.rel (0) target = $region61
    $region60: #{cnn_shared_forward.1} parent=1 // pred_region
      %82 = dma.done [#allocation9], 8192
    $region61: #{cnn_shared_forward.1} parent=1 // pred_fallthru
      _
    %v84 = vld [vmem:[%s1] sm:$0xff]
    %v85 = vld [vmem:[%s1 + $0x8] sm:$0x3]
    %v86 = vld [vmem:[%s1 + $0x10] sm:$0xff]
    %v87 = vld [vmem:[%s1 + $0x18] sm:$0x3]
    %v88 = vld [vmem:[%s1 + $0x20] sm:$0xff]
    %v89 = vld [vmem:[%s1 + $0x28] sm:$0x3]
    %v90 = vld [vmem:[%s1 + $0x30] sm:$0xff]
    %v91 = vld [vmem:[%s1 + $0x38] sm:$0x3]
    %v92 = vld [vmem:[%s1 + $0x40] sm:$0xff]
    %v93 = vld [vmem:[%s1 + $0x48] sm:$0x3]
    %v94 = vld [vmem:[%s1 + $0x50] sm:$0xff]
    %v95 = vld [vmem:[%s1 + $0x58] sm:$0x3]
    %v96 = vld [vmem:[%s1 + $0x60] sm:$0xff]
    %v97 = vld [vmem:[%s1 + $0x68] sm:$0x3]
    %v98 = vld [vmem:[%s1 + $0x70] sm:$0xff]
    %v99 = vld [vmem:[%s1 + $0x78] sm:$0x3]
    %v100 = vld [vmem:[%s1 + $0x80] sm:$0xff]
    %v101 = vld [vmem:[%s1 + $0x88] sm:$0x3]
    %v102 = vld [vmem:[%s1 + $0x90] sm:$0xff]
    %v103 = vld [vmem:[%s1 + $0x98] sm:$0x3]
    %v104 = vld [vmem:[%s1 + $0xa0] sm:$0xff]
    %v105 = vld [vmem:[%s1 + $0xa8] sm:$0x3]
    %v106 = vld [vmem:[%s1 + $0xb0] sm:$0xff]
    %v107 = vld [vmem:[%s1 + $0xb8] sm:$0x3]
    %v108 = vld [vmem:[%s1 + $0xc0] sm:$0xff]
    %v109 = vld [vmem:[%s1 + $0xc8] sm:$0x3]
    %v110 = vld [vmem:[%s1 + $0xd0] sm:$0xff]
    %v111 = vld [vmem:[%s1 + $0xd8] sm:$0x3]
    %v112 = vld [vmem:[%s1 + $0xe0] sm:$0xff]
    %v113 = vld [vmem:[%s1 + $0xe8] sm:$0x3]
    %v114 = vld [vmem:[%s1 + $0xf0] sm:$0xff]
    %v115 = vld [vmem:[%s1 + $0xf8] sm:$0x3]
    %v116 = vld [vmem:[%s1 + $0x100] sm:$0xff]
    %v117 = vld [vmem:[%s1 + $0x108] sm:$0x3]
    %v118 = vld [vmem:[%s1 + $0x110] sm:$0xff]
    %v119 = vld [vmem:[%s1 + $0x118] sm:$0x3]
    %v120 = vld [vmem:[%s1 + $0x120] sm:$0xff]
    %v121 = vld [vmem:[%s1 + $0x128] sm:$0x3]
    %v122 = vld [vmem:[%s1 + $0x130] sm:$0xff]
    %v123 = vld [vmem:[%s1 + $0x138] sm:$0x3]
    %v124 = vld [vmem:[%s2] sm:$0x1]
    %126 = vset.pattern.permute.xlu0 0
    %127 = vperm.xlu0 %126, %v84
    %v128 = vpop.permute.xlu0 %127
    %131 = vset.pattern.permute.xlu0 0
    %132 = vperm.xlu0 %131, %v86
    %v133 = vpop.permute.xlu0 %132
    %136 = vset.pattern.permute.xlu0 0
    %137 = vperm.xlu0 %136, %v88
    %v138 = vpop.permute.xlu0 %137
    %141 = vset.pattern.permute.xlu0 0
    %142 = vperm.xlu0 %141, %v90
    %v143 = vpop.permute.xlu0 %142
    %146 = vset.pattern.permute.xlu0 0
    %147 = vperm.xlu0 %146, %v92
    %v148 = vpop.permute.xlu0 %147
    %151 = vset.pattern.permute.xlu0 0
    %152 = vperm.xlu0 %151, %v94
    %v153 = vpop.permute.xlu0 %152
    %156 = vset.pattern.permute.xlu0 0
    %157 = vperm.xlu0 %156, %v96
    %v158 = vpop.permute.xlu0 %157
    %161 = vset.pattern.permute.xlu0 0
    %162 = vperm.xlu0 %161, %v98
    %v163 = vpop.permute.xlu0 %162
    %166 = vset.pattern.permute.xlu0 0
    %167 = vperm.xlu0 %166, %v104
    %v168 = vpop.permute.xlu0 %167
    %171 = vset.pattern.permute.xlu0 0
    %172 = vperm.xlu0 %171, %v106
    %v173 = vpop.permute.xlu0 %172
    %176 = vset.pattern.permute.xlu0 0
    %177 = vperm.xlu0 %176, %v108
    %v178 = vpop.permute.xlu0 %177
    %181 = vset.pattern.permute.xlu0 0
    %182 = vperm.xlu0 %181, %v110
    %v183 = vpop.permute.xlu0 %182
    %186 = vset.pattern.permute.xlu0 0
    %187 = vperm.xlu0 %186, %v112
    %v188 = vpop.permute.xlu0 %187
    %191 = vset.pattern.permute.xlu0 0
    %192 = vperm.xlu0 %191, %v114
    %v193 = vpop.permute.xlu0 %192
    %196 = vset.pattern.permute.xlu0 0
    %197 = vperm.xlu0 %196, %v116
    %v198 = vpop.permute.xlu0 %197
    %201 = vset.pattern.permute.xlu0 0
    %202 = vperm.xlu0 %201, %v118
    %v203 = vpop.permute.xlu0 %202
    %v205 = vlaneseq
    %v206 = vshrl.u32 %v205, 7
    %v207 = vsub.s32 0, %v206
    %v208 = vrot.slane %v124, %v207
    %v209 = vmul.f32 %v128, %v208
    %v210 = vmul.f32 %v133, %v208
    %v211 = vmul.f32 %v138, %v208
    %v212 = vmul.f32 %v143, %v208
    %v213 = vmul.f32 %v148, %v208
    %v214 = vmul.f32 %v153, %v208
    %v215 = vmul.f32 %v158, %v208
    %v216 = vmul.f32 %v163, %v208
    %v217 = vmul.f32 %v168, %v208
    %v218 = vmul.f32 %v173, %v208
    %v219 = vmul.f32 %v178, %v208
    %v220 = vmul.f32 %v183, %v208
    %v221 = vmul.f32 %v188, %v208
    %v222 = vmul.f32 %v193, %v208
    %v223 = vmul.f32 %v198, %v208
    %v224 = vmul.f32 %v203, %v208
    %v225 = vld [vmem:[%s2 + $0x1] sm:$0x1]
    %227 = vset.pattern.permute.xlu0 0
    %228 = vperm.xlu0 %227, %v85
    %v229 = vpop.permute.xlu0 %228
    %232 = vset.pattern.permute.xlu0 0
    %233 = vperm.xlu0 %232, %v87
    %v234 = vpop.permute.xlu0 %233
    %237 = vset.pattern.permute.xlu0 0
    %238 = vperm.xlu0 %237, %v89
    %v239 = vpop.permute.xlu0 %238
    %242 = vset.pattern.permute.xlu0 0
    %243 = vperm.xlu0 %242, %v91
    %v244 = vpop.permute.xlu0 %243
    %247 = vset.pattern.permute.xlu0 0
    %248 = vperm.xlu0 %247, %v93
    %v249 = vpop.permute.xlu0 %248
    %252 = vset.pattern.permute.xlu0 0
    %253 = vperm.xlu0 %252, %v95
    %v254 = vpop.permute.xlu0 %253
    %257 = vset.pattern.permute.xlu0 0
    %258 = vperm.xlu0 %257, %v97
    %v259 = vpop.permute.xlu0 %258
    %262 = vset.pattern.permute.xlu0 0
    %263 = vperm.xlu0 %262, %v99
    %v264 = vpop.permute.xlu0 %263
    %267 = vset.pattern.permute.xlu0 0
    %268 = vperm.xlu0 %267, %v105
    %v269 = vpop.permute.xlu0 %268
    %272 = vset.pattern.permute.xlu0 0
    %273 = vperm.xlu0 %272, %v107
    %v274 = vpop.permute.xlu0 %273
    %277 = vset.pattern.permute.xlu0 0
    %278 = vperm.xlu0 %277, %v109
    %v279 = vpop.permute.xlu0 %278
    %282 = vset.pattern.permute.xlu0 0
    %283 = vperm.xlu0 %282, %v111
    %v284 = vpop.permute.xlu0 %283
    %287 = vset.pattern.permute.xlu0 0
    %288 = vperm.xlu0 %287, %v113
    %v289 = vpop.permute.xlu0 %288
    %292 = vset.pattern.permute.xlu0 0
    %293 = vperm.xlu0 %292, %v115
    %v294 = vpop.permute.xlu0 %293
    %297 = vset.pattern.permute.xlu0 0
    %298 = vperm.xlu0 %297, %v117
    %v299 = vpop.permute.xlu0 %298
    %302 = vset.pattern.permute.xlu0 0
    %303 = vperm.xlu0 %302, %v119
    %v304 = vpop.permute.xlu0 %303
    %v306 = vlaneseq
    %v307 = vshrl.u32 %v306, 7
    %v308 = vsub.s32 0, %v307
    %v309 = vrot.slane %v225, %v308
    %v310 = vmul.f32 %v128, %v309
    %v311 = vmul.f32 %v229, %v309
    %v312 = vmul.f32 %v133, %v309
    %v313 = vmul.f32 %v234, %v309
    %v314 = vmul.f32 %v138, %v309
    %v315 = vmul.f32 %v239, %v309
    %v316 = vmul.f32 %v143, %v309
    %v317 = vmul.f32 %v244, %v309
    %v318 = vmul.f32 %v148, %v309
    %v319 = vmul.f32 %v249, %v309
    %v320 = vmul.f32 %v153, %v309
    %v321 = vmul.f32 %v254, %v309
    %v322 = vmul.f32 %v158, %v309
    %v323 = vmul.f32 %v259, %v309
    %v324 = vmul.f32 %v163, %v309
    %v325 = vmul.f32 %v264, %v309
    %v326 = vmul.f32 %v168, %v309
    %v327 = vmul.f32 %v269, %v309
    %v328 = vmul.f32 %v173, %v309
    %v329 = vmul.f32 %v274, %v309
    %v330 = vmul.f32 %v178, %v309
    %v331 = vmul.f32 %v279, %v309
    %v332 = vmul.f32 %v183, %v309
    %v333 = vmul.f32 %v284, %v309
    %v334 = vmul.f32 %v188, %v309
    %v335 = vmul.f32 %v289, %v309
    %v336 = vmul.f32 %v193, %v309
    %v337 = vmul.f32 %v294, %v309
    %v338 = vmul.f32 %v198, %v309
    %v339 = vmul.f32 %v299, %v309
    %v340 = vmul.f32 %v203, %v309
    %v341 = vmul.f32 %v304, %v309
    %vm374 = vcmask 1046528
    %v375 = vrot.slane %v310, 1
    %v376 = vrot.slane %v311, 1
    %v377 = vsel %vm374, %v375, %v376
    %v378 = vrot.slane %v312, 1
    %v379 = vrot.slane %v313, 1
    %v380 = vsel %vm374, %v378, %v379
    %v381 = vrot.slane %v314, 1
    %v382 = vrot.slane %v315, 1
    %v383 = vsel %vm374, %v381, %v382
    %v384 = vrot.slane %v316, 1
    %v385 = vrot.slane %v317, 1
    %v386 = vsel %vm374, %v384, %v385
    %v387 = vrot.slane %v318, 1
    %v388 = vrot.slane %v319, 1
    %v389 = vsel %vm374, %v387, %v388
    %v390 = vrot.slane %v320, 1
    %v391 = vrot.slane %v321, 1
    %v392 = vsel %vm374, %v390, %v391
    %v393 = vrot.slane %v322, 1
    %v394 = vrot.slane %v323, 1
    %v395 = vsel %vm374, %v393, %v394
    %v396 = vrot.slane %v324, 1
    %v397 = vrot.slane %v325, 1
    %v398 = vsel %vm374, %v396, %v397
    %v399 = vrot.slane %v326, 1
    %v400 = vrot.slane %v327, 1
    %v401 = vsel %vm374, %v399, %v400
    %v402 = vrot.slane %v328, 1
    %v403 = vrot.slane %v329, 1
    %v404 = vsel %vm374, %v402, %v403
    %v405 = vrot.slane %v330, 1
    %v406 = vrot.slane %v331, 1
    %v407 = vsel %vm374, %v405, %v406
    %v408 = vrot.slane %v332, 1
    %v409 = vrot.slane %v333, 1
    %v410 = vsel %vm374, %v408, %v409
    %v411 = vrot.slane %v334, 1
    %v412 = vrot.slane %v335, 1
    %v413 = vsel %vm374, %v411, %v412
    %v414 = vrot.slane %v336, 1
    %v415 = vrot.slane %v337, 1
    %v416 = vsel %vm374, %v414, %v415
    %v417 = vrot.slane %v338, 1
    %v418 = vrot.slane %v339, 1
    %v419 = vsel %vm374, %v417, %v418
    %v420 = vrot.slane %v340, 1
    %v421 = vrot.slane %v341, 1
    %v422 = vsel %vm374, %v420, %v421
    %v439 = vadd.f32 %v209, %v377
    %v440 = vadd.f32 %v210, %v380
    %v441 = vadd.f32 %v211, %v383
    %v442 = vadd.f32 %v212, %v386
    %v443 = vadd.f32 %v213, %v389
    %v444 = vadd.f32 %v214, %v392
    %v445 = vadd.f32 %v215, %v395
    %v446 = vadd.f32 %v216, %v398
    %v447 = vadd.f32 %v217, %v401
    %v448 = vadd.f32 %v218, %v404
    %v449 = vadd.f32 %v219, %v407
    %v450 = vadd.f32 %v220, %v410
    %v451 = vadd.f32 %v221, %v413
    %v452 = vadd.f32 %v222, %v416
    %v453 = vadd.f32 %v223, %v419
    %v454 = vadd.f32 %v224, %v422
    %v455 = vld [vmem:[%s2 + $0x2] sm:$0x1]
    %v456 = vlaneseq
    %v457 = vshrl.u32 %v456, 7
    %v458 = vsub.s32 0, %v457
    %v459 = vrot.slane %v455, %v458
    %v460 = vmul.f32 %v128, %v459
    %v461 = vmul.f32 %v229, %v459
    %v462 = vmul.f32 %v133, %v459
    %v463 = vmul.f32 %v234, %v459
    %v464 = vmul.f32 %v138, %v459
    %v465 = vmul.f32 %v239, %v459
    %v466 = vmul.f32 %v143, %v459
    %v467 = vmul.f32 %v244, %v459
    %v468 = vmul.f32 %v148, %v459
    %v469 = vmul.f32 %v249, %v459
    %v470 = vmul.f32 %v153, %v459
    %v471 = vmul.f32 %v254, %v459
    %v472 = vmul.f32 %v158, %v459
    %v473 = vmul.f32 %v259, %v459
    %v474 = vmul.f32 %v163, %v459
    %v475 = vmul.f32 %v264, %v459
    %v476 = vmul.f32 %v168, %v459
    %v477 = vmul.f32 %v269, %v459
    %v478 = vmul.f32 %v173, %v459
    %v479 = vmul.f32 %v274, %v459
    %v480 = vmul.f32 %v178, %v459
    %v481 = vmul.f32 %v279, %v459
    %v482 = vmul.f32 %v183, %v459
    %v483 = vmul.f32 %v284, %v459
    %v484 = vmul.f32 %v188, %v459
    %v485 = vmul.f32 %v289, %v459
    %v486 = vmul.f32 %v193, %v459
    %v487 = vmul.f32 %v294, %v459
    %v488 = vmul.f32 %v198, %v459
    %v489 = vmul.f32 %v299, %v459
    %v490 = vmul.f32 %v203, %v459
    %v491 = vmul.f32 %v304, %v459
    %vm524 = vcmask 1045504
    %v525 = vrot.slane %v460, 2
    %v526 = vrot.slane %v461, 2
    %v527 = vsel %vm524, %v525, %v526
    %v528 = vrot.slane %v462, 2
    %v529 = vrot.slane %v463, 2
    %v530 = vsel %vm524, %v528, %v529
    %v531 = vrot.slane %v464, 2
    %v532 = vrot.slane %v465, 2
    %v533 = vsel %vm524, %v531, %v532
    %v534 = vrot.slane %v466, 2
    %v535 = vrot.slane %v467, 2
    %v536 = vsel %vm524, %v534, %v535
    %v537 = vrot.slane %v468, 2
    %v538 = vrot.slane %v469, 2
    %v539 = vsel %vm524, %v537, %v538
    %v540 = vrot.slane %v470, 2
    %v541 = vrot.slane %v471, 2
    %v542 = vsel %vm524, %v540, %v541
    %v543 = vrot.slane %v472, 2
    %v544 = vrot.slane %v473, 2
    %v545 = vsel %vm524, %v543, %v544
    %v546 = vrot.slane %v474, 2
    %v547 = vrot.slane %v475, 2
    %v548 = vsel %vm524, %v546, %v547
    %v549 = vrot.slane %v476, 2
    %v550 = vrot.slane %v477, 2
    %v551 = vsel %vm524, %v549, %v550
    %v552 = vrot.slane %v478, 2
    %v553 = vrot.slane %v479, 2
    %v554 = vsel %vm524, %v552, %v553
    %v555 = vrot.slane %v480, 2
    %v556 = vrot.slane %v481, 2
    %v557 = vsel %vm524, %v555, %v556
    %v558 = vrot.slane %v482, 2
    %v559 = vrot.slane %v483, 2
    %v560 = vsel %vm524, %v558, %v559
    %v561 = vrot.slane %v484, 2
    %v562 = vrot.slane %v485, 2
    %v563 = vsel %vm524, %v561, %v562
    %v564 = vrot.slane %v486, 2
    %v565 = vrot.slane %v487, 2
    %v566 = vsel %vm524, %v564, %v565
    %v567 = vrot.slane %v488, 2
    %v568 = vrot.slane %v489, 2
    %v569 = vsel %vm524, %v567, %v568
    %v570 = vrot.slane %v490, 2
    %v571 = vrot.slane %v491, 2
    %v572 = vsel %vm524, %v570, %v571
    %v589 = vadd.f32 %v439, %v527
    %v590 = vadd.f32 %v440, %v530
    %v591 = vadd.f32 %v441, %v533
    %v592 = vadd.f32 %v442, %v536
    %v593 = vadd.f32 %v443, %v539
    %v594 = vadd.f32 %v444, %v542
    %v595 = vadd.f32 %v445, %v545
    %v596 = vadd.f32 %v446, %v548
    %v597 = vadd.f32 %v447, %v551
    %v598 = vadd.f32 %v448, %v554
    %v599 = vadd.f32 %v449, %v557
    %v600 = vadd.f32 %v450, %v560
    %v601 = vadd.f32 %v451, %v563
    %v602 = vadd.f32 %v452, %v566
    %v603 = vadd.f32 %v453, %v569
    %v604 = vadd.f32 %v454, %v572
    %v605 = vld [vmem:[%s2 + $0x3] sm:$0x1]
    %607 = vset.pattern.permute.xlu0 0
    %608 = vperm.xlu0 %607, %v100
    %v609 = vpop.permute.xlu0 %608
    %612 = vset.pattern.permute.xlu0 0
    %613 = vperm.xlu0 %612, %v120
    %v614 = vpop.permute.xlu0 %613
    %v616 = vlaneseq
    %v617 = vshrl.u32 %v616, 7
    %v618 = vsub.s32 0, %v617
    %v619 = vrot.slane %v605, %v618
    %v620 = vmul.f32 %v133, %v619
    %v621 = vmul.f32 %v138, %v619
    %v622 = vmul.f32 %v143, %v619
    %v623 = vmul.f32 %v148, %v619
    %v624 = vmul.f32 %v153, %v619
    %v625 = vmul.f32 %v158, %v619
    %v626 = vmul.f32 %v163, %v619
    %v627 = vmul.f32 %v609, %v619
    %v628 = vmul.f32 %v173, %v619
    %v629 = vmul.f32 %v178, %v619
    %v630 = vmul.f32 %v183, %v619
    %v631 = vmul.f32 %v188, %v619
    %v632 = vmul.f32 %v193, %v619
    %v633 = vmul.f32 %v198, %v619
    %v634 = vmul.f32 %v203, %v619
    %v635 = vmul.f32 %v614, %v619
    %v636 = vadd.f32 %v589, %v620
    %v637 = vadd.f32 %v590, %v621
    %v638 = vadd.f32 %v591, %v622
    %v639 = vadd.f32 %v592, %v623
    %v640 = vadd.f32 %v593, %v624
    %v641 = vadd.f32 %v594, %v625
    %v642 = vadd.f32 %v595, %v626
    %v643 = vadd.f32 %v596, %v627
    %v644 = vadd.f32 %v597, %v628
    %v645 = vadd.f32 %v598, %v629
    %v646 = vadd.f32 %v599, %v630
    %v647 = vadd.f32 %v600, %v631
    %v648 = vadd.f32 %v601, %v632
    %v649 = vadd.f32 %v602, %v633
    %v650 = vadd.f32 %v603, %v634
    %v651 = vadd.f32 %v604, %v635
    %v652 = vld [vmem:[%s2 + $0x4] sm:$0x1]
    %654 = vset.pattern.permute.xlu0 0
    %655 = vperm.xlu0 %654, %v101
    %v656 = vpop.permute.xlu0 %655
    %659 = vset.pattern.permute.xlu0 0
    %660 = vperm.xlu0 %659, %v121
    %v661 = vpop.permute.xlu0 %660
    %v663 = vlaneseq
    %v664 = vshrl.u32 %v663, 7
    %v665 = vsub.s32 0, %v664
    %v666 = vrot.slane %v652, %v665
    %v667 = vmul.f32 %v133, %v666
    %v668 = vmul.f32 %v234, %v666
    %v669 = vmul.f32 %v138, %v666
    %v670 = vmul.f32 %v239, %v666
    %v671 = vmul.f32 %v143, %v666
    %v672 = vmul.f32 %v244, %v666
    %v673 = vmul.f32 %v148, %v666
    %v674 = vmul.f32 %v249, %v666
    %v675 = vmul.f32 %v153, %v666
    %v676 = vmul.f32 %v254, %v666
    %v677 = vmul.f32 %v158, %v666
    %v678 = vmul.f32 %v259, %v666
    %v679 = vmul.f32 %v163, %v666
    %v680 = vmul.f32 %v264, %v666
    %v681 = vmul.f32 %v609, %v666
    %v682 = vmul.f32 %v656, %v666
    %v683 = vmul.f32 %v173, %v666
    %v684 = vmul.f32 %v274, %v666
    %v685 = vmul.f32 %v178, %v666
    %v686 = vmul.f32 %v279, %v666
    %v687 = vmul.f32 %v183, %v666
    %v688 = vmul.f32 %v284, %v666
    %v689 = vmul.f32 %v188, %v666
    %v690 = vmul.f32 %v289, %v666
    %v691 = vmul.f32 %v193, %v666
    %v692 = vmul.f32 %v294, %v666
    %v693 = vmul.f32 %v198, %v666
    %v694 = vmul.f32 %v299, %v666
    %v695 = vmul.f32 %v203, %v666
    %v696 = vmul.f32 %v304, %v666
    %v697 = vmul.f32 %v614, %v666
    %v698 = vmul.f32 %v661, %v666
    %v731 = vrot.slane %v667, 1
    %v732 = vrot.slane %v668, 1
    %v733 = vsel %vm374, %v731, %v732
    %v734 = vrot.slane %v669, 1
    %v735 = vrot.slane %v670, 1
    %v736 = vsel %vm374, %v734, %v735
    %v737 = vrot.slane %v671, 1
    %v738 = vrot.slane %v672, 1
    %v739 = vsel %vm374, %v737, %v738
    %v740 = vrot.slane %v673, 1
    %v741 = vrot.slane %v674, 1
    %v742 = vsel %vm374, %v740, %v741
    %v743 = vrot.slane %v675, 1
    %v744 = vrot.slane %v676, 1
    %v745 = vsel %vm374, %v743, %v744
    %v746 = vrot.slane %v677, 1
    %v747 = vrot.slane %v678, 1
    %v748 = vsel %vm374, %v746, %v747
    %v749 = vrot.slane %v679, 1
    %v750 = vrot.slane %v680, 1
    %v751 = vsel %vm374, %v749, %v750
    %v752 = vrot.slane %v681, 1
    %v753 = vrot.slane %v682, 1
    %v754 = vsel %vm374, %v752, %v753
    %v755 = vrot.slane %v683, 1
    %v756 = vrot.slane %v684, 1
    %v757 = vsel %vm374, %v755, %v756
    %v758 = vrot.slane %v685, 1
    %v759 = vrot.slane %v686, 1
    %v760 = vsel %vm374, %v758, %v759
    %v761 = vrot.slane %v687, 1
    %v762 = vrot.slane %v688, 1
    %v763 = vsel %vm374, %v761, %v762
    %v764 = vrot.slane %v689, 1
    %v765 = vrot.slane %v690, 1
    %v766 = vsel %vm374, %v764, %v765
    %v767 = vrot.slane %v691, 1
    %v768 = vrot.slane %v692, 1
    %v769 = vsel %vm374, %v767, %v768
    %v770 = vrot.slane %v693, 1
    %v771 = vrot.slane %v694, 1
    %v772 = vsel %vm374, %v770, %v771
    %v773 = vrot.slane %v695, 1
    %v774 = vrot.slane %v696, 1
    %v775 = vsel %vm374, %v773, %v774
    %v776 = vrot.slane %v697, 1
    %v777 = vrot.slane %v698, 1
    %v778 = vsel %vm374, %v776, %v777
    %v795 = vadd.f32 %v636, %v733
    %v796 = vadd.f32 %v637, %v736
    %v797 = vadd.f32 %v638, %v739
    %v798 = vadd.f32 %v639, %v742
    %v799 = vadd.f32 %v640, %v745
    %v800 = vadd.f32 %v641, %v748
    %v801 = vadd.f32 %v642, %v751
    %v802 = vadd.f32 %v643, %v754
    %v803 = vadd.f32 %v644, %v757
    %v804 = vadd.f32 %v645, %v760
    %v805 = vadd.f32 %v646, %v763
    %v806 = vadd.f32 %v647, %v766
    %v807 = vadd.f32 %v648, %v769
    %v808 = vadd.f32 %v649, %v772
    %v809 = vadd.f32 %v650, %v775
    %v810 = vadd.f32 %v651, %v778
    %v811 = vld [vmem:[%s2 + $0x5] sm:$0x1]
    %v812 = vlaneseq
    %v813 = vshrl.u32 %v812, 7
    %v814 = vsub.s32 0, %v813
    %v815 = vrot.slane %v811, %v814
    %v816 = vmul.f32 %v133, %v815
    %v817 = vmul.f32 %v234, %v815
    %v818 = vmul.f32 %v138, %v815
    %v819 = vmul.f32 %v239, %v815
    %v820 = vmul.f32 %v143, %v815
    %v821 = vmul.f32 %v244, %v815
    %v822 = vmul.f32 %v148, %v815
    %v823 = vmul.f32 %v249, %v815
    %v824 = vmul.f32 %v153, %v815
    %v825 = vmul.f32 %v254, %v815
    %v826 = vmul.f32 %v158, %v815
    %v827 = vmul.f32 %v259, %v815
    %v828 = vmul.f32 %v163, %v815
    %v829 = vmul.f32 %v264, %v815
    %v830 = vmul.f32 %v609, %v815
    %v831 = vmul.f32 %v656, %v815
    %v832 = vmul.f32 %v173, %v815
    %v833 = vmul.f32 %v274, %v815
    %v834 = vmul.f32 %v178, %v815
    %v835 = vmul.f32 %v279, %v815
    %v836 = vmul.f32 %v183, %v815
    %v837 = vmul.f32 %v284, %v815
    %v838 = vmul.f32 %v188, %v815
    %v839 = vmul.f32 %v289, %v815
    %v840 = vmul.f32 %v193, %v815
    %v841 = vmul.f32 %v294, %v815
    %v842 = vmul.f32 %v198, %v815
    %v843 = vmul.f32 %v299, %v815
    %v844 = vmul.f32 %v203, %v815
    %v845 = vmul.f32 %v304, %v815
    %v846 = vmul.f32 %v614, %v815
    %v847 = vmul.f32 %v661, %v815
    %v880 = vrot.slane %v816, 2
    %v881 = vrot.slane %v817, 2
    %v882 = vsel %vm524, %v880, %v881
    %v883 = vrot.slane %v818, 2
    %v884 = vrot.slane %v819, 2
    %v885 = vsel %vm524, %v883, %v884
    %v886 = vrot.slane %v820, 2
    %v887 = vrot.slane %v821, 2
    %v888 = vsel %vm524, %v886, %v887
    %v889 = vrot.slane %v822, 2
    %v890 = vrot.slane %v823, 2
    %v891 = vsel %vm524, %v889, %v890
    %v892 = vrot.slane %v824, 2
    %v893 = vrot.slane %v825, 2
    %v894 = vsel %vm524, %v892, %v893
    %v895 = vrot.slane %v826, 2
    %v896 = vrot.slane %v827, 2
    %v897 = vsel %vm524, %v895, %v896
    %v898 = vrot.slane %v828, 2
    %v899 = vrot.slane %v829, 2
    %v900 = vsel %vm524, %v898, %v899
    %v901 = vrot.slane %v830, 2
    %v902 = vrot.slane %v831, 2
    %v903 = vsel %vm524, %v901, %v902
    %v904 = vrot.slane %v832, 2
    %v905 = vrot.slane %v833, 2
    %v906 = vsel %vm524, %v904, %v905
    %v907 = vrot.slane %v834, 2
    %v908 = vrot.slane %v835, 2
    %v909 = vsel %vm524, %v907, %v908
    %v910 = vrot.slane %v836, 2
    %v911 = vrot.slane %v837, 2
    %v912 = vsel %vm524, %v910, %v911
    %v913 = vrot.slane %v838, 2
    %v914 = vrot.slane %v839, 2
    %v915 = vsel %vm524, %v913, %v914
    %v916 = vrot.slane %v840, 2
    %v917 = vrot.slane %v841, 2
    %v918 = vsel %vm524, %v916, %v917
    %v919 = vrot.slane %v842, 2
    %v920 = vrot.slane %v843, 2
    %v921 = vsel %vm524, %v919, %v920
    %v922 = vrot.slane %v844, 2
    %v923 = vrot.slane %v845, 2
    %v924 = vsel %vm524, %v922, %v923
    %v925 = vrot.slane %v846, 2
    %v926 = vrot.slane %v847, 2
    %v927 = vsel %vm524, %v925, %v926
    %v944 = vadd.f32 %v795, %v882
    %v945 = vadd.f32 %v796, %v885
    %v946 = vadd.f32 %v797, %v888
    %v947 = vadd.f32 %v798, %v891
    %v948 = vadd.f32 %v799, %v894
    %v949 = vadd.f32 %v800, %v897
    %v950 = vadd.f32 %v801, %v900
    %v951 = vadd.f32 %v802, %v903
    %v952 = vadd.f32 %v803, %v906
    %v953 = vadd.f32 %v804, %v909
    %v954 = vadd.f32 %v805, %v912
    %v955 = vadd.f32 %v806, %v915
    %v956 = vadd.f32 %v807, %v918
    %v957 = vadd.f32 %v808, %v921
    %v958 = vadd.f32 %v809, %v924
    %v959 = vadd.f32 %v810, %v927
    %v960 = vld [vmem:[%s2 + $0x6] sm:$0x1]
    %962 = vset.pattern.permute.xlu0 0
    %963 = vperm.xlu0 %962, %v102
    %v964 = vpop.permute.xlu0 %963
    %967 = vset.pattern.permute.xlu0 0
    %968 = vperm.xlu0 %967, %v122
    %v969 = vpop.permute.xlu0 %968
    %v971 = vlaneseq
    %v972 = vshrl.u32 %v971, 7
    %v973 = vsub.s32 0, %v972
    %v974 = vrot.slane %v960, %v973
    %v975 = vmul.f32 %v138, %v974
    %v976 = vmul.f32 %v143, %v974
    %v977 = vmul.f32 %v148, %v974
    %v978 = vmul.f32 %v153, %v974
    %v979 = vmul.f32 %v158, %v974
    %v980 = vmul.f32 %v163, %v974
    %v981 = vmul.f32 %v609, %v974
    %v982 = vmul.f32 %v964, %v974
    %v983 = vmul.f32 %v178, %v974
    %v984 = vmul.f32 %v183, %v974
    %v985 = vmul.f32 %v188, %v974
    %v986 = vmul.f32 %v193, %v974
    %v987 = vmul.f32 %v198, %v974
    %v988 = vmul.f32 %v203, %v974
    %v989 = vmul.f32 %v614, %v974
    %v990 = vmul.f32 %v969, %v974
    %v991 = vadd.f32 %v944, %v975
    %v992 = vadd.f32 %v945, %v976
    %v993 = vadd.f32 %v946, %v977
    %v994 = vadd.f32 %v947, %v978
    %v995 = vadd.f32 %v948, %v979
    %v996 = vadd.f32 %v949, %v980
    %v997 = vadd.f32 %v950, %v981
    %v998 = vadd.f32 %v951, %v982
    %v999 = vadd.f32 %v952, %v983
    %v1000 = vadd.f32 %v953, %v984
    %v1001 = vadd.f32 %v954, %v985
    %v1002 = vadd.f32 %v955, %v986
    %v1003 = vadd.f32 %v956, %v987
    %v1004 = vadd.f32 %v957, %v988
    %v1005 = vadd.f32 %v958, %v989
    %v1006 = vadd.f32 %v959, %v990
    %v1007 = vld [vmem:[%s2 + $0x7] sm:$0x1]
    %1009 = vset.pattern.permute.xlu0 0
    %1010 = vperm.xlu0 %1009, %v103
    %v1011 = vpop.permute.xlu0 %1010
    %1014 = vset.pattern.permute.xlu0 0
    %1015 = vperm.xlu0 %1014, %v123
    %v1016 = vpop.permute.xlu0 %1015
    %v1018 = vlaneseq
    %v1019 = vshrl.u32 %v1018, 7
    %v1020 = vsub.s32 0, %v1019
    %v1021 = vrot.slane %v1007, %v1020
    %v1022 = vmul.f32 %v138, %v1021
    %v1023 = vmul.f32 %v239, %v1021
    %v1024 = vmul.f32 %v143, %v1021
    %v1025 = vmul.f32 %v244, %v1021
    %v1026 = vmul.f32 %v148, %v1021
    %v1027 = vmul.f32 %v249, %v1021
    %v1028 = vmul.f32 %v153, %v1021
    %v1029 = vmul.f32 %v254, %v1021
    %v1030 = vmul.f32 %v158, %v1021
    %v1031 = vmul.f32 %v259, %v1021
    %v1032 = vmul.f32 %v163, %v1021
    %v1033 = vmul.f32 %v264, %v1021
    %v1034 = vmul.f32 %v609, %v1021
    %v1035 = vmul.f32 %v656, %v1021
    %v1036 = vmul.f32 %v964, %v1021
    %v1037 = vmul.f32 %v1011, %v1021
    %v1038 = vmul.f32 %v178, %v1021
    %v1039 = vmul.f32 %v279, %v1021
    %v1040 = vmul.f32 %v183, %v1021
    %v1041 = vmul.f32 %v284, %v1021
    %v1042 = vmul.f32 %v188, %v1021
    %v1043 = vmul.f32 %v289, %v1021
    %v1044 = vmul.f32 %v193, %v1021
    %v1045 = vmul.f32 %v294, %v1021
    %v1046 = vmul.f32 %v198, %v1021
    %v1047 = vmul.f32 %v299, %v1021
    %v1048 = vmul.f32 %v203, %v1021
    %v1049 = vmul.f32 %v304, %v1021
    %v1050 = vmul.f32 %v614, %v1021
    %v1051 = vmul.f32 %v661, %v1021
    %v1052 = vmul.f32 %v969, %v1021
    %v1053 = vmul.f32 %v1016, %v1021
    %v1086 = vrot.slane %v1022, 1
    %v1087 = vrot.slane %v1023, 1
    %v1088 = vsel %vm374, %v1086, %v1087
    %v1089 = vrot.slane %v1024, 1
    %v1090 = vrot.slane %v1025, 1
    %v1091 = vsel %vm374, %v1089, %v1090
    %v1092 = vrot.slane %v1026, 1
    %v1093 = vrot.slane %v1027, 1
    %v1094 = vsel %vm374, %v1092, %v1093
    %v1095 = vrot.slane %v1028, 1
    %v1096 = vrot.slane %v1029, 1
    %v1097 = vsel %vm374, %v1095, %v1096
    %v1098 = vrot.slane %v1030, 1
    %v1099 = vrot.slane %v1031, 1
    %v1100 = vsel %vm374, %v1098, %v1099
    %v1101 = vrot.slane %v1032, 1
    %v1102 = vrot.slane %v1033, 1
    %v1103 = vsel %vm374, %v1101, %v1102
    %v1104 = vrot.slane %v1034, 1
    %v1105 = vrot.slane %v1035, 1
    %v1106 = vsel %vm374, %v1104, %v1105
    %v1107 = vrot.slane %v1036, 1
    %v1108 = vrot.slane %v1037, 1
    %v1109 = vsel %vm374, %v1107, %v1108
    %v1110 = vrot.slane %v1038, 1
    %v1111 = vrot.slane %v1039, 1
    %v1112 = vsel %vm374, %v1110, %v1111
    %v1113 = vrot.slane %v1040, 1
    %v1114 = vrot.slane %v1041, 1
    %v1115 = vsel %vm374, %v1113, %v1114
    %v1116 = vrot.slane %v1042, 1
    %v1117 = vrot.slane %v1043, 1
    %v1118 = vsel %vm374, %v1116, %v1117
    %v1119 = vrot.slane %v1044, 1
    %v1120 = vrot.slane %v1045, 1
    %v1121 = vsel %vm374, %v1119, %v1120
    %v1122 = vrot.slane %v1046, 1
    %v1123 = vrot.slane %v1047, 1
    %v1124 = vsel %vm374, %v1122, %v1123
    %v1125 = vrot.slane %v1048, 1
    %v1126 = vrot.slane %v1049, 1
    %v1127 = vsel %vm374, %v1125, %v1126
    %v1128 = vrot.slane %v1050, 1
    %v1129 = vrot.slane %v1051, 1
    %v1130 = vsel %vm374, %v1128, %v1129
    %v1131 = vrot.slane %v1052, 1
    %v1132 = vrot.slane %v1053, 1
    %v1133 = vsel %vm374, %v1131, %v1132
    %v1150 = vadd.f32 %v991, %v1088
    %v1151 = vadd.f32 %v992, %v1091
    %v1152 = vadd.f32 %v993, %v1094
    %v1153 = vadd.f32 %v994, %v1097
    %v1154 = vadd.f32 %v995, %v1100
    %v1155 = vadd.f32 %v996, %v1103
    %v1156 = vadd.f32 %v997, %v1106
    %v1157 = vadd.f32 %v998, %v1109
    %v1158 = vadd.f32 %v999, %v1112
    %v1159 = vadd.f32 %v1000, %v1115
    %v1160 = vadd.f32 %v1001, %v1118
    %v1161 = vadd.f32 %v1002, %v1121
    %v1162 = vadd.f32 %v1003, %v1124
    %v1163 = vadd.f32 %v1004, %v1127
    %v1164 = vadd.f32 %v1005, %v1130
    %v1165 = vadd.f32 %v1006, %v1133
    %v1166 = vld [vmem:[%s2 + $0x8] sm:$0x1]
    %v1167 = vlaneseq
    %v1168 = vshrl.u32 %v1167, 7
    %v1169 = vsub.s32 0, %v1168
    %v1170 = vrot.slane %v1166, %v1169
    %v1171 = vmul.f32 %v138, %v1170
    %v1172 = vmul.f32 %v239, %v1170
    %v1173 = vmul.f32 %v143, %v1170
    %v1174 = vmul.f32 %v244, %v1170
    %v1175 = vmul.f32 %v148, %v1170
    %v1176 = vmul.f32 %v249, %v1170
    %v1177 = vmul.f32 %v153, %v1170
    %v1178 = vmul.f32 %v254, %v1170
    %v1179 = vmul.f32 %v158, %v1170
    %v1180 = vmul.f32 %v259, %v1170
    %v1181 = vmul.f32 %v163, %v1170
    %v1182 = vmul.f32 %v264, %v1170
    %v1183 = vmul.f32 %v609, %v1170
    %v1184 = vmul.f32 %v656, %v1170
    %v1185 = vmul.f32 %v964, %v1170
    %v1186 = vmul.f32 %v1011, %v1170
    %v1187 = vmul.f32 %v178, %v1170
    %v1188 = vmul.f32 %v279, %v1170
    %v1189 = vmul.f32 %v183, %v1170
    %v1190 = vmul.f32 %v284, %v1170
    %v1191 = vmul.f32 %v188, %v1170
    %v1192 = vmul.f32 %v289, %v1170
    %v1193 = vmul.f32 %v193, %v1170
    %v1194 = vmul.f32 %v294, %v1170
    %v1195 = vmul.f32 %v198, %v1170
    %v1196 = vmul.f32 %v299, %v1170
    %v1197 = vmul.f32 %v203, %v1170
    %v1198 = vmul.f32 %v304, %v1170
    %v1199 = vmul.f32 %v614, %v1170
    %v1200 = vmul.f32 %v661, %v1170
    %v1201 = vmul.f32 %v969, %v1170
    %v1202 = vmul.f32 %v1016, %v1170
    %v1235 = vrot.slane %v1171, 2
    %v1236 = vrot.slane %v1172, 2
    %v1237 = vsel %vm524, %v1235, %v1236
    %v1238 = vrot.slane %v1173, 2
    %v1239 = vrot.slane %v1174, 2
    %v1240 = vsel %vm524, %v1238, %v1239
    %v1241 = vrot.slane %v1175, 2
    %v1242 = vrot.slane %v1176, 2
    %v1243 = vsel %vm524, %v1241, %v1242
    %v1244 = vrot.slane %v1177, 2
    %v1245 = vrot.slane %v1178, 2
    %v1246 = vsel %vm524, %v1244, %v1245
    %v1247 = vrot.slane %v1179, 2
    %v1248 = vrot.slane %v1180, 2
    %v1249 = vsel %vm524, %v1247, %v1248
    %v1250 = vrot.slane %v1181, 2
    %v1251 = vrot.slane %v1182, 2
    %v1252 = vsel %vm524, %v1250, %v1251
    %v1253 = vrot.slane %v1183, 2
    %v1254 = vrot.slane %v1184, 2
    %v1255 = vsel %vm524, %v1253, %v1254
    %v1256 = vrot.slane %v1185, 2
    %v1257 = vrot.slane %v1186, 2
    %v1258 = vsel %vm524, %v1256, %v1257
    %v1259 = vrot.slane %v1187, 2
    %v1260 = vrot.slane %v1188, 2
    %v1261 = vsel %vm524, %v1259, %v1260
    %v1262 = vrot.slane %v1189, 2
    %v1263 = vrot.slane %v1190, 2
    %v1264 = vsel %vm524, %v1262, %v1263
    %v1265 = vrot.slane %v1191, 2
    %v1266 = vrot.slane %v1192, 2
    %v1267 = vsel %vm524, %v1265, %v1266
    %v1268 = vrot.slane %v1193, 2
    %v1269 = vrot.slane %v1194, 2
    %v1270 = vsel %vm524, %v1268, %v1269
    %v1271 = vrot.slane %v1195, 2
    %v1272 = vrot.slane %v1196, 2
    %v1273 = vsel %vm524, %v1271, %v1272
    %v1274 = vrot.slane %v1197, 2
    %v1275 = vrot.slane %v1198, 2
    %v1276 = vsel %vm524, %v1274, %v1275
    %v1277 = vrot.slane %v1199, 2
    %v1278 = vrot.slane %v1200, 2
    %v1279 = vsel %vm524, %v1277, %v1278
    %v1280 = vrot.slane %v1201, 2
    %v1281 = vrot.slane %v1202, 2
    %v1282 = vsel %vm524, %v1280, %v1281
    %v1299 = vadd.f32 %v1150, %v1237
    %v1300 = vadd.f32 %v1151, %v1240
    %v1301 = vadd.f32 %v1152, %v1243
    %v1302 = vadd.f32 %v1153, %v1246
    %v1303 = vadd.f32 %v1154, %v1249
    %v1304 = vadd.f32 %v1155, %v1252
    %v1305 = vadd.f32 %v1156, %v1255
    %v1306 = vadd.f32 %v1157, %v1258
    %v1307 = vadd.f32 %v1158, %v1261
    %v1308 = vadd.f32 %v1159, %v1264
    %v1309 = vadd.f32 %v1160, %v1267
    %v1310 = vadd.f32 %v1161, %v1270
    %v1311 = vadd.f32 %v1162, %v1273
    %v1312 = vadd.f32 %v1163, %v1276
    %v1313 = vadd.f32 %v1164, %v1279
    %v1314 = vadd.f32 %v1165, %v1282
    %v1315 = vld [vmem:[%s3] sm:$0x1]
    %v1317 = vlaneseq
    %v1318 = vshrl.u32 %v1317, 7
    %v1319 = vsub.s32 0, %v1318
    %v1320 = vrot.slane %v1315, %v1319
    %v1322 = vadd.f32 %v1299, %v1320
    %v1323 = vadd.f32 %v1300, %v1320
    %v1324 = vadd.f32 %v1301, %v1320
    %v1325 = vadd.f32 %v1302, %v1320
    %v1326 = vadd.f32 %v1303, %v1320
    %v1327 = vadd.f32 %v1304, %v1320
    %v1328 = vadd.f32 %v1305, %v1320
    %v1329 = vadd.f32 %v1306, %v1320
    %v1330 = vadd.f32 %v1307, %v1320
    %v1331 = vadd.f32 %v1308, %v1320
    %v1332 = vadd.f32 %v1309, %v1320
    %v1333 = vadd.f32 %v1310, %v1320
    %v1334 = vadd.f32 %v1311, %v1320
    %v1335 = vadd.f32 %v1312, %v1320
    %v1336 = vadd.f32 %v1313, %v1320
    %v1337 = vadd.f32 %v1314, %v1320
    %v1338 = vmax.f32 %v1322, 0.0
    %v1339 = vmax.f32 %v1323, 0.0
    %v1340 = vmax.f32 %v1324, 0.0
    %v1341 = vmax.f32 %v1325, 0.0
    %v1342 = vmax.f32 %v1326, 0.0
    %v1343 = vmax.f32 %v1327, 0.0
    %v1344 = vmax.f32 %v1328, 0.0
    %v1345 = vmax.f32 %v1329, 0.0
    %v1346 = vmax.f32 %v1330, 0.0
    %v1347 = vmax.f32 %v1331, 0.0
    %v1348 = vmax.f32 %v1332, 0.0
    %v1349 = vmax.f32 %v1333, 0.0
    %v1350 = vmax.f32 %v1334, 0.0
    %v1351 = vmax.f32 %v1335, 0.0
    %v1352 = vmax.f32 %v1336, 0.0
    %v1353 = vmax.f32 %v1337, 0.0
    %vm1354 = vcmask 521216
    %1355 = vst.msk [vmem:[#allocation2] sm:$0x3f] %vm1354, %v1338
    %v1357 = vrot.slane %v1338, 1
    %1358 = vrot.lane.b32.xlu0 %v1357, 64
    %v1359 = vpop.permute.xlu0 %1358
    %vm1361 = vcmask 1046016
    %1362 = vst.msk [vmem:[#allocation2] sm:$0x3f] %vm1361, %v1359
    %v1363 = vrot.slane %v1338, 2
    %1365 = vst.msk [vmem:[#allocation2 + $0x8] sm:$0x3f] %vm1354, %v1363
    %1367 = vrot.lane.b32.xlu0 %v1339, 64
    %v1368 = vpop.permute.xlu0 %1367
    %1370 = vst.msk [vmem:[#allocation2 + $0x8] sm:$0x3f] %vm1361, %v1368
    %v1371 = vrot.slane %v1339, 1
    %1373 = vst.msk [vmem:[#allocation2 + $0x10] sm:$0x3f] %vm1354, %v1371
    %v1374 = vrot.slane %v1339, 2
    %1375 = vrot.lane.b32.xlu0 %v1374, 64
    %v1376 = vpop.permute.xlu0 %1375
    %1378 = vst.msk [vmem:[#allocation2 + $0x10] sm:$0x3f] %vm1361, %v1376
    %1379 = vst.msk [vmem:[#allocation2 + $0x18] sm:$0x3f] %vm1354, %v1340
    %v1381 = vrot.slane %v1340, 1
    %1382 = vrot.lane.b32.xlu0 %v1381, 64
    %v1383 = vpop.permute.xlu0 %1382
    %1385 = vst.msk [vmem:[#allocation2 + $0x18] sm:$0x3f] %vm1361, %v1383
    %v1386 = vrot.slane %v1340, 2
    %1388 = vst.msk [vmem:[#allocation2 + $0x20] sm:$0x3f] %vm1354, %v1386
    %vm1390 = vcmask 523270
    %1391 = vst.msk [vmem:[#allocation2] sm:$0xc0] %vm1390, %v1374
    %vm1392 = vcmask 519168
    %1393 = vst.msk [vmem:[#allocation2 + $0x28] sm:$0xf] %vm1392, %v1374
    %v1394 = vrot.slane %v1339, 3
    %1395 = vrot.lane.b32.xlu0 %v1394, 64
    %v1396 = vpop.permute.xlu0 %1395
    %vm1398 = vcmask 1048070
    %1399 = vst.msk [vmem:[#allocation2] sm:$0xc0] %vm1398, %v1396
    %vm1400 = vcmask 1043968
    %1401 = vst.msk [vmem:[#allocation2 + $0x28] sm:$0xf] %vm1400, %v1396
    %v1402 = vrot.slane %v1339, 4
    %1404 = vst.msk [vmem:[#allocation2 + $0x8] sm:$0xc0] %vm1390, %v1402
    %1405 = vst.msk [vmem:[#allocation2 + $0x30] sm:$0xf] %vm1392, %v1402
    %1406 = vrot.lane.b32.xlu0 %v1386, 64
    %v1407 = vpop.permute.xlu0 %1406
    %1409 = vst.msk [vmem:[#allocation2 + $0x8] sm:$0xc0] %vm1398, %v1407
    %1410 = vst.msk [vmem:[#allocation2 + $0x30] sm:$0xf] %vm1400, %v1407
    %v1411 = vrot.slane %v1340, 3
    %1413 = vst.msk [vmem:[#allocation2 + $0x10] sm:$0xc0] %vm1390, %v1411
    %1414 = vst.msk [vmem:[#allocation2 + $0x38] sm:$0xf] %vm1392, %v1411
    %v1415 = vrot.slane %v1340, 4
    %1416 = vrot.lane.b32.xlu0 %v1415, 64
    %v1417 = vpop.permute.xlu0 %1416
    %1419 = vst.msk [vmem:[#allocation2 + $0x10] sm:$0xc0] %vm1398, %v1417
    %1420 = vst.msk [vmem:[#allocation2 + $0x38] sm:$0xf] %vm1400, %v1417
    %v1422 = vrot.slane %v1341, 2
    %1424 = vst.msk [vmem:[#allocation2 + $0x18] sm:$0xc0] %vm1390, %v1422
    %1425 = vst.msk [vmem:[#allocation2 + $0x40] sm:$0xf] %vm1392, %v1422
    %v1426 = vrot.slane %v1341, 3
    %1427 = vrot.lane.b32.xlu0 %v1426, 64
    %v1428 = vpop.permute.xlu0 %1427
    %1430 = vst.msk [vmem:[#allocation2 + $0x18] sm:$0xc0] %vm1398, %v1428
    %1431 = vst.msk [vmem:[#allocation2 + $0x40] sm:$0xf] %vm1400, %v1428
    %v1432 = vrot.slane %v1341, 4
    %1434 = vst.msk [vmem:[#allocation2 + $0x20] sm:$0xc0] %vm1390, %v1432
    %1435 = vst.msk [vmem:[#allocation2 + $0x48] sm:$0xf] %vm1392, %v1432
    %vm1437 = vcmask 523268
    %1438 = vst.msk [vmem:[#allocation2 + $0x28] sm:$0xf0] %vm1437, %v1415
    %vm1439 = vcmask 517120
    %1440 = vst.msk [vmem:[#allocation2 + $0x50] sm:$0x3] %vm1439, %v1415
    %v1441 = vrot.slane %v1340, 5
    %1442 = vrot.lane.b32.xlu0 %v1441, 64
    %v1443 = vpop.permute.xlu0 %1442
    %vm1445 = vcmask 1048068
    %1446 = vst.msk [vmem:[#allocation2 + $0x28] sm:$0xf0] %vm1445, %v1443
    %vm1447 = vcmask 1041920
    %1448 = vst.msk [vmem:[#allocation2 + $0x50] sm:$0x3] %vm1447, %v1443
    %v1449 = vrot.slane %v1340, 6
    %1451 = vst.msk [vmem:[#allocation2 + $0x30] sm:$0xf0] %vm1437, %v1449
    %1452 = vst.msk [vmem:[#allocation2 + $0x58] sm:$0x3] %vm1439, %v1449
    %1453 = vrot.lane.b32.xlu0 %v1432, 64
    %v1454 = vpop.permute.xlu0 %1453
    %1456 = vst.msk [vmem:[#allocation2 + $0x30] sm:$0xf0] %vm1445, %v1454
    %1457 = vst.msk [vmem:[#allocation2 + $0x58] sm:$0x3] %vm1447, %v1454
    %v1458 = vrot.slane %v1341, 5
    %1460 = vst.msk [vmem:[#allocation2 + $0x38] sm:$0xf0] %vm1437, %v1458
    %1461 = vst.msk [vmem:[#allocation2 + $0x60] sm:$0x3] %vm1439, %v1458
    %v1462 = vrot.slane %v1341, 6
    %1463 = vrot.lane.b32.xlu0 %v1462, 64
    %v1464 = vpop.permute.xlu0 %1463
    %1466 = vst.msk [vmem:[#allocation2 + $0x38] sm:$0xf0] %vm1445, %v1464
    %1467 = vst.msk [vmem:[#allocation2 + $0x60] sm:$0x3] %vm1447, %v1464
    %v1469 = vrot.slane %v1342, 4
    %1471 = vst.msk [vmem:[#allocation2 + $0x40] sm:$0xf0] %vm1437, %v1469
    %1472 = vst.msk [vmem:[#allocation2 + $0x68] sm:$0x3] %vm1439, %v1469
    %v1473 = vrot.slane %v1342, 5
    %1474 = vrot.lane.b32.xlu0 %v1473, 64
    %v1475 = vpop.permute.xlu0 %1474
    %1477 = vst.msk [vmem:[#allocation2 + $0x40] sm:$0xf0] %vm1445, %v1475
    %1478 = vst.msk [vmem:[#allocation2 + $0x68] sm:$0x3] %vm1447, %v1475
    %v1479 = vrot.slane %v1342, 6
    %1481 = vst.msk [vmem:[#allocation2 + $0x48] sm:$0xf0] %vm1437, %v1479
    %1482 = vst.msk [vmem:[#allocation2 + $0x70] sm:$0x3] %vm1439, %v1479
    %vm1484 = vcmask 523266
    %1485 = vst.msk [vmem:[#allocation2 + $0x50] sm:$0xfc] %vm1484, %v1462
    %v1486 = vrot.slane %v1341, 7
    %1487 = vrot.lane.b32.xlu0 %v1486, 64
    %v1488 = vpop.permute.xlu0 %1487
    %vm1490 = vcmask 1048066
    %1491 = vst.msk [vmem:[#allocation2 + $0x50] sm:$0xfc] %vm1490, %v1488
    %1492 = vst.msk [vmem:[#allocation2 + $0x58] sm:$0xfc] %vm1484, %v1341
    %1493 = vrot.lane.b32.xlu0 %v1479, 64
    %v1494 = vpop.permute.xlu0 %1493
    %1496 = vst.msk [vmem:[#allocation2 + $0x58] sm:$0xfc] %vm1490, %v1494
    %v1497 = vrot.slane %v1342, 7
    %1499 = vst.msk [vmem:[#allocation2 + $0x60] sm:$0xfc] %vm1484, %v1497
    %1500 = vrot.lane.b32.xlu0 %v1342, 64
    %v1501 = vpop.permute.xlu0 %1500
    %1503 = vst.msk [vmem:[#allocation2 + $0x60] sm:$0xfc] %vm1490, %v1501
    %v1505 = vrot.slane %v1343, 6
    %1507 = vst.msk [vmem:[#allocation2 + $0x68] sm:$0xfc] %vm1484, %v1505
    %v1508 = vrot.slane %v1343, 7
    %1509 = vrot.lane.b32.xlu0 %v1508, 64
    %v1510 = vpop.permute.xlu0 %1509
    %1512 = vst.msk [vmem:[#allocation2 + $0x68] sm:$0xfc] %vm1490, %v1510
    %1513 = vst.msk [vmem:[#allocation2 + $0x70] sm:$0xfc] %vm1484, %v1343
    %1514 = vst.msk [vmem:[#allocation2 + $0x78] sm:$0x3f] %vm1354, %v1342
    %v1515 = vrot.slane %v1342, 1
    %1516 = vrot.lane.b32.xlu0 %v1515, 64
    %v1517 = vpop.permute.xlu0 %1516
    %1519 = vst.msk [vmem:[#allocation2 + $0x78] sm:$0x3f] %vm1361, %v1517
    %v1520 = vrot.slane %v1342, 2
    %1522 = vst.msk [vmem:[#allocation2 + $0x80] sm:$0x3f] %vm1354, %v1520
    %1523 = vrot.lane.b32.xlu0 %v1343, 64
    %v1524 = vpop.permute.xlu0 %1523
    %1526 = vst.msk [vmem:[#allocation2 + $0x80] sm:$0x3f] %vm1361, %v1524
    %v1527 = vrot.slane %v1343, 1
    %1529 = vst.msk [vmem:[#allocation2 + $0x88] sm:$0x3f] %vm1354, %v1527
    %v1530 = vrot.slane %v1343, 2
    %1531 = vrot.lane.b32.xlu0 %v1530, 64
    %v1532 = vpop.permute.xlu0 %1531
    %1534 = vst.msk [vmem:[#allocation2 + $0x88] sm:$0x3f] %vm1361, %v1532
    %1535 = vst.msk [vmem:[#allocation2 + $0x90] sm:$0x3f] %vm1354, %v1344
    %v1537 = vrot.slane %v1344, 1
    %1538 = vrot.lane.b32.xlu0 %v1537, 64
    %v1539 = vpop.permute.xlu0 %1538
    %1541 = vst.msk [vmem:[#allocation2 + $0x90] sm:$0x3f] %vm1361, %v1539
    %v1542 = vrot.slane %v1344, 2
    %1544 = vst.msk [vmem:[#allocation2 + $0x98] sm:$0x3f] %vm1354, %v1542
    %1546 = vst.msk [vmem:[#allocation2 + $0x78] sm:$0xc0] %vm1390, %v1530
    %1547 = vst.msk [vmem:[#allocation2 + $0xa0] sm:$0xf] %vm1392, %v1530
    %v1548 = vrot.slane %v1343, 3
    %1549 = vrot.lane.b32.xlu0 %v1548, 64
    %v1550 = vpop.permute.xlu0 %1549
    %1552 = vst.msk [vmem:[#allocation2 + $0x78] sm:$0xc0] %vm1398, %v1550
    %1553 = vst.msk [vmem:[#allocation2 + $0xa0] sm:$0xf] %vm1400, %v1550
    %v1554 = vrot.slane %v1343, 4
    %1556 = vst.msk [vmem:[#allocation2 + $0x80] sm:$0xc0] %vm1390, %v1554
    %1557 = vst.msk [vmem:[#allocation2 + $0xa8] sm:$0xf] %vm1392, %v1554
    %1558 = vrot.lane.b32.xlu0 %v1542, 64
    %v1559 = vpop.permute.xlu0 %1558
    %1561 = vst.msk [vmem:[#allocation2 + $0x80] sm:$0xc0] %vm1398, %v1559
    %1562 = vst.msk [vmem:[#allocation2 + $0xa8] sm:$0xf] %vm1400, %v1559
    %v1563 = vrot.slane %v1344, 3
    %1565 = vst.msk [vmem:[#allocation2 + $0x88] sm:$0xc0] %vm1390, %v1563
    %1566 = vst.msk [vmem:[#allocation2 + $0xb0] sm:$0xf] %vm1392, %v1563
    %v1567 = vrot.slane %v1344, 4
    %1568 = vrot.lane.b32.xlu0 %v1567, 64
    %v1569 = vpop.permute.xlu0 %1568
    %1571 = vst.msk [vmem:[#allocation2 + $0x88] sm:$0xc0] %vm1398, %v1569
    %1572 = vst.msk [vmem:[#allocation2 + $0xb0] sm:$0xf] %vm1400, %v1569
    %v1574 = vrot.slane %v1345, 2
    %1576 = vst.msk [vmem:[#allocation2 + $0x90] sm:$0xc0] %vm1390, %v1574
    %1577 = vst.msk [vmem:[#allocation2 + $0xb8] sm:$0xf] %vm1392, %v1574
    %v1578 = vrot.slane %v1345, 3
    %1579 = vrot.lane.b32.xlu0 %v1578, 64
    %v1580 = vpop.permute.xlu0 %1579
    %1582 = vst.msk [vmem:[#allocation2 + $0x90] sm:$0xc0] %vm1398, %v1580
    %1583 = vst.msk [vmem:[#allocation2 + $0xb8] sm:$0xf] %vm1400, %v1580
    %v1584 = vrot.slane %v1345, 4
    %1586 = vst.msk [vmem:[#allocation2 + $0x98] sm:$0xc0] %vm1390, %v1584
    %1587 = vst.msk [vmem:[#allocation2 + $0xc0] sm:$0xf] %vm1392, %v1584
    %v1589 = vrot.slane %v1346, 4
    %1591 = vst.msk [vmem:[#allocation2 + $0xa0] sm:$0xf0] %vm1437, %v1589
    %1592 = vst.msk [vmem:[#allocation2 + $0xc8] sm:$0x3] %vm1439, %v1589
    %v1593 = vrot.slane %v1346, 5
    %1594 = vrot.lane.b32.xlu0 %v1593, 64
    %v1595 = vpop.permute.xlu0 %1594
    %1597 = vst.msk [vmem:[#allocation2 + $0xa0] sm:$0xf0] %vm1445, %v1595
    %1598 = vst.msk [vmem:[#allocation2 + $0xc8] sm:$0x3] %vm1447, %v1595
    %v1599 = vrot.slane %v1346, 6
    %1601 = vst.msk [vmem:[#allocation2 + $0xa8] sm:$0xf0] %vm1437, %v1599
    %1602 = vst.msk [vmem:[#allocation2 + $0xd0] sm:$0x3] %vm1439, %v1599
    %v1604 = vrot.slane %v1347, 4
    %1605 = vrot.lane.b32.xlu0 %v1604, 64
    %v1606 = vpop.permute.xlu0 %1605
    %1608 = vst.msk [vmem:[#allocation2 + $0xa8] sm:$0xf0] %vm1445, %v1606
    %1609 = vst.msk [vmem:[#allocation2 + $0xd0] sm:$0x3] %vm1447, %v1606
    %v1610 = vrot.slane %v1347, 5
    %1612 = vst.msk [vmem:[#allocation2 + $0xb0] sm:$0xf0] %vm1437, %v1610
    %1613 = vst.msk [vmem:[#allocation2 + $0xd8] sm:$0x3] %vm1439, %v1610
    %v1614 = vrot.slane %v1347, 6
    %1615 = vrot.lane.b32.xlu0 %v1614, 64
    %v1616 = vpop.permute.xlu0 %1615
    %1618 = vst.msk [vmem:[#allocation2 + $0xb0] sm:$0xf0] %vm1445, %v1616
    %1619 = vst.msk [vmem:[#allocation2 + $0xd8] sm:$0x3] %vm1447, %v1616
    %v1621 = vrot.slane %v1348, 4
    %1623 = vst.msk [vmem:[#allocation2 + $0xb8] sm:$0xf0] %vm1437, %v1621
    %1624 = vst.msk [vmem:[#allocation2 + $0xe0] sm:$0x3] %vm1439, %v1621
    %v1625 = vrot.slane %v1348, 5
    %1626 = vrot.lane.b32.xlu0 %v1625, 64
    %v1627 = vpop.permute.xlu0 %1626
    %1629 = vst.msk [vmem:[#allocation2 + $0xb8] sm:$0xf0] %vm1445, %v1627
    %1630 = vst.msk [vmem:[#allocation2 + $0xe0] sm:$0x3] %vm1447, %v1627
    %v1631 = vrot.slane %v1348, 6
    %1633 = vst.msk [vmem:[#allocation2 + $0xc0] sm:$0xf0] %vm1437, %v1631
    %1634 = vst.msk [vmem:[#allocation2 + $0xe8] sm:$0x3] %vm1439, %v1631
    %1636 = vst.msk [vmem:[#allocation2 + $0xc8] sm:$0xfc] %vm1484, %v1614
    %v1637 = vrot.slane %v1347, 7
    %1638 = vrot.lane.b32.xlu0 %v1637, 64
    %v1639 = vpop.permute.xlu0 %1638
    %1641 = vst.msk [vmem:[#allocation2 + $0xc8] sm:$0xfc] %vm1490, %v1639
    %1642 = vst.msk [vmem:[#allocation2 + $0xd0] sm:$0xfc] %vm1484, %v1347
    %1643 = vrot.lane.b32.xlu0 %v1631, 64
    %v1644 = vpop.permute.xlu0 %1643
    %1646 = vst.msk [vmem:[#allocation2 + $0xd0] sm:$0xfc] %vm1490, %v1644
    %v1647 = vrot.slane %v1348, 7
    %1649 = vst.msk [vmem:[#allocation2 + $0xd8] sm:$0xfc] %vm1484, %v1647
    %1650 = vrot.lane.b32.xlu0 %v1348, 64
    %v1651 = vpop.permute.xlu0 %1650
    %1653 = vst.msk [vmem:[#allocation2 + $0xd8] sm:$0xfc] %vm1490, %v1651
    %v1655 = vrot.slane %v1349, 6
    %1657 = vst.msk [vmem:[#allocation2 + $0xe0] sm:$0xfc] %vm1484, %v1655
    %v1658 = vrot.slane %v1349, 7
    %1659 = vrot.lane.b32.xlu0 %v1658, 64
    %v1660 = vpop.permute.xlu0 %1659
    %1662 = vst.msk [vmem:[#allocation2 + $0xe0] sm:$0xfc] %vm1490, %v1660
    %1663 = vst.msk [vmem:[#allocation2 + $0xe8] sm:$0xfc] %vm1484, %v1349
    %1664 = vst.msk [vmem:[#allocation2 + $0xf0] sm:$0x3f] %vm1354, %v1348
    %v1665 = vrot.slane %v1348, 1
    %1666 = vrot.lane.b32.xlu0 %v1665, 64
    %v1667 = vpop.permute.xlu0 %1666
    %1669 = vst.msk [vmem:[#allocation2 + $0xf0] sm:$0x3f] %vm1361, %v1667
    %v1670 = vrot.slane %v1348, 2
    %1672 = vst.msk [vmem:[#allocation2 + $0xf8] sm:$0x3f] %vm1354, %v1670
    %1673 = vrot.lane.b32.xlu0 %v1349, 64
    %v1674 = vpop.permute.xlu0 %1673
    %1676 = vst.msk [vmem:[#allocation2 + $0xf8] sm:$0x3f] %vm1361, %v1674
    %v1677 = vrot.slane %v1349, 1
    %1679 = vst.msk [vmem:[#allocation2 + $0x100] sm:$0x3f] %vm1354, %v1677
    %v1680 = vrot.slane %v1349, 2
    %1681 = vrot.lane.b32.xlu0 %v1680, 64
    %v1682 = vpop.permute.xlu0 %1681
    %1684 = vst.msk [vmem:[#allocation2 + $0x100] sm:$0x3f] %vm1361, %v1682
    %1685 = vst.msk [vmem:[#allocation2 + $0x108] sm:$0x3f] %vm1354, %v1350
    %v1687 = vrot.slane %v1350, 1
    %1688 = vrot.lane.b32.xlu0 %v1687, 64
    %v1689 = vpop.permute.xlu0 %1688
    %1691 = vst.msk [vmem:[#allocation2 + $0x108] sm:$0x3f] %vm1361, %v1689
    %v1692 = vrot.slane %v1350, 2
    %1694 = vst.msk [vmem:[#allocation2 + $0x110] sm:$0x3f] %vm1354, %v1692
    %1696 = vst.msk [vmem:[#allocation2 + $0xf0] sm:$0xc0] %vm1390, %v1680
    %1697 = vst.msk [vmem:[#allocation2 + $0x118] sm:$0xf] %vm1392, %v1680
    %v1698 = vrot.slane %v1349, 3
    %1699 = vrot.lane.b32.xlu0 %v1698, 64
    %v1700 = vpop.permute.xlu0 %1699
    %1702 = vst.msk [vmem:[#allocation2 + $0xf0] sm:$0xc0] %vm1398, %v1700
    %1703 = vst.msk [vmem:[#allocation2 + $0x118] sm:$0xf] %vm1400, %v1700
    %v1704 = vrot.slane %v1349, 4
    %1706 = vst.msk [vmem:[#allocation2 + $0xf8] sm:$0xc0] %vm1390, %v1704
    %1707 = vst.msk [vmem:[#allocation2 + $0x120] sm:$0xf] %vm1392, %v1704
    %1708 = vrot.lane.b32.xlu0 %v1692, 64
    %v1709 = vpop.permute.xlu0 %1708
    %1711 = vst.msk [vmem:[#allocation2 + $0xf8] sm:$0xc0] %vm1398, %v1709
    %1712 = vst.msk [vmem:[#allocation2 + $0x120] sm:$0xf] %vm1400, %v1709
    %v1713 = vrot.slane %v1350, 3
    %1715 = vst.msk [vmem:[#allocation2 + $0x100] sm:$0xc0] %vm1390, %v1713
    %1716 = vst.msk [vmem:[#allocation2 + $0x128] sm:$0xf] %vm1392, %v1713
    %v1717 = vrot.slane %v1350, 4
    %1718 = vrot.lane.b32.xlu0 %v1717, 64
    %v1719 = vpop.permute.xlu0 %1718
    %1721 = vst.msk [vmem:[#allocation2 + $0x100] sm:$0xc0] %vm1398, %v1719
    %1722 = vst.msk [vmem:[#allocation2 + $0x128] sm:$0xf] %vm1400, %v1719
    %v1724 = vrot.slane %v1351, 2
    %1726 = vst.msk [vmem:[#allocation2 + $0x108] sm:$0xc0] %vm1390, %v1724
    %1727 = vst.msk [vmem:[#allocation2 + $0x130] sm:$0xf] %vm1392, %v1724
    %v1728 = vrot.slane %v1351, 3
    %1729 = vrot.lane.b32.xlu0 %v1728, 64
    %v1730 = vpop.permute.xlu0 %1729
    %1732 = vst.msk [vmem:[#allocation2 + $0x108] sm:$0xc0] %vm1398, %v1730
    %1733 = vst.msk [vmem:[#allocation2 + $0x130] sm:$0xf] %vm1400, %v1730
    %v1734 = vrot.slane %v1351, 4
    %1736 = vst.msk [vmem:[#allocation2 + $0x110] sm:$0xc0] %vm1390, %v1734
    %1737 = vst.msk [vmem:[#allocation2 + $0x138] sm:$0xf] %vm1392, %v1734
    %1739 = vst.msk [vmem:[#allocation2 + $0x118] sm:$0xf0] %vm1437, %v1717
    %1740 = vst.msk [vmem:[#allocation2 + $0x140] sm:$0x3] %vm1439, %v1717
    %v1741 = vrot.slane %v1350, 5
    %1742 = vrot.lane.b32.xlu0 %v1741, 64
    %v1743 = vpop.permute.xlu0 %1742
    %1745 = vst.msk [vmem:[#allocation2 + $0x118] sm:$0xf0] %vm1445, %v1743
    %1746 = vst.msk [vmem:[#allocation2 + $0x140] sm:$0x3] %vm1447, %v1743
    %v1747 = vrot.slane %v1350, 6
    %1749 = vst.msk [vmem:[#allocation2 + $0x120] sm:$0xf0] %vm1437, %v1747
    %1750 = vst.msk [vmem:[#allocation2 + $0x148] sm:$0x3] %vm1439, %v1747
    %1751 = vrot.lane.b32.xlu0 %v1734, 64
    %v1752 = vpop.permute.xlu0 %1751
    %1754 = vst.msk [vmem:[#allocation2 + $0x120] sm:$0xf0] %vm1445, %v1752
    %1755 = vst.msk [vmem:[#allocation2 + $0x148] sm:$0x3] %vm1447, %v1752
    %v1756 = vrot.slane %v1351, 5
    %1758 = vst.msk [vmem:[#allocation2 + $0x128] sm:$0xf0] %vm1437, %v1756
    %1759 = vst.msk [vmem:[#allocation2 + $0x150] sm:$0x3] %vm1439, %v1756
    %v1760 = vrot.slane %v1351, 6
    %1761 = vrot.lane.b32.xlu0 %v1760, 64
    %v1762 = vpop.permute.xlu0 %1761
    %1764 = vst.msk [vmem:[#allocation2 + $0x128] sm:$0xf0] %vm1445, %v1762
    %1765 = vst.msk [vmem:[#allocation2 + $0x150] sm:$0x3] %vm1447, %v1762
    %v1767 = vrot.slane %v1352, 4
    %1769 = vst.msk [vmem:[#allocation2 + $0x130] sm:$0xf0] %vm1437, %v1767
    %1770 = vst.msk [vmem:[#allocation2 + $0x158] sm:$0x3] %vm1439, %v1767
    %v1771 = vrot.slane %v1352, 5
    %1772 = vrot.lane.b32.xlu0 %v1771, 64
    %v1773 = vpop.permute.xlu0 %1772
    %1775 = vst.msk [vmem:[#allocation2 + $0x130] sm:$0xf0] %vm1445, %v1773
    %1776 = vst.msk [vmem:[#allocation2 + $0x158] sm:$0x3] %vm1447, %v1773
    %v1777 = vrot.slane %v1352, 6
    %1779 = vst.msk [vmem:[#allocation2 + $0x138] sm:$0xf0] %vm1437, %v1777
    %1780 = vst.msk [vmem:[#allocation2 + $0x160] sm:$0x3] %vm1439, %v1777
    %1782 = vst.msk [vmem:[#allocation2 + $0x140] sm:$0xfc] %vm1484, %v1760
    %v1783 = vrot.slane %v1351, 7
    %1784 = vrot.lane.b32.xlu0 %v1783, 64
    %v1785 = vpop.permute.xlu0 %1784
    %1787 = vst.msk [vmem:[#allocation2 + $0x140] sm:$0xfc] %vm1490, %v1785
    %1788 = vst.msk [vmem:[#allocation2 + $0x148] sm:$0xfc] %vm1484, %v1351
    %1789 = vrot.lane.b32.xlu0 %v1777, 64
    %v1790 = vpop.permute.xlu0 %1789
    %1792 = vst.msk [vmem:[#allocation2 + $0x148] sm:$0xfc] %vm1490, %v1790
    %v1793 = vrot.slane %v1352, 7
    %1795 = vst.msk [vmem:[#allocation2 + $0x150] sm:$0xfc] %vm1484, %v1793
    %1796 = vrot.lane.b32.xlu0 %v1352, 64
    %v1797 = vpop.permute.xlu0 %1796
    %1799 = vst.msk [vmem:[#allocation2 + $0x150] sm:$0xfc] %vm1490, %v1797
    %v1801 = vrot.slane %v1353, 6
    %1803 = vst.msk [vmem:[#allocation2 + $0x158] sm:$0xfc] %vm1484, %v1801
    %v1804 = vrot.slane %v1353, 7
    %1805 = vrot.lane.b32.xlu0 %v1804, 64
    %v1806 = vpop.permute.xlu0 %1805
    %1808 = vst.msk [vmem:[#allocation2 + $0x158] sm:$0xfc] %vm1490, %v1806
    %1809 = vst.msk [vmem:[#allocation2 + $0x160] sm:$0xfc] %vm1484, %v1353
    %v1810 = vld [vmem:[#allocation2] sm:$0xff]
    %v1811 = vld [vmem:[#allocation2 + $0x8] sm:$0xff]
    %v1812 = vld [vmem:[#allocation2 + $0x10] sm:$0xff]
    %v1813 = vld [vmem:[#allocation2 + $0x18] sm:$0xff]
    %v1814 = vld [vmem:[#allocation2 + $0x20] sm:$0xff]
    %v1815 = vld [vmem:[#allocation2 + $0x28] sm:$0xff]
    %v1816 = vld [vmem:[#allocation2 + $0x30] sm:$0xff]
    %v1817 = vld [vmem:[#allocation2 + $0x38] sm:$0xff]
    %v1818 = vld [vmem:[#allocation2 + $0x40] sm:$0xff]
    %v1819 = vld [vmem:[#allocation2 + $0x48] sm:$0xff]
    %v1820 = vld [vmem:[#allocation2 + $0x50] sm:$0xff]
    %v1821 = vld [vmem:[#allocation2 + $0x58] sm:$0xff]
    %v1822 = vld [vmem:[#allocation2 + $0x60] sm:$0xff]
    %v1823 = vld [vmem:[#allocation2 + $0x68] sm:$0xff]
    %v1824 = vld [vmem:[#allocation2 + $0x70] sm:$0xff]
    %v1825 = vld [vmem:[#allocation2 + $0x78] sm:$0xff]
    %v1826 = vld [vmem:[#allocation2 + $0x80] sm:$0xff]
    %v1827 = vld [vmem:[#allocation2 + $0x88] sm:$0xff]
    %v1828 = vld [vmem:[#allocation2 + $0x90] sm:$0xff]
    %v1829 = vld [vmem:[#allocation2 + $0x98] sm:$0xff]
    %v1830 = vld [vmem:[#allocation2 + $0xa0] sm:$0xff]
    %v1831 = vld [vmem:[#allocation2 + $0xa8] sm:$0xff]
    %v1832 = vld [vmem:[#allocation2 + $0xb0] sm:$0xff]
    %v1833 = vld [vmem:[#allocation2 + $0xb8] sm:$0xff]
    %v1834 = vld [vmem:[#allocation2 + $0xc0] sm:$0xff]
    %v1835 = vld [vmem:[#allocation2 + $0xc8] sm:$0xff]
    %v1836 = vld [vmem:[#allocation2 + $0xd0] sm:$0xff]
    %v1837 = vld [vmem:[#allocation2 + $0xd8] sm:$0xff]
    %v1838 = vld [vmem:[#allocation2 + $0xe0] sm:$0xff]
    %v1839 = vld [vmem:[#allocation2 + $0xe8] sm:$0xff]
    %v1840 = vld [vmem:[#allocation2 + $0xf0] sm:$0xff]
    %v1841 = vld [vmem:[#allocation2 + $0xf8] sm:$0xff]
    %v1842 = vld [vmem:[#allocation2 + $0x100] sm:$0xff]
    %v1843 = vld [vmem:[#allocation2 + $0x108] sm:$0xff]
    %v1844 = vld [vmem:[#allocation2 + $0x110] sm:$0xff]
    %v1845 = vld [vmem:[#allocation2 + $0x118] sm:$0xff]
    %v1846 = vld [vmem:[#allocation2 + $0x120] sm:$0xff]
    %v1847 = vld [vmem:[#allocation2 + $0x128] sm:$0xff]
    %v1848 = vld [vmem:[#allocation2 + $0x130] sm:$0xff]
    %v1849 = vld [vmem:[#allocation2 + $0x138] sm:$0xff]
    %v1850 = vld [vmem:[#allocation2 + $0x140] sm:$0xff]
    %v1851 = vld [vmem:[#allocation2 + $0x148] sm:$0xff]
    %v1852 = vld [vmem:[#allocation2 + $0x150] sm:$0xff]
    %v1853 = vld [vmem:[#allocation2 + $0x158] sm:$0xff]
    %v1854 = vld [vmem:[#allocation2 + $0x160] sm:$0xff]
    %v1855 = vpack.c.bf16 %v1815, %v1810
    %v1856 = vpack.c.bf16 %v1816, %v1811
    %v1857 = vpack.c.bf16 %v1817, %v1812
    %v1858 = vpack.c.bf16 %v1818, %v1813
    %v1859 = vpack.c.bf16 %v1819, %v1814
    %v1860 = vpack.c.bf16 %v1825, %v1820
    %v1861 = vpack.c.bf16 %v1826, %v1821
    %v1862 = vpack.c.bf16 %v1827, %v1822
    %v1863 = vpack.c.bf16 %v1828, %v1823
    %v1864 = vpack.c.bf16 %v1829, %v1824
    %v1865 = vpack.c.bf16 %v1835, %v1830
    %v1866 = vpack.c.bf16 %v1836, %v1831
    %v1867 = vpack.c.bf16 %v1837, %v1832
    %v1868 = vpack.c.bf16 %v1838, %v1833
    %v1869 = vpack.c.bf16 %v1839, %v1834
    %v1870 = vpack.c.bf16 %v1845, %v1840
    %v1871 = vpack.c.bf16 %v1846, %v1841
    %v1872 = vpack.c.bf16 %v1847, %v1842
    %v1873 = vpack.c.bf16 %v1848, %v1843
    %v1874 = vpack.c.bf16 %v1849, %v1844
    %v1875 = vpack.c.bf16 %v1850, %v1850
    %v1876 = vpack.c.bf16 %v1851, %v1851
    %v1877 = vpack.c.bf16 %v1852, %v1852
    %v1878 = vpack.c.bf16 %v1853, %v1853
    %v1879 = vpack.c.bf16 %v1854, %v1854
    %v1880 = vld [vmem:[%s4] sm:$0xf]
    %v1881 = vld [vmem:[%s4 + $0x4] sm:$0xf]
    %v1882 = vld [vmem:[%s4 + $0x8] sm:$0xf]
    %v1883 = vld [vmem:[%s4 + $0xc] sm:$0xf]
    %v1884 = vld [vmem:[%s4 + $0x10] sm:$0xf]
    %v1885 = vld [vmem:[%s4 + $0x14] sm:$0xf]
    %v1886 = vld [vmem:[%s4 + $0x18] sm:$0xf]
    %v1887 = vld [vmem:[%s4 + $0x1c] sm:$0xf]
    %v1888 = vld [vmem:[%s4 + $0x20] sm:$0xf]
    %v1889 = vld [vmem:[%s4 + $0x24] sm:$0xf]
    %v1890 = vld [vmem:[%s4 + $0x28] sm:$0xf]
    %v1891 = vld [vmem:[%s4 + $0x2c] sm:$0xf]
    %v1892 = vld [vmem:[%s4 + $0x30] sm:$0xf]
    %v1893 = vld [vmem:[%s4 + $0x34] sm:$0xf]
    %v1894 = vld [vmem:[%s4 + $0x38] sm:$0xf]
    %v1895 = vld [vmem:[%s4 + $0x3c] sm:$0xf]
    %v1896 = vld [vmem:[%s4 + $0x40] sm:$0xf]
    %v1897 = vld [vmem:[%s4 + $0x44] sm:$0xf]
    %v1898 = vld [vmem:[%s4 + $0x48] sm:$0xf]
    %v1899 = vld [vmem:[%s4 + $0x4c] sm:$0xf]
    %v1900 = vld [vmem:[%s4 + $0x50] sm:$0xf]
    %v1901 = vld [vmem:[%s4 + $0x54] sm:$0xf]
    %v1902 = vld [vmem:[%s4 + $0x58] sm:$0xf]
    %v1903 = vld [vmem:[%s4 + $0x5c] sm:$0xf]
    %v1904 = vld [vmem:[%s4 + $0x60] sm:$0xf]
    %v1905 = vld [vmem:[%s4 + $0x64] sm:$0xf]
    %v1906 = vld [vmem:[%s4 + $0x68] sm:$0xf]
    %v1907 = vld [vmem:[%s4 + $0x6c] sm:$0xf]
    %v1908 = vld [vmem:[%s4 + $0x70] sm:$0xf]
    %v1909 = vld [vmem:[%s4 + $0x74] sm:$0xf]
    %v1910 = vld [vmem:[%s4 + $0x78] sm:$0xf]
    %v1911 = vld [vmem:[%s4 + $0x7c] sm:$0xf]
    %v1912 = vld [vmem:[%s4 + $0x80] sm:$0xf]
    %v1913 = vld [vmem:[%s4 + $0x84] sm:$0xf]
    %v1914 = vld [vmem:[%s4 + $0x88] sm:$0xf]
    %v1915 = vld [vmem:[%s4 + $0x8c] sm:$0xf]
    %v1916 = vld [vmem:[%s4 + $0x90] sm:$0xf]
    %v1917 = vld [vmem:[%s4 + $0x94] sm:$0xf]
    %v1918 = vld [vmem:[%s4 + $0x98] sm:$0xf]
    %v1919 = vld [vmem:[%s4 + $0x9c] sm:$0xf]
    %v1920 = vld [vmem:[%s4 + $0xa0] sm:$0xf]
    %v1921 = vld [vmem:[%s4 + $0xa4] sm:$0xf]
    %v1922 = vld [vmem:[%s4 + $0xa8] sm:$0xf]
    %v1923 = vld [vmem:[%s4 + $0xac] sm:$0xf]
    %v1924 = vld [vmem:[%s4 + $0xb0] sm:$0xf]
    %v1925 = vld [vmem:[%s4 + $0xb4] sm:$0xf]
    %v1926 = vld [vmem:[%s4 + $0xb8] sm:$0xf]
    %v1927 = vld [vmem:[%s4 + $0xbc] sm:$0xf]
    %v1928 = vld [vmem:[%s4 + $0xc0] sm:$0xf]
    %v1929 = vld [vmem:[%s4 + $0xc4] sm:$0xf]
    %v1930 = vld [vmem:[%s4 + $0xc8] sm:$0xf]
    %v1931 = vld [vmem:[%s4 + $0xcc] sm:$0xf]
    %v1932 = vld [vmem:[%s4 + $0xd0] sm:$0xf]
    %v1933 = vld [vmem:[%s4 + $0xd4] sm:$0xf]
    %v1934 = vld [vmem:[%s4 + $0xd8] sm:$0xf]
    %v1935 = vld [vmem:[%s4 + $0xdc] sm:$0xf]
    %v1936 = vld [vmem:[%s4 + $0xe0] sm:$0xf]
    %v1937 = vld [vmem:[%s4 + $0xe4] sm:$0xf]
    %v1938 = vld [vmem:[%s4 + $0xe8] sm:$0xf]
    %v1939 = vld [vmem:[%s4 + $0xec] sm:$0xf]
    %v1940 = vld [vmem:[%s4 + $0xf0] sm:$0xf]
    %v1941 = vld [vmem:[%s4 + $0xf4] sm:$0xf]
    %v1942 = vld [vmem:[%s4 + $0xf8] sm:$0xf]
    %v1943 = vld [vmem:[%s4 + $0xfc] sm:$0xf]
    %v1944 = vld [vmem:[%s4 + $0x100] sm:$0xf]
    %v1945 = vld [vmem:[%s4 + $0x104] sm:$0xf]
    %v1946 = vld [vmem:[%s4 + $0x108] sm:$0xf]
    %v1947 = vld [vmem:[%s4 + $0x10c] sm:$0xf]
    %v1948 = vld [vmem:[%s4 + $0x110] sm:$0xf]
    %v1949 = vld [vmem:[%s4 + $0x114] sm:$0xf]
    %v1950 = vld [vmem:[%s4 + $0x118] sm:$0xf]
    %v1951 = vld [vmem:[%s4 + $0x11c] sm:$0xf]
    %v1952 = vld [vmem:[%s5] sm:$0x1]
    %v1954 = vlaneseq
    %v1955 = vshrl.u32 %v1954, 7
    %v1956 = vsub.s32 0, %v1955
    %v1957 = vrot.slane %v1952, %v1956
    %v2031 = vunpack.c.l.b16 %v1880
    %v2032 = vunpack.c.l.b16 %v1881
    %v2033 = vunpack.c.l.b16 %v1882
    %v2034 = vunpack.c.l.b16 %v1883
    %v2035 = vunpack.c.l.b16 %v1884
    %v2036 = vunpack.c.l.b16 %v1885
    %v2037 = vunpack.c.l.b16 %v1886
    %v2038 = vunpack.c.l.b16 %v1887
    %v2039 = vunpack.c.l.b16 %v1888
    %v2040 = vunpack.c.l.b16 %v1889
    %v2041 = vunpack.c.l.b16 %v1890
    %v2042 = vunpack.c.l.b16 %v1891
    %v2043 = vunpack.c.l.b16 %v1892
    %v2044 = vunpack.c.l.b16 %v1893
    %v2045 = vunpack.c.l.b16 %v1894
    %v2046 = vunpack.c.l.b16 %v1895
    %v2047 = vunpack.c.l.b16 %v1896
    %v2048 = vunpack.c.l.b16 %v1897
    %v2049 = vunpack.c.l.b16 %v1898
    %v2050 = vunpack.c.l.b16 %v1899
    %v2051 = vunpack.c.l.b16 %v1900
    %v2052 = vunpack.c.l.b16 %v1901
    %v2053 = vunpack.c.l.b16 %v1902
    %v2054 = vunpack.c.l.b16 %v1903
    %v2055 = vunpack.c.l.b16 %v1904
    %v2056 = vunpack.c.l.b16 %v1905
    %v2057 = vunpack.c.l.b16 %v1906
    %v2058 = vunpack.c.l.b16 %v1907
    %v2059 = vunpack.c.l.b16 %v1908
    %v2060 = vunpack.c.l.b16 %v1909
    %v2061 = vunpack.c.l.b16 %v1910
    %v2062 = vunpack.c.l.b16 %v1911
    %v2063 = vunpack.c.l.b16 %v1912
    %v2064 = vunpack.c.l.b16 %v1913
    %v2065 = vunpack.c.l.b16 %v1914
    %v2066 = vunpack.c.l.b16 %v1915
    %v2067 = vunpack.c.l.b16 %v1916
    %v2068 = vunpack.c.l.b16 %v1917
    %v2069 = vunpack.c.l.b16 %v1918
    %v2070 = vunpack.c.l.b16 %v1919
    %v2071 = vunpack.c.l.b16 %v1920
    %v2072 = vunpack.c.l.b16 %v1921
    %v2073 = vunpack.c.l.b16 %v1922
    %v2074 = vunpack.c.l.b16 %v1923
    %v2075 = vunpack.c.l.b16 %v1924
    %v2076 = vunpack.c.l.b16 %v1925
    %v2077 = vunpack.c.l.b16 %v1926
    %v2078 = vunpack.c.l.b16 %v1927
    %v2079 = vunpack.c.l.b16 %v1928
    %v2080 = vunpack.c.l.b16 %v1929
    %v2081 = vunpack.c.l.b16 %v1930
    %v2082 = vunpack.c.l.b16 %v1931
    %v2083 = vunpack.c.l.b16 %v1932
    %v2084 = vunpack.c.l.b16 %v1933
    %v2085 = vunpack.c.l.b16 %v1934
    %v2086 = vunpack.c.l.b16 %v1935
    %v2087 = vunpack.c.l.b16 %v1936
    %v2088 = vunpack.c.l.b16 %v1937
    %v2089 = vunpack.c.l.b16 %v1938
    %v2090 = vunpack.c.l.b16 %v1939
    %v2091 = vunpack.c.l.b16 %v1940
    %v2092 = vunpack.c.l.b16 %v1941
    %v2093 = vunpack.c.l.b16 %v1942
    %v2094 = vunpack.c.l.b16 %v1943
    %v2095 = vunpack.c.l.b16 %v1944
    %v2096 = vunpack.c.l.b16 %v1945
    %v2097 = vunpack.c.l.b16 %v1946
    %v2098 = vunpack.c.l.b16 %v1947
    %v2099 = vunpack.c.l.b16 %v1948
    %v2100 = vunpack.c.l.b16 %v1949
    %v2101 = vunpack.c.l.b16 %v1950
    %v2102 = vunpack.c.l.b16 %v1951
    %v2103 = vpack.c.b16 %v2032, %v2031
    %v2104 = vpack.c.b16 %v2034, %v2033
    %v2105 = vpack.c.b16 %v2036, %v2035
    %v2106 = vpack.c.b16 %v2038, %v2037
    %v2107 = vpack.c.b16 %v2040, %v2039
    %v2108 = vpack.c.b16 %v2042, %v2041
    %v2109 = vpack.c.b16 %v2044, %v2043
    %v2110 = vpack.c.b16 %v2046, %v2045
    %v2111 = vpack.c.b16 %v2048, %v2047
    %v2112 = vpack.c.b16 %v2050, %v2049
    %v2113 = vpack.c.b16 %v2052, %v2051
    %v2114 = vpack.c.b16 %v2054, %v2053
    %v2115 = vpack.c.b16 %v2056, %v2055
    %v2116 = vpack.c.b16 %v2058, %v2057
    %v2117 = vpack.c.b16 %v2060, %v2059
    %v2118 = vpack.c.b16 %v2062, %v2061
    %v2119 = vpack.c.b16 %v2064, %v2063
    %v2120 = vpack.c.b16 %v2066, %v2065
    %v2121 = vpack.c.b16 %v2068, %v2067
    %v2122 = vpack.c.b16 %v2070, %v2069
    %v2123 = vpack.c.b16 %v2072, %v2071
    %v2124 = vpack.c.b16 %v2074, %v2073
    %v2125 = vpack.c.b16 %v2076, %v2075
    %v2126 = vpack.c.b16 %v2078, %v2077
    %v2127 = vpack.c.b16 %v2080, %v2079
    %v2128 = vpack.c.b16 %v2082, %v2081
    %v2129 = vpack.c.b16 %v2084, %v2083
    %v2130 = vpack.c.b16 %v2086, %v2085
    %v2131 = vpack.c.b16 %v2088, %v2087
    %v2132 = vpack.c.b16 %v2090, %v2089
    %v2133 = vpack.c.b16 %v2092, %v2091
    %v2134 = vpack.c.b16 %v2094, %v2093
    %v2135 = vpack.c.b16 %v2096, %v2095
    %v2136 = vpack.c.b16 %v2098, %v2097
    %v2137 = vpack.c.b16 %v2100, %v2099
    %v2138 = vpack.c.b16 %v2102, %v2101
    %vm2175 = vcmask 523264
    %v2177 = vsel %vm2175, %v1859, 0
    %v2180 = vsel %vm2175, %v1864, 0
    %v2183 = vsel %vm2175, %v1869, 0
    %v2186 = vsel %vm2175, %v1874, 0
    %v2189 = vsel %vm2175, %v1879, 0
    %2191 = vmatprep.subr.bf16.mxu0 0
    %2192 = vmatpush1.bf16.msra.mxu0 %v2110
    %2193 = vmatprep.subr.bf16.mxu0 0
    %2194 = vmatpush1.bf16.msra.mxu0 %v2109
    %2195 = vmatprep.subr.bf16.mxu0 0
    %2196 = vmatpush1.bf16.msra.mxu0 %v2108
    %2197 = vmatprep.subr.bf16.mxu0 0
    %2198 = vmatpush1.bf16.msra.mxu0 %v2107
    %2199 = vmatprep.subr.bf16.mxu0 0
    %2200 = vmatpush1.bf16.msra.mxu0 %v2106
    %2201 = vmatprep.subr.bf16.mxu0 0
    %2202 = vmatpush1.bf16.msra.mxu0 %v2105
    %2203 = vmatprep.subr.bf16.mxu0 0
    %2204 = vmatpush1.bf16.msra.mxu0 %v2104
    %2205 = vmatprep.subr.bf16.mxu0 0
    %2206 = vmatpush1.bf16.msra.mxu0 %v2103
    %2207 = vmatprep.subr.bf16.mxu0 0
    %2208 = vmatpush2.bf16.msra.mxu0 %v2118
    %2209 = vmatprep.subr.bf16.mxu0 0
    %2210 = vmatpush2.bf16.msra.mxu0 %v2117
    %2211 = vmatprep.subr.bf16.mxu0 0
    %2212 = vmatpush2.bf16.msra.mxu0 %v2116
    %2213 = vmatprep.subr.bf16.mxu0 0
    %2214 = vmatpush2.bf16.msra.mxu0 %v2115
    %2215 = vmatprep.subr.bf16.mxu0 0
    %2216 = vmatpush2.bf16.msra.mxu0 %v2114
    %2217 = vmatprep.subr.bf16.mxu0 0
    %2218 = vmatpush2.bf16.msra.mxu0 %v2113
    %2219 = vmatprep.subr.bf16.mxu0 0
    %2220 = vmatpush2.bf16.msra.mxu0 %v2112
    %2221 = vmatprep.subr.bf16.mxu0 0
    %2222 = vmatpush2.bf16.msra.mxu0 %v2111
    %2223 = vmatprep.mubr.bf16.mxu0 %v1856
    %2224 = vmatmul.mubr.bf16.gmra.mxu0 %v1855
    %v2225 = vpop.f32.mrf.mxu0
    %v2226 = vadd.f32 %v1957, %v2225
    %v2227 = vpop.f32.mrf.mxu0
    %v2228 = vpop.f32.mrf.mxu0
    %v2229 = vadd.f32 %v1957, %v2228
    %v2230 = vpop.f32.mrf.mxu0
    %2231 = vmatprep.mubr.bf16.mxu0 %v1861
    %2232 = vmatmul.mubr.bf16.gmra.mxu0 %v1860
    %v2233 = vpop.f32.mrf.mxu0
    %v2234 = vadd.f32 %v1957, %v2233
    %v2235 = vpop.f32.mrf.mxu0
    %v2236 = vpop.f32.mrf.mxu0
    %v2237 = vadd.f32 %v1957, %v2236
    %v2238 = vpop.f32.mrf.mxu0
    %2239 = vmatprep.mubr.bf16.mxu0 %v1866
    %2240 = vmatmul.mubr.bf16.gmra.mxu0 %v1865
    %v2241 = vpop.f32.mrf.mxu0
    %v2242 = vadd.f32 %v1957, %v2241
    %v2243 = vpop.f32.mrf.mxu0
    %v2244 = vpop.f32.mrf.mxu0
    %v2245 = vadd.f32 %v1957, %v2244
    %v2246 = vpop.f32.mrf.mxu0
    %2247 = vmatprep.mubr.bf16.mxu0 %v1871
    %2248 = vmatmul.mubr.bf16.gmra.mxu0 %v1870
    %v2249 = vpop.f32.mrf.mxu0
    %v2250 = vadd.f32 %v1957, %v2249
    %v2251 = vpop.f32.mrf.mxu0
    %v2252 = vpop.f32.mrf.mxu0
    %v2253 = vadd.f32 %v1957, %v2252
    %v2254 = vpop.f32.mrf.mxu0
    %2255 = vmatprep.mubr.bf16.mxu0 %v1876
    %2256 = vmatmul.mubr.bf16.gmra.mxu0 %v1875
    %v2257 = vpop.f32.mrf.mxu0
    %v2258 = vadd.f32 %v1957, %v2257
    %v2259 = vpop.f32.mrf.mxu0
    %v2260 = vpop.f32.mrf.mxu0
    %v2261 = vpop.f32.mrf.mxu0
    %2262 = vdwg.mxu0
    %2263 = vmatprep.subr.bf16.mxu0 0
    %2264 = vmatpush1.bf16.msra.mxu0 %v2126
    %2265 = vmatprep.subr.bf16.mxu0 0
    %2266 = vmatpush1.bf16.msra.mxu0 %v2125
    %2267 = vmatprep.subr.bf16.mxu0 0
    %2268 = vmatpush1.bf16.msra.mxu0 %v2124
    %2269 = vmatprep.subr.bf16.mxu0 0
    %2270 = vmatpush1.bf16.msra.mxu0 %v2123
    %2271 = vmatprep.subr.bf16.mxu0 0
    %2272 = vmatpush1.bf16.msra.mxu0 %v2122
    %2273 = vmatprep.subr.bf16.mxu0 0
    %2274 = vmatpush1.bf16.msra.mxu0 %v2121
    %2275 = vmatprep.subr.bf16.mxu0 0
    %2276 = vmatpush1.bf16.msra.mxu0 %v2120
    %2277 = vmatprep.subr.bf16.mxu0 0
    %2278 = vmatpush1.bf16.msra.mxu0 %v2119
    %2279 = vmatprep.subr.bf16.mxu0 0
    %2280 = vmatpush2.bf16.msra.mxu0 %v2134
    %2281 = vmatprep.subr.bf16.mxu0 0
    %2282 = vmatpush2.bf16.msra.mxu0 %v2133
    %2283 = vmatprep.subr.bf16.mxu0 0
    %2284 = vmatpush2.bf16.msra.mxu0 %v2132
    %2285 = vmatprep.subr.bf16.mxu0 0
    %2286 = vmatpush2.bf16.msra.mxu0 %v2131
    %2287 = vmatprep.subr.bf16.mxu0 0
    %2288 = vmatpush2.bf16.msra.mxu0 %v2130
    %2289 = vmatprep.subr.bf16.mxu0 0
    %2290 = vmatpush2.bf16.msra.mxu0 %v2129
    %2291 = vmatprep.subr.bf16.mxu0 0
    %2292 = vmatpush2.bf16.msra.mxu0 %v2128
    %2293 = vmatprep.subr.bf16.mxu0 0
    %2294 = vmatpush2.bf16.msra.mxu0 %v2127
    %2295 = vmatprep.mubr.bf16.mxu0 %v1858
    %2296 = vmatmul.mubr.bf16.gmra.mxu0 %v1857
    %v2297 = vpop.f32.mrf.mxu0
    %v2298 = vadd.f32 %v2226, %v2297
    %v2299 = vpop.f32.mrf.mxu0
    %v2300 = vpop.f32.mrf.mxu0
    %v2301 = vadd.f32 %v2229, %v2300
    %v2302 = vpop.f32.mrf.mxu0
    %2303 = vmatprep.mubr.bf16.mxu0 %v1863
    %2304 = vmatmul.mubr.bf16.gmra.mxu0 %v1862
    %v2305 = vpop.f32.mrf.mxu0
    %v2306 = vadd.f32 %v2234, %v2305
    %v2307 = vpop.f32.mrf.mxu0
    %v2308 = vpop.f32.mrf.mxu0
    %v2309 = vadd.f32 %v2237, %v2308
    %v2310 = vpop.f32.mrf.mxu0
    %2311 = vmatprep.mubr.bf16.mxu0 %v1868
    %2312 = vmatmul.mubr.bf16.gmra.mxu0 %v1867
    %v2313 = vpop.f32.mrf.mxu0
    %v2314 = vadd.f32 %v2242, %v2313
    %v2315 = vpop.f32.mrf.mxu0
    %v2316 = vpop.f32.mrf.mxu0
    %v2317 = vadd.f32 %v2245, %v2316
    %v2318 = vpop.f32.mrf.mxu0
    %2319 = vmatprep.mubr.bf16.mxu0 %v1873
    %2320 = vmatmul.mubr.bf16.gmra.mxu0 %v1872
    %v2321 = vpop.f32.mrf.mxu0
    %v2322 = vadd.f32 %v2250, %v2321
    %v2323 = vpop.f32.mrf.mxu0
    %v2324 = vpop.f32.mrf.mxu0
    %v2325 = vadd.f32 %v2253, %v2324
    %v2326 = vpop.f32.mrf.mxu0
    %2327 = vmatprep.mubr.bf16.mxu0 %v1878
    %2328 = vmatmul.mubr.bf16.gmra.mxu0 %v1877
    %v2329 = vpop.f32.mrf.mxu0
    %v2330 = vadd.f32 %v2258, %v2329
    %v2331 = vpop.f32.mrf.mxu0
    %v2332 = vpop.f32.mrf.mxu0
    %v2333 = vpop.f32.mrf.mxu0
    %2334 = vdwg.mxu0
    %2335 = vmatprep.subr.bf16.mxu0 0
    %2336 = vmatpush1.bf16.msra.mxu0 0
    %2337 = vmatprep.subr.bf16.mxu0 0
    %2338 = vmatpush1.bf16.msra.mxu0 0
    %2339 = vmatprep.subr.bf16.mxu0 0
    %2340 = vmatpush1.bf16.msra.mxu0 0
    %2341 = vmatprep.subr.bf16.mxu0 0
    %2342 = vmatpush1.bf16.msra.mxu0 0
    %2343 = vmatprep.subr.bf16.mxu0 0
    %2344 = vmatpush1.bf16.msra.mxu0 %v2138
    %2345 = vmatprep.subr.bf16.mxu0 0
    %2346 = vmatpush1.bf16.msra.mxu0 %v2137
    %2347 = vmatprep.subr.bf16.mxu0 0
    %2348 = vmatpush1.bf16.msra.mxu0 %v2136
    %2349 = vmatprep.subr.bf16.mxu0 0
    %2350 = vmatpush1.bf16.msra.mxu0 %v2135
    %2351 = vmatprep.subr.bf16.mxu0 0
    %2352 = vmatpush2.bf16.msra.mxu0 0
    %2353 = vmatprep.subr.bf16.mxu0 0
    %2354 = vmatpush2.bf16.msra.mxu0 0
    %2355 = vmatprep.subr.bf16.mxu0 0
    %2356 = vmatpush2.bf16.msra.mxu0 0
    %2357 = vmatprep.subr.bf16.mxu0 0
    %2358 = vmatpush2.bf16.msra.mxu0 0
    %2359 = vmatprep.subr.bf16.mxu0 0
    %2360 = vmatpush2.bf16.msra.mxu0 0
    %2361 = vmatprep.subr.bf16.mxu0 0
    %2362 = vmatpush2.bf16.msra.mxu0 0
    %2363 = vmatprep.subr.bf16.mxu0 0
    %2364 = vmatpush2.bf16.msra.mxu0 0
    %2365 = vmatprep.subr.bf16.mxu0 0
    %2366 = vmatpush2.bf16.msra.mxu0 0
    %2367 = vmatprep.mubr.bf16.mxu0 0
    %2368 = vmatmul.mubr.bf16.gmra.mxu0 %v2177
    %v2369 = vpop.f32.mrf.mxu0
    %v2370 = vadd.f32 %v2298, %v2369
    %v2371 = vpop.f32.mrf.mxu0
    %v2372 = vpop.f32.mrf.mxu0
    %v2373 = vadd.f32 %v2301, %v2372
    %v2374 = vpop.f32.mrf.mxu0
    %2375 = vmatprep.mubr.bf16.mxu0 0
    %2376 = vmatmul.mubr.bf16.gmra.mxu0 %v2180
    %v2377 = vpop.f32.mrf.mxu0
    %v2378 = vadd.f32 %v2306, %v2377
    %v2379 = vpop.f32.mrf.mxu0
    %v2380 = vpop.f32.mrf.mxu0
    %v2381 = vadd.f32 %v2309, %v2380
    %v2382 = vpop.f32.mrf.mxu0
    %2383 = vmatprep.mubr.bf16.mxu0 0
    %2384 = vmatmul.mubr.bf16.gmra.mxu0 %v2183
    %v2385 = vpop.f32.mrf.mxu0
    %v2386 = vadd.f32 %v2314, %v2385
    %v2387 = vpop.f32.mrf.mxu0
    %v2388 = vpop.f32.mrf.mxu0
    %v2389 = vadd.f32 %v2317, %v2388
    %v2390 = vpop.f32.mrf.mxu0
    %2391 = vmatprep.mubr.bf16.mxu0 0
    %2392 = vmatmul.mubr.bf16.gmra.mxu0 %v2186
    %v2393 = vpop.f32.mrf.mxu0
    %v2394 = vadd.f32 %v2322, %v2393
    %v2395 = vpop.f32.mrf.mxu0
    %v2396 = vpop.f32.mrf.mxu0
    %v2397 = vadd.f32 %v2325, %v2396
    %v2398 = vpop.f32.mrf.mxu0
    %2399 = vmatprep.mubr.bf16.mxu0 0
    %2400 = vmatmul.mubr.bf16.gmra.mxu0 %v2189
    %v2401 = vpop.f32.mrf.mxu0
    %v2402 = vadd.f32 %v2330, %v2401
    %v2403 = vpop.f32.mrf.mxu0
    %v2404 = vpop.f32.mrf.mxu0
    %v2405 = vpop.f32.mrf.mxu0
    %2406 = vdwg.mxu0
    %v2407 = vmax.f32 %v2370, 0.0
    %v2408 = vmax.f32 %v2373, 0.0
    %v2409 = vmax.f32 %v2378, 0.0
    %v2410 = vmax.f32 %v2381, 0.0
    %v2411 = vmax.f32 %v2386, 0.0
    %v2412 = vmax.f32 %v2389, 0.0
    %v2413 = vmax.f32 %v2394, 0.0
    %v2414 = vmax.f32 %v2397, 0.0
    %v2415 = vmax.f32 %v2402, 0.0
    %vm2418 = vcmask 1041408
    %v2419 = vrot.slane %v2407, 6
    %v2420 = vrot.slane %v2408, 6
    %v2421 = vsel %vm2418, %v2419, %v2420
    %v2423 = vmax.f32 %v2407, %v2421
    %v2425 = vrot.slane %v2423, 1
    %v2427 = vmax.f32 %v2423, %v2425
    %2428 = vst [vmem:[#allocation3] sm:$0x1] %v2427
    %2429 = vst [vmem:[#allocation3] sm:$0x4] %v2427
    %2430 = vst [vmem:[#allocation3] sm:$0x10] %v2427
    %v2432 = vrot.slane %v2409, 6
    %v2434 = vmax.f32 %v2408, %v2432
    %v2435 = vmax.f32 %v2409, %v2432
    %v2437 = vrot.slane %v2434, 1
    %v2439 = vmax.f32 %v2434, %v2437
    %2440 = vst [vmem:[#allocation3 + $0x2] sm:$0x10] %v2439
    %2441 = vst [vmem:[#allocation3 + $0x2] sm:$0x40] %v2439
    %v2443 = vrot.slane %v2435, 1
    %v2445 = vmax.f32 %v2435, %v2443
    %2446 = vst [vmem:[#allocation3 + $0xa] sm:$0x1] %v2445
    %v2449 = vrot.slane %v2410, 6
    %v2450 = vrot.slane %v2411, 6
    %v2451 = vsel %vm2418, %v2449, %v2450
    %v2453 = vmax.f32 %v2410, %v2451
    %v2455 = vrot.slane %v2453, 1
    %v2457 = vmax.f32 %v2453, %v2455
    %2458 = vst [vmem:[#allocation3 + $0xc] sm:$0x1] %v2457
    %2459 = vst [vmem:[#allocation3 + $0xc] sm:$0x4] %v2457
    %2460 = vst [vmem:[#allocation3 + $0xc] sm:$0x10] %v2457
    %v2462 = vrot.slane %v2412, 6
    %v2464 = vmax.f32 %v2411, %v2462
    %v2465 = vmax.f32 %v2412, %v2462
    %v2467 = vrot.slane %v2464, 1
    %v2469 = vmax.f32 %v2464, %v2467
    %2470 = vst [vmem:[#allocation3 - $0x3] sm:$0x10] %v2469
    %2471 = vst [vmem:[#allocation3 - $0x3] sm:$0x40] %v2469
    %v2473 = vrot.slane %v2465, 1
    %v2475 = vmax.f32 %v2465, %v2473
    %2476 = vst [vmem:[#allocation3 + $0x5] sm:$0x1] %v2475
    %v2479 = vrot.slane %v2413, 6
    %v2480 = vrot.slane %v2414, 6
    %v2481 = vsel %vm2418, %v2479, %v2480
    %v2483 = vmax.f32 %v2413, %v2481
    %v2485 = vrot.slane %v2483, 1
    %v2487 = vmax.f32 %v2483, %v2485
    %2488 = vst [vmem:[#allocation3 + $0x7] sm:$0x1] %v2487
    %2489 = vst [vmem:[#allocation3 + $0x7] sm:$0x4] %v2487
    %2490 = vst [vmem:[#allocation3 + $0x7] sm:$0x10] %v2487
    %v2492 = vrot.slane %v2415, 6
    %v2494 = vmax.f32 %v2414, %v2492
    %v2495 = vmax.f32 %v2415, %v2492
    %v2497 = vrot.slane %v2494, 1
    %v2499 = vmax.f32 %v2494, %v2497
    %2500 = vst [vmem:[#allocation3 + $0x9] sm:$0x10] %v2499
    %2501 = vst [vmem:[#allocation3 + $0x9] sm:$0x40] %v2499
    %v2503 = vrot.slane %v2495, 1
    %v2505 = vmax.f32 %v2495, %v2503
    %2506 = vst [vmem:[#allocation3 + $0x11] sm:$0x1] %v2505
    %v2507 = vld [vmem:[#allocation3] sm:$0x3]
    %2508 = vst [vmem:[#allocation4] sm:$0x3] %v2507
    %v2509 = vld [vmem:[#allocation3 + $0x2] sm:$0x3]
    %2510 = vst [vmem:[#allocation4 + $0x2] sm:$0x3] %v2509
    %v2511 = vld [vmem:[#allocation3 + $0x4] sm:$0x3]
    %2512 = vst [vmem:[#allocation4 + $0x4] sm:$0x3] %v2511
    %v2513 = vld [vmem:[#allocation3 + $0x6] sm:$0x3]
    %2514 = vst [vmem:[#allocation4 + $0x6] sm:$0x3] %v2513
    %v2515 = vld [vmem:[#allocation3 + $0x8] sm:$0x3]
    %2516 = vst [vmem:[#allocation4 + $0x8] sm:$0x3] %v2515
    %v2517 = vld [vmem:[#allocation3 + $0xa] sm:$0x3]
    %2518 = vst [vmem:[#allocation4 + $0xa] sm:$0x3] %v2517
    %v2519 = vld [vmem:[#allocation3 + $0xc] sm:$0x3]
    %2520 = vst [vmem:[#allocation4 + $0xc] sm:$0x3] %v2519
    %v2521 = vld [vmem:[#allocation3 + $0xe] sm:$0x3]
    %2522 = vst [vmem:[#allocation4 + $0xe] sm:$0x3] %v2521
    %v2523 = vld [vmem:[#allocation3 + $0x10] sm:$0x3]
    %2524 = vst [vmem:[#allocation4 + $0x10] sm:$0x3] %v2523
    %v2525 = vld [vmem:[#allocation4] sm:$0xff]
    %v2526 = vld [vmem:[#allocation4 + $0x8] sm:$0xff]
    %v2527 = vld [vmem:[#allocation4 + $0x10] sm:$0x3]
    %v2531 = vcombine.high %v2525, %v2525
    %v2533 = vunpack.c.l.s4 1983009808
    %v2534 = vunpack.c.0.s8 %v2533
    %v2535 = vlaneseq
    %v2536 = vshrl.u32 %v2535, 7
    %v2537 = vsub.s32 %v2534, %v2536
    %v2538 = vrot.slane %v2525, %v2537
    %v2540 = vunpack.c.l.s4 1983009808
    %v2541 = vunpack.c.0.s8 %v2540
    %v2542 = vlaneseq
    %v2543 = vshrl.u32 %v2542, 7
    %v2544 = vsub.s32 %v2541, %v2543
    %v2545 = vrot.slane %v2531, %v2544
    %v2546 = vcombine.high %v2538, %v2538
    %v2547 = vcombine.high %v2545, %v2545
    %v2548 = vcombine.high %v2526, %v2526
    %v2550 = vunpack.c.l.s4 1983009808
    %v2551 = vunpack.c.0.s8 %v2550
    %v2552 = vlaneseq
    %v2553 = vshrl.u32 %v2552, 7
    %v2554 = vsub.s32 %v2551, %v2553
    %v2555 = vrot.slane %v2526, %v2554
    %v2557 = vunpack.c.l.s4 1983009808
    %v2558 = vunpack.c.0.s8 %v2557
    %v2559 = vlaneseq
    %v2560 = vshrl.u32 %v2559, 7
    %v2561 = vsub.s32 %v2558, %v2560
    %v2562 = vrot.slane %v2548, %v2561
    %v2563 = vcombine.high %v2555, %v2555
    %v2564 = vcombine.high %v2562, %v2562
    %v2566 = vunpack.c.l.s4 1983009808
    %v2567 = vunpack.c.0.s8 %v2566
    %v2568 = vlaneseq
    %v2569 = vshrl.u32 %v2568, 7
    %v2570 = vsub.s32 %v2567, %v2569
    %v2571 = vrot.slane %v2527, %v2570
    %v2581 = vpack.c.bf16 %v2538, %v2538
    %v2582 = vpack.c.bf16 %v2546, %v2546
    %v2583 = vpack.c.bf16 %v2545, %v2545
    %v2584 = vpack.c.bf16 %v2547, %v2547
    %v2585 = vpack.c.bf16 %v2555, %v2555
    %v2586 = vpack.c.bf16 %v2563, %v2563
    %v2587 = vpack.c.bf16 %v2562, %v2562
    %v2588 = vpack.c.bf16 %v2564, %v2564
    %v2589 = vpack.c.bf16 %v2571, %v2571
    %v2590 = vld [vmem:[#allocation5] sm:$0xff]
    %v2591 = vld [vmem:[#allocation5 + $0x8] sm:$0xff]
    %v2592 = vld [vmem:[#allocation5 + $0x10] sm:$0xff]
    %v2593 = vld [vmem:[#allocation5 + $0x18] sm:$0xff]
    %v2594 = vld [vmem:[#allocation5 + $0x20] sm:$0xff]
    %v2595 = vld [vmem:[#allocation5 + $0x28] sm:$0xff]
    %v2596 = vld [vmem:[#allocation5 + $0x30] sm:$0xff]
    %v2597 = vld [vmem:[#allocation5 + $0x38] sm:$0xff]
    %v2598 = vld [vmem:[#allocation5 + $0x40] sm:$0xff]
    %v2599 = vld [vmem:[#allocation5 + $0x48] sm:$0xff]
    %v2600 = vld [vmem:[#allocation5 + $0x50] sm:$0xff]
    %v2601 = vld [vmem:[#allocation5 + $0x58] sm:$0xff]
    %v2602 = vld [vmem:[#allocation5 + $0x60] sm:$0xff]
    %v2603 = vld [vmem:[#allocation5 + $0x68] sm:$0xff]
    %v2604 = vld [vmem:[#allocation5 + $0x70] sm:$0xff]
    %v2605 = vld [vmem:[#allocation5 + $0x78] sm:$0xff]
    %v2606 = vld [vmem:[#allocation5 + $0x80] sm:$0xff]
    %v2607 = vld [vmem:[#allocation5 + $0x88] sm:$0xff]
    %v2608 = vld [vmem:[#allocation5 + $0x90] sm:$0xff]
    %v2609 = vld [vmem:[#allocation5 + $0x98] sm:$0xff]
    %v2610 = vld [vmem:[#allocation5 + $0xa0] sm:$0xff]
    %v2611 = vld [vmem:[#allocation5 + $0xa8] sm:$0xff]
    %v2612 = vld [vmem:[#allocation5 + $0xb0] sm:$0xff]
    %v2613 = vld [vmem:[#allocation5 + $0xb8] sm:$0xff]
    %v2614 = vld [vmem:[#allocation5 + $0xc0] sm:$0xff]
    %v2615 = vld [vmem:[#allocation5 + $0xc8] sm:$0xff]
    %v2616 = vld [vmem:[#allocation5 + $0xd0] sm:$0xff]
    %v2617 = vld [vmem:[#allocation5 + $0xd8] sm:$0xff]
    %v2618 = vld [vmem:[#allocation5 + $0xe0] sm:$0xff]
    %v2619 = vld [vmem:[#allocation5 + $0xe8] sm:$0xff]
    %v2620 = vld [vmem:[#allocation5 + $0xf0] sm:$0xff]
    %v2621 = vld [vmem:[#allocation5 + $0xf8] sm:$0xff]
    %v2622 = vld [vmem:[#allocation5 + $0x100] sm:$0xff]
    %v2623 = vld [vmem:[#allocation5 + $0x108] sm:$0xff]
    %v2624 = vld [vmem:[#allocation5 + $0x110] sm:$0xff]
    %v2625 = vld [vmem:[#allocation5 + $0x118] sm:$0xff]
    %v2626 = vld [vmem:[#allocation5 + $0x120] sm:$0xff]
    %v2627 = vld [vmem:[#allocation5 + $0x128] sm:$0xff]
    %v2628 = vld [vmem:[#allocation5 + $0x130] sm:$0xff]
    %v2629 = vld [vmem:[#allocation5 + $0x138] sm:$0xff]
    %v2630 = vld [vmem:[#allocation5 + $0x140] sm:$0xff]
    %v2631 = vld [vmem:[#allocation5 + $0x148] sm:$0xff]
    %v2632 = vld [vmem:[#allocation5 + $0x150] sm:$0xff]
    %v2633 = vld [vmem:[#allocation5 + $0x158] sm:$0xff]
    %v2634 = vld [vmem:[#allocation5 + $0x160] sm:$0xff]
    %v2635 = vld [vmem:[#allocation5 + $0x168] sm:$0xff]
    %v2636 = vld [vmem:[#allocation5 + $0x170] sm:$0xff]
    %v2637 = vld [vmem:[#allocation5 + $0x178] sm:$0xff]
    %v2638 = vld [vmem:[#allocation5 + $0x180] sm:$0xff]
    %v2639 = vld [vmem:[#allocation5 + $0x188] sm:$0xff]
    %v2640 = vld [vmem:[#allocation5 + $0x190] sm:$0xff]
    %v2641 = vld [vmem:[#allocation5 + $0x198] sm:$0xff]
    %v2642 = vld [vmem:[#allocation5 + $0x1a0] sm:$0xff]
    %v2643 = vld [vmem:[#allocation5 + $0x1a8] sm:$0xff]
    %v2644 = vld [vmem:[#allocation5 + $0x1b0] sm:$0xff]
    %v2645 = vld [vmem:[#allocation5 + $0x1b8] sm:$0xff]
    %v2646 = vld [vmem:[#allocation5 + $0x1c0] sm:$0xff]
    %v2647 = vld [vmem:[#allocation5 + $0x1c8] sm:$0xff]
    %v2648 = vld [vmem:[#allocation5 + $0x1d0] sm:$0xff]
    %v2649 = vld [vmem:[#allocation5 + $0x1d8] sm:$0xff]
    %v2650 = vld [vmem:[#allocation5 + $0x1e0] sm:$0xff]
    %v2651 = vld [vmem:[#allocation5 + $0x1e8] sm:$0xff]
    %v2652 = vld [vmem:[#allocation5 + $0x1f0] sm:$0xff]
    %v2653 = vld [vmem:[#allocation5 + $0x1f8] sm:$0xff]
    %v2654 = vld [vmem:[#allocation5 + $0x200] sm:$0xff]
    %v2655 = vld [vmem:[#allocation5 + $0x208] sm:$0xff]
    %v2656 = vld [vmem:[#allocation5 + $0x210] sm:$0xff]
    %v2657 = vld [vmem:[#allocation5 + $0x218] sm:$0xff]
    %v2658 = vld [vmem:[#allocation5 + $0x220] sm:$0xff]
    %v2659 = vld [vmem:[#allocation5 + $0x228] sm:$0xff]
    %v2660 = vld [vmem:[#allocation5 + $0x230] sm:$0xff]
    %v2661 = vld [vmem:[#allocation5 + $0x238] sm:$0xff]
    %v2662 = vld [vmem:[#allocation5 + $0x240] sm:$0xff]
    %v2663 = vld [vmem:[#allocation5 + $0x248] sm:$0xff]
    %v2664 = vld [vmem:[#allocation5 + $0x250] sm:$0xff]
    %v2665 = vld [vmem:[#allocation5 + $0x258] sm:$0xff]
    %v2666 = vld [vmem:[#allocation5 + $0x260] sm:$0xff]
    %v2667 = vld [vmem:[#allocation5 + $0x268] sm:$0xff]
    %v2668 = vld [vmem:[#allocation5 + $0x270] sm:$0xff]
    %v2669 = vld [vmem:[#allocation5 + $0x278] sm:$0xff]
    %v2670 = vld [vmem:[#allocation5 + $0x280] sm:$0xff]
    %v2671 = vld [vmem:[#allocation5 + $0x288] sm:$0xff]
    %v2672 = vld [vmem:[#allocation5 + $0x290] sm:$0xff]
    %v2673 = vld [vmem:[#allocation5 + $0x298] sm:$0xff]
    %v2674 = vld [vmem:[#allocation5 + $0x2a0] sm:$0xff]
    %v2675 = vld [vmem:[#allocation5 + $0x2a8] sm:$0xff]
    %v2676 = vld [vmem:[#allocation5 + $0x2b0] sm:$0xff]
    %v2677 = vld [vmem:[#allocation5 + $0x2b8] sm:$0xff]
    %v2678 = vld [vmem:[#allocation5 + $0x2c0] sm:$0xff]
    %v2679 = vld [vmem:[#allocation5 + $0x2c8] sm:$0xff]
    %v2680 = vld [vmem:[#allocation5 + $0x2d0] sm:$0xff]
    %v2681 = vld [vmem:[#allocation5 + $0x2d8] sm:$0xff]
    %v2682 = vld [vmem:[#allocation5 + $0x2e0] sm:$0xff]
    %v2683 = vld [vmem:[#allocation5 + $0x2e8] sm:$0xff]
    %v2684 = vld [vmem:[#allocation5 + $0x2f0] sm:$0xff]
    %v2685 = vld [vmem:[#allocation5 + $0x2f8] sm:$0xff]
    %v2686 = vld [vmem:[#allocation5 + $0x300] sm:$0xff]
    %v2687 = vld [vmem:[#allocation5 + $0x308] sm:$0xff]
    %v2688 = vld [vmem:[#allocation5 + $0x310] sm:$0xff]
    %v2689 = vld [vmem:[#allocation5 + $0x318] sm:$0xff]
    %v2690 = vld [vmem:[#allocation5 + $0x320] sm:$0xff]
    %v2691 = vld [vmem:[#allocation5 + $0x328] sm:$0xff]
    %v2692 = vld [vmem:[#allocation5 + $0x330] sm:$0xff]
    %v2693 = vld [vmem:[#allocation5 + $0x338] sm:$0xff]
    %v2694 = vld [vmem:[#allocation5 + $0x340] sm:$0xff]
    %v2695 = vld [vmem:[#allocation5 + $0x348] sm:$0xff]
    %v2696 = vld [vmem:[#allocation5 + $0x350] sm:$0xff]
    %v2697 = vld [vmem:[#allocation5 + $0x358] sm:$0xff]
    %v2698 = vld [vmem:[#allocation5 + $0x360] sm:$0xff]
    %v2699 = vld [vmem:[#allocation5 + $0x368] sm:$0xff]
    %v2700 = vld [vmem:[#allocation5 + $0x370] sm:$0xff]
    %v2701 = vld [vmem:[#allocation5 + $0x378] sm:$0xff]
    %v2702 = vld [vmem:[#allocation5 + $0x380] sm:$0xff]
    %v2703 = vld [vmem:[#allocation5 + $0x388] sm:$0xff]
    %v2704 = vld [vmem:[#allocation5 + $0x390] sm:$0xff]
    %v2705 = vld [vmem:[#allocation5 + $0x398] sm:$0xff]
    %v2706 = vld [vmem:[#allocation5 + $0x3a0] sm:$0xff]
    %v2707 = vld [vmem:[#allocation5 + $0x3a8] sm:$0xff]
    %v2708 = vld [vmem:[#allocation5 + $0x3b0] sm:$0xff]
    %v2709 = vld [vmem:[#allocation5 + $0x3b8] sm:$0xff]
    %v2710 = vld [vmem:[#allocation5 + $0x3c0] sm:$0xff]
    %v2711 = vld [vmem:[#allocation5 + $0x3c8] sm:$0xff]
    %v2712 = vld [vmem:[#allocation5 + $0x3d0] sm:$0xff]
    %v2713 = vld [vmem:[#allocation5 + $0x3d8] sm:$0xff]
    %v2714 = vld [vmem:[#allocation5 + $0x3e0] sm:$0xff]
    %v2715 = vld [vmem:[#allocation5 + $0x3e8] sm:$0xff]
    %v2716 = vld [vmem:[#allocation5 + $0x3f0] sm:$0xff]
    %v2717 = vld [vmem:[#allocation5 + $0x3f8] sm:$0xff]
    %v2718 = vld [vmem:[#allocation5 + $0x400] sm:$0xff]
    %v2719 = vld [vmem:[#allocation5 + $0x408] sm:$0xff]
    %v2720 = vld [vmem:[#allocation5 + $0x410] sm:$0xff]
    %v2721 = vld [vmem:[#allocation5 + $0x418] sm:$0xff]
    %v2722 = vld [vmem:[#allocation5 + $0x420] sm:$0xff]
    %v2723 = vld [vmem:[#allocation5 + $0x428] sm:$0xff]
    %v2724 = vld [vmem:[#allocation5 + $0x430] sm:$0xff]
    %v2725 = vld [vmem:[#allocation5 + $0x438] sm:$0xff]
    %v2726 = vld [vmem:[#allocation5 + $0x440] sm:$0xff]
    %v2727 = vld [vmem:[#allocation5 + $0x448] sm:$0xff]
    %v2728 = vld [vmem:[#allocation5 + $0x450] sm:$0xff]
    %v2729 = vld [vmem:[#allocation5 + $0x458] sm:$0xff]
    %v2730 = vld [vmem:[#allocation5 + $0x460] sm:$0xff]
    %v2731 = vld [vmem:[#allocation5 + $0x468] sm:$0xff]
    %v2732 = vld [vmem:[#allocation5 + $0x470] sm:$0xff]
    %v2733 = vld [vmem:[#allocation5 + $0x478] sm:$0xff]
    %v2734 = vld [vmem:[%s7] sm:$0x3]
    %v2736 = vlaneseq
    %v2737 = vshrl.u32 %v2736, 7
    %v2738 = vsub.s32 0, %v2737
    %v2739 = vrot.slane %v2734, %v2738
    %v2740 = vlaneseq
    %v2741 = vshrl.u32 %v2740, 7
    %v2742 = vsub.s32 1, %v2741
    %v2743 = vrot.slane %v2734, %v2742
    %v2890 = vunpack.c.l.b16 %v2590
    %v2891 = vunpack.c.h.b16 %v2590
    %v2892 = vunpack.c.l.b16 %v2591
    %v2893 = vunpack.c.h.b16 %v2591
    %v2894 = vunpack.c.l.b16 %v2592
    %v2895 = vunpack.c.h.b16 %v2592
    %v2896 = vunpack.c.l.b16 %v2593
    %v2897 = vunpack.c.h.b16 %v2593
    %v2898 = vunpack.c.l.b16 %v2594
    %v2899 = vunpack.c.h.b16 %v2594
    %v2900 = vunpack.c.l.b16 %v2595
    %v2901 = vunpack.c.h.b16 %v2595
    %v2902 = vunpack.c.l.b16 %v2596
    %v2903 = vunpack.c.h.b16 %v2596
    %v2904 = vunpack.c.l.b16 %v2597
    %v2905 = vunpack.c.h.b16 %v2597
    %v2906 = vunpack.c.l.b16 %v2598
    %v2907 = vunpack.c.h.b16 %v2598
    %v2908 = vunpack.c.l.b16 %v2599
    %v2909 = vunpack.c.h.b16 %v2599
    %v2910 = vunpack.c.l.b16 %v2600
    %v2911 = vunpack.c.h.b16 %v2600
    %v2912 = vunpack.c.l.b16 %v2601
    %v2913 = vunpack.c.h.b16 %v2601
    %v2914 = vunpack.c.l.b16 %v2602
    %v2915 = vunpack.c.h.b16 %v2602
    %v2916 = vunpack.c.l.b16 %v2603
    %v2917 = vunpack.c.h.b16 %v2603
    %v2918 = vunpack.c.l.b16 %v2604
    %v2919 = vunpack.c.h.b16 %v2604
    %v2920 = vunpack.c.l.b16 %v2605
    %v2921 = vunpack.c.h.b16 %v2605
    %v2922 = vunpack.c.l.b16 %v2606
    %v2923 = vunpack.c.h.b16 %v2606
    %v2924 = vunpack.c.l.b16 %v2607
    %v2925 = vunpack.c.h.b16 %v2607
    %v2926 = vunpack.c.l.b16 %v2608
    %v2927 = vunpack.c.h.b16 %v2608
    %v2928 = vunpack.c.l.b16 %v2609
    %v2929 = vunpack.c.h.b16 %v2609
    %v2930 = vunpack.c.l.b16 %v2610
    %v2931 = vunpack.c.h.b16 %v2610
    %v2932 = vunpack.c.l.b16 %v2611
    %v2933 = vunpack.c.h.b16 %v2611
    %v2934 = vunpack.c.l.b16 %v2612
    %v2935 = vunpack.c.h.b16 %v2612
    %v2936 = vunpack.c.l.b16 %v2613
    %v2937 = vunpack.c.h.b16 %v2613
    %v2938 = vunpack.c.l.b16 %v2614
    %v2939 = vunpack.c.h.b16 %v2614
    %v2940 = vunpack.c.l.b16 %v2615
    %v2941 = vunpack.c.h.b16 %v2615
    %v2942 = vunpack.c.l.b16 %v2616
    %v2943 = vunpack.c.h.b16 %v2616
    %v2944 = vunpack.c.l.b16 %v2617
    %v2945 = vunpack.c.h.b16 %v2617
    %v2946 = vunpack.c.l.b16 %v2618
    %v2947 = vunpack.c.h.b16 %v2618
    %v2948 = vunpack.c.l.b16 %v2619
    %v2949 = vunpack.c.h.b16 %v2619
    %v2950 = vunpack.c.l.b16 %v2620
    %v2951 = vunpack.c.h.b16 %v2620
    %v2952 = vunpack.c.l.b16 %v2621
    %v2953 = vunpack.c.h.b16 %v2621
    %v2954 = vunpack.c.l.b16 %v2622
    %v2955 = vunpack.c.h.b16 %v2622
    %v2956 = vunpack.c.l.b16 %v2623
    %v2957 = vunpack.c.h.b16 %v2623
    %v2958 = vunpack.c.l.b16 %v2624
    %v2959 = vunpack.c.h.b16 %v2624
    %v2960 = vunpack.c.l.b16 %v2625
    %v2961 = vunpack.c.h.b16 %v2625
    %v2962 = vunpack.c.l.b16 %v2626
    %v2963 = vunpack.c.h.b16 %v2626
    %v2964 = vunpack.c.l.b16 %v2627
    %v2965 = vunpack.c.h.b16 %v2627
    %v2966 = vunpack.c.l.b16 %v2628
    %v2967 = vunpack.c.h.b16 %v2628
    %v2968 = vunpack.c.l.b16 %v2629
    %v2969 = vunpack.c.h.b16 %v2629
    %v2970 = vunpack.c.l.b16 %v2630
    %v2971 = vunpack.c.h.b16 %v2630
    %v2972 = vunpack.c.l.b16 %v2631
    %v2973 = vunpack.c.h.b16 %v2631
    %v2974 = vunpack.c.l.b16 %v2632
    %v2975 = vunpack.c.h.b16 %v2632
    %v2976 = vunpack.c.l.b16 %v2633
    %v2977 = vunpack.c.h.b16 %v2633
    %v2978 = vunpack.c.l.b16 %v2634
    %v2979 = vunpack.c.h.b16 %v2634
    %v2980 = vunpack.c.l.b16 %v2635
    %v2981 = vunpack.c.h.b16 %v2635
    %v2982 = vunpack.c.l.b16 %v2636
    %v2983 = vunpack.c.h.b16 %v2636
    %v2984 = vunpack.c.l.b16 %v2637
    %v2985 = vunpack.c.h.b16 %v2637
    %v2986 = vunpack.c.l.b16 %v2638
    %v2987 = vunpack.c.h.b16 %v2638
    %v2988 = vunpack.c.l.b16 %v2639
    %v2989 = vunpack.c.h.b16 %v2639
    %v2990 = vunpack.c.l.b16 %v2640
    %v2991 = vunpack.c.h.b16 %v2640
    %v2992 = vunpack.c.l.b16 %v2641
    %v2993 = vunpack.c.h.b16 %v2641
    %v2994 = vunpack.c.l.b16 %v2642
    %v2995 = vunpack.c.h.b16 %v2642
    %v2996 = vunpack.c.l.b16 %v2643
    %v2997 = vunpack.c.h.b16 %v2643
    %v2998 = vunpack.c.l.b16 %v2644
    %v2999 = vunpack.c.h.b16 %v2644
    %v3000 = vunpack.c.l.b16 %v2645
    %v3001 = vunpack.c.h.b16 %v2645
    %v3002 = vunpack.c.l.b16 %v2646
    %v3003 = vunpack.c.h.b16 %v2646
    %v3004 = vunpack.c.l.b16 %v2647
    %v3005 = vunpack.c.h.b16 %v2647
    %v3006 = vunpack.c.l.b16 %v2648
    %v3007 = vunpack.c.h.b16 %v2648
    %v3008 = vunpack.c.l.b16 %v2649
    %v3009 = vunpack.c.h.b16 %v2649
    %v3010 = vunpack.c.l.b16 %v2650
    %v3011 = vunpack.c.h.b16 %v2650
    %v3012 = vunpack.c.l.b16 %v2651
    %v3013 = vunpack.c.h.b16 %v2651
    %v3014 = vunpack.c.l.b16 %v2652
    %v3015 = vunpack.c.h.b16 %v2652
    %v3016 = vunpack.c.l.b16 %v2653
    %v3017 = vunpack.c.h.b16 %v2653
    %v3018 = vunpack.c.l.b16 %v2654
    %v3019 = vunpack.c.h.b16 %v2654
    %v3020 = vunpack.c.l.b16 %v2655
    %v3021 = vunpack.c.h.b16 %v2655
    %v3022 = vunpack.c.l.b16 %v2656
    %v3023 = vunpack.c.h.b16 %v2656
    %v3024 = vunpack.c.l.b16 %v2657
    %v3025 = vunpack.c.h.b16 %v2657
    %v3026 = vunpack.c.l.b16 %v2658
    %v3027 = vunpack.c.h.b16 %v2658
    %v3028 = vunpack.c.l.b16 %v2659
    %v3029 = vunpack.c.h.b16 %v2659
    %v3030 = vunpack.c.l.b16 %v2660
    %v3031 = vunpack.c.h.b16 %v2660
    %v3032 = vunpack.c.l.b16 %v2661
    %v3033 = vunpack.c.h.b16 %v2661
    %v3034 = vunpack.c.l.b16 %v2662
    %v3035 = vunpack.c.h.b16 %v2662
    %v3036 = vunpack.c.l.b16 %v2663
    %v3037 = vunpack.c.h.b16 %v2663
    %v3038 = vunpack.c.l.b16 %v2664
    %v3039 = vunpack.c.h.b16 %v2664
    %v3040 = vunpack.c.l.b16 %v2665
    %v3041 = vunpack.c.h.b16 %v2665
    %v3042 = vunpack.c.l.b16 %v2666
    %v3043 = vunpack.c.h.b16 %v2666
    %v3044 = vunpack.c.l.b16 %v2667
    %v3045 = vunpack.c.h.b16 %v2667
    %v3046 = vunpack.c.l.b16 %v2668
    %v3047 = vunpack.c.h.b16 %v2668
    %v3048 = vunpack.c.l.b16 %v2669
    %v3049 = vunpack.c.h.b16 %v2669
    %v3050 = vunpack.c.l.b16 %v2670
    %v3051 = vunpack.c.h.b16 %v2670
    %v3052 = vunpack.c.l.b16 %v2671
    %v3053 = vunpack.c.h.b16 %v2671
    %v3054 = vunpack.c.l.b16 %v2672
    %v3055 = vunpack.c.h.b16 %v2672
    %v3056 = vunpack.c.l.b16 %v2673
    %v3057 = vunpack.c.h.b16 %v2673
    %v3058 = vunpack.c.l.b16 %v2674
    %v3059 = vunpack.c.h.b16 %v2674
    %v3060 = vunpack.c.l.b16 %v2675
    %v3061 = vunpack.c.h.b16 %v2675
    %v3062 = vunpack.c.l.b16 %v2676
    %v3063 = vunpack.c.h.b16 %v2676
    %v3064 = vunpack.c.l.b16 %v2677
    %v3065 = vunpack.c.h.b16 %v2677
    %v3066 = vunpack.c.l.b16 %v2678
    %v3067 = vunpack.c.h.b16 %v2678
    %v3068 = vunpack.c.l.b16 %v2679
    %v3069 = vunpack.c.h.b16 %v2679
    %v3070 = vunpack.c.l.b16 %v2680
    %v3071 = vunpack.c.h.b16 %v2680
    %v3072 = vunpack.c.l.b16 %v2681
    %v3073 = vunpack.c.h.b16 %v2681
    %v3074 = vunpack.c.l.b16 %v2682
    %v3075 = vunpack.c.h.b16 %v2682
    %v3076 = vunpack.c.l.b16 %v2683
    %v3077 = vunpack.c.h.b16 %v2683
    %v3078 = vunpack.c.l.b16 %v2684
    %v3079 = vunpack.c.h.b16 %v2684
    %v3080 = vunpack.c.l.b16 %v2685
    %v3081 = vunpack.c.h.b16 %v2685
    %v3082 = vunpack.c.l.b16 %v2686
    %v3083 = vunpack.c.h.b16 %v2686
    %v3084 = vunpack.c.l.b16 %v2687
    %v3085 = vunpack.c.h.b16 %v2687
    %v3086 = vunpack.c.l.b16 %v2688
    %v3087 = vunpack.c.h.b16 %v2688
    %v3088 = vunpack.c.l.b16 %v2689
    %v3089 = vunpack.c.h.b16 %v2689
    %v3090 = vunpack.c.l.b16 %v2690
    %v3091 = vunpack.c.h.b16 %v2690
    %v3092 = vunpack.c.l.b16 %v2691
    %v3093 = vunpack.c.h.b16 %v2691
    %v3094 = vunpack.c.l.b16 %v2692
    %v3095 = vunpack.c.h.b16 %v2692
    %v3096 = vunpack.c.l.b16 %v2693
    %v3097 = vunpack.c.h.b16 %v2693
    %v3098 = vunpack.c.l.b16 %v2694
    %v3099 = vunpack.c.h.b16 %v2694
    %v3100 = vunpack.c.l.b16 %v2695
    %v3101 = vunpack.c.h.b16 %v2695
    %v3102 = vunpack.c.l.b16 %v2696
    %v3103 = vunpack.c.h.b16 %v2696
    %v3104 = vunpack.c.l.b16 %v2697
    %v3105 = vunpack.c.h.b16 %v2697
    %v3106 = vunpack.c.l.b16 %v2698
    %v3107 = vunpack.c.h.b16 %v2698
    %v3108 = vunpack.c.l.b16 %v2699
    %v3109 = vunpack.c.h.b16 %v2699
    %v3110 = vunpack.c.l.b16 %v2700
    %v3111 = vunpack.c.h.b16 %v2700
    %v3112 = vunpack.c.l.b16 %v2701
    %v3113 = vunpack.c.h.b16 %v2701
    %v3114 = vunpack.c.l.b16 %v2702
    %v3115 = vunpack.c.h.b16 %v2702
    %v3116 = vunpack.c.l.b16 %v2703
    %v3117 = vunpack.c.h.b16 %v2703
    %v3118 = vunpack.c.l.b16 %v2704
    %v3119 = vunpack.c.h.b16 %v2704
    %v3120 = vunpack.c.l.b16 %v2705
    %v3121 = vunpack.c.h.b16 %v2705
    %v3122 = vunpack.c.l.b16 %v2706
    %v3123 = vunpack.c.h.b16 %v2706
    %v3124 = vunpack.c.l.b16 %v2707
    %v3125 = vunpack.c.h.b16 %v2707
    %v3126 = vunpack.c.l.b16 %v2708
    %v3127 = vunpack.c.h.b16 %v2708
    %v3128 = vunpack.c.l.b16 %v2709
    %v3129 = vunpack.c.h.b16 %v2709
    %v3130 = vunpack.c.l.b16 %v2710
    %v3131 = vunpack.c.h.b16 %v2710
    %v3132 = vunpack.c.l.b16 %v2711
    %v3133 = vunpack.c.h.b16 %v2711
    %v3134 = vunpack.c.l.b16 %v2712
    %v3135 = vunpack.c.h.b16 %v2712
    %v3136 = vunpack.c.l.b16 %v2713
    %v3137 = vunpack.c.h.b16 %v2713
    %v3138 = vunpack.c.l.b16 %v2714
    %v3139 = vunpack.c.h.b16 %v2714
    %v3140 = vunpack.c.l.b16 %v2715
    %v3141 = vunpack.c.h.b16 %v2715
    %v3142 = vunpack.c.l.b16 %v2716
    %v3143 = vunpack.c.h.b16 %v2716
    %v3144 = vunpack.c.l.b16 %v2717
    %v3145 = vunpack.c.h.b16 %v2717
    %v3146 = vunpack.c.l.b16 %v2718
    %v3147 = vunpack.c.h.b16 %v2718
    %v3148 = vunpack.c.l.b16 %v2719
    %v3149 = vunpack.c.h.b16 %v2719
    %v3150 = vunpack.c.l.b16 %v2720
    %v3151 = vunpack.c.h.b16 %v2720
    %v3152 = vunpack.c.l.b16 %v2721
    %v3153 = vunpack.c.h.b16 %v2721
    %v3154 = vunpack.c.l.b16 %v2722
    %v3155 = vunpack.c.h.b16 %v2722
    %v3156 = vunpack.c.l.b16 %v2723
    %v3157 = vunpack.c.h.b16 %v2723
    %v3158 = vunpack.c.l.b16 %v2724
    %v3159 = vunpack.c.h.b16 %v2724
    %v3160 = vunpack.c.l.b16 %v2725
    %v3161 = vunpack.c.h.b16 %v2725
    %v3162 = vunpack.c.l.b16 %v2726
    %v3163 = vunpack.c.h.b16 %v2726
    %v3164 = vunpack.c.l.b16 %v2727
    %v3165 = vunpack.c.h.b16 %v2727
    %v3166 = vunpack.c.l.b16 %v2728
    %v3167 = vunpack.c.h.b16 %v2728
    %v3168 = vunpack.c.l.b16 %v2729
    %v3169 = vunpack.c.h.b16 %v2729
    %v3170 = vunpack.c.l.b16 %v2730
    %v3171 = vunpack.c.h.b16 %v2730
    %v3172 = vunpack.c.l.b16 %v2731
    %v3173 = vunpack.c.h.b16 %v2731
    %v3174 = vunpack.c.l.b16 %v2732
    %v3175 = vunpack.c.h.b16 %v2732
    %v3176 = vunpack.c.l.b16 %v2733
    %v3177 = vunpack.c.h.b16 %v2733
    %v3178 = vpack.c.b16 %v2892, %v2890
    %v3179 = vpack.c.b16 %v2893, %v2891
    %v3180 = vpack.c.b16 %v2896, %v2894
    %v3181 = vpack.c.b16 %v2897, %v2895
    %v3182 = vpack.c.b16 %v2900, %v2898
    %v3183 = vpack.c.b16 %v2901, %v2899
    %v3184 = vpack.c.b16 %v2904, %v2902
    %v3185 = vpack.c.b16 %v2905, %v2903
    %v3186 = vpack.c.b16 %v2908, %v2906
    %v3187 = vpack.c.b16 %v2909, %v2907
    %v3188 = vpack.c.b16 %v2912, %v2910
    %v3189 = vpack.c.b16 %v2913, %v2911
    %v3190 = vpack.c.b16 %v2916, %v2914
    %v3191 = vpack.c.b16 %v2917, %v2915
    %v3192 = vpack.c.b16 %v2920, %v2918
    %v3193 = vpack.c.b16 %v2921, %v2919
    %v3194 = vpack.c.b16 %v2924, %v2922
    %v3195 = vpack.c.b16 %v2925, %v2923
    %v3196 = vpack.c.b16 %v2928, %v2926
    %v3197 = vpack.c.b16 %v2929, %v2927
    %v3198 = vpack.c.b16 %v2932, %v2930
    %v3199 = vpack.c.b16 %v2933, %v2931
    %v3200 = vpack.c.b16 %v2936, %v2934
    %v3201 = vpack.c.b16 %v2937, %v2935
    %v3202 = vpack.c.b16 %v2940, %v2938
    %v3203 = vpack.c.b16 %v2941, %v2939
    %v3204 = vpack.c.b16 %v2944, %v2942
    %v3205 = vpack.c.b16 %v2945, %v2943
    %v3206 = vpack.c.b16 %v2948, %v2946
    %v3207 = vpack.c.b16 %v2949, %v2947
    %v3208 = vpack.c.b16 %v2952, %v2950
    %v3209 = vpack.c.b16 %v2953, %v2951
    %v3210 = vpack.c.b16 %v2956, %v2954
    %v3211 = vpack.c.b16 %v2957, %v2955
    %v3212 = vpack.c.b16 %v2960, %v2958
    %v3213 = vpack.c.b16 %v2961, %v2959
    %v3214 = vpack.c.b16 %v2964, %v2962
    %v3215 = vpack.c.b16 %v2965, %v2963
    %v3216 = vpack.c.b16 %v2968, %v2966
    %v3217 = vpack.c.b16 %v2969, %v2967
    %v3218 = vpack.c.b16 %v2972, %v2970
    %v3219 = vpack.c.b16 %v2973, %v2971
    %v3220 = vpack.c.b16 %v2976, %v2974
    %v3221 = vpack.c.b16 %v2977, %v2975
    %v3222 = vpack.c.b16 %v2980, %v2978
    %v3223 = vpack.c.b16 %v2981, %v2979
    %v3224 = vpack.c.b16 %v2984, %v2982
    %v3225 = vpack.c.b16 %v2985, %v2983
    %v3226 = vpack.c.b16 %v2988, %v2986
    %v3227 = vpack.c.b16 %v2989, %v2987
    %v3228 = vpack.c.b16 %v2992, %v2990
    %v3229 = vpack.c.b16 %v2993, %v2991
    %v3230 = vpack.c.b16 %v2996, %v2994
    %v3231 = vpack.c.b16 %v2997, %v2995
    %v3232 = vpack.c.b16 %v3000, %v2998
    %v3233 = vpack.c.b16 %v3001, %v2999
    %v3234 = vpack.c.b16 %v3004, %v3002
    %v3235 = vpack.c.b16 %v3005, %v3003
    %v3236 = vpack.c.b16 %v3008, %v3006
    %v3237 = vpack.c.b16 %v3009, %v3007
    %v3238 = vpack.c.b16 %v3012, %v3010
    %v3239 = vpack.c.b16 %v3013, %v3011
    %v3240 = vpack.c.b16 %v3016, %v3014
    %v3241 = vpack.c.b16 %v3017, %v3015
    %v3242 = vpack.c.b16 %v3020, %v3018
    %v3243 = vpack.c.b16 %v3021, %v3019
    %v3244 = vpack.c.b16 %v3024, %v3022
    %v3245 = vpack.c.b16 %v3025, %v3023
    %v3246 = vpack.c.b16 %v3028, %v3026
    %v3247 = vpack.c.b16 %v3029, %v3027
    %v3248 = vpack.c.b16 %v3032, %v3030
    %v3249 = vpack.c.b16 %v3033, %v3031
    %v3250 = vpack.c.b16 %v3036, %v3034
    %v3251 = vpack.c.b16 %v3037, %v3035
    %v3252 = vpack.c.b16 %v3040, %v3038
    %v3253 = vpack.c.b16 %v3041, %v3039
    %v3254 = vpack.c.b16 %v3044, %v3042
    %v3255 = vpack.c.b16 %v3045, %v3043
    %v3256 = vpack.c.b16 %v3048, %v3046
    %v3257 = vpack.c.b16 %v3049, %v3047
    %v3258 = vpack.c.b16 %v3052, %v3050
    %v3259 = vpack.c.b16 %v3053, %v3051
    %v3260 = vpack.c.b16 %v3056, %v3054
    %v3261 = vpack.c.b16 %v3057, %v3055
    %v3262 = vpack.c.b16 %v3060, %v3058
    %v3263 = vpack.c.b16 %v3061, %v3059
    %v3264 = vpack.c.b16 %v3064, %v3062
    %v3265 = vpack.c.b16 %v3065, %v3063
    %v3266 = vpack.c.b16 %v3068, %v3066
    %v3267 = vpack.c.b16 %v3069, %v3067
    %v3268 = vpack.c.b16 %v3072, %v3070
    %v3269 = vpack.c.b16 %v3073, %v3071
    %v3270 = vpack.c.b16 %v3076, %v3074
    %v3271 = vpack.c.b16 %v3077, %v3075
    %v3272 = vpack.c.b16 %v3080, %v3078
    %v3273 = vpack.c.b16 %v3081, %v3079
    %v3274 = vpack.c.b16 %v3084, %v3082
    %v3275 = vpack.c.b16 %v3085, %v3083
    %v3276 = vpack.c.b16 %v3088, %v3086
    %v3277 = vpack.c.b16 %v3089, %v3087
    %v3278 = vpack.c.b16 %v3092, %v3090
    %v3279 = vpack.c.b16 %v3093, %v3091
    %v3280 = vpack.c.b16 %v3096, %v3094
    %v3281 = vpack.c.b16 %v3097, %v3095
    %v3282 = vpack.c.b16 %v3100, %v3098
    %v3283 = vpack.c.b16 %v3101, %v3099
    %v3284 = vpack.c.b16 %v3104, %v3102
    %v3285 = vpack.c.b16 %v3105, %v3103
    %v3286 = vpack.c.b16 %v3108, %v3106
    %v3287 = vpack.c.b16 %v3109, %v3107
    %v3288 = vpack.c.b16 %v3112, %v3110
    %v3289 = vpack.c.b16 %v3113, %v3111
    %v3290 = vpack.c.b16 %v3116, %v3114
    %v3291 = vpack.c.b16 %v3117, %v3115
    %v3292 = vpack.c.b16 %v3120, %v3118
    %v3293 = vpack.c.b16 %v3121, %v3119
    %v3294 = vpack.c.b16 %v3124, %v3122
    %v3295 = vpack.c.b16 %v3125, %v3123
    %v3296 = vpack.c.b16 %v3128, %v3126
    %v3297 = vpack.c.b16 %v3129, %v3127
    %v3298 = vpack.c.b16 %v3132, %v3130
    %v3299 = vpack.c.b16 %v3133, %v3131
    %v3300 = vpack.c.b16 %v3136, %v3134
    %v3301 = vpack.c.b16 %v3137, %v3135
    %v3302 = vpack.c.b16 %v3140, %v3138
    %v3303 = vpack.c.b16 %v3141, %v3139
    %v3304 = vpack.c.b16 %v3144, %v3142
    %v3305 = vpack.c.b16 %v3145, %v3143
    %v3306 = vpack.c.b16 %v3148, %v3146
    %v3307 = vpack.c.b16 %v3149, %v3147
    %v3308 = vpack.c.b16 %v3152, %v3150
    %v3309 = vpack.c.b16 %v3153, %v3151
    %v3310 = vpack.c.b16 %v3156, %v3154
    %v3311 = vpack.c.b16 %v3157, %v3155
    %v3312 = vpack.c.b16 %v3160, %v3158
    %v3313 = vpack.c.b16 %v3161, %v3159
    %v3314 = vpack.c.b16 %v3164, %v3162
    %v3315 = vpack.c.b16 %v3165, %v3163
    %v3316 = vpack.c.b16 %v3168, %v3166
    %v3317 = vpack.c.b16 %v3169, %v3167
    %v3318 = vpack.c.b16 %v3172, %v3170
    %v3319 = vpack.c.b16 %v3173, %v3171
    %v3320 = vpack.c.b16 %v3176, %v3174
    %v3321 = vpack.c.b16 %v3177, %v3175
    %3466 = vmatprep.subr.bf16.mxu0 %v3193
    %3467 = vmatpush1.bf16.msra.mxu0 %v3192
    %3468 = vmatprep.subr.bf16.mxu0 %v3191
    %3469 = vmatpush1.bf16.msra.mxu0 %v3190
    %3470 = vmatprep.subr.bf16.mxu0 %v3189
    %3471 = vmatpush1.bf16.msra.mxu0 %v3188
    %3472 = vmatprep.subr.bf16.mxu0 %v3187
    %3473 = vmatpush1.bf16.msra.mxu0 %v3186
    %3474 = vmatprep.subr.bf16.mxu0 %v3185
    %3475 = vmatpush1.bf16.msra.mxu0 %v3184
    %3476 = vmatprep.subr.bf16.mxu0 %v3183
    %3477 = vmatpush1.bf16.msra.mxu0 %v3182
    %3478 = vmatprep.subr.bf16.mxu0 %v3181
    %3479 = vmatpush1.bf16.msra.mxu0 %v3180
    %3480 = vmatprep.subr.bf16.mxu0 %v3179
    %3481 = vmatpush1.bf16.msra.mxu0 %v3178
    %3482 = vmatprep.subr.bf16.mxu0 %v3209
    %3483 = vmatpush2.bf16.msra.mxu0 %v3208
    %3484 = vmatprep.subr.bf16.mxu0 %v3207
    %3485 = vmatpush2.bf16.msra.mxu0 %v3206
    %3486 = vmatprep.subr.bf16.mxu0 %v3205
    %3487 = vmatpush2.bf16.msra.mxu0 %v3204
    %3488 = vmatprep.subr.bf16.mxu0 %v3203
    %3489 = vmatpush2.bf16.msra.mxu0 %v3202
    %3490 = vmatprep.subr.bf16.mxu0 %v3201
    %3491 = vmatpush2.bf16.msra.mxu0 %v3200
    %3492 = vmatprep.subr.bf16.mxu0 %v3199
    %3493 = vmatpush2.bf16.msra.mxu0 %v3198
    %3494 = vmatprep.subr.bf16.mxu0 %v3197
    %3495 = vmatpush2.bf16.msra.mxu0 %v3196
    %3496 = vmatprep.subr.bf16.mxu0 %v3195
    %3497 = vmatpush2.bf16.msra.mxu0 %v3194
    %3498 = vmatprep.mubr.bf16.mxu0 %v2582
    %3499 = vmatmul.mubr.bf16.gmra.mxu0 %v2581
    %v3500 = vpop.f32.mrf.mxu0
    %v3501 = vadd.f32 %v2739, %v3500
    %v3502 = vpop.f32.mrf.mxu0
    %v3503 = vadd.f32 %v2743, %v3502
    %v3504 = vpop.f32.mrf.mxu0
    %v3505 = vpop.f32.mrf.mxu0
    %3506 = vdwg.mxu0
    %3507 = vmatprep.subr.bf16.mxu0 %v3225
    %3508 = vmatpush1.bf16.msra.mxu0 %v3224
    %3509 = vmatprep.subr.bf16.mxu0 %v3223
    %3510 = vmatpush1.bf16.msra.mxu0 %v3222
    %3511 = vmatprep.subr.bf16.mxu0 %v3221
    %3512 = vmatpush1.bf16.msra.mxu0 %v3220
    %3513 = vmatprep.subr.bf16.mxu0 %v3219
    %3514 = vmatpush1.bf16.msra.mxu0 %v3218
    %3515 = vmatprep.subr.bf16.mxu0 %v3217
    %3516 = vmatpush1.bf16.msra.mxu0 %v3216
    %3517 = vmatprep.subr.bf16.mxu0 %v3215
    %3518 = vmatpush1.bf16.msra.mxu0 %v3214
    %3519 = vmatprep.subr.bf16.mxu0 %v3213
    %3520 = vmatpush1.bf16.msra.mxu0 %v3212
    %3521 = vmatprep.subr.bf16.mxu0 %v3211
    %3522 = vmatpush1.bf16.msra.mxu0 %v3210
    %3523 = vmatprep.subr.bf16.mxu0 %v3241
    %3524 = vmatpush2.bf16.msra.mxu0 %v3240
    %3525 = vmatprep.subr.bf16.mxu0 %v3239
    %3526 = vmatpush2.bf16.msra.mxu0 %v3238
    %3527 = vmatprep.subr.bf16.mxu0 %v3237
    %3528 = vmatpush2.bf16.msra.mxu0 %v3236
    %3529 = vmatprep.subr.bf16.mxu0 %v3235
    %3530 = vmatpush2.bf16.msra.mxu0 %v3234
    %3531 = vmatprep.subr.bf16.mxu0 %v3233
    %3532 = vmatpush2.bf16.msra.mxu0 %v3232
    %3533 = vmatprep.subr.bf16.mxu0 %v3231
    %3534 = vmatpush2.bf16.msra.mxu0 %v3230
    %3535 = vmatprep.subr.bf16.mxu0 %v3229
    %3536 = vmatpush2.bf16.msra.mxu0 %v3228
    %3537 = vmatprep.subr.bf16.mxu0 %v3227
    %3538 = vmatpush2.bf16.msra.mxu0 %v3226
    %3539 = vmatprep.mubr.bf16.mxu0 %v2584
    %3540 = vmatmul.mubr.bf16.gmra.mxu0 %v2583
    %v3541 = vpop.f32.mrf.mxu0
    %v3542 = vadd.f32 %v3501, %v3541
    %v3543 = vpop.f32.mrf.mxu0
    %v3544 = vadd.f32 %v3503, %v3543
    %v3545 = vpop.f32.mrf.mxu0
    %v3546 = vpop.f32.mrf.mxu0
    %3547 = vdwg.mxu0
    %3548 = vmatprep.subr.bf16.mxu0 %v3257
    %3549 = vmatpush1.bf16.msra.mxu0 %v3256
    %3550 = vmatprep.subr.bf16.mxu0 %v3255
    %3551 = vmatpush1.bf16.msra.mxu0 %v3254
    %3552 = vmatprep.subr.bf16.mxu0 %v3253
    %3553 = vmatpush1.bf16.msra.mxu0 %v3252
    %3554 = vmatprep.subr.bf16.mxu0 %v3251
    %3555 = vmatpush1.bf16.msra.mxu0 %v3250
    %3556 = vmatprep.subr.bf16.mxu0 %v3249
    %3557 = vmatpush1.bf16.msra.mxu0 %v3248
    %3558 = vmatprep.subr.bf16.mxu0 %v3247
    %3559 = vmatpush1.bf16.msra.mxu0 %v3246
    %3560 = vmatprep.subr.bf16.mxu0 %v3245
    %3561 = vmatpush1.bf16.msra.mxu0 %v3244
    %3562 = vmatprep.subr.bf16.mxu0 %v3243
    %3563 = vmatpush1.bf16.msra.mxu0 %v3242
    %3564 = vmatprep.subr.bf16.mxu0 %v3273
    %3565 = vmatpush2.bf16.msra.mxu0 %v3272
    %3566 = vmatprep.subr.bf16.mxu0 %v3271
    %3567 = vmatpush2.bf16.msra.mxu0 %v3270
    %3568 = vmatprep.subr.bf16.mxu0 %v3269
    %3569 = vmatpush2.bf16.msra.mxu0 %v3268
    %3570 = vmatprep.subr.bf16.mxu0 %v3267
    %3571 = vmatpush2.bf16.msra.mxu0 %v3266
    %3572 = vmatprep.subr.bf16.mxu0 %v3265
    %3573 = vmatpush2.bf16.msra.mxu0 %v3264
    %3574 = vmatprep.subr.bf16.mxu0 %v3263
    %3575 = vmatpush2.bf16.msra.mxu0 %v3262
    %3576 = vmatprep.subr.bf16.mxu0 %v3261
    %3577 = vmatpush2.bf16.msra.mxu0 %v3260
    %3578 = vmatprep.subr.bf16.mxu0 %v3259
    %3579 = vmatpush2.bf16.msra.mxu0 %v3258
    %3580 = vmatprep.mubr.bf16.mxu0 %v2586
    %3581 = vmatmul.mubr.bf16.gmra.mxu0 %v2585
    %v3582 = vpop.f32.mrf.mxu0
    %v3583 = vadd.f32 %v3542, %v3582
    %v3584 = vpop.f32.mrf.mxu0
    %v3585 = vadd.f32 %v3544, %v3584
    %v3586 = vpop.f32.mrf.mxu0
    %v3587 = vpop.f32.mrf.mxu0
    %3588 = vdwg.mxu0
    %3589 = vmatprep.subr.bf16.mxu0 %v3289
    %3590 = vmatpush1.bf16.msra.mxu0 %v3288
    %3591 = vmatprep.subr.bf16.mxu0 %v3287
    %3592 = vmatpush1.bf16.msra.mxu0 %v3286
    %3593 = vmatprep.subr.bf16.mxu0 %v3285
    %3594 = vmatpush1.bf16.msra.mxu0 %v3284
    %3595 = vmatprep.subr.bf16.mxu0 %v3283
    %3596 = vmatpush1.bf16.msra.mxu0 %v3282
    %3597 = vmatprep.subr.bf16.mxu0 %v3281
    %3598 = vmatpush1.bf16.msra.mxu0 %v3280
    %3599 = vmatprep.subr.bf16.mxu0 %v3279
    %3600 = vmatpush1.bf16.msra.mxu0 %v3278
    %3601 = vmatprep.subr.bf16.mxu0 %v3277
    %3602 = vmatpush1.bf16.msra.mxu0 %v3276
    %3603 = vmatprep.subr.bf16.mxu0 %v3275
    %3604 = vmatpush1.bf16.msra.mxu0 %v3274
    %3605 = vmatprep.subr.bf16.mxu0 %v3305
    %3606 = vmatpush2.bf16.msra.mxu0 %v3304
    %3607 = vmatprep.subr.bf16.mxu0 %v3303
    %3608 = vmatpush2.bf16.msra.mxu0 %v3302
    %3609 = vmatprep.subr.bf16.mxu0 %v3301
    %3610 = vmatpush2.bf16.msra.mxu0 %v3300
    %3611 = vmatprep.subr.bf16.mxu0 %v3299
    %3612 = vmatpush2.bf16.msra.mxu0 %v3298
    %3613 = vmatprep.subr.bf16.mxu0 %v3297
    %3614 = vmatpush2.bf16.msra.mxu0 %v3296
    %3615 = vmatprep.subr.bf16.mxu0 %v3295
    %3616 = vmatpush2.bf16.msra.mxu0 %v3294
    %3617 = vmatprep.subr.bf16.mxu0 %v3293
    %3618 = vmatpush2.bf16.msra.mxu0 %v3292
    %3619 = vmatprep.subr.bf16.mxu0 %v3291
    %3620 = vmatpush2.bf16.msra.mxu0 %v3290
    %3621 = vmatprep.mubr.bf16.mxu0 %v2588
    %3622 = vmatmul.mubr.bf16.gmra.mxu0 %v2587
    %v3623 = vpop.f32.mrf.mxu0
    %v3624 = vadd.f32 %v3583, %v3623
    %v3625 = vpop.f32.mrf.mxu0
    %v3626 = vadd.f32 %v3585, %v3625
    %v3627 = vpop.f32.mrf.mxu0
    %v3628 = vpop.f32.mrf.mxu0
    %3629 = vdwg.mxu0
    %3630 = vmatprep.subr.bf16.mxu0 %v3321
    %3631 = vmatpush1.bf16.msra.mxu0 %v3320
    %3632 = vmatprep.subr.bf16.mxu0 %v3319
    %3633 = vmatpush1.bf16.msra.mxu0 %v3318
    %3634 = vmatprep.subr.bf16.mxu0 %v3317
    %3635 = vmatpush1.bf16.msra.mxu0 %v3316
    %3636 = vmatprep.subr.bf16.mxu0 %v3315
    %3637 = vmatpush1.bf16.msra.mxu0 %v3314
    %3638 = vmatprep.subr.bf16.mxu0 %v3313
    %3639 = vmatpush1.bf16.msra.mxu0 %v3312
    %3640 = vmatprep.subr.bf16.mxu0 %v3311
    %3641 = vmatpush1.bf16.msra.mxu0 %v3310
    %3642 = vmatprep.subr.bf16.mxu0 %v3309
    %3643 = vmatpush1.bf16.msra.mxu0 %v3308
    %3644 = vmatprep.subr.bf16.mxu0 %v3307
    %3645 = vmatpush1.bf16.msra.mxu0 %v3306
    %3646 = vmatprep.subr.bf16.mxu0 0
    %3647 = vmatpush2.bf16.msra.mxu0 0
    %3648 = vmatprep.subr.bf16.mxu0 0
    %3649 = vmatpush2.bf16.msra.mxu0 0
    %3650 = vmatprep.subr.bf16.mxu0 0
    %3651 = vmatpush2.bf16.msra.mxu0 0
    %3652 = vmatprep.subr.bf16.mxu0 0
    %3653 = vmatpush2.bf16.msra.mxu0 0
    %3654 = vmatprep.subr.bf16.mxu0 0
    %3655 = vmatpush2.bf16.msra.mxu0 0
    %3656 = vmatprep.subr.bf16.mxu0 0
    %3657 = vmatpush2.bf16.msra.mxu0 0
    %3658 = vmatprep.subr.bf16.mxu0 0
    %3659 = vmatpush2.bf16.msra.mxu0 0
    %3660 = vmatprep.subr.bf16.mxu0 0
    %3661 = vmatpush2.bf16.msra.mxu0 0
    %3662 = vmatprep.mubr.bf16.mxu0 0
    %3663 = vmatmul.mubr.bf16.gmra.mxu0 %v2589
    %v3664 = vpop.f32.mrf.mxu0
    %v3665 = vadd.f32 %v3624, %v3664
    %v3666 = vpop.f32.mrf.mxu0
    %v3667 = vadd.f32 %v3626, %v3666
    %v3668 = vpop.f32.mrf.mxu0
    %v3669 = vpop.f32.mrf.mxu0
    %3670 = vdwg.mxu0
    %v3671 = vmax.f32 %v3665, 0.0
    %v3672 = vmax.f32 %v3667, 0.0
    %v3673 = vld [vmem:[%s9] sm:$0xff]
    %v3674 = vld [vmem:[%s0] sm:$0xf]
    %v3677 = vunpack.c.l.s4 1983009808
    %v3678 = vunpack.c.0.s8 %v3677
    %v3679 = vlaneseq
    %v3680 = vshrl.u32 %v3679, 7
    %v3681 = vsub.s32 %v3678, %v3680
    %v3682 = vrot.slane %v3674, %v3681
    %v3683 = vcombine.high %v3682, %v3682
    %v3686 = vpack.c.bf16 %v3682, %v3682
    %v3687 = vpack.c.bf16 %v3683, %v3683
    %v3688 = vld [vmem:[#allocation8] sm:$0xff]
    %v3689 = vld [vmem:[#allocation8 + $0x8] sm:$0xff]
    %v3690 = vld [vmem:[#allocation8 + $0x10] sm:$0xff]
    %v3691 = vld [vmem:[#allocation8 + $0x18] sm:$0xff]
    %v3692 = vld [vmem:[#allocation8 + $0x20] sm:$0xff]
    %v3693 = vld [vmem:[#allocation8 + $0x28] sm:$0xff]
    %v3694 = vld [vmem:[#allocation8 + $0x30] sm:$0xff]
    %v3695 = vld [vmem:[#allocation8 + $0x38] sm:$0xff]
    %v3696 = vld [vmem:[#allocation8 + $0x40] sm:$0xff]
    %v3697 = vld [vmem:[#allocation8 + $0x48] sm:$0xff]
    %v3698 = vld [vmem:[#allocation8 + $0x50] sm:$0xff]
    %v3699 = vld [vmem:[#allocation8 + $0x58] sm:$0xff]
    %v3700 = vld [vmem:[#allocation8 + $0x60] sm:$0xff]
    %v3701 = vld [vmem:[#allocation8 + $0x68] sm:$0xff]
    %v3702 = vld [vmem:[#allocation8 + $0x70] sm:$0xff]
    %v3703 = vld [vmem:[#allocation8 + $0x78] sm:$0xff]
    %v3704 = vld [vmem:[#allocation8 + $0x80] sm:$0xff]
    %v3705 = vld [vmem:[#allocation8 + $0x88] sm:$0xff]
    %v3706 = vld [vmem:[#allocation8 + $0x90] sm:$0xff]
    %v3707 = vld [vmem:[#allocation8 + $0x98] sm:$0xff]
    %v3708 = vld [vmem:[#allocation8 + $0xa0] sm:$0xff]
    %v3709 = vld [vmem:[#allocation8 + $0xa8] sm:$0xff]
    %v3710 = vld [vmem:[#allocation8 + $0xb0] sm:$0xff]
    %v3711 = vld [vmem:[#allocation8 + $0xb8] sm:$0xff]
    %v3712 = vld [vmem:[#allocation8 + $0xc0] sm:$0xff]
    %v3713 = vld [vmem:[#allocation8 + $0xc8] sm:$0xff]
    %v3714 = vld [vmem:[#allocation8 + $0xd0] sm:$0xff]
    %v3715 = vld [vmem:[#allocation8 + $0xd8] sm:$0xff]
    %v3716 = vld [vmem:[#allocation8 + $0xe0] sm:$0xff]
    %v3717 = vld [vmem:[#allocation8 + $0xe8] sm:$0xff]
    %v3718 = vld [vmem:[#allocation8 + $0xf0] sm:$0xff]
    %v3719 = vld [vmem:[#allocation8 + $0xf8] sm:$0xff]
    %v3720 = vld [vmem:[#allocation8 + $0x100] sm:$0xff]
    %v3721 = vld [vmem:[#allocation8 + $0x108] sm:$0xff]
    %v3722 = vld [vmem:[#allocation8 + $0x110] sm:$0xff]
    %v3723 = vld [vmem:[#allocation8 + $0x118] sm:$0xff]
    %v3724 = vld [vmem:[#allocation8 + $0x120] sm:$0xff]
    %v3725 = vld [vmem:[#allocation8 + $0x128] sm:$0xff]
    %v3726 = vld [vmem:[#allocation8 + $0x130] sm:$0xff]
    %v3727 = vld [vmem:[#allocation8 + $0x138] sm:$0xff]
    %v3728 = vld [vmem:[#allocation8 + $0x140] sm:$0xff]
    %v3729 = vld [vmem:[#allocation8 + $0x148] sm:$0xff]
    %v3730 = vld [vmem:[#allocation8 + $0x150] sm:$0xff]
    %v3731 = vld [vmem:[#allocation8 + $0x158] sm:$0xff]
    %v3732 = vld [vmem:[#allocation8 + $0x160] sm:$0xff]
    %v3733 = vld [vmem:[#allocation8 + $0x168] sm:$0xff]
    %v3734 = vld [vmem:[#allocation8 + $0x170] sm:$0xff]
    %v3735 = vld [vmem:[#allocation8 + $0x178] sm:$0xff]
    %v3736 = vld [vmem:[#allocation8 + $0x180] sm:$0xff]
    %v3737 = vld [vmem:[#allocation8 + $0x188] sm:$0xff]
    %v3738 = vld [vmem:[#allocation8 + $0x190] sm:$0xff]
    %v3739 = vld [vmem:[#allocation8 + $0x198] sm:$0xff]
    %v3740 = vld [vmem:[#allocation8 + $0x1a0] sm:$0xff]
    %v3741 = vld [vmem:[#allocation8 + $0x1a8] sm:$0xff]
    %v3742 = vld [vmem:[#allocation8 + $0x1b0] sm:$0xff]
    %v3743 = vld [vmem:[#allocation8 + $0x1b8] sm:$0xff]
    %v3744 = vld [vmem:[#allocation8 + $0x1c0] sm:$0xff]
    %v3745 = vld [vmem:[#allocation8 + $0x1c8] sm:$0xff]
    %v3746 = vld [vmem:[#allocation8 + $0x1d0] sm:$0xff]
    %v3747 = vld [vmem:[#allocation8 + $0x1d8] sm:$0xff]
    %v3748 = vld [vmem:[#allocation8 + $0x1e0] sm:$0xff]
    %v3749 = vld [vmem:[#allocation8 + $0x1e8] sm:$0xff]
    %v3750 = vld [vmem:[#allocation8 + $0x1f0] sm:$0xff]
    %v3751 = vld [vmem:[#allocation8 + $0x1f8] sm:$0xff]
    %v3752 = vld [vmem:[#allocation8 + $0x200] sm:$0xff]
    %v3753 = vld [vmem:[#allocation8 + $0x208] sm:$0xff]
    %v3754 = vld [vmem:[#allocation8 + $0x210] sm:$0xff]
    %v3755 = vld [vmem:[#allocation8 + $0x218] sm:$0xff]
    %v3756 = vld [vmem:[#allocation8 + $0x220] sm:$0xff]
    %v3757 = vld [vmem:[#allocation8 + $0x228] sm:$0xff]
    %v3758 = vld [vmem:[#allocation8 + $0x230] sm:$0xff]
    %v3759 = vld [vmem:[#allocation8 + $0x238] sm:$0xff]
    %v3760 = vld [vmem:[#allocation8 + $0x240] sm:$0xff]
    %v3761 = vld [vmem:[#allocation8 + $0x248] sm:$0xff]
    %v3762 = vld [vmem:[#allocation8 + $0x250] sm:$0xff]
    %v3763 = vld [vmem:[#allocation8 + $0x258] sm:$0xff]
    %v3764 = vld [vmem:[#allocation8 + $0x260] sm:$0xff]
    %v3765 = vld [vmem:[#allocation8 + $0x268] sm:$0xff]
    %v3766 = vld [vmem:[#allocation8 + $0x270] sm:$0xff]
    %v3767 = vld [vmem:[#allocation8 + $0x278] sm:$0xff]
    %v3768 = vld [vmem:[#allocation8 + $0x280] sm:$0xff]
    %v3769 = vld [vmem:[#allocation8 + $0x288] sm:$0xff]
    %v3770 = vld [vmem:[#allocation8 + $0x290] sm:$0xff]
    %v3771 = vld [vmem:[#allocation8 + $0x298] sm:$0xff]
    %v3772 = vld [vmem:[#allocation8 + $0x2a0] sm:$0xff]
    %v3773 = vld [vmem:[#allocation8 + $0x2a8] sm:$0xff]
    %v3774 = vld [vmem:[#allocation8 + $0x2b0] sm:$0xff]
    %v3775 = vld [vmem:[#allocation8 + $0x2b8] sm:$0xff]
    %v3776 = vld [vmem:[#allocation8 + $0x2c0] sm:$0xff]
    %v3777 = vld [vmem:[#allocation8 + $0x2c8] sm:$0xff]
    %v3778 = vld [vmem:[#allocation8 + $0x2d0] sm:$0xff]
    %v3779 = vld [vmem:[#allocation8 + $0x2d8] sm:$0xff]
    %v3780 = vld [vmem:[#allocation8 + $0x2e0] sm:$0xff]
    %v3781 = vld [vmem:[#allocation8 + $0x2e8] sm:$0xff]
    %v3782 = vld [vmem:[#allocation8 + $0x2f0] sm:$0xff]
    %v3783 = vld [vmem:[#allocation8 + $0x2f8] sm:$0xff]
    %v3784 = vld [vmem:[#allocation8 + $0x300] sm:$0xff]
    %v3785 = vld [vmem:[#allocation8 + $0x308] sm:$0xff]
    %v3786 = vld [vmem:[#allocation8 + $0x310] sm:$0xff]
    %v3787 = vld [vmem:[#allocation8 + $0x318] sm:$0xff]
    %v3788 = vld [vmem:[#allocation8 + $0x320] sm:$0xff]
    %v3789 = vld [vmem:[#allocation8 + $0x328] sm:$0xff]
    %v3790 = vld [vmem:[#allocation8 + $0x330] sm:$0xff]
    %v3791 = vld [vmem:[#allocation8 + $0x338] sm:$0xff]
    %v3792 = vld [vmem:[#allocation8 + $0x340] sm:$0xff]
    %v3793 = vld [vmem:[#allocation8 + $0x348] sm:$0xff]
    %v3794 = vld [vmem:[#allocation8 + $0x350] sm:$0xff]
    %v3795 = vld [vmem:[#allocation8 + $0x358] sm:$0xff]
    %v3796 = vld [vmem:[#allocation8 + $0x360] sm:$0xff]
    %v3797 = vld [vmem:[#allocation8 + $0x368] sm:$0xff]
    %v3798 = vld [vmem:[#allocation8 + $0x370] sm:$0xff]
    %v3799 = vld [vmem:[#allocation8 + $0x378] sm:$0xff]
    %v3800 = vld [vmem:[#allocation8 + $0x380] sm:$0xff]
    %v3801 = vld [vmem:[#allocation8 + $0x388] sm:$0xff]
    %v3802 = vld [vmem:[#allocation8 + $0x390] sm:$0xff]
    %v3803 = vld [vmem:[#allocation8 + $0x398] sm:$0xff]
    %v3804 = vld [vmem:[#allocation8 + $0x3a0] sm:$0xff]
    %v3805 = vld [vmem:[#allocation8 + $0x3a8] sm:$0xff]
    %v3806 = vld [vmem:[#allocation8 + $0x3b0] sm:$0xff]
    %v3807 = vld [vmem:[#allocation8 + $0x3b8] sm:$0xff]
    %v3808 = vld [vmem:[#allocation8 + $0x3c0] sm:$0xff]
    %v3809 = vld [vmem:[#allocation8 + $0x3c8] sm:$0xff]
    %v3810 = vld [vmem:[#allocation8 + $0x3d0] sm:$0xff]
    %v3811 = vld [vmem:[#allocation8 + $0x3d8] sm:$0xff]
    %v3812 = vld [vmem:[#allocation8 + $0x3e0] sm:$0xff]
    %v3813 = vld [vmem:[#allocation8 + $0x3e8] sm:$0xff]
    %v3814 = vld [vmem:[#allocation8 + $0x3f0] sm:$0xff]
    %v3815 = vld [vmem:[#allocation8 + $0x3f8] sm:$0xff]
    %v3944 = vunpack.c.l.b16 %v3688
    %v3945 = vunpack.c.h.b16 %v3688
    %v3946 = vunpack.c.l.b16 %v3689
    %v3947 = vunpack.c.h.b16 %v3689
    %v3948 = vunpack.c.l.b16 %v3690
    %v3949 = vunpack.c.h.b16 %v3690
    %v3950 = vunpack.c.l.b16 %v3691
    %v3951 = vunpack.c.h.b16 %v3691
    %v3952 = vunpack.c.l.b16 %v3692
    %v3953 = vunpack.c.h.b16 %v3692
    %v3954 = vunpack.c.l.b16 %v3693
    %v3955 = vunpack.c.h.b16 %v3693
    %v3956 = vunpack.c.l.b16 %v3694
    %v3957 = vunpack.c.h.b16 %v3694
    %v3958 = vunpack.c.l.b16 %v3695
    %v3959 = vunpack.c.h.b16 %v3695
    %v3960 = vunpack.c.l.b16 %v3696
    %v3961 = vunpack.c.h.b16 %v3696
    %v3962 = vunpack.c.l.b16 %v3697
    %v3963 = vunpack.c.h.b16 %v3697
    %v3964 = vunpack.c.l.b16 %v3698
    %v3965 = vunpack.c.h.b16 %v3698
    %v3966 = vunpack.c.l.b16 %v3699
    %v3967 = vunpack.c.h.b16 %v3699
    %v3968 = vunpack.c.l.b16 %v3700
    %v3969 = vunpack.c.h.b16 %v3700
    %v3970 = vunpack.c.l.b16 %v3701
    %v3971 = vunpack.c.h.b16 %v3701
    %v3972 = vunpack.c.l.b16 %v3702
    %v3973 = vunpack.c.h.b16 %v3702
    %v3974 = vunpack.c.l.b16 %v3703
    %v3975 = vunpack.c.h.b16 %v3703
    %v3976 = vunpack.c.l.b16 %v3704
    %v3977 = vunpack.c.h.b16 %v3704
    %v3978 = vunpack.c.l.b16 %v3705
    %v3979 = vunpack.c.h.b16 %v3705
    %v3980 = vunpack.c.l.b16 %v3706
    %v3981 = vunpack.c.h.b16 %v3706
    %v3982 = vunpack.c.l.b16 %v3707
    %v3983 = vunpack.c.h.b16 %v3707
    %v3984 = vunpack.c.l.b16 %v3708
    %v3985 = vunpack.c.h.b16 %v3708
    %v3986 = vunpack.c.l.b16 %v3709
    %v3987 = vunpack.c.h.b16 %v3709
    %v3988 = vunpack.c.l.b16 %v3710
    %v3989 = vunpack.c.h.b16 %v3710
    %v3990 = vunpack.c.l.b16 %v3711
    %v3991 = vunpack.c.h.b16 %v3711
    %v3992 = vunpack.c.l.b16 %v3712
    %v3993 = vunpack.c.h.b16 %v3712
    %v3994 = vunpack.c.l.b16 %v3713
    %v3995 = vunpack.c.h.b16 %v3713
    %v3996 = vunpack.c.l.b16 %v3714
    %v3997 = vunpack.c.h.b16 %v3714
    %v3998 = vunpack.c.l.b16 %v3715
    %v3999 = vunpack.c.h.b16 %v3715
    %v4000 = vunpack.c.l.b16 %v3716
    %v4001 = vunpack.c.h.b16 %v3716
    %v4002 = vunpack.c.l.b16 %v3717
    %v4003 = vunpack.c.h.b16 %v3717
    %v4004 = vunpack.c.l.b16 %v3718
    %v4005 = vunpack.c.h.b16 %v3718
    %v4006 = vunpack.c.l.b16 %v3719
    %v4007 = vunpack.c.h.b16 %v3719
    %v4008 = vunpack.c.l.b16 %v3720
    %v4009 = vunpack.c.h.b16 %v3720
    %v4010 = vunpack.c.l.b16 %v3721
    %v4011 = vunpack.c.h.b16 %v3721
    %v4012 = vunpack.c.l.b16 %v3722
    %v4013 = vunpack.c.h.b16 %v3722
    %v4014 = vunpack.c.l.b16 %v3723
    %v4015 = vunpack.c.h.b16 %v3723
    %v4016 = vunpack.c.l.b16 %v3724
    %v4017 = vunpack.c.h.b16 %v3724
    %v4018 = vunpack.c.l.b16 %v3725
    %v4019 = vunpack.c.h.b16 %v3725
    %v4020 = vunpack.c.l.b16 %v3726
    %v4021 = vunpack.c.h.b16 %v3726
    %v4022 = vunpack.c.l.b16 %v3727
    %v4023 = vunpack.c.h.b16 %v3727
    %v4024 = vunpack.c.l.b16 %v3728
    %v4025 = vunpack.c.h.b16 %v3728
    %v4026 = vunpack.c.l.b16 %v3729
    %v4027 = vunpack.c.h.b16 %v3729
    %v4028 = vunpack.c.l.b16 %v3730
    %v4029 = vunpack.c.h.b16 %v3730
    %v4030 = vunpack.c.l.b16 %v3731
    %v4031 = vunpack.c.h.b16 %v3731
    %v4032 = vunpack.c.l.b16 %v3732
    %v4033 = vunpack.c.h.b16 %v3732
    %v4034 = vunpack.c.l.b16 %v3733
    %v4035 = vunpack.c.h.b16 %v3733
    %v4036 = vunpack.c.l.b16 %v3734
    %v4037 = vunpack.c.h.b16 %v3734
    %v4038 = vunpack.c.l.b16 %v3735
    %v4039 = vunpack.c.h.b16 %v3735
    %v4040 = vunpack.c.l.b16 %v3736
    %v4041 = vunpack.c.h.b16 %v3736
    %v4042 = vunpack.c.l.b16 %v3737
    %v4043 = vunpack.c.h.b16 %v3737
    %v4044 = vunpack.c.l.b16 %v3738
    %v4045 = vunpack.c.h.b16 %v3738
    %v4046 = vunpack.c.l.b16 %v3739
    %v4047 = vunpack.c.h.b16 %v3739
    %v4048 = vunpack.c.l.b16 %v3740
    %v4049 = vunpack.c.h.b16 %v3740
    %v4050 = vunpack.c.l.b16 %v3741
    %v4051 = vunpack.c.h.b16 %v3741
    %v4052 = vunpack.c.l.b16 %v3742
    %v4053 = vunpack.c.h.b16 %v3742
    %v4054 = vunpack.c.l.b16 %v3743
    %v4055 = vunpack.c.h.b16 %v3743
    %v4056 = vunpack.c.l.b16 %v3744
    %v4057 = vunpack.c.h.b16 %v3744
    %v4058 = vunpack.c.l.b16 %v3745
    %v4059 = vunpack.c.h.b16 %v3745
    %v4060 = vunpack.c.l.b16 %v3746
    %v4061 = vunpack.c.h.b16 %v3746
    %v4062 = vunpack.c.l.b16 %v3747
    %v4063 = vunpack.c.h.b16 %v3747
    %v4064 = vunpack.c.l.b16 %v3748
    %v4065 = vunpack.c.h.b16 %v3748
    %v4066 = vunpack.c.l.b16 %v3749
    %v4067 = vunpack.c.h.b16 %v3749
    %v4068 = vunpack.c.l.b16 %v3750
    %v4069 = vunpack.c.h.b16 %v3750
    %v4070 = vunpack.c.l.b16 %v3751
    %v4071 = vunpack.c.h.b16 %v3751
    %v4072 = vunpack.c.l.b16 %v3752
    %v4073 = vunpack.c.h.b16 %v3752
    %v4074 = vunpack.c.l.b16 %v3753
    %v4075 = vunpack.c.h.b16 %v3753
    %v4076 = vunpack.c.l.b16 %v3754
    %v4077 = vunpack.c.h.b16 %v3754
    %v4078 = vunpack.c.l.b16 %v3755
    %v4079 = vunpack.c.h.b16 %v3755
    %v4080 = vunpack.c.l.b16 %v3756
    %v4081 = vunpack.c.h.b16 %v3756
    %v4082 = vunpack.c.l.b16 %v3757
    %v4083 = vunpack.c.h.b16 %v3757
    %v4084 = vunpack.c.l.b16 %v3758
    %v4085 = vunpack.c.h.b16 %v3758
    %v4086 = vunpack.c.l.b16 %v3759
    %v4087 = vunpack.c.h.b16 %v3759
    %v4088 = vunpack.c.l.b16 %v3760
    %v4089 = vunpack.c.h.b16 %v3760
    %v4090 = vunpack.c.l.b16 %v3761
    %v4091 = vunpack.c.h.b16 %v3761
    %v4092 = vunpack.c.l.b16 %v3762
    %v4093 = vunpack.c.h.b16 %v3762
    %v4094 = vunpack.c.l.b16 %v3763
    %v4095 = vunpack.c.h.b16 %v3763
    %v4096 = vunpack.c.l.b16 %v3764
    %v4097 = vunpack.c.h.b16 %v3764
    %v4098 = vunpack.c.l.b16 %v3765
    %v4099 = vunpack.c.h.b16 %v3765
    %v4100 = vunpack.c.l.b16 %v3766
    %v4101 = vunpack.c.h.b16 %v3766
    %v4102 = vunpack.c.l.b16 %v3767
    %v4103 = vunpack.c.h.b16 %v3767
    %v4104 = vunpack.c.l.b16 %v3768
    %v4105 = vunpack.c.h.b16 %v3768
    %v4106 = vunpack.c.l.b16 %v3769
    %v4107 = vunpack.c.h.b16 %v3769
    %v4108 = vunpack.c.l.b16 %v3770
    %v4109 = vunpack.c.h.b16 %v3770
    %v4110 = vunpack.c.l.b16 %v3771
    %v4111 = vunpack.c.h.b16 %v3771
    %v4112 = vunpack.c.l.b16 %v3772
    %v4113 = vunpack.c.h.b16 %v3772
    %v4114 = vunpack.c.l.b16 %v3773
    %v4115 = vunpack.c.h.b16 %v3773
    %v4116 = vunpack.c.l.b16 %v3774
    %v4117 = vunpack.c.h.b16 %v3774
    %v4118 = vunpack.c.l.b16 %v3775
    %v4119 = vunpack.c.h.b16 %v3775
    %v4120 = vunpack.c.l.b16 %v3776
    %v4121 = vunpack.c.h.b16 %v3776
    %v4122 = vunpack.c.l.b16 %v3777
    %v4123 = vunpack.c.h.b16 %v3777
    %v4124 = vunpack.c.l.b16 %v3778
    %v4125 = vunpack.c.h.b16 %v3778
    %v4126 = vunpack.c.l.b16 %v3779
    %v4127 = vunpack.c.h.b16 %v3779
    %v4128 = vunpack.c.l.b16 %v3780
    %v4129 = vunpack.c.h.b16 %v3780
    %v4130 = vunpack.c.l.b16 %v3781
    %v4131 = vunpack.c.h.b16 %v3781
    %v4132 = vunpack.c.l.b16 %v3782
    %v4133 = vunpack.c.h.b16 %v3782
    %v4134 = vunpack.c.l.b16 %v3783
    %v4135 = vunpack.c.h.b16 %v3783
    %v4136 = vunpack.c.l.b16 %v3784
    %v4137 = vunpack.c.h.b16 %v3784
    %v4138 = vunpack.c.l.b16 %v3785
    %v4139 = vunpack.c.h.b16 %v3785
    %v4140 = vunpack.c.l.b16 %v3786
    %v4141 = vunpack.c.h.b16 %v3786
    %v4142 = vunpack.c.l.b16 %v3787
    %v4143 = vunpack.c.h.b16 %v3787
    %v4144 = vunpack.c.l.b16 %v3788
    %v4145 = vunpack.c.h.b16 %v3788
    %v4146 = vunpack.c.l.b16 %v3789
    %v4147 = vunpack.c.h.b16 %v3789
    %v4148 = vunpack.c.l.b16 %v3790
    %v4149 = vunpack.c.h.b16 %v3790
    %v4150 = vunpack.c.l.b16 %v3791
    %v4151 = vunpack.c.h.b16 %v3791
    %v4152 = vunpack.c.l.b16 %v3792
    %v4153 = vunpack.c.h.b16 %v3792
    %v4154 = vunpack.c.l.b16 %v3793
    %v4155 = vunpack.c.h.b16 %v3793
    %v4156 = vunpack.c.l.b16 %v3794
    %v4157 = vunpack.c.h.b16 %v3794
    %v4158 = vunpack.c.l.b16 %v3795
    %v4159 = vunpack.c.h.b16 %v3795
    %v4160 = vunpack.c.l.b16 %v3796
    %v4161 = vunpack.c.h.b16 %v3796
    %v4162 = vunpack.c.l.b16 %v3797
    %v4163 = vunpack.c.h.b16 %v3797
    %v4164 = vunpack.c.l.b16 %v3798
    %v4165 = vunpack.c.h.b16 %v3798
    %v4166 = vunpack.c.l.b16 %v3799
    %v4167 = vunpack.c.h.b16 %v3799
    %v4168 = vunpack.c.l.b16 %v3800
    %v4169 = vunpack.c.h.b16 %v3800
    %v4170 = vunpack.c.l.b16 %v3801
    %v4171 = vunpack.c.h.b16 %v3801
    %v4172 = vunpack.c.l.b16 %v3802
    %v4173 = vunpack.c.h.b16 %v3802
    %v4174 = vunpack.c.l.b16 %v3803
    %v4175 = vunpack.c.h.b16 %v3803
    %v4176 = vunpack.c.l.b16 %v3804
    %v4177 = vunpack.c.h.b16 %v3804
    %v4178 = vunpack.c.l.b16 %v3805
    %v4179 = vunpack.c.h.b16 %v3805
    %v4180 = vunpack.c.l.b16 %v3806
    %v4181 = vunpack.c.h.b16 %v3806
    %v4182 = vunpack.c.l.b16 %v3807
    %v4183 = vunpack.c.h.b16 %v3807
    %v4184 = vunpack.c.l.b16 %v3808
    %v4185 = vunpack.c.h.b16 %v3808
    %v4186 = vunpack.c.l.b16 %v3809
    %v4187 = vunpack.c.h.b16 %v3809
    %v4188 = vunpack.c.l.b16 %v3810
    %v4189 = vunpack.c.h.b16 %v3810
    %v4190 = vunpack.c.l.b16 %v3811
    %v4191 = vunpack.c.h.b16 %v3811
    %v4192 = vunpack.c.l.b16 %v3812
    %v4193 = vunpack.c.h.b16 %v3812
    %v4194 = vunpack.c.l.b16 %v3813
    %v4195 = vunpack.c.h.b16 %v3813
    %v4196 = vunpack.c.l.b16 %v3814
    %v4197 = vunpack.c.h.b16 %v3814
    %v4198 = vunpack.c.l.b16 %v3815
    %v4199 = vunpack.c.h.b16 %v3815
    %v4200 = vpack.c.b16 %v3952, %v3944
    %v4201 = vpack.c.b16 %v3953, %v3945
    %v4202 = vpack.c.b16 %v3954, %v3946
    %v4203 = vpack.c.b16 %v3955, %v3947
    %v4204 = vpack.c.b16 %v3956, %v3948
    %v4205 = vpack.c.b16 %v3957, %v3949
    %v4206 = vpack.c.b16 %v3958, %v3950
    %v4207 = vpack.c.b16 %v3959, %v3951
    %v4208 = vpack.c.b16 %v3968, %v3960
    %v4209 = vpack.c.b16 %v3969, %v3961
    %v4210 = vpack.c.b16 %v3970, %v3962
    %v4211 = vpack.c.b16 %v3971, %v3963
    %v4212 = vpack.c.b16 %v3972, %v3964
    %v4213 = vpack.c.b16 %v3973, %v3965
    %v4214 = vpack.c.b16 %v3974, %v3966
    %v4215 = vpack.c.b16 %v3975, %v3967
    %v4216 = vpack.c.b16 %v3984, %v3976
    %v4217 = vpack.c.b16 %v3985, %v3977
    %v4218 = vpack.c.b16 %v3986, %v3978
    %v4219 = vpack.c.b16 %v3987, %v3979
    %v4220 = vpack.c.b16 %v3988, %v3980
    %v4221 = vpack.c.b16 %v3989, %v3981
    %v4222 = vpack.c.b16 %v3990, %v3982
    %v4223 = vpack.c.b16 %v3991, %v3983
    %v4224 = vpack.c.b16 %v4000, %v3992
    %v4225 = vpack.c.b16 %v4001, %v3993
    %v4226 = vpack.c.b16 %v4002, %v3994
    %v4227 = vpack.c.b16 %v4003, %v3995
    %v4228 = vpack.c.b16 %v4004, %v3996
    %v4229 = vpack.c.b16 %v4005, %v3997
    %v4230 = vpack.c.b16 %v4006, %v3998
    %v4231 = vpack.c.b16 %v4007, %v3999
    %v4232 = vpack.c.b16 %v4016, %v4008
    %v4233 = vpack.c.b16 %v4017, %v4009
    %v4234 = vpack.c.b16 %v4018, %v4010
    %v4235 = vpack.c.b16 %v4019, %v4011
    %v4236 = vpack.c.b16 %v4020, %v4012
    %v4237 = vpack.c.b16 %v4021, %v4013
    %v4238 = vpack.c.b16 %v4022, %v4014
    %v4239 = vpack.c.b16 %v4023, %v4015
    %v4240 = vpack.c.b16 %v4032, %v4024
    %v4241 = vpack.c.b16 %v4033, %v4025
    %v4242 = vpack.c.b16 %v4034, %v4026
    %v4243 = vpack.c.b16 %v4035, %v4027
    %v4244 = vpack.c.b16 %v4036, %v4028
    %v4245 = vpack.c.b16 %v4037, %v4029
    %v4246 = vpack.c.b16 %v4038, %v4030
    %v4247 = vpack.c.b16 %v4039, %v4031
    %v4248 = vpack.c.b16 %v4048, %v4040
    %v4249 = vpack.c.b16 %v4049, %v4041
    %v4250 = vpack.c.b16 %v4050, %v4042
    %v4251 = vpack.c.b16 %v4051, %v4043
    %v4252 = vpack.c.b16 %v4052, %v4044
    %v4253 = vpack.c.b16 %v4053, %v4045
    %v4254 = vpack.c.b16 %v4054, %v4046
    %v4255 = vpack.c.b16 %v4055, %v4047
    %v4256 = vpack.c.b16 %v4064, %v4056
    %v4257 = vpack.c.b16 %v4065, %v4057
    %v4258 = vpack.c.b16 %v4066, %v4058
    %v4259 = vpack.c.b16 %v4067, %v4059
    %v4260 = vpack.c.b16 %v4068, %v4060
    %v4261 = vpack.c.b16 %v4069, %v4061
    %v4262 = vpack.c.b16 %v4070, %v4062
    %v4263 = vpack.c.b16 %v4071, %v4063
    %v4264 = vpack.c.b16 %v4080, %v4072
    %v4265 = vpack.c.b16 %v4081, %v4073
    %v4266 = vpack.c.b16 %v4082, %v4074
    %v4267 = vpack.c.b16 %v4083, %v4075
    %v4268 = vpack.c.b16 %v4084, %v4076
    %v4269 = vpack.c.b16 %v4085, %v4077
    %v4270 = vpack.c.b16 %v4086, %v4078
    %v4271 = vpack.c.b16 %v4087, %v4079
    %v4272 = vpack.c.b16 %v4096, %v4088
    %v4273 = vpack.c.b16 %v4097, %v4089
    %v4274 = vpack.c.b16 %v4098, %v4090
    %v4275 = vpack.c.b16 %v4099, %v4091
    %v4276 = vpack.c.b16 %v4100, %v4092
    %v4277 = vpack.c.b16 %v4101, %v4093
    %v4278 = vpack.c.b16 %v4102, %v4094
    %v4279 = vpack.c.b16 %v4103, %v4095
    %v4280 = vpack.c.b16 %v4112, %v4104
    %v4281 = vpack.c.b16 %v4113, %v4105
    %v4282 = vpack.c.b16 %v4114, %v4106
    %v4283 = vpack.c.b16 %v4115, %v4107
    %v4284 = vpack.c.b16 %v4116, %v4108
    %v4285 = vpack.c.b16 %v4117, %v4109
    %v4286 = vpack.c.b16 %v4118, %v4110
    %v4287 = vpack.c.b16 %v4119, %v4111
    %v4288 = vpack.c.b16 %v4128, %v4120
    %v4289 = vpack.c.b16 %v4129, %v4121
    %v4290 = vpack.c.b16 %v4130, %v4122
    %v4291 = vpack.c.b16 %v4131, %v4123
    %v4292 = vpack.c.b16 %v4132, %v4124
    %v4293 = vpack.c.b16 %v4133, %v4125
    %v4294 = vpack.c.b16 %v4134, %v4126
    %v4295 = vpack.c.b16 %v4135, %v4127
    %v4296 = vpack.c.b16 %v4144, %v4136
    %v4297 = vpack.c.b16 %v4145, %v4137
    %v4298 = vpack.c.b16 %v4146, %v4138
    %v4299 = vpack.c.b16 %v4147, %v4139
    %v4300 = vpack.c.b16 %v4148, %v4140
    %v4301 = vpack.c.b16 %v4149, %v4141
    %v4302 = vpack.c.b16 %v4150, %v4142
    %v4303 = vpack.c.b16 %v4151, %v4143
    %v4304 = vpack.c.b16 %v4160, %v4152
    %v4305 = vpack.c.b16 %v4161, %v4153
    %v4306 = vpack.c.b16 %v4162, %v4154
    %v4307 = vpack.c.b16 %v4163, %v4155
    %v4308 = vpack.c.b16 %v4164, %v4156
    %v4309 = vpack.c.b16 %v4165, %v4157
    %v4310 = vpack.c.b16 %v4166, %v4158
    %v4311 = vpack.c.b16 %v4167, %v4159
    %v4312 = vpack.c.b16 %v4176, %v4168
    %v4313 = vpack.c.b16 %v4177, %v4169
    %v4314 = vpack.c.b16 %v4178, %v4170
    %v4315 = vpack.c.b16 %v4179, %v4171
    %v4316 = vpack.c.b16 %v4180, %v4172
    %v4317 = vpack.c.b16 %v4181, %v4173
    %v4318 = vpack.c.b16 %v4182, %v4174
    %v4319 = vpack.c.b16 %v4183, %v4175
    %v4320 = vpack.c.b16 %v4192, %v4184
    %v4321 = vpack.c.b16 %v4193, %v4185
    %v4322 = vpack.c.b16 %v4194, %v4186
    %v4323 = vpack.c.b16 %v4195, %v4187
    %v4324 = vpack.c.b16 %v4196, %v4188
    %v4325 = vpack.c.b16 %v4197, %v4189
    %v4326 = vpack.c.b16 %v4198, %v4190
    %v4327 = vpack.c.b16 %v4199, %v4191
    %4456 = vmatprep.subr.bf16.mxu0 %v4257
    %4457 = vmatpush1.bf16.msra.mxu0 %v4256
    %4458 = vmatprep.subr.bf16.mxu0 %v4249
    %4459 = vmatpush1.bf16.msra.mxu0 %v4248
    %4460 = vmatprep.subr.bf16.mxu0 %v4241
    %4461 = vmatpush1.bf16.msra.mxu0 %v4240
    %4462 = vmatprep.subr.bf16.mxu0 %v4233
    %4463 = vmatpush1.bf16.msra.mxu0 %v4232
    %4464 = vmatprep.subr.bf16.mxu0 %v4225
    %4465 = vmatpush1.bf16.msra.mxu0 %v4224
    %4466 = vmatprep.subr.bf16.mxu0 %v4217
    %4467 = vmatpush1.bf16.msra.mxu0 %v4216
    %4468 = vmatprep.subr.bf16.mxu0 %v4209
    %4469 = vmatpush1.bf16.msra.mxu0 %v4208
    %4470 = vmatprep.subr.bf16.mxu0 %v4201
    %4471 = vmatpush1.bf16.msra.mxu0 %v4200
    %4472 = vmatprep.subr.bf16.mxu0 %v4321
    %4473 = vmatpush2.bf16.msra.mxu0 %v4320
    %4474 = vmatprep.subr.bf16.mxu0 %v4313
    %4475 = vmatpush2.bf16.msra.mxu0 %v4312
    %4476 = vmatprep.subr.bf16.mxu0 %v4305
    %4477 = vmatpush2.bf16.msra.mxu0 %v4304
    %4478 = vmatprep.subr.bf16.mxu0 %v4297
    %4479 = vmatpush2.bf16.msra.mxu0 %v4296
    %4480 = vmatprep.subr.bf16.mxu0 %v4289
    %4481 = vmatpush2.bf16.msra.mxu0 %v4288
    %4482 = vmatprep.subr.bf16.mxu0 %v4281
    %4483 = vmatpush2.bf16.msra.mxu0 %v4280
    %4484 = vmatprep.subr.bf16.mxu0 %v4273
    %4485 = vmatpush2.bf16.msra.mxu0 %v4272
    %4486 = vmatprep.subr.bf16.mxu0 %v4265
    %4487 = vmatpush2.bf16.msra.mxu0 %v4264
    %4488 = vmatprep.mubr.bf16.mxu0 %v3687
    %4489 = vmatmul.mubr.bf16.gmra.mxu0 %v3686
    %v4490 = vpop.f32.mrf.mxu0
    %v4491 = vadd.f32 0.0, %v4490
    %v4492 = vpop.f32.mrf.mxu0
    %v4493 = vadd.f32 0.0, %v4492
    %v4494 = vpop.f32.mrf.mxu0
    %v4495 = vpop.f32.mrf.mxu0
    %4496 = vdwg.mxu0
    %4497 = vmatprep.subr.bf16.mxu0 %v4259
    %4498 = vmatpush1.bf16.msra.mxu0 %v4258
    %4499 = vmatprep.subr.bf16.mxu0 %v4251
    %4500 = vmatpush1.bf16.msra.mxu0 %v4250
    %4501 = vmatprep.subr.bf16.mxu0 %v4243
    %4502 = vmatpush1.bf16.msra.mxu0 %v4242
    %4503 = vmatprep.subr.bf16.mxu0 %v4235
    %4504 = vmatpush1.bf16.msra.mxu0 %v4234
    %4505 = vmatprep.subr.bf16.mxu0 %v4227
    %4506 = vmatpush1.bf16.msra.mxu0 %v4226
    %4507 = vmatprep.subr.bf16.mxu0 %v4219
    %4508 = vmatpush1.bf16.msra.mxu0 %v4218
    %4509 = vmatprep.subr.bf16.mxu0 %v4211
    %4510 = vmatpush1.bf16.msra.mxu0 %v4210
    %4511 = vmatprep.subr.bf16.mxu0 %v4203
    %4512 = vmatpush1.bf16.msra.mxu0 %v4202
    %4513 = vmatprep.subr.bf16.mxu0 %v4323
    %4514 = vmatpush2.bf16.msra.mxu0 %v4322
    %4515 = vmatprep.subr.bf16.mxu0 %v4315
    %4516 = vmatpush2.bf16.msra.mxu0 %v4314
    %4517 = vmatprep.subr.bf16.mxu0 %v4307
    %4518 = vmatpush2.bf16.msra.mxu0 %v4306
    %4519 = vmatprep.subr.bf16.mxu0 %v4299
    %4520 = vmatpush2.bf16.msra.mxu0 %v4298
    %4521 = vmatprep.subr.bf16.mxu0 %v4291
    %4522 = vmatpush2.bf16.msra.mxu0 %v4290
    %4523 = vmatprep.subr.bf16.mxu0 %v4283
    %4524 = vmatpush2.bf16.msra.mxu0 %v4282
    %4525 = vmatprep.subr.bf16.mxu0 %v4275
    %4526 = vmatpush2.bf16.msra.mxu0 %v4274
    %4527 = vmatprep.subr.bf16.mxu0 %v4267
    %4528 = vmatpush2.bf16.msra.mxu0 %v4266
    %4529 = vmatprep.mubr.bf16.mxu0 %v3687
    %4530 = vmatmul.mubr.bf16.gmra.mxu0 %v3686
    %v4531 = vpop.f32.mrf.mxu0
    %v4532 = vadd.f32 0.0, %v4531
    %v4533 = vpop.f32.mrf.mxu0
    %v4534 = vadd.f32 0.0, %v4533
    %v4535 = vpop.f32.mrf.mxu0
    %v4536 = vpop.f32.mrf.mxu0
    %4537 = vdwg.mxu0
    %4538 = vmatprep.subr.bf16.mxu0 %v4261
    %4539 = vmatpush1.bf16.msra.mxu0 %v4260
    %4540 = vmatprep.subr.bf16.mxu0 %v4253
    %4541 = vmatpush1.bf16.msra.mxu0 %v4252
    %4542 = vmatprep.subr.bf16.mxu0 %v4245
    %4543 = vmatpush1.bf16.msra.mxu0 %v4244
    %4544 = vmatprep.subr.bf16.mxu0 %v4237
    %4545 = vmatpush1.bf16.msra.mxu0 %v4236
    %4546 = vmatprep.subr.bf16.mxu0 %v4229
    %4547 = vmatpush1.bf16.msra.mxu0 %v4228
    %4548 = vmatprep.subr.bf16.mxu0 %v4221
    %4549 = vmatpush1.bf16.msra.mxu0 %v4220
    %4550 = vmatprep.subr.bf16.mxu0 %v4213
    %4551 = vmatpush1.bf16.msra.mxu0 %v4212
    %4552 = vmatprep.subr.bf16.mxu0 %v4205
    %4553 = vmatpush1.bf16.msra.mxu0 %v4204
    %4554 = vmatprep.subr.bf16.mxu0 %v4325
    %4555 = vmatpush2.bf16.msra.mxu0 %v4324
    %4556 = vmatprep.subr.bf16.mxu0 %v4317
    %4557 = vmatpush2.bf16.msra.mxu0 %v4316
    %4558 = vmatprep.subr.bf16.mxu0 %v4309
    %4559 = vmatpush2.bf16.msra.mxu0 %v4308
    %4560 = vmatprep.subr.bf16.mxu0 %v4301
    %4561 = vmatpush2.bf16.msra.mxu0 %v4300
    %4562 = vmatprep.subr.bf16.mxu0 %v4293
    %4563 = vmatpush2.bf16.msra.mxu0 %v4292
    %4564 = vmatprep.subr.bf16.mxu0 %v4285
    %4565 = vmatpush2.bf16.msra.mxu0 %v4284
    %4566 = vmatprep.subr.bf16.mxu0 %v4277
    %4567 = vmatpush2.bf16.msra.mxu0 %v4276
    %4568 = vmatprep.subr.bf16.mxu0 %v4269
    %4569 = vmatpush2.bf16.msra.mxu0 %v4268
    %4570 = vmatprep.mubr.bf16.mxu0 %v3687
    %4571 = vmatmul.mubr.bf16.gmra.mxu0 %v3686
    %v4572 = vpop.f32.mrf.mxu0
    %v4573 = vadd.f32 0.0, %v4572
    %v4574 = vpop.f32.mrf.mxu0
    %v4575 = vadd.f32 0.0, %v4574
    %v4576 = vpop.f32.mrf.mxu0
    %v4577 = vpop.f32.mrf.mxu0
    %4578 = vdwg.mxu0
    %4579 = vmatprep.subr.bf16.mxu0 %v4263
    %4580 = vmatpush1.bf16.msra.mxu0 %v4262
    %4581 = vmatprep.subr.bf16.mxu0 %v4255
    %4582 = vmatpush1.bf16.msra.mxu0 %v4254
    %4583 = vmatprep.subr.bf16.mxu0 %v4247
    %4584 = vmatpush1.bf16.msra.mxu0 %v4246
    %4585 = vmatprep.subr.bf16.mxu0 %v4239
    %4586 = vmatpush1.bf16.msra.mxu0 %v4238
    %4587 = vmatprep.subr.bf16.mxu0 %v4231
    %4588 = vmatpush1.bf16.msra.mxu0 %v4230
    %4589 = vmatprep.subr.bf16.mxu0 %v4223
    %4590 = vmatpush1.bf16.msra.mxu0 %v4222
    %4591 = vmatprep.subr.bf16.mxu0 %v4215
    %4592 = vmatpush1.bf16.msra.mxu0 %v4214
    %4593 = vmatprep.subr.bf16.mxu0 %v4207
    %4594 = vmatpush1.bf16.msra.mxu0 %v4206
    %4595 = vmatprep.subr.bf16.mxu0 %v4327
    %4596 = vmatpush2.bf16.msra.mxu0 %v4326
    %4597 = vmatprep.subr.bf16.mxu0 %v4319
    %4598 = vmatpush2.bf16.msra.mxu0 %v4318
    %4599 = vmatprep.subr.bf16.mxu0 %v4311
    %4600 = vmatpush2.bf16.msra.mxu0 %v4310
    %4601 = vmatprep.subr.bf16.mxu0 %v4303
    %4602 = vmatpush2.bf16.msra.mxu0 %v4302
    %4603 = vmatprep.subr.bf16.mxu0 %v4295
    %4604 = vmatpush2.bf16.msra.mxu0 %v4294
    %4605 = vmatprep.subr.bf16.mxu0 %v4287
    %4606 = vmatpush2.bf16.msra.mxu0 %v4286
    %4607 = vmatprep.subr.bf16.mxu0 %v4279
    %4608 = vmatpush2.bf16.msra.mxu0 %v4278
    %4609 = vmatprep.subr.bf16.mxu0 %v4271
    %4610 = vmatpush2.bf16.msra.mxu0 %v4270
    %4611 = vmatprep.mubr.bf16.mxu0 %v3687
    %4612 = vmatmul.mubr.bf16.gmra.mxu0 %v3686
    %v4613 = vpop.f32.mrf.mxu0
    %v4614 = vadd.f32 0.0, %v4613
    %v4615 = vpop.f32.mrf.mxu0
    %v4616 = vadd.f32 0.0, %v4615
    %v4617 = vpop.f32.mrf.mxu0
    %v4618 = vpop.f32.mrf.mxu0
    %4619 = vdwg.mxu0
    %v4621 = vlaneseq
    %v4622 = vshrl.u32 %v4621, 7
    %v4623 = vsub.s32 0, %v4622
    %v4624 = vrot.slane %v3673, %v4623
    %v4625 = vlaneseq
    %v4626 = vshrl.u32 %v4625, 7
    %v4627 = vsub.s32 1, %v4626
    %v4628 = vrot.slane %v3673, %v4627
    %v4629 = vlaneseq
    %v4630 = vshrl.u32 %v4629, 7
    %v4631 = vsub.s32 2, %v4630
    %v4632 = vrot.slane %v3673, %v4631
    %v4633 = vlaneseq
    %v4634 = vshrl.u32 %v4633, 7
    %v4635 = vsub.s32 3, %v4634
    %v4636 = vrot.slane %v3673, %v4635
    %v4637 = vlaneseq
    %v4638 = vshrl.u32 %v4637, 7
    %v4639 = vsub.s32 4, %v4638
    %v4640 = vrot.slane %v3673, %v4639
    %v4641 = vlaneseq
    %v4642 = vshrl.u32 %v4641, 7
    %v4643 = vsub.s32 5, %v4642
    %v4644 = vrot.slane %v3673, %v4643
    %v4645 = vlaneseq
    %v4646 = vshrl.u32 %v4645, 7
    %v4647 = vsub.s32 6, %v4646
    %v4648 = vrot.slane %v3673, %v4647
    %v4649 = vlaneseq
    %v4650 = vshrl.u32 %v4649, 7
    %v4651 = vsub.s32 7, %v4650
    %v4652 = vrot.slane %v3673, %v4651
    %v4661 = vadd.f32 %v4624, %v4491
    %v4662 = vadd.f32 %v4628, %v4493
    %v4663 = vadd.f32 %v4632, %v4532
    %v4664 = vadd.f32 %v4636, %v4534
    %v4665 = vadd.f32 %v4640, %v4573
    %v4666 = vadd.f32 %v4644, %v4575
    %v4667 = vadd.f32 %v4648, %v4614
    %v4668 = vadd.f32 %v4652, %v4616
    %v4669 = vpack.c.bf16 %v3671, %v3671
    %v4670 = vpack.c.bf16 %v3672, %v3672
    %v4671 = vld [vmem:[#allocation8 + $0x400] sm:$0xff]
    %v4672 = vld [vmem:[#allocation8 + $0x408] sm:$0xff]
    %v4673 = vld [vmem:[#allocation8 + $0x410] sm:$0xff]
    %v4674 = vld [vmem:[#allocation8 + $0x418] sm:$0xff]
    %v4675 = vld [vmem:[#allocation8 + $0x420] sm:$0xff]
    %v4676 = vld [vmem:[#allocation8 + $0x428] sm:$0xff]
    %v4677 = vld [vmem:[#allocation8 + $0x430] sm:$0xff]
    %v4678 = vld [vmem:[#allocation8 + $0x438] sm:$0xff]
    %v4679 = vld [vmem:[#allocation8 + $0x440] sm:$0xff]
    %v4680 = vld [vmem:[#allocation8 + $0x448] sm:$0xff]
    %v4681 = vld [vmem:[#allocation8 + $0x450] sm:$0xff]
    %v4682 = vld [vmem:[#allocation8 + $0x458] sm:$0xff]
    %v4683 = vld [vmem:[#allocation8 + $0x460] sm:$0xff]
    %v4684 = vld [vmem:[#allocation8 + $0x468] sm:$0xff]
    %v4685 = vld [vmem:[#allocation8 + $0x470] sm:$0xff]
    %v4686 = vld [vmem:[#allocation8 + $0x478] sm:$0xff]
    %v4687 = vld [vmem:[#allocation8 + $0x480] sm:$0xff]
    %v4688 = vld [vmem:[#allocation8 + $0x488] sm:$0xff]
    %v4689 = vld [vmem:[#allocation8 + $0x490] sm:$0xff]
    %v4690 = vld [vmem:[#allocation8 + $0x498] sm:$0xff]
    %v4691 = vld [vmem:[#allocation8 + $0x4a0] sm:$0xff]
    %v4692 = vld [vmem:[#allocation8 + $0x4a8] sm:$0xff]
    %v4693 = vld [vmem:[#allocation8 + $0x4b0] sm:$0xff]
    %v4694 = vld [vmem:[#allocation8 + $0x4b8] sm:$0xff]
    %v4695 = vld [vmem:[#allocation8 + $0x4c0] sm:$0xff]
    %v4696 = vld [vmem:[#allocation8 + $0x4c8] sm:$0xff]
    %v4697 = vld [vmem:[#allocation8 + $0x4d0] sm:$0xff]
    %v4698 = vld [vmem:[#allocation8 + $0x4d8] sm:$0xff]
    %v4699 = vld [vmem:[#allocation8 + $0x4e0] sm:$0xff]
    %v4700 = vld [vmem:[#allocation8 + $0x4e8] sm:$0xff]
    %v4701 = vld [vmem:[#allocation8 + $0x4f0] sm:$0xff]
    %v4702 = vld [vmem:[#allocation8 + $0x4f8] sm:$0xff]
    %v4703 = vld [vmem:[#allocation8 + $0x500] sm:$0xff]
    %v4704 = vld [vmem:[#allocation8 + $0x508] sm:$0xff]
    %v4705 = vld [vmem:[#allocation8 + $0x510] sm:$0xff]
    %v4706 = vld [vmem:[#allocation8 + $0x518] sm:$0xff]
    %v4707 = vld [vmem:[#allocation8 + $0x520] sm:$0xff]
    %v4708 = vld [vmem:[#allocation8 + $0x528] sm:$0xff]
    %v4709 = vld [vmem:[#allocation8 + $0x530] sm:$0xff]
    %v4710 = vld [vmem:[#allocation8 + $0x538] sm:$0xff]
    %v4711 = vld [vmem:[#allocation8 + $0x540] sm:$0xff]
    %v4712 = vld [vmem:[#allocation8 + $0x548] sm:$0xff]
    %v4713 = vld [vmem:[#allocation8 + $0x550] sm:$0xff]
    %v4714 = vld [vmem:[#allocation8 + $0x558] sm:$0xff]
    %v4715 = vld [vmem:[#allocation8 + $0x560] sm:$0xff]
    %v4716 = vld [vmem:[#allocation8 + $0x568] sm:$0xff]
    %v4717 = vld [vmem:[#allocation8 + $0x570] sm:$0xff]
    %v4718 = vld [vmem:[#allocation8 + $0x578] sm:$0xff]
    %v4719 = vld [vmem:[#allocation8 + $0x580] sm:$0xff]
    %v4720 = vld [vmem:[#allocation8 + $0x588] sm:$0xff]
    %v4721 = vld [vmem:[#allocation8 + $0x590] sm:$0xff]
    %v4722 = vld [vmem:[#allocation8 + $0x598] sm:$0xff]
    %v4723 = vld [vmem:[#allocation8 + $0x5a0] sm:$0xff]
    %v4724 = vld [vmem:[#allocation8 + $0x5a8] sm:$0xff]
    %v4725 = vld [vmem:[#allocation8 + $0x5b0] sm:$0xff]
    %v4726 = vld [vmem:[#allocation8 + $0x5b8] sm:$0xff]
    %v4727 = vld [vmem:[#allocation8 + $0x5c0] sm:$0xff]
    %v4728 = vld [vmem:[#allocation8 + $0x5c8] sm:$0xff]
    %v4729 = vld [vmem:[#allocation8 + $0x5d0] sm:$0xff]
    %v4730 = vld [vmem:[#allocation8 + $0x5d8] sm:$0xff]
    %v4731 = vld [vmem:[#allocation8 + $0x5e0] sm:$0xff]
    %v4732 = vld [vmem:[#allocation8 + $0x5e8] sm:$0xff]
    %v4733 = vld [vmem:[#allocation8 + $0x5f0] sm:$0xff]
    %v4734 = vld [vmem:[#allocation8 + $0x5f8] sm:$0xff]
    %v4735 = vld [vmem:[#allocation8 + $0x600] sm:$0xff]
    %v4736 = vld [vmem:[#allocation8 + $0x608] sm:$0xff]
    %v4737 = vld [vmem:[#allocation8 + $0x610] sm:$0xff]
    %v4738 = vld [vmem:[#allocation8 + $0x618] sm:$0xff]
    %v4739 = vld [vmem:[#allocation8 + $0x620] sm:$0xff]
    %v4740 = vld [vmem:[#allocation8 + $0x628] sm:$0xff]
    %v4741 = vld [vmem:[#allocation8 + $0x630] sm:$0xff]
    %v4742 = vld [vmem:[#allocation8 + $0x638] sm:$0xff]
    %v4743 = vld [vmem:[#allocation8 + $0x640] sm:$0xff]
    %v4744 = vld [vmem:[#allocation8 + $0x648] sm:$0xff]
    %v4745 = vld [vmem:[#allocation8 + $0x650] sm:$0xff]
    %v4746 = vld [vmem:[#allocation8 + $0x658] sm:$0xff]
    %v4747 = vld [vmem:[#allocation8 + $0x660] sm:$0xff]
    %v4748 = vld [vmem:[#allocation8 + $0x668] sm:$0xff]
    %v4749 = vld [vmem:[#allocation8 + $0x670] sm:$0xff]
    %v4750 = vld [vmem:[#allocation8 + $0x678] sm:$0xff]
    %v4751 = vld [vmem:[#allocation8 + $0x680] sm:$0xff]
    %v4752 = vld [vmem:[#allocation8 + $0x688] sm:$0xff]
    %v4753 = vld [vmem:[#allocation8 + $0x690] sm:$0xff]
    %v4754 = vld [vmem:[#allocation8 + $0x698] sm:$0xff]
    %v4755 = vld [vmem:[#allocation8 + $0x6a0] sm:$0xff]
    %v4756 = vld [vmem:[#allocation8 + $0x6a8] sm:$0xff]
    %v4757 = vld [vmem:[#allocation8 + $0x6b0] sm:$0xff]
    %v4758 = vld [vmem:[#allocation8 + $0x6b8] sm:$0xff]
    %v4759 = vld [vmem:[#allocation8 + $0x6c0] sm:$0xff]
    %v4760 = vld [vmem:[#allocation8 + $0x6c8] sm:$0xff]
    %v4761 = vld [vmem:[#allocation8 + $0x6d0] sm:$0xff]
    %v4762 = vld [vmem:[#allocation8 + $0x6d8] sm:$0xff]
    %v4763 = vld [vmem:[#allocation8 + $0x6e0] sm:$0xff]
    %v4764 = vld [vmem:[#allocation8 + $0x6e8] sm:$0xff]
    %v4765 = vld [vmem:[#allocation8 + $0x6f0] sm:$0xff]
    %v4766 = vld [vmem:[#allocation8 + $0x6f8] sm:$0xff]
    %v4767 = vld [vmem:[#allocation8 + $0x700] sm:$0xff]
    %v4768 = vld [vmem:[#allocation8 + $0x708] sm:$0xff]
    %v4769 = vld [vmem:[#allocation8 + $0x710] sm:$0xff]
    %v4770 = vld [vmem:[#allocation8 + $0x718] sm:$0xff]
    %v4771 = vld [vmem:[#allocation8 + $0x720] sm:$0xff]
    %v4772 = vld [vmem:[#allocation8 + $0x728] sm:$0xff]
    %v4773 = vld [vmem:[#allocation8 + $0x730] sm:$0xff]
    %v4774 = vld [vmem:[#allocation8 + $0x738] sm:$0xff]
    %v4775 = vld [vmem:[#allocation8 + $0x740] sm:$0xff]
    %v4776 = vld [vmem:[#allocation8 + $0x748] sm:$0xff]
    %v4777 = vld [vmem:[#allocation8 + $0x750] sm:$0xff]
    %v4778 = vld [vmem:[#allocation8 + $0x758] sm:$0xff]
    %v4779 = vld [vmem:[#allocation8 + $0x760] sm:$0xff]
    %v4780 = vld [vmem:[#allocation8 + $0x768] sm:$0xff]
    %v4781 = vld [vmem:[#allocation8 + $0x770] sm:$0xff]
    %v4782 = vld [vmem:[#allocation8 + $0x778] sm:$0xff]
    %v4783 = vld [vmem:[#allocation8 + $0x780] sm:$0xff]
    %v4784 = vld [vmem:[#allocation8 + $0x788] sm:$0xff]
    %v4785 = vld [vmem:[#allocation8 + $0x790] sm:$0xff]
    %v4786 = vld [vmem:[#allocation8 + $0x798] sm:$0xff]
    %v4787 = vld [vmem:[#allocation8 + $0x7a0] sm:$0xff]
    %v4788 = vld [vmem:[#allocation8 + $0x7a8] sm:$0xff]
    %v4789 = vld [vmem:[#allocation8 + $0x7b0] sm:$0xff]
    %v4790 = vld [vmem:[#allocation8 + $0x7b8] sm:$0xff]
    %v4791 = vld [vmem:[#allocation8 + $0x7c0] sm:$0xff]
    %v4792 = vld [vmem:[#allocation8 + $0x7c8] sm:$0xff]
    %v4793 = vld [vmem:[#allocation8 + $0x7d0] sm:$0xff]
    %v4794 = vld [vmem:[#allocation8 + $0x7d8] sm:$0xff]
    %v4795 = vld [vmem:[#allocation8 + $0x7e0] sm:$0xff]
    %v4796 = vld [vmem:[#allocation8 + $0x7e8] sm:$0xff]
    %v4797 = vld [vmem:[#allocation8 + $0x7f0] sm:$0xff]
    %v4798 = vld [vmem:[#allocation8 + $0x7f8] sm:$0xff]
    %v4927 = vunpack.c.l.b16 %v4671
    %v4928 = vunpack.c.h.b16 %v4671
    %v4929 = vunpack.c.l.b16 %v4672
    %v4930 = vunpack.c.h.b16 %v4672
    %v4931 = vunpack.c.l.b16 %v4673
    %v4932 = vunpack.c.h.b16 %v4673
    %v4933 = vunpack.c.l.b16 %v4674
    %v4934 = vunpack.c.h.b16 %v4674
    %v4935 = vunpack.c.l.b16 %v4675
    %v4936 = vunpack.c.h.b16 %v4675
    %v4937 = vunpack.c.l.b16 %v4676
    %v4938 = vunpack.c.h.b16 %v4676
    %v4939 = vunpack.c.l.b16 %v4677
    %v4940 = vunpack.c.h.b16 %v4677
    %v4941 = vunpack.c.l.b16 %v4678
    %v4942 = vunpack.c.h.b16 %v4678
    %v4943 = vunpack.c.l.b16 %v4679
    %v4944 = vunpack.c.h.b16 %v4679
    %v4945 = vunpack.c.l.b16 %v4680
    %v4946 = vunpack.c.h.b16 %v4680
    %v4947 = vunpack.c.l.b16 %v4681
    %v4948 = vunpack.c.h.b16 %v4681
    %v4949 = vunpack.c.l.b16 %v4682
    %v4950 = vunpack.c.h.b16 %v4682
    %v4951 = vunpack.c.l.b16 %v4683
    %v4952 = vunpack.c.h.b16 %v4683
    %v4953 = vunpack.c.l.b16 %v4684
    %v4954 = vunpack.c.h.b16 %v4684
    %v4955 = vunpack.c.l.b16 %v4685
    %v4956 = vunpack.c.h.b16 %v4685
    %v4957 = vunpack.c.l.b16 %v4686
    %v4958 = vunpack.c.h.b16 %v4686
    %v4959 = vunpack.c.l.b16 %v4687
    %v4960 = vunpack.c.h.b16 %v4687
    %v4961 = vunpack.c.l.b16 %v4688
    %v4962 = vunpack.c.h.b16 %v4688
    %v4963 = vunpack.c.l.b16 %v4689
    %v4964 = vunpack.c.h.b16 %v4689
    %v4965 = vunpack.c.l.b16 %v4690
    %v4966 = vunpack.c.h.b16 %v4690
    %v4967 = vunpack.c.l.b16 %v4691
    %v4968 = vunpack.c.h.b16 %v4691
    %v4969 = vunpack.c.l.b16 %v4692
    %v4970 = vunpack.c.h.b16 %v4692
    %v4971 = vunpack.c.l.b16 %v4693
    %v4972 = vunpack.c.h.b16 %v4693
    %v4973 = vunpack.c.l.b16 %v4694
    %v4974 = vunpack.c.h.b16 %v4694
    %v4975 = vunpack.c.l.b16 %v4695
    %v4976 = vunpack.c.h.b16 %v4695
    %v4977 = vunpack.c.l.b16 %v4696
    %v4978 = vunpack.c.h.b16 %v4696
    %v4979 = vunpack.c.l.b16 %v4697
    %v4980 = vunpack.c.h.b16 %v4697
    %v4981 = vunpack.c.l.b16 %v4698
    %v4982 = vunpack.c.h.b16 %v4698
    %v4983 = vunpack.c.l.b16 %v4699
    %v4984 = vunpack.c.h.b16 %v4699
    %v4985 = vunpack.c.l.b16 %v4700
    %v4986 = vunpack.c.h.b16 %v4700
    %v4987 = vunpack.c.l.b16 %v4701
    %v4988 = vunpack.c.h.b16 %v4701
    %v4989 = vunpack.c.l.b16 %v4702
    %v4990 = vunpack.c.h.b16 %v4702
    %v4991 = vunpack.c.l.b16 %v4703
    %v4992 = vunpack.c.h.b16 %v4703
    %v4993 = vunpack.c.l.b16 %v4704
    %v4994 = vunpack.c.h.b16 %v4704
    %v4995 = vunpack.c.l.b16 %v4705
    %v4996 = vunpack.c.h.b16 %v4705
    %v4997 = vunpack.c.l.b16 %v4706
    %v4998 = vunpack.c.h.b16 %v4706
    %v4999 = vunpack.c.l.b16 %v4707
    %v5000 = vunpack.c.h.b16 %v4707
    %v5001 = vunpack.c.l.b16 %v4708
    %v5002 = vunpack.c.h.b16 %v4708
    %v5003 = vunpack.c.l.b16 %v4709
    %v5004 = vunpack.c.h.b16 %v4709
    %v5005 = vunpack.c.l.b16 %v4710
    %v5006 = vunpack.c.h.b16 %v4710
    %v5007 = vunpack.c.l.b16 %v4711
    %v5008 = vunpack.c.h.b16 %v4711
    %v5009 = vunpack.c.l.b16 %v4712
    %v5010 = vunpack.c.h.b16 %v4712
    %v5011 = vunpack.c.l.b16 %v4713
    %v5012 = vunpack.c.h.b16 %v4713
    %v5013 = vunpack.c.l.b16 %v4714
    %v5014 = vunpack.c.h.b16 %v4714
    %v5015 = vunpack.c.l.b16 %v4715
    %v5016 = vunpack.c.h.b16 %v4715
    %v5017 = vunpack.c.l.b16 %v4716
    %v5018 = vunpack.c.h.b16 %v4716
    %v5019 = vunpack.c.l.b16 %v4717
    %v5020 = vunpack.c.h.b16 %v4717
    %v5021 = vunpack.c.l.b16 %v4718
    %v5022 = vunpack.c.h.b16 %v4718
    %v5023 = vunpack.c.l.b16 %v4719
    %v5024 = vunpack.c.h.b16 %v4719
    %v5025 = vunpack.c.l.b16 %v4720
    %v5026 = vunpack.c.h.b16 %v4720
    %v5027 = vunpack.c.l.b16 %v4721
    %v5028 = vunpack.c.h.b16 %v4721
    %v5029 = vunpack.c.l.b16 %v4722
    %v5030 = vunpack.c.h.b16 %v4722
    %v5031 = vunpack.c.l.b16 %v4723
    %v5032 = vunpack.c.h.b16 %v4723
    %v5033 = vunpack.c.l.b16 %v4724
    %v5034 = vunpack.c.h.b16 %v4724
    %v5035 = vunpack.c.l.b16 %v4725
    %v5036 = vunpack.c.h.b16 %v4725
    %v5037 = vunpack.c.l.b16 %v4726
    %v5038 = vunpack.c.h.b16 %v4726
    %v5039 = vunpack.c.l.b16 %v4727
    %v5040 = vunpack.c.h.b16 %v4727
    %v5041 = vunpack.c.l.b16 %v4728
    %v5042 = vunpack.c.h.b16 %v4728
    %v5043 = vunpack.c.l.b16 %v4729
    %v5044 = vunpack.c.h.b16 %v4729
    %v5045 = vunpack.c.l.b16 %v4730
    %v5046 = vunpack.c.h.b16 %v4730
    %v5047 = vunpack.c.l.b16 %v4731
    %v5048 = vunpack.c.h.b16 %v4731
    %v5049 = vunpack.c.l.b16 %v4732
    %v5050 = vunpack.c.h.b16 %v4732
    %v5051 = vunpack.c.l.b16 %v4733
    %v5052 = vunpack.c.h.b16 %v4733
    %v5053 = vunpack.c.l.b16 %v4734
    %v5054 = vunpack.c.h.b16 %v4734
    %v5055 = vunpack.c.l.b16 %v4735
    %v5056 = vunpack.c.h.b16 %v4735
    %v5057 = vunpack.c.l.b16 %v4736
    %v5058 = vunpack.c.h.b16 %v4736
    %v5059 = vunpack.c.l.b16 %v4737
    %v5060 = vunpack.c.h.b16 %v4737
    %v5061 = vunpack.c.l.b16 %v4738
    %v5062 = vunpack.c.h.b16 %v4738
    %v5063 = vunpack.c.l.b16 %v4739
    %v5064 = vunpack.c.h.b16 %v4739
    %v5065 = vunpack.c.l.b16 %v4740
    %v5066 = vunpack.c.h.b16 %v4740
    %v5067 = vunpack.c.l.b16 %v4741
    %v5068 = vunpack.c.h.b16 %v4741
    %v5069 = vunpack.c.l.b16 %v4742
    %v5070 = vunpack.c.h.b16 %v4742
    %v5071 = vunpack.c.l.b16 %v4743
    %v5072 = vunpack.c.h.b16 %v4743
    %v5073 = vunpack.c.l.b16 %v4744
    %v5074 = vunpack.c.h.b16 %v4744
    %v5075 = vunpack.c.l.b16 %v4745
    %v5076 = vunpack.c.h.b16 %v4745
    %v5077 = vunpack.c.l.b16 %v4746
    %v5078 = vunpack.c.h.b16 %v4746
    %v5079 = vunpack.c.l.b16 %v4747
    %v5080 = vunpack.c.h.b16 %v4747
    %v5081 = vunpack.c.l.b16 %v4748
    %v5082 = vunpack.c.h.b16 %v4748
    %v5083 = vunpack.c.l.b16 %v4749
    %v5084 = vunpack.c.h.b16 %v4749
    %v5085 = vunpack.c.l.b16 %v4750
    %v5086 = vunpack.c.h.b16 %v4750
    %v5087 = vunpack.c.l.b16 %v4751
    %v5088 = vunpack.c.h.b16 %v4751
    %v5089 = vunpack.c.l.b16 %v4752
    %v5090 = vunpack.c.h.b16 %v4752
    %v5091 = vunpack.c.l.b16 %v4753
    %v5092 = vunpack.c.h.b16 %v4753
    %v5093 = vunpack.c.l.b16 %v4754
    %v5094 = vunpack.c.h.b16 %v4754
    %v5095 = vunpack.c.l.b16 %v4755
    %v5096 = vunpack.c.h.b16 %v4755
    %v5097 = vunpack.c.l.b16 %v4756
    %v5098 = vunpack.c.h.b16 %v4756
    %v5099 = vunpack.c.l.b16 %v4757
    %v5100 = vunpack.c.h.b16 %v4757
    %v5101 = vunpack.c.l.b16 %v4758
    %v5102 = vunpack.c.h.b16 %v4758
    %v5103 = vunpack.c.l.b16 %v4759
    %v5104 = vunpack.c.h.b16 %v4759
    %v5105 = vunpack.c.l.b16 %v4760
    %v5106 = vunpack.c.h.b16 %v4760
    %v5107 = vunpack.c.l.b16 %v4761
    %v5108 = vunpack.c.h.b16 %v4761
    %v5109 = vunpack.c.l.b16 %v4762
    %v5110 = vunpack.c.h.b16 %v4762
    %v5111 = vunpack.c.l.b16 %v4763
    %v5112 = vunpack.c.h.b16 %v4763
    %v5113 = vunpack.c.l.b16 %v4764
    %v5114 = vunpack.c.h.b16 %v4764
    %v5115 = vunpack.c.l.b16 %v4765
    %v5116 = vunpack.c.h.b16 %v4765
    %v5117 = vunpack.c.l.b16 %v4766
    %v5118 = vunpack.c.h.b16 %v4766
    %v5119 = vunpack.c.l.b16 %v4767
    %v5120 = vunpack.c.h.b16 %v4767
    %v5121 = vunpack.c.l.b16 %v4768
    %v5122 = vunpack.c.h.b16 %v4768
    %v5123 = vunpack.c.l.b16 %v4769
    %v5124 = vunpack.c.h.b16 %v4769
    %v5125 = vunpack.c.l.b16 %v4770
    %v5126 = vunpack.c.h.b16 %v4770
    %v5127 = vunpack.c.l.b16 %v4771
    %v5128 = vunpack.c.h.b16 %v4771
    %v5129 = vunpack.c.l.b16 %v4772
    %v5130 = vunpack.c.h.b16 %v4772
    %v5131 = vunpack.c.l.b16 %v4773
    %v5132 = vunpack.c.h.b16 %v4773
    %v5133 = vunpack.c.l.b16 %v4774
    %v5134 = vunpack.c.h.b16 %v4774
    %v5135 = vunpack.c.l.b16 %v4775
    %v5136 = vunpack.c.h.b16 %v4775
    %v5137 = vunpack.c.l.b16 %v4776
    %v5138 = vunpack.c.h.b16 %v4776
    %v5139 = vunpack.c.l.b16 %v4777
    %v5140 = vunpack.c.h.b16 %v4777
    %v5141 = vunpack.c.l.b16 %v4778
    %v5142 = vunpack.c.h.b16 %v4778
    %v5143 = vunpack.c.l.b16 %v4779
    %v5144 = vunpack.c.h.b16 %v4779
    %v5145 = vunpack.c.l.b16 %v4780
    %v5146 = vunpack.c.h.b16 %v4780
    %v5147 = vunpack.c.l.b16 %v4781
    %v5148 = vunpack.c.h.b16 %v4781
    %v5149 = vunpack.c.l.b16 %v4782
    %v5150 = vunpack.c.h.b16 %v4782
    %v5151 = vunpack.c.l.b16 %v4783
    %v5152 = vunpack.c.h.b16 %v4783
    %v5153 = vunpack.c.l.b16 %v4784
    %v5154 = vunpack.c.h.b16 %v4784
    %v5155 = vunpack.c.l.b16 %v4785
    %v5156 = vunpack.c.h.b16 %v4785
    %v5157 = vunpack.c.l.b16 %v4786
    %v5158 = vunpack.c.h.b16 %v4786
    %v5159 = vunpack.c.l.b16 %v4787
    %v5160 = vunpack.c.h.b16 %v4787
    %v5161 = vunpack.c.l.b16 %v4788
    %v5162 = vunpack.c.h.b16 %v4788
    %v5163 = vunpack.c.l.b16 %v4789
    %v5164 = vunpack.c.h.b16 %v4789
    %v5165 = vunpack.c.l.b16 %v4790
    %v5166 = vunpack.c.h.b16 %v4790
    %v5167 = vunpack.c.l.b16 %v4791
    %v5168 = vunpack.c.h.b16 %v4791
    %v5169 = vunpack.c.l.b16 %v4792
    %v5170 = vunpack.c.h.b16 %v4792
    %v5171 = vunpack.c.l.b16 %v4793
    %v5172 = vunpack.c.h.b16 %v4793
    %v5173 = vunpack.c.l.b16 %v4794
    %v5174 = vunpack.c.h.b16 %v4794
    %v5175 = vunpack.c.l.b16 %v4795
    %v5176 = vunpack.c.h.b16 %v4795
    %v5177 = vunpack.c.l.b16 %v4796
    %v5178 = vunpack.c.h.b16 %v4796
    %v5179 = vunpack.c.l.b16 %v4797
    %v5180 = vunpack.c.h.b16 %v4797
    %v5181 = vunpack.c.l.b16 %v4798
    %v5182 = vunpack.c.h.b16 %v4798
    %v5183 = vpack.c.b16 %v4935, %v4927
    %v5184 = vpack.c.b16 %v4936, %v4928
    %v5185 = vpack.c.b16 %v4937, %v4929
    %v5186 = vpack.c.b16 %v4938, %v4930
    %v5187 = vpack.c.b16 %v4939, %v4931
    %v5188 = vpack.c.b16 %v4940, %v4932
    %v5189 = vpack.c.b16 %v4941, %v4933
    %v5190 = vpack.c.b16 %v4942, %v4934
    %v5191 = vpack.c.b16 %v4951, %v4943
    %v5192 = vpack.c.b16 %v4952, %v4944
    %v5193 = vpack.c.b16 %v4953, %v4945
    %v5194 = vpack.c.b16 %v4954, %v4946
    %v5195 = vpack.c.b16 %v4955, %v4947
    %v5196 = vpack.c.b16 %v4956, %v4948
    %v5197 = vpack.c.b16 %v4957, %v4949
    %v5198 = vpack.c.b16 %v4958, %v4950
    %v5199 = vpack.c.b16 %v4967, %v4959
    %v5200 = vpack.c.b16 %v4968, %v4960
    %v5201 = vpack.c.b16 %v4969, %v4961
    %v5202 = vpack.c.b16 %v4970, %v4962
    %v5203 = vpack.c.b16 %v4971, %v4963
    %v5204 = vpack.c.b16 %v4972, %v4964
    %v5205 = vpack.c.b16 %v4973, %v4965
    %v5206 = vpack.c.b16 %v4974, %v4966
    %v5207 = vpack.c.b16 %v4983, %v4975
    %v5208 = vpack.c.b16 %v4984, %v4976
    %v5209 = vpack.c.b16 %v4985, %v4977
    %v5210 = vpack.c.b16 %v4986, %v4978
    %v5211 = vpack.c.b16 %v4987, %v4979
    %v5212 = vpack.c.b16 %v4988, %v4980
    %v5213 = vpack.c.b16 %v4989, %v4981
    %v5214 = vpack.c.b16 %v4990, %v4982
    %v5215 = vpack.c.b16 %v4999, %v4991
    %v5216 = vpack.c.b16 %v5000, %v4992
    %v5217 = vpack.c.b16 %v5001, %v4993
    %v5218 = vpack.c.b16 %v5002, %v4994
    %v5219 = vpack.c.b16 %v5003, %v4995
    %v5220 = vpack.c.b16 %v5004, %v4996
    %v5221 = vpack.c.b16 %v5005, %v4997
    %v5222 = vpack.c.b16 %v5006, %v4998
    %v5223 = vpack.c.b16 %v5015, %v5007
    %v5224 = vpack.c.b16 %v5016, %v5008
    %v5225 = vpack.c.b16 %v5017, %v5009
    %v5226 = vpack.c.b16 %v5018, %v5010
    %v5227 = vpack.c.b16 %v5019, %v5011
    %v5228 = vpack.c.b16 %v5020, %v5012
    %v5229 = vpack.c.b16 %v5021, %v5013
    %v5230 = vpack.c.b16 %v5022, %v5014
    %v5231 = vpack.c.b16 %v5031, %v5023
    %v5232 = vpack.c.b16 %v5032, %v5024
    %v5233 = vpack.c.b16 %v5033, %v5025
    %v5234 = vpack.c.b16 %v5034, %v5026
    %v5235 = vpack.c.b16 %v5035, %v5027
    %v5236 = vpack.c.b16 %v5036, %v5028
    %v5237 = vpack.c.b16 %v5037, %v5029
    %v5238 = vpack.c.b16 %v5038, %v5030
    %v5239 = vpack.c.b16 %v5047, %v5039
    %v5240 = vpack.c.b16 %v5048, %v5040
    %v5241 = vpack.c.b16 %v5049, %v5041
    %v5242 = vpack.c.b16 %v5050, %v5042
    %v5243 = vpack.c.b16 %v5051, %v5043
    %v5244 = vpack.c.b16 %v5052, %v5044
    %v5245 = vpack.c.b16 %v5053, %v5045
    %v5246 = vpack.c.b16 %v5054, %v5046
    %v5247 = vpack.c.b16 %v5063, %v5055
    %v5248 = vpack.c.b16 %v5064, %v5056
    %v5249 = vpack.c.b16 %v5065, %v5057
    %v5250 = vpack.c.b16 %v5066, %v5058
    %v5251 = vpack.c.b16 %v5067, %v5059
    %v5252 = vpack.c.b16 %v5068, %v5060
    %v5253 = vpack.c.b16 %v5069, %v5061
    %v5254 = vpack.c.b16 %v5070, %v5062
    %v5255 = vpack.c.b16 %v5079, %v5071
    %v5256 = vpack.c.b16 %v5080, %v5072
    %v5257 = vpack.c.b16 %v5081, %v5073
    %v5258 = vpack.c.b16 %v5082, %v5074
    %v5259 = vpack.c.b16 %v5083, %v5075
    %v5260 = vpack.c.b16 %v5084, %v5076
    %v5261 = vpack.c.b16 %v5085, %v5077
    %v5262 = vpack.c.b16 %v5086, %v5078
    %v5263 = vpack.c.b16 %v5095, %v5087
    %v5264 = vpack.c.b16 %v5096, %v5088
    %v5265 = vpack.c.b16 %v5097, %v5089
    %v5266 = vpack.c.b16 %v5098, %v5090
    %v5267 = vpack.c.b16 %v5099, %v5091
    %v5268 = vpack.c.b16 %v5100, %v5092
    %v5269 = vpack.c.b16 %v5101, %v5093
    %v5270 = vpack.c.b16 %v5102, %v5094
    %v5271 = vpack.c.b16 %v5111, %v5103
    %v5272 = vpack.c.b16 %v5112, %v5104
    %v5273 = vpack.c.b16 %v5113, %v5105
    %v5274 = vpack.c.b16 %v5114, %v5106
    %v5275 = vpack.c.b16 %v5115, %v5107
    %v5276 = vpack.c.b16 %v5116, %v5108
    %v5277 = vpack.c.b16 %v5117, %v5109
    %v5278 = vpack.c.b16 %v5118, %v5110
    %v5279 = vpack.c.b16 %v5127, %v5119
    %v5280 = vpack.c.b16 %v5128, %v5120
    %v5281 = vpack.c.b16 %v5129, %v5121
    %v5282 = vpack.c.b16 %v5130, %v5122
    %v5283 = vpack.c.b16 %v5131, %v5123
    %v5284 = vpack.c.b16 %v5132, %v5124
    %v5285 = vpack.c.b16 %v5133, %v5125
    %v5286 = vpack.c.b16 %v5134, %v5126
    %v5287 = vpack.c.b16 %v5143, %v5135
    %v5288 = vpack.c.b16 %v5144, %v5136
    %v5289 = vpack.c.b16 %v5145, %v5137
    %v5290 = vpack.c.b16 %v5146, %v5138
    %v5291 = vpack.c.b16 %v5147, %v5139
    %v5292 = vpack.c.b16 %v5148, %v5140
    %v5293 = vpack.c.b16 %v5149, %v5141
    %v5294 = vpack.c.b16 %v5150, %v5142
    %v5295 = vpack.c.b16 %v5159, %v5151
    %v5296 = vpack.c.b16 %v5160, %v5152
    %v5297 = vpack.c.b16 %v5161, %v5153
    %v5298 = vpack.c.b16 %v5162, %v5154
    %v5299 = vpack.c.b16 %v5163, %v5155
    %v5300 = vpack.c.b16 %v5164, %v5156
    %v5301 = vpack.c.b16 %v5165, %v5157
    %v5302 = vpack.c.b16 %v5166, %v5158
    %v5303 = vpack.c.b16 %v5175, %v5167
    %v5304 = vpack.c.b16 %v5176, %v5168
    %v5305 = vpack.c.b16 %v5177, %v5169
    %v5306 = vpack.c.b16 %v5178, %v5170
    %v5307 = vpack.c.b16 %v5179, %v5171
    %v5308 = vpack.c.b16 %v5180, %v5172
    %v5309 = vpack.c.b16 %v5181, %v5173
    %v5310 = vpack.c.b16 %v5182, %v5174
    %5439 = vmatprep.subr.bf16.mxu0 %v5240
    %5440 = vmatpush1.bf16.msra.mxu0 %v5239
    %5441 = vmatprep.subr.bf16.mxu0 %v5232
    %5442 = vmatpush1.bf16.msra.mxu0 %v5231
    %5443 = vmatprep.subr.bf16.mxu0 %v5224
    %5444 = vmatpush1.bf16.msra.mxu0 %v5223
    %5445 = vmatprep.subr.bf16.mxu0 %v5216
    %5446 = vmatpush1.bf16.msra.mxu0 %v5215
    %5447 = vmatprep.subr.bf16.mxu0 %v5208
    %5448 = vmatpush1.bf16.msra.mxu0 %v5207
    %5449 = vmatprep.subr.bf16.mxu0 %v5200
    %5450 = vmatpush1.bf16.msra.mxu0 %v5199
    %5451 = vmatprep.subr.bf16.mxu0 %v5192
    %5452 = vmatpush1.bf16.msra.mxu0 %v5191
    %5453 = vmatprep.subr.bf16.mxu0 %v5184
    %5454 = vmatpush1.bf16.msra.mxu0 %v5183
    %5455 = vmatprep.subr.bf16.mxu0 %v5304
    %5456 = vmatpush2.bf16.msra.mxu0 %v5303
    %5457 = vmatprep.subr.bf16.mxu0 %v5296
    %5458 = vmatpush2.bf16.msra.mxu0 %v5295
    %5459 = vmatprep.subr.bf16.mxu0 %v5288
    %5460 = vmatpush2.bf16.msra.mxu0 %v5287
    %5461 = vmatprep.subr.bf16.mxu0 %v5280
    %5462 = vmatpush2.bf16.msra.mxu0 %v5279
    %5463 = vmatprep.subr.bf16.mxu0 %v5272
    %5464 = vmatpush2.bf16.msra.mxu0 %v5271
    %5465 = vmatprep.subr.bf16.mxu0 %v5264
    %5466 = vmatpush2.bf16.msra.mxu0 %v5263
    %5467 = vmatprep.subr.bf16.mxu0 %v5256
    %5468 = vmatpush2.bf16.msra.mxu0 %v5255
    %5469 = vmatprep.subr.bf16.mxu0 %v5248
    %5470 = vmatpush2.bf16.msra.mxu0 %v5247
    %5471 = vmatprep.mubr.bf16.mxu0 %v4670
    %5472 = vmatmul.mubr.bf16.gmra.mxu0 %v4669
    %v5473 = vpop.f32.mrf.mxu0
    %v5474 = vadd.f32 0.0, %v5473
    %v5475 = vpop.f32.mrf.mxu0
    %v5476 = vadd.f32 0.0, %v5475
    %v5477 = vpop.f32.mrf.mxu0
    %v5478 = vpop.f32.mrf.mxu0
    %5479 = vdwg.mxu0
    %5480 = vmatprep.subr.bf16.mxu0 %v5242
    %5481 = vmatpush1.bf16.msra.mxu0 %v5241
    %5482 = vmatprep.subr.bf16.mxu0 %v5234
    %5483 = vmatpush1.bf16.msra.mxu0 %v5233
    %5484 = vmatprep.subr.bf16.mxu0 %v5226
    %5485 = vmatpush1.bf16.msra.mxu0 %v5225
    %5486 = vmatprep.subr.bf16.mxu0 %v5218
    %5487 = vmatpush1.bf16.msra.mxu0 %v5217
    %5488 = vmatprep.subr.bf16.mxu0 %v5210
    %5489 = vmatpush1.bf16.msra.mxu0 %v5209
    %5490 = vmatprep.subr.bf16.mxu0 %v5202
    %5491 = vmatpush1.bf16.msra.mxu0 %v5201
    %5492 = vmatprep.subr.bf16.mxu0 %v5194
    %5493 = vmatpush1.bf16.msra.mxu0 %v5193
    %5494 = vmatprep.subr.bf16.mxu0 %v5186
    %5495 = vmatpush1.bf16.msra.mxu0 %v5185
    %5496 = vmatprep.subr.bf16.mxu0 %v5306
    %5497 = vmatpush2.bf16.msra.mxu0 %v5305
    %5498 = vmatprep.subr.bf16.mxu0 %v5298
    %5499 = vmatpush2.bf16.msra.mxu0 %v5297
    %5500 = vmatprep.subr.bf16.mxu0 %v5290
    %5501 = vmatpush2.bf16.msra.mxu0 %v5289
    %5502 = vmatprep.subr.bf16.mxu0 %v5282
    %5503 = vmatpush2.bf16.msra.mxu0 %v5281
    %5504 = vmatprep.subr.bf16.mxu0 %v5274
    %5505 = vmatpush2.bf16.msra.mxu0 %v5273
    %5506 = vmatprep.subr.bf16.mxu0 %v5266
    %5507 = vmatpush2.bf16.msra.mxu0 %v5265
    %5508 = vmatprep.subr.bf16.mxu0 %v5258
    %5509 = vmatpush2.bf16.msra.mxu0 %v5257
    %5510 = vmatprep.subr.bf16.mxu0 %v5250
    %5511 = vmatpush2.bf16.msra.mxu0 %v5249
    %5512 = vmatprep.mubr.bf16.mxu0 %v4670
    %5513 = vmatmul.mubr.bf16.gmra.mxu0 %v4669
    %v5514 = vpop.f32.mrf.mxu0
    %v5515 = vadd.f32 0.0, %v5514
    %v5516 = vpop.f32.mrf.mxu0
    %v5517 = vadd.f32 0.0, %v5516
    %v5518 = vpop.f32.mrf.mxu0
    %v5519 = vpop.f32.mrf.mxu0
    %5520 = vdwg.mxu0
    %5521 = vmatprep.subr.bf16.mxu0 %v5244
    %5522 = vmatpush1.bf16.msra.mxu0 %v5243
    %5523 = vmatprep.subr.bf16.mxu0 %v5236
    %5524 = vmatpush1.bf16.msra.mxu0 %v5235
    %5525 = vmatprep.subr.bf16.mxu0 %v5228
    %5526 = vmatpush1.bf16.msra.mxu0 %v5227
    %5527 = vmatprep.subr.bf16.mxu0 %v5220
    %5528 = vmatpush1.bf16.msra.mxu0 %v5219
    %5529 = vmatprep.subr.bf16.mxu0 %v5212
    %5530 = vmatpush1.bf16.msra.mxu0 %v5211
    %5531 = vmatprep.subr.bf16.mxu0 %v5204
    %5532 = vmatpush1.bf16.msra.mxu0 %v5203
    %5533 = vmatprep.subr.bf16.mxu0 %v5196
    %5534 = vmatpush1.bf16.msra.mxu0 %v5195
    %5535 = vmatprep.subr.bf16.mxu0 %v5188
    %5536 = vmatpush1.bf16.msra.mxu0 %v5187
    %5537 = vmatprep.subr.bf16.mxu0 %v5308
    %5538 = vmatpush2.bf16.msra.mxu0 %v5307
    %5539 = vmatprep.subr.bf16.mxu0 %v5300
    %5540 = vmatpush2.bf16.msra.mxu0 %v5299
    %5541 = vmatprep.subr.bf16.mxu0 %v5292
    %5542 = vmatpush2.bf16.msra.mxu0 %v5291
    %5543 = vmatprep.subr.bf16.mxu0 %v5284
    %5544 = vmatpush2.bf16.msra.mxu0 %v5283
    %5545 = vmatprep.subr.bf16.mxu0 %v5276
    %5546 = vmatpush2.bf16.msra.mxu0 %v5275
    %5547 = vmatprep.subr.bf16.mxu0 %v5268
    %5548 = vmatpush2.bf16.msra.mxu0 %v5267
    %5549 = vmatprep.subr.bf16.mxu0 %v5260
    %5550 = vmatpush2.bf16.msra.mxu0 %v5259
    %5551 = vmatprep.subr.bf16.mxu0 %v5252
    %5552 = vmatpush2.bf16.msra.mxu0 %v5251
    %5553 = vmatprep.mubr.bf16.mxu0 %v4670
    %5554 = vmatmul.mubr.bf16.gmra.mxu0 %v4669
    %v5555 = vpop.f32.mrf.mxu0
    %v5556 = vadd.f32 0.0, %v5555
    %v5557 = vpop.f32.mrf.mxu0
    %v5558 = vadd.f32 0.0, %v5557
    %v5559 = vpop.f32.mrf.mxu0
    %v5560 = vpop.f32.mrf.mxu0
    %5561 = vdwg.mxu0
    %5562 = vmatprep.subr.bf16.mxu0 %v5246
    %5563 = vmatpush1.bf16.msra.mxu0 %v5245
    %5564 = vmatprep.subr.bf16.mxu0 %v5238
    %5565 = vmatpush1.bf16.msra.mxu0 %v5237
    %5566 = vmatprep.subr.bf16.mxu0 %v5230
    %5567 = vmatpush1.bf16.msra.mxu0 %v5229
    %5568 = vmatprep.subr.bf16.mxu0 %v5222
    %5569 = vmatpush1.bf16.msra.mxu0 %v5221
    %5570 = vmatprep.subr.bf16.mxu0 %v5214
    %5571 = vmatpush1.bf16.msra.mxu0 %v5213
    %5572 = vmatprep.subr.bf16.mxu0 %v5206
    %5573 = vmatpush1.bf16.msra.mxu0 %v5205
    %5574 = vmatprep.subr.bf16.mxu0 %v5198
    %5575 = vmatpush1.bf16.msra.mxu0 %v5197
    %5576 = vmatprep.subr.bf16.mxu0 %v5190
    %5577 = vmatpush1.bf16.msra.mxu0 %v5189
    %5578 = vmatprep.subr.bf16.mxu0 %v5310
    %5579 = vmatpush2.bf16.msra.mxu0 %v5309
    %5580 = vmatprep.subr.bf16.mxu0 %v5302
    %5581 = vmatpush2.bf16.msra.mxu0 %v5301
    %5582 = vmatprep.subr.bf16.mxu0 %v5294
    %5583 = vmatpush2.bf16.msra.mxu0 %v5293
    %5584 = vmatprep.subr.bf16.mxu0 %v5286
    %5585 = vmatpush2.bf16.msra.mxu0 %v5285
    %5586 = vmatprep.subr.bf16.mxu0 %v5278
    %5587 = vmatpush2.bf16.msra.mxu0 %v5277
    %5588 = vmatprep.subr.bf16.mxu0 %v5270
    %5589 = vmatpush2.bf16.msra.mxu0 %v5269
    %5590 = vmatprep.subr.bf16.mxu0 %v5262
    %5591 = vmatpush2.bf16.msra.mxu0 %v5261
    %5592 = vmatprep.subr.bf16.mxu0 %v5254
    %5593 = vmatpush2.bf16.msra.mxu0 %v5253
    %5594 = vmatprep.mubr.bf16.mxu0 %v4670
    %5595 = vmatmul.mubr.bf16.gmra.mxu0 %v4669
    %v5596 = vpop.f32.mrf.mxu0
    %v5597 = vadd.f32 0.0, %v5596
    %v5598 = vpop.f32.mrf.mxu0
    %v5599 = vadd.f32 0.0, %v5598
    %v5600 = vpop.f32.mrf.mxu0
    %v5601 = vpop.f32.mrf.mxu0
    %5602 = vdwg.mxu0
    %v5603 = vadd.f32 %v4661, %v5474
    %v5604 = vadd.f32 %v4662, %v5476
    %v5605 = vadd.f32 %v4663, %v5515
    %v5606 = vadd.f32 %v4664, %v5517
    %v5607 = vadd.f32 %v4665, %v5556
    %v5608 = vadd.f32 %v4666, %v5558
    %v5609 = vadd.f32 %v4667, %v5597
    %v5610 = vadd.f32 %v4668, %v5599
    %v5611 = vmax.f32 %v5603, 0.0
    %v5612 = vmax.f32 %v5604, 0.0
    %v5613 = vmax.f32 %v5605, 0.0
    %v5614 = vmax.f32 %v5606, 0.0
    %v5615 = vmax.f32 %v5607, 0.0
    %v5616 = vmax.f32 %v5608, 0.0
    %v5617 = vmax.f32 %v5609, 0.0
    %v5618 = vmax.f32 %v5610, 0.0
    %v5619 = vpack.c.bf16 %v5611, %v5611
    %v5620 = vpack.c.bf16 %v5612, %v5612
    %v5621 = vpack.c.bf16 %v5613, %v5613
    %v5622 = vpack.c.bf16 %v5614, %v5614
    %v5623 = vpack.c.bf16 %v5615, %v5615
    %v5624 = vpack.c.bf16 %v5616, %v5616
    %v5625 = vpack.c.bf16 %v5617, %v5617
    %v5626 = vpack.c.bf16 %v5618, %v5618
    %v5627 = vld [vmem:[#allocation10] sm:$0xf]
    %v5628 = vld [vmem:[#allocation10 + $0x4] sm:$0xf]
    %v5629 = vld [vmem:[#allocation10 + $0x8] sm:$0xf]
    %v5630 = vld [vmem:[#allocation10 + $0xc] sm:$0xf]
    %v5631 = vld [vmem:[#allocation10 + $0x10] sm:$0xf]
    %v5632 = vld [vmem:[#allocation10 + $0x14] sm:$0xf]
    %v5633 = vld [vmem:[#allocation10 + $0x18] sm:$0xf]
    %v5634 = vld [vmem:[#allocation10 + $0x1c] sm:$0xf]
    %v5635 = vld [vmem:[#allocation10 + $0x20] sm:$0xf]
    %v5636 = vld [vmem:[#allocation10 + $0x24] sm:$0xf]
    %v5637 = vld [vmem:[#allocation10 + $0x28] sm:$0xf]
    %v5638 = vld [vmem:[#allocation10 + $0x2c] sm:$0xf]
    %v5639 = vld [vmem:[#allocation10 + $0x30] sm:$0xf]
    %v5640 = vld [vmem:[#allocation10 + $0x34] sm:$0xf]
    %v5641 = vld [vmem:[#allocation10 + $0x38] sm:$0xf]
    %v5642 = vld [vmem:[#allocation10 + $0x3c] sm:$0xf]
    %v5643 = vld [vmem:[#allocation10 + $0x40] sm:$0xf]
    %v5644 = vld [vmem:[#allocation10 + $0x44] sm:$0xf]
    %v5645 = vld [vmem:[#allocation10 + $0x48] sm:$0xf]
    %v5646 = vld [vmem:[#allocation10 + $0x4c] sm:$0xf]
    %v5647 = vld [vmem:[#allocation10 + $0x50] sm:$0xf]
    %v5648 = vld [vmem:[#allocation10 + $0x54] sm:$0xf]
    %v5649 = vld [vmem:[#allocation10 + $0x58] sm:$0xf]
    %v5650 = vld [vmem:[#allocation10 + $0x5c] sm:$0xf]
    %v5651 = vld [vmem:[#allocation10 + $0x60] sm:$0xf]
    %v5652 = vld [vmem:[#allocation10 + $0x64] sm:$0xf]
    %v5653 = vld [vmem:[#allocation10 + $0x68] sm:$0xf]
    %v5654 = vld [vmem:[#allocation10 + $0x6c] sm:$0xf]
    %v5655 = vld [vmem:[#allocation10 + $0x70] sm:$0xf]
    %v5656 = vld [vmem:[#allocation10 + $0x74] sm:$0xf]
    %v5657 = vld [vmem:[#allocation10 + $0x78] sm:$0xf]
    %v5658 = vld [vmem:[#allocation10 + $0x7c] sm:$0xf]
    %v5659 = vld [vmem:[#allocation10 + $0x80] sm:$0xf]
    %v5660 = vld [vmem:[#allocation10 + $0x84] sm:$0xf]
    %v5661 = vld [vmem:[#allocation10 + $0x88] sm:$0xf]
    %v5662 = vld [vmem:[#allocation10 + $0x8c] sm:$0xf]
    %v5663 = vld [vmem:[#allocation10 + $0x90] sm:$0xf]
    %v5664 = vld [vmem:[#allocation10 + $0x94] sm:$0xf]
    %v5665 = vld [vmem:[#allocation10 + $0x98] sm:$0xf]
    %v5666 = vld [vmem:[#allocation10 + $0x9c] sm:$0xf]
    %v5667 = vld [vmem:[#allocation10 + $0xa0] sm:$0xf]
    %v5668 = vld [vmem:[#allocation10 + $0xa4] sm:$0xf]
    %v5669 = vld [vmem:[#allocation10 + $0xa8] sm:$0xf]
    %v5670 = vld [vmem:[#allocation10 + $0xac] sm:$0xf]
    %v5671 = vld [vmem:[#allocation10 + $0xb0] sm:$0xf]
    %v5672 = vld [vmem:[#allocation10 + $0xb4] sm:$0xf]
    %v5673 = vld [vmem:[#allocation10 + $0xb8] sm:$0xf]
    %v5674 = vld [vmem:[#allocation10 + $0xbc] sm:$0xf]
    %v5675 = vld [vmem:[#allocation10 + $0xc0] sm:$0xf]
    %v5676 = vld [vmem:[#allocation10 + $0xc4] sm:$0xf]
    %v5677 = vld [vmem:[#allocation10 + $0xc8] sm:$0xf]
    %v5678 = vld [vmem:[#allocation10 + $0xcc] sm:$0xf]
    %v5679 = vld [vmem:[#allocation10 + $0xd0] sm:$0xf]
    %v5680 = vld [vmem:[#allocation10 + $0xd4] sm:$0xf]
    %v5681 = vld [vmem:[#allocation10 + $0xd8] sm:$0xf]
    %v5682 = vld [vmem:[#allocation10 + $0xdc] sm:$0xf]
    %v5683 = vld [vmem:[#allocation10 + $0xe0] sm:$0xf]
    %v5684 = vld [vmem:[#allocation10 + $0xe4] sm:$0xf]
    %v5685 = vld [vmem:[#allocation10 + $0xe8] sm:$0xf]
    %v5686 = vld [vmem:[#allocation10 + $0xec] sm:$0xf]
    %v5687 = vld [vmem:[#allocation10 + $0xf0] sm:$0xf]
    %v5688 = vld [vmem:[#allocation10 + $0xf4] sm:$0xf]
    %v5689 = vld [vmem:[#allocation10 + $0xf8] sm:$0xf]
    %v5690 = vld [vmem:[#allocation10 + $0xfc] sm:$0xf]
    %v5691 = vld [vmem:[#allocation10 + $0x100] sm:$0xf]
    %v5692 = vld [vmem:[#allocation10 + $0x104] sm:$0xf]
    %v5693 = vld [vmem:[#allocation10 + $0x108] sm:$0xf]
    %v5694 = vld [vmem:[#allocation10 + $0x10c] sm:$0xf]
    %v5695 = vld [vmem:[#allocation10 + $0x110] sm:$0xf]
    %v5696 = vld [vmem:[#allocation10 + $0x114] sm:$0xf]
    %v5697 = vld [vmem:[#allocation10 + $0x118] sm:$0xf]
    %v5698 = vld [vmem:[#allocation10 + $0x11c] sm:$0xf]
    %v5699 = vld [vmem:[#allocation10 + $0x120] sm:$0xf]
    %v5700 = vld [vmem:[#allocation10 + $0x124] sm:$0xf]
    %v5701 = vld [vmem:[#allocation10 + $0x128] sm:$0xf]
    %v5702 = vld [vmem:[#allocation10 + $0x12c] sm:$0xf]
    %v5703 = vld [vmem:[#allocation10 + $0x130] sm:$0xf]
    %v5704 = vld [vmem:[#allocation10 + $0x134] sm:$0xf]
    %v5705 = vld [vmem:[#allocation10 + $0x138] sm:$0xf]
    %v5706 = vld [vmem:[#allocation10 + $0x13c] sm:$0xf]
    %v5707 = vld [vmem:[#allocation10 + $0x140] sm:$0xf]
    %v5708 = vld [vmem:[#allocation10 + $0x144] sm:$0xf]
    %v5709 = vld [vmem:[#allocation10 + $0x148] sm:$0xf]
    %v5710 = vld [vmem:[#allocation10 + $0x14c] sm:$0xf]
    %v5711 = vld [vmem:[#allocation10 + $0x150] sm:$0xf]
    %v5712 = vld [vmem:[#allocation10 + $0x154] sm:$0xf]
    %v5713 = vld [vmem:[#allocation10 + $0x158] sm:$0xf]
    %v5714 = vld [vmem:[#allocation10 + $0x15c] sm:$0xf]
    %v5715 = vld [vmem:[#allocation10 + $0x160] sm:$0xf]
    %v5716 = vld [vmem:[#allocation10 + $0x164] sm:$0xf]
    %v5717 = vld [vmem:[#allocation10 + $0x168] sm:$0xf]
    %v5718 = vld [vmem:[#allocation10 + $0x16c] sm:$0xf]
    %v5719 = vld [vmem:[#allocation10 + $0x170] sm:$0xf]
    %v5720 = vld [vmem:[#allocation10 + $0x174] sm:$0xf]
    %v5721 = vld [vmem:[#allocation10 + $0x178] sm:$0xf]
    %v5722 = vld [vmem:[#allocation10 + $0x17c] sm:$0xf]
    %v5723 = vld [vmem:[#allocation10 + $0x180] sm:$0xf]
    %v5724 = vld [vmem:[#allocation10 + $0x184] sm:$0xf]
    %v5725 = vld [vmem:[#allocation10 + $0x188] sm:$0xf]
    %v5726 = vld [vmem:[#allocation10 + $0x18c] sm:$0xf]
    %v5727 = vld [vmem:[#allocation10 + $0x190] sm:$0xf]
    %v5728 = vld [vmem:[#allocation10 + $0x194] sm:$0xf]
    %v5729 = vld [vmem:[#allocation10 + $0x198] sm:$0xf]
    %v5730 = vld [vmem:[#allocation10 + $0x19c] sm:$0xf]
    %v5731 = vld [vmem:[#allocation10 + $0x1a0] sm:$0xf]
    %v5732 = vld [vmem:[#allocation10 + $0x1a4] sm:$0xf]
    %v5733 = vld [vmem:[#allocation10 + $0x1a8] sm:$0xf]
    %v5734 = vld [vmem:[#allocation10 + $0x1ac] sm:$0xf]
    %v5735 = vld [vmem:[#allocation10 + $0x1b0] sm:$0xf]
    %v5736 = vld [vmem:[#allocation10 + $0x1b4] sm:$0xf]
    %v5737 = vld [vmem:[#allocation10 + $0x1b8] sm:$0xf]
    %v5738 = vld [vmem:[#allocation10 + $0x1bc] sm:$0xf]
    %v5739 = vld [vmem:[#allocation10 + $0x1c0] sm:$0xf]
    %v5740 = vld [vmem:[#allocation10 + $0x1c4] sm:$0xf]
    %v5741 = vld [vmem:[#allocation10 + $0x1c8] sm:$0xf]
    %v5742 = vld [vmem:[#allocation10 + $0x1cc] sm:$0xf]
    %v5743 = vld [vmem:[#allocation10 + $0x1d0] sm:$0xf]
    %v5744 = vld [vmem:[#allocation10 + $0x1d4] sm:$0xf]
    %v5745 = vld [vmem:[#allocation10 + $0x1d8] sm:$0xf]
    %v5746 = vld [vmem:[#allocation10 + $0x1dc] sm:$0xf]
    %v5747 = vld [vmem:[#allocation10 + $0x1e0] sm:$0xf]
    %v5748 = vld [vmem:[#allocation10 + $0x1e4] sm:$0xf]
    %v5749 = vld [vmem:[#allocation10 + $0x1e8] sm:$0xf]
    %v5750 = vld [vmem:[#allocation10 + $0x1ec] sm:$0xf]
    %v5751 = vld [vmem:[#allocation10 + $0x1f0] sm:$0xf]
    %v5752 = vld [vmem:[#allocation10 + $0x1f4] sm:$0xf]
    %v5753 = vld [vmem:[#allocation10 + $0x1f8] sm:$0xf]
    %v5754 = vld [vmem:[#allocation10 + $0x1fc] sm:$0xf]
    %v5755 = vld [vmem:[%s11] sm:$0x1]
    %v5757 = vlaneseq
    %v5758 = vshrl.u32 %v5757, 7
    %v5759 = vsub.s32 0, %v5758
    %v5760 = vrot.slane %v5755, %v5759
    %v5890 = vunpack.c.l.b16 %v5627
    %v5891 = vunpack.c.l.b16 %v5628
    %v5892 = vunpack.c.l.b16 %v5629
    %v5893 = vunpack.c.l.b16 %v5630
    %v5894 = vunpack.c.l.b16 %v5631
    %v5895 = vunpack.c.l.b16 %v5632
    %v5896 = vunpack.c.l.b16 %v5633
    %v5897 = vunpack.c.l.b16 %v5634
    %v5898 = vunpack.c.l.b16 %v5635
    %v5899 = vunpack.c.l.b16 %v5636
    %v5900 = vunpack.c.l.b16 %v5637
    %v5901 = vunpack.c.l.b16 %v5638
    %v5902 = vunpack.c.l.b16 %v5639
    %v5903 = vunpack.c.l.b16 %v5640
    %v5904 = vunpack.c.l.b16 %v5641
    %v5905 = vunpack.c.l.b16 %v5642
    %v5906 = vunpack.c.l.b16 %v5643
    %v5907 = vunpack.c.l.b16 %v5644
    %v5908 = vunpack.c.l.b16 %v5645
    %v5909 = vunpack.c.l.b16 %v5646
    %v5910 = vunpack.c.l.b16 %v5647
    %v5911 = vunpack.c.l.b16 %v5648
    %v5912 = vunpack.c.l.b16 %v5649
    %v5913 = vunpack.c.l.b16 %v5650
    %v5914 = vunpack.c.l.b16 %v5651
    %v5915 = vunpack.c.l.b16 %v5652
    %v5916 = vunpack.c.l.b16 %v5653
    %v5917 = vunpack.c.l.b16 %v5654
    %v5918 = vunpack.c.l.b16 %v5655
    %v5919 = vunpack.c.l.b16 %v5656
    %v5920 = vunpack.c.l.b16 %v5657
    %v5921 = vunpack.c.l.b16 %v5658
    %v5922 = vunpack.c.l.b16 %v5659
    %v5923 = vunpack.c.l.b16 %v5660
    %v5924 = vunpack.c.l.b16 %v5661
    %v5925 = vunpack.c.l.b16 %v5662
    %v5926 = vunpack.c.l.b16 %v5663
    %v5927 = vunpack.c.l.b16 %v5664
    %v5928 = vunpack.c.l.b16 %v5665
    %v5929 = vunpack.c.l.b16 %v5666
    %v5930 = vunpack.c.l.b16 %v5667
    %v5931 = vunpack.c.l.b16 %v5668
    %v5932 = vunpack.c.l.b16 %v5669
    %v5933 = vunpack.c.l.b16 %v5670
    %v5934 = vunpack.c.l.b16 %v5671
    %v5935 = vunpack.c.l.b16 %v5672
    %v5936 = vunpack.c.l.b16 %v5673
    %v5937 = vunpack.c.l.b16 %v5674
    %v5938 = vunpack.c.l.b16 %v5675
    %v5939 = vunpack.c.l.b16 %v5676
    %v5940 = vunpack.c.l.b16 %v5677
    %v5941 = vunpack.c.l.b16 %v5678
    %v5942 = vunpack.c.l.b16 %v5679
    %v5943 = vunpack.c.l.b16 %v5680
    %v5944 = vunpack.c.l.b16 %v5681
    %v5945 = vunpack.c.l.b16 %v5682
    %v5946 = vunpack.c.l.b16 %v5683
    %v5947 = vunpack.c.l.b16 %v5684
    %v5948 = vunpack.c.l.b16 %v5685
    %v5949 = vunpack.c.l.b16 %v5686
    %v5950 = vunpack.c.l.b16 %v5687
    %v5951 = vunpack.c.l.b16 %v5688
    %v5952 = vunpack.c.l.b16 %v5689
    %v5953 = vunpack.c.l.b16 %v5690
    %v5954 = vunpack.c.l.b16 %v5691
    %v5955 = vunpack.c.l.b16 %v5692
    %v5956 = vunpack.c.l.b16 %v5693
    %v5957 = vunpack.c.l.b16 %v5694
    %v5958 = vunpack.c.l.b16 %v5695
    %v5959 = vunpack.c.l.b16 %v5696
    %v5960 = vunpack.c.l.b16 %v5697
    %v5961 = vunpack.c.l.b16 %v5698
    %v5962 = vunpack.c.l.b16 %v5699
    %v5963 = vunpack.c.l.b16 %v5700
    %v5964 = vunpack.c.l.b16 %v5701
    %v5965 = vunpack.c.l.b16 %v5702
    %v5966 = vunpack.c.l.b16 %v5703
    %v5967 = vunpack.c.l.b16 %v5704
    %v5968 = vunpack.c.l.b16 %v5705
    %v5969 = vunpack.c.l.b16 %v5706
    %v5970 = vunpack.c.l.b16 %v5707
    %v5971 = vunpack.c.l.b16 %v5708
    %v5972 = vunpack.c.l.b16 %v5709
    %v5973 = vunpack.c.l.b16 %v5710
    %v5974 = vunpack.c.l.b16 %v5711
    %v5975 = vunpack.c.l.b16 %v5712
    %v5976 = vunpack.c.l.b16 %v5713
    %v5977 = vunpack.c.l.b16 %v5714
    %v5978 = vunpack.c.l.b16 %v5715
    %v5979 = vunpack.c.l.b16 %v5716
    %v5980 = vunpack.c.l.b16 %v5717
    %v5981 = vunpack.c.l.b16 %v5718
    %v5982 = vunpack.c.l.b16 %v5719
    %v5983 = vunpack.c.l.b16 %v5720
    %v5984 = vunpack.c.l.b16 %v5721
    %v5985 = vunpack.c.l.b16 %v5722
    %v5986 = vunpack.c.l.b16 %v5723
    %v5987 = vunpack.c.l.b16 %v5724
    %v5988 = vunpack.c.l.b16 %v5725
    %v5989 = vunpack.c.l.b16 %v5726
    %v5990 = vunpack.c.l.b16 %v5727
    %v5991 = vunpack.c.l.b16 %v5728
    %v5992 = vunpack.c.l.b16 %v5729
    %v5993 = vunpack.c.l.b16 %v5730
    %v5994 = vunpack.c.l.b16 %v5731
    %v5995 = vunpack.c.l.b16 %v5732
    %v5996 = vunpack.c.l.b16 %v5733
    %v5997 = vunpack.c.l.b16 %v5734
    %v5998 = vunpack.c.l.b16 %v5735
    %v5999 = vunpack.c.l.b16 %v5736
    %v6000 = vunpack.c.l.b16 %v5737
    %v6001 = vunpack.c.l.b16 %v5738
    %v6002 = vunpack.c.l.b16 %v5739
    %v6003 = vunpack.c.l.b16 %v5740
    %v6004 = vunpack.c.l.b16 %v5741
    %v6005 = vunpack.c.l.b16 %v5742
    %v6006 = vunpack.c.l.b16 %v5743
    %v6007 = vunpack.c.l.b16 %v5744
    %v6008 = vunpack.c.l.b16 %v5745
    %v6009 = vunpack.c.l.b16 %v5746
    %v6010 = vunpack.c.l.b16 %v5747
    %v6011 = vunpack.c.l.b16 %v5748
    %v6012 = vunpack.c.l.b16 %v5749
    %v6013 = vunpack.c.l.b16 %v5750
    %v6014 = vunpack.c.l.b16 %v5751
    %v6015 = vunpack.c.l.b16 %v5752
    %v6016 = vunpack.c.l.b16 %v5753
    %v6017 = vunpack.c.l.b16 %v5754
    %v6018 = vpack.c.b16 %v5891, %v5890
    %v6019 = vpack.c.b16 %v5893, %v5892
    %v6020 = vpack.c.b16 %v5895, %v5894
    %v6021 = vpack.c.b16 %v5897, %v5896
    %v6022 = vpack.c.b16 %v5899, %v5898
    %v6023 = vpack.c.b16 %v5901, %v5900
    %v6024 = vpack.c.b16 %v5903, %v5902
    %v6025 = vpack.c.b16 %v5905, %v5904
    %v6026 = vpack.c.b16 %v5907, %v5906
    %v6027 = vpack.c.b16 %v5909, %v5908
    %v6028 = vpack.c.b16 %v5911, %v5910
    %v6029 = vpack.c.b16 %v5913, %v5912
    %v6030 = vpack.c.b16 %v5915, %v5914
    %v6031 = vpack.c.b16 %v5917, %v5916
    %v6032 = vpack.c.b16 %v5919, %v5918
    %v6033 = vpack.c.b16 %v5921, %v5920
    %v6034 = vpack.c.b16 %v5923, %v5922
    %v6035 = vpack.c.b16 %v5925, %v5924
    %v6036 = vpack.c.b16 %v5927, %v5926
    %v6037 = vpack.c.b16 %v5929, %v5928
    %v6038 = vpack.c.b16 %v5931, %v5930
    %v6039 = vpack.c.b16 %v5933, %v5932
    %v6040 = vpack.c.b16 %v5935, %v5934
    %v6041 = vpack.c.b16 %v5937, %v5936
    %v6042 = vpack.c.b16 %v5939, %v5938
    %v6043 = vpack.c.b16 %v5941, %v5940
    %v6044 = vpack.c.b16 %v5943, %v5942
    %v6045 = vpack.c.b16 %v5945, %v5944
    %v6046 = vpack.c.b16 %v5947, %v5946
    %v6047 = vpack.c.b16 %v5949, %v5948
    %v6048 = vpack.c.b16 %v5951, %v5950
    %v6049 = vpack.c.b16 %v5953, %v5952
    %v6050 = vpack.c.b16 %v5955, %v5954
    %v6051 = vpack.c.b16 %v5957, %v5956
    %v6052 = vpack.c.b16 %v5959, %v5958
    %v6053 = vpack.c.b16 %v5961, %v5960
    %v6054 = vpack.c.b16 %v5963, %v5962
    %v6055 = vpack.c.b16 %v5965, %v5964
    %v6056 = vpack.c.b16 %v5967, %v5966
    %v6057 = vpack.c.b16 %v5969, %v5968
    %v6058 = vpack.c.b16 %v5971, %v5970
    %v6059 = vpack.c.b16 %v5973, %v5972
    %v6060 = vpack.c.b16 %v5975, %v5974
    %v6061 = vpack.c.b16 %v5977, %v5976
    %v6062 = vpack.c.b16 %v5979, %v5978
    %v6063 = vpack.c.b16 %v5981, %v5980
    %v6064 = vpack.c.b16 %v5983, %v5982
    %v6065 = vpack.c.b16 %v5985, %v5984
    %v6066 = vpack.c.b16 %v5987, %v5986
    %v6067 = vpack.c.b16 %v5989, %v5988
    %v6068 = vpack.c.b16 %v5991, %v5990
    %v6069 = vpack.c.b16 %v5993, %v5992
    %v6070 = vpack.c.b16 %v5995, %v5994
    %v6071 = vpack.c.b16 %v5997, %v5996
    %v6072 = vpack.c.b16 %v5999, %v5998
    %v6073 = vpack.c.b16 %v6001, %v6000
    %v6074 = vpack.c.b16 %v6003, %v6002
    %v6075 = vpack.c.b16 %v6005, %v6004
    %v6076 = vpack.c.b16 %v6007, %v6006
    %v6077 = vpack.c.b16 %v6009, %v6008
    %v6078 = vpack.c.b16 %v6011, %v6010
    %v6079 = vpack.c.b16 %v6013, %v6012
    %v6080 = vpack.c.b16 %v6015, %v6014
    %v6081 = vpack.c.b16 %v6017, %v6016
    %6146 = vmatprep.subr.bf16.mxu0 0
    %6147 = vmatpush1.bf16.msra.mxu0 %v6025
    %6148 = vmatprep.subr.bf16.mxu0 0
    %6149 = vmatpush1.bf16.msra.mxu0 %v6024
    %6150 = vmatprep.subr.bf16.mxu0 0
    %6151 = vmatpush1.bf16.msra.mxu0 %v6023
    %6152 = vmatprep.subr.bf16.mxu0 0
    %6153 = vmatpush1.bf16.msra.mxu0 %v6022
    %6154 = vmatprep.subr.bf16.mxu0 0
    %6155 = vmatpush1.bf16.msra.mxu0 %v6021
    %6156 = vmatprep.subr.bf16.mxu0 0
    %6157 = vmatpush1.bf16.msra.mxu0 %v6020
    %6158 = vmatprep.subr.bf16.mxu0 0
    %6159 = vmatpush1.bf16.msra.mxu0 %v6019
    %6160 = vmatprep.subr.bf16.mxu0 0
    %6161 = vmatpush1.bf16.msra.mxu0 %v6018
    %6162 = vmatprep.subr.bf16.mxu0 0
    %6163 = vmatpush2.bf16.msra.mxu0 %v6033
    %6164 = vmatprep.subr.bf16.mxu0 0
    %6165 = vmatpush2.bf16.msra.mxu0 %v6032
    %6166 = vmatprep.subr.bf16.mxu0 0
    %6167 = vmatpush2.bf16.msra.mxu0 %v6031
    %6168 = vmatprep.subr.bf16.mxu0 0
    %6169 = vmatpush2.bf16.msra.mxu0 %v6030
    %6170 = vmatprep.subr.bf16.mxu0 0
    %6171 = vmatpush2.bf16.msra.mxu0 %v6029
    %6172 = vmatprep.subr.bf16.mxu0 0
    %6173 = vmatpush2.bf16.msra.mxu0 %v6028
    %6174 = vmatprep.subr.bf16.mxu0 0
    %6175 = vmatpush2.bf16.msra.mxu0 %v6027
    %6176 = vmatprep.subr.bf16.mxu0 0
    %6177 = vmatpush2.bf16.msra.mxu0 %v6026
    %6178 = vmatprep.mubr.bf16.mxu0 %v5620
    %6179 = vmatmul.mubr.bf16.gmra.mxu0 %v5619
    %v6180 = vpop.f32.mrf.mxu0
    %v6181 = vadd.f32 %v5760, %v6180
    %v6182 = vpop.f32.mrf.mxu0
    %v6183 = vpop.f32.mrf.mxu0
    %v6184 = vpop.f32.mrf.mxu0
    %6185 = vdwg.mxu0
    %6186 = vmatprep.subr.bf16.mxu0 0
    %6187 = vmatpush1.bf16.msra.mxu0 %v6041
    %6188 = vmatprep.subr.bf16.mxu0 0
    %6189 = vmatpush1.bf16.msra.mxu0 %v6040
    %6190 = vmatprep.subr.bf16.mxu0 0
    %6191 = vmatpush1.bf16.msra.mxu0 %v6039
    %6192 = vmatprep.subr.bf16.mxu0 0
    %6193 = vmatpush1.bf16.msra.mxu0 %v6038
    %6194 = vmatprep.subr.bf16.mxu0 0
    %6195 = vmatpush1.bf16.msra.mxu0 %v6037
    %6196 = vmatprep.subr.bf16.mxu0 0
    %6197 = vmatpush1.bf16.msra.mxu0 %v6036
    %6198 = vmatprep.subr.bf16.mxu0 0
    %6199 = vmatpush1.bf16.msra.mxu0 %v6035
    %6200 = vmatprep.subr.bf16.mxu0 0
    %6201 = vmatpush1.bf16.msra.mxu0 %v6034
    %6202 = vmatprep.subr.bf16.mxu0 0
    %6203 = vmatpush2.bf16.msra.mxu0 %v6049
    %6204 = vmatprep.subr.bf16.mxu0 0
    %6205 = vmatpush2.bf16.msra.mxu0 %v6048
    %6206 = vmatprep.subr.bf16.mxu0 0
    %6207 = vmatpush2.bf16.msra.mxu0 %v6047
    %6208 = vmatprep.subr.bf16.mxu0 0
    %6209 = vmatpush2.bf16.msra.mxu0 %v6046
    %6210 = vmatprep.subr.bf16.mxu0 0
    %6211 = vmatpush2.bf16.msra.mxu0 %v6045
    %6212 = vmatprep.subr.bf16.mxu0 0
    %6213 = vmatpush2.bf16.msra.mxu0 %v6044
    %6214 = vmatprep.subr.bf16.mxu0 0
    %6215 = vmatpush2.bf16.msra.mxu0 %v6043
    %6216 = vmatprep.subr.bf16.mxu0 0
    %6217 = vmatpush2.bf16.msra.mxu0 %v6042
    %6218 = vmatprep.mubr.bf16.mxu0 %v5622
    %6219 = vmatmul.mubr.bf16.gmra.mxu0 %v5621
    %v6220 = vpop.f32.mrf.mxu0
    %v6221 = vadd.f32 %v6181, %v6220
    %v6222 = vpop.f32.mrf.mxu0
    %v6223 = vpop.f32.mrf.mxu0
    %v6224 = vpop.f32.mrf.mxu0
    %6225 = vdwg.mxu0
    %6226 = vmatprep.subr.bf16.mxu0 0
    %6227 = vmatpush1.bf16.msra.mxu0 %v6057
    %6228 = vmatprep.subr.bf16.mxu0 0
    %6229 = vmatpush1.bf16.msra.mxu0 %v6056
    %6230 = vmatprep.subr.bf16.mxu0 0
    %6231 = vmatpush1.bf16.msra.mxu0 %v6055
    %6232 = vmatprep.subr.bf16.mxu0 0
    %6233 = vmatpush1.bf16.msra.mxu0 %v6054
    %6234 = vmatprep.subr.bf16.mxu0 0
    %6235 = vmatpush1.bf16.msra.mxu0 %v6053
    %6236 = vmatprep.subr.bf16.mxu0 0
    %6237 = vmatpush1.bf16.msra.mxu0 %v6052
    %6238 = vmatprep.subr.bf16.mxu0 0
    %6239 = vmatpush1.bf16.msra.mxu0 %v6051
    %6240 = vmatprep.subr.bf16.mxu0 0
    %6241 = vmatpush1.bf16.msra.mxu0 %v6050
    %6242 = vmatprep.subr.bf16.mxu0 0
    %6243 = vmatpush2.bf16.msra.mxu0 %v6065
    %6244 = vmatprep.subr.bf16.mxu0 0
    %6245 = vmatpush2.bf16.msra.mxu0 %v6064
    %6246 = vmatprep.subr.bf16.mxu0 0
    %6247 = vmatpush2.bf16.msra.mxu0 %v6063
    %6248 = vmatprep.subr.bf16.mxu0 0
    %6249 = vmatpush2.bf16.msra.mxu0 %v6062
    %6250 = vmatprep.subr.bf16.mxu0 0
    %6251 = vmatpush2.bf16.msra.mxu0 %v6061
    %6252 = vmatprep.subr.bf16.mxu0 0
    %6253 = vmatpush2.bf16.msra.mxu0 %v6060
    %6254 = vmatprep.subr.bf16.mxu0 0
    %6255 = vmatpush2.bf16.msra.mxu0 %v6059
    %6256 = vmatprep.subr.bf16.mxu0 0
    %6257 = vmatpush2.bf16.msra.mxu0 %v6058
    %6258 = vmatprep.mubr.bf16.mxu0 %v5624
    %6259 = vmatmul.mubr.bf16.gmra.mxu0 %v5623
    %v6260 = vpop.f32.mrf.mxu0
    %v6261 = vadd.f32 %v6221, %v6260
    %v6262 = vpop.f32.mrf.mxu0
    %v6263 = vpop.f32.mrf.mxu0
    %v6264 = vpop.f32.mrf.mxu0
    %6265 = vdwg.mxu0
    %6266 = vmatprep.subr.bf16.mxu0 0
    %6267 = vmatpush1.bf16.msra.mxu0 %v6073
    %6268 = vmatprep.subr.bf16.mxu0 0
    %6269 = vmatpush1.bf16.msra.mxu0 %v6072
    %6270 = vmatprep.subr.bf16.mxu0 0
    %6271 = vmatpush1.bf16.msra.mxu0 %v6071
    %6272 = vmatprep.subr.bf16.mxu0 0
    %6273 = vmatpush1.bf16.msra.mxu0 %v6070
    %6274 = vmatprep.subr.bf16.mxu0 0
    %6275 = vmatpush1.bf16.msra.mxu0 %v6069
    %6276 = vmatprep.subr.bf16.mxu0 0
    %6277 = vmatpush1.bf16.msra.mxu0 %v6068
    %6278 = vmatprep.subr.bf16.mxu0 0
    %6279 = vmatpush1.bf16.msra.mxu0 %v6067
    %6280 = vmatprep.subr.bf16.mxu0 0
    %6281 = vmatpush1.bf16.msra.mxu0 %v6066
    %6282 = vmatprep.subr.bf16.mxu0 0
    %6283 = vmatpush2.bf16.msra.mxu0 %v6081
    %6284 = vmatprep.subr.bf16.mxu0 0
    %6285 = vmatpush2.bf16.msra.mxu0 %v6080
    %6286 = vmatprep.subr.bf16.mxu0 0
    %6287 = vmatpush2.bf16.msra.mxu0 %v6079
    %6288 = vmatprep.subr.bf16.mxu0 0
    %6289 = vmatpush2.bf16.msra.mxu0 %v6078
    %6290 = vmatprep.subr.bf16.mxu0 0
    %6291 = vmatpush2.bf16.msra.mxu0 %v6077
    %6292 = vmatprep.subr.bf16.mxu0 0
    %6293 = vmatpush2.bf16.msra.mxu0 %v6076
    %6294 = vmatprep.subr.bf16.mxu0 0
    %6295 = vmatpush2.bf16.msra.mxu0 %v6075
    %6296 = vmatprep.subr.bf16.mxu0 0
    %6297 = vmatpush2.bf16.msra.mxu0 %v6074
    %6298 = vmatprep.mubr.bf16.mxu0 %v5626
    %6299 = vmatmul.mubr.bf16.gmra.mxu0 %v5625
    %v6300 = vpop.f32.mrf.mxu0
    %v6301 = vadd.f32 %v6261, %v6300
    %v6302 = vpop.f32.mrf.mxu0
    %v6303 = vpop.f32.mrf.mxu0
    %v6304 = vpop.f32.mrf.mxu0
    %6305 = vdwg.mxu0
    %6306 = vst [vmem:[#allocation11] sm:$0x3] %v6301
    // Predicated region
    $region62: #{cnn_shared_forward.1} parent=1 // pred_check
      _
    $region63: #{cnn_shared_forward.1} parent=1 // pred_check_branch
      %6308 = sbr.rel (0) target = $region65
    $region64: #{cnn_shared_forward.1} parent=1 // pred_region
      %s6310 = ssub.s32 32, 32
      %6311 = vsyncadd [#allocation7], %s6310
      %s6313 = sshll.u32 [#allocation11], 4
      %s6314 = int_to_ptr.vmem [resolvable:$true] %s6313
      %6316 = dma.vmem_to_hbm [thread:$0]  %s6314, 32, %s12, [#allocation7]
    $region65: #{cnn_shared_forward.1} parent=1 // pred_fallthru
      _
    // Predicated region
    $region66: #{cnn_shared_forward.1} parent=1 // pred_check
      _
    $region67: #{cnn_shared_forward.1} parent=1 // pred_check_branch
      %6318 = sbr.rel (0) target = $region69
    $region68: #{cnn_shared_forward.1} parent=1 // pred_region
      %6319 = dma.done [#allocation7], 32
    $region69: #{cnn_shared_forward.1} parent=1 // pred_fallthru
      _
    %6320 = vsyncpa [#allocation6], 1
    %6321 = vsyncpa [#allocation9], 1
    %6322 = vsyncpa [#allocation7], 1

</llo_original>
